<compile_context>
chip_gen: v7x
topology: tpu7x:2x2x1
jax: 0.10.0
libtpu: 0.0.40
codegen_flags: <defaults>
</compile_context>

<pallas_src>
import math

import jax
import jax.numpy as jnp
from jax import lax
from jax.experimental import pallas as pl
from jax.experimental.pallas import tpu as pltpu

TEAM_FEATS = 10
PLAY_FEATS = 200
HIDDEN = 500
HIDDEN_PAD = 512                    # lane-aligned hidden size used inside kernels
TIME_PAD = 128                      # lane-aligned width for the 1-wide time head
VMEM_LIMIT = 48 * 1024 * 1024       # stay under v7x's 64 MiB per-core VMEM


def _round_up(x, m):
    return ((x + m - 1) // m) * m


# ----------------------------------------------------------------------------
# Pallas kernels
# ----------------------------------------------------------------------------
def _matmul_bias_kernel(x_ref, w_ref, b_ref, o_ref):
    """o = x @ w + b on one row block.  Used for the hoisted LSTM input projections."""
    o_ref[...] = (jnp.dot(x_ref[...], w_ref[...],
                          preferred_element_type=jnp.float32) + b_ref[...])


def _lstm_scan_kernel(xp_ref, whh_ref, y_ref):
    """One LSTM layer, whole time loop inside the kernel.

    xp_ref : (S, B, 4*Hp)  precomputed x @ W_ih + (b_ih + b_hh), gate order i,f,g,o
    whh_ref: (Hp, 4*Hp)    fused (all four gates) recurrent weights
    y_ref  : (S, B, Hp)    per-step hidden states

    Padded hidden channels stay exactly zero: their gate pre-activations are 0, so
    c_pad -> 0.5 * c_pad (stays 0) and h_pad = 0.5 * tanh(0) = 0.
    """
    S, B, G = xp_ref.shape
    Hp = G // 4

    def step(t, carry):
        h, c = carry
        gates = xp_ref[t] + jnp.dot(h, whh_ref[...],
                                    preferred_element_type=jnp.float32)
        sig = jax.nn.sigmoid(gates)                    # one fused EUP pass
        i = sig[:, 0 * Hp:1 * Hp]
        f = sig[:, 1 * Hp:2 * Hp]
        o = sig[:, 3 * Hp:4 * Hp]
        g = jnp.tanh(gates[:, 2 * Hp:3 * Hp])
        c_new = f * c + i * g
        h_new = o * jnp.tanh(c_new)
        y_ref[t] = h_new
        return (h_new, c_new)

    zero = jnp.zeros((B, Hp), jnp.float32)
    lax.fori_loop(0, S, step, (zero, zero))


def _proj_kernel(h1_ref, h2_ref, wp_ref, bp_ref, wt_ref, bt_ref, filt_ref,
                 out1_ref, out2_ref):
    """Batched output projections on a row block, lane-dense stores.

    out1 = (h1 @ Wp + bp) * filt      (rows, NPp)
    out2 =  h2 @ Wt + bt              (rows, TIME_PAD); column 0 is the real head
    """
    logits = (jnp.dot(h1_ref[...], wp_ref[...],
                      preferred_element_type=jnp.float32) + bp_ref[...])
    out1_ref[...] = logits * filt_ref[...]
    out2_ref[...] = (jnp.dot(h2_ref[...], wt_ref[...],
                             preferred_element_type=jnp.float32) + bt_ref[...])


# ----------------------------------------------------------------------------
# Wrappers
# ----------------------------------------------------------------------------
def matmul_bias(x, w, b, *, block_rows=256):
    """x: (R, K), w: (K, N), b: (1, N) -> (R, N).  Rows tiled; K, N kept whole."""
    R, K = x.shape
    N = w.shape[1]
    tm = min(block_rows, _round_up(R, 8))
    rp = _round_up(R, tm)
    if rp != R:
        x = jnp.pad(x, ((0, rp - R), (0, 0)))
    out = pl.pallas_call(
        _matmul_bias_kernel,
        out_shape=jax.ShapeDtypeStruct((rp, N), jnp.float32),
        grid_spec=pltpu.PrefetchScalarGridSpec(
            num_scalar_prefetch=0,
            grid=(rp // tm,),
            in_specs=[
                pl.BlockSpec((tm, K), lambda i: (i, 0)),
                pl.BlockSpec((K, N), lambda i: (0, 0)),
                pl.BlockSpec((1, N), lambda i: (0, 0)),
            ],
            out_specs=pl.BlockSpec((tm, N), lambda i: (i, 0)),
        ),
        compiler_params=pltpu.CompilerParams(
            dimension_semantics=("parallel",),
            vmem_limit_bytes=VMEM_LIMIT),
    )(x, w, b)
    return out[:R] if rp != R else out


def lstm_scan(xp, whh):
    """xp: (S, B, 4*Hp) precomputed input projection; whh: (Hp, 4*Hp)."""
    S, B, G = xp.shape
    Hp = whh.shape[0]
    return pl.pallas_call(
        _lstm_scan_kernel,
        out_shape=jax.ShapeDtypeStruct((S, B, Hp), jnp.float32),
        grid_spec=pltpu.PrefetchScalarGridSpec(
            num_scalar_prefetch=0,
            grid=(1,),
            in_specs=[
                pl.BlockSpec((S, B, G), lambda i: (0, 0, 0)),
                pl.BlockSpec((Hp, G), lambda i: (0, 0)),
            ],
            out_specs=pl.BlockSpec((S, B, Hp), lambda i: (0, 0, 0)),
        ),
        compiler_params=pltpu.CompilerParams(
            dimension_semantics=("arbitrary",),   # serial time recurrence inside
            vmem_limit_bytes=VMEM_LIMIT),
    )(xp, whh)


def project_outputs(h1, h2, wp, bp, wt, bt, filt, *, block_rows=256):
    """h1, h2: (R, Hp); wp: (Hp, NPp); wt: (Hp, TIME_PAD); filt: (R, NPp)."""
    R, Hp = h1.shape
    NPp = wp.shape[1]
    tm = min(block_rows, _round_up(R, 8))
    rp = _round_up(R, tm)
    if rp != R:
        pad = ((0, rp - R), (0, 0))
        h1, h2, filt = jnp.pad(h1, pad), jnp.pad(h2, pad), jnp.pad(filt, pad)
    out1, out2 = pl.pallas_call(
        _proj_kernel,
        out_shape=(jax.ShapeDtypeStruct((rp, NPp), jnp.float32),
                   jax.ShapeDtypeStruct((rp, TIME_PAD), jnp.float32)),
        grid_spec=pltpu.PrefetchScalarGridSpec(
            num_scalar_prefetch=0,
            grid=(rp // tm,),
            in_specs=[
                pl.BlockSpec((tm, Hp), lambda i: (i, 0)),
                pl.BlockSpec((tm, Hp), lambda i: (i, 0)),
                pl.BlockSpec((Hp, NPp), lambda i: (0, 0)),
                pl.BlockSpec((1, NPp), lambda i: (0, 0)),
                pl.BlockSpec((Hp, TIME_PAD), lambda i: (0, 0)),
                pl.BlockSpec((1, TIME_PAD), lambda i: (0, 0)),
                pl.BlockSpec((tm, NPp), lambda i: (i, 0)),
            ],
            out_specs=[pl.BlockSpec((tm, NPp), lambda i: (i, 0)),
                       pl.BlockSpec((tm, TIME_PAD), lambda i: (i, 0))],
        ),
        compiler_params=pltpu.CompilerParams(
            dimension_semantics=("parallel",),    # row blocks -> megacore on v7x
            vmem_limit_bytes=VMEM_LIMIT),
    )(h1, h2, wp, bp, wt, bt, filt)
    return (out1[:R], out2[:R]) if rp != R else (out1, out2)


# ----------------------------------------------------------------------------
# Parameters (synthetic init with shapes from GameSimulator.__init__)
# ----------------------------------------------------------------------------
def init_params(key, n_teams, n_plays):
    keys = iter(jax.random.split(key, 32))

    def unif(shape, bound):
        return jax.random.uniform(next(keys), shape, jnp.float32, -bound, bound)

    H = HIDDEN
    lstm_bound = 1.0 / math.sqrt(H)

    def lstm_params(din):
        return (unif((4 * H, din), lstm_bound),   # w_ih
                unif((4 * H, H), lstm_bound),     # w_hh
                unif((4 * H,), lstm_bound),       # b_ih
                unif((4 * H,), lstm_bound))       # b_hh

    p = {}
    p['team_emb'] = jax.random.normal(next(keys), (n_teams, TEAM_FEATS), jnp.float32)
    play_emb = jax.random.normal(next(keys), (n_plays, PLAY_FEATS), jnp.float32)
    p['play_emb'] = play_emb.at[0].set(0.0)                    # padding_idx=0

    din1 = 2 * TEAM_FEATS + PLAY_FEATS + 1                     # 221
    p['lstm1_l0'] = lstm_params(din1)                          # recurrent1 layer 0
    p['lstm1_l1'] = lstm_params(H)                             # recurrent1 layer 1
    p['lstm2'] = lstm_params(H)                                # recurrent2

    lin_bound = 1.0 / math.sqrt(H)
    p['play_out_w'] = unif((n_plays, H), lin_bound)
    p['play_out_b'] = unif((n_plays,), lin_bound)
    p['time_out_w'] = unif((1, H), lin_bound)
    p['time_out_b'] = unif((1,), lin_bound)

    p['team_filter_w'] = jnp.zeros((n_plays, n_teams), jnp.float32)   # zeros_ init
    p['team_filter_b'] = unif((n_plays,), 1.0 / math.sqrt(n_teams))
    # recurrent_score / score_out / score_time_out / final_score_out / play_fc
    # are unused by forward(); omitted.
    return p


def _prep_lstm(w_ih, w_hh, b_ih, b_hh, din_pad):
    """PyTorch (4H, Din)/(4H, H) weights -> fused-gate, transposed, lane-padded."""
    H, Hp = HIDDEN, HIDDEN_PAD
    din = w_ih.shape[1]
    wih = w_ih.reshape(4, H, din).transpose(0, 2, 1)                  # (4, din, H)
    wih = jnp.pad(wih, ((0, 0), (0, din_pad - din), (0, Hp - H)))
    wih = wih.transpose(1, 0, 2).reshape(din_pad, 4 * Hp)             # (din_pad, 4Hp)
    whh = w_hh.reshape(4, H, H).transpose(0, 2, 1)                    # (4, H, H)
    whh = jnp.pad(whh, ((0, 0), (0, Hp - H), (0, Hp - H)))
    whh = whh.transpose(1, 0, 2).reshape(Hp, 4 * Hp)                  # (Hp, 4Hp)
    b = jnp.pad((b_ih + b_hh).reshape(4, H), ((0, 0), (0, Hp - H))).reshape(1, 4 * Hp)
    return wih, whh, b


def prepare_params(raw, n_teams, n_plays):
    """One-time weight fuse / transpose / pad (not repeated per forward call)."""
    H, Hp = HIDDEN, HIDDEN_PAD
    NPp = _round_up(n_plays, 128)
    din1 = 2 * TEAM_FEATS + PLAY_FEATS + 1

    p = {'team_emb': raw['team_emb'], 'play_emb': raw['play_emb']}
    p['wih1'], p['whh1'], p['b1'] = _prep_lstm(*raw['lstm1_l0'], din_pad=din1)
    p['wih2'], p['whh2'], p['b2'] = _prep_lstm(*raw['lstm1_l1'], din_pad=Hp)
    p['wih3'], p['whh3'], p['b3'] = _prep_lstm(*raw['lstm2'], din_pad=Hp)

    p['play_w'] = jnp.pad(raw['play_out_w'].T, ((0, Hp - H), (0, NPp - n_plays)))
    p['play_b'] = jnp.pad(raw['play_out_b'], (0, NPp - n_plays)).reshape(1, NPp)
    p['time_w'] = jnp.pad(raw['time_out_w'].T, ((0, Hp - H), (0, TIME_PAD - 1)))
    p['time_b'] = jnp.pad(raw['time_out_b'], (0, TIME_PAD - 1)).reshape(1, TIME_PAD)

    p['team_filter_w_t'] = raw['team_filter_w'].T        # (n_teams, n_plays)
    p['team_filter_b'] = raw['team_filter_b']            # (n_plays,)
    return p


def _embed_max_norm(table, idx, max_norm=1.0):
    """Embedding lookup with PyTorch-style max_norm renormalization (eps=1e-7)."""
    # TODO(synk): PyTorch also mutates the embedding table in place on renorm; only
    # the forward-value effect is reproduced here.
    vecs = table[idx]
    norm = jnp.linalg.norm(vecs, axis=-1, keepdims=True)
    scale = jnp.where(norm > max_norm, max_norm / (norm + 1e-7), 1.0)
    return vecs * scale


# ----------------------------------------------------------------------------
# Forward
# ----------------------------------------------------------------------------
def forward(params, teams, plays, times):
    """teams: (B, 2) int32; plays: (S, B) int32; times: (S, B, 1) float32."""
    S, B = plays.shape
    Hp = params['whh1'].shape[0]
    Gp = 4 * Hp
    n_teams, n_plays = params['team_filter_w_t'].shape
    NPp = params['play_w'].shape[1]

    play_emb = _embed_max_norm(params['play_emb'], plays)                   # (S,B,200)
    flat_teams = _embed_max_norm(params['team_emb'], teams).reshape(B, -1)  # (B,20)
    teams_emb = jnp.broadcast_to(flat_teams[None], (S, B, flat_teams.shape[1]))
    x = jnp.concatenate([teams_emb, play_emb, times.astype(jnp.float32)], axis=2)
    din = x.shape[2]

    # recurrent1 layer 0: hoisted input projection (big matmul) + in-kernel time scan
    xp1 = matmul_bias(x.reshape(S * B, din), params['wih1'], params['b1'])
    y1 = lstm_scan(xp1.reshape(S, B, Gp), params['whh1'])
    # recurrent1 layer 1
    xp2 = matmul_bias(y1.reshape(S * B, Hp), params['wih2'], params['b2'])
    y2 = lstm_scan(xp2.reshape(S, B, Gp), params['whh2'])          # recurrent1 output
    # recurrent2
    xp3 = matmul_bias(y2.reshape(S * B, Hp), params['wih3'], params['b3'])
    y3 = lstm_scan(xp3.reshape(S, B, Gp), params['whh3'])          # recurrent2 output

    # team-filter input: one-hot rows with 1.0 at home/away indices (assignment, not add)
    rows = jnp.arange(B)
    tf_in = jnp.zeros((B, n_teams), jnp.float32)
    tf_in = tf_in.at[rows, teams[:, 0]].set(1.0)
    tf_in = tf_in.at[rows, teams[:, 1]].set(1.0)
    filt = tf_in @ params['team_filter_w_t'] + params['team_filter_b']   # (B, n_plays)
    filt = jnp.pad(filt, ((0, 0), (0, NPp - n_plays)))
    filtf = jnp.broadcast_to(filt[None], (S, B, NPp)).reshape(S * B, NPp)

    out1f, out2f = project_outputs(y2.reshape(S * B, Hp), y3.reshape(S * B, Hp),
                                   params['play_w'], params['play_b'],
                                   params['time_w'], params['time_b'], filtf)
    out1 = out1f[:, :n_plays].reshape(S, B, n_plays)
    out2 = out2f[:, :1].reshape(S, B, 1)
    return out1, out2


if __name__ == "__main__":
    n_teams, n_plays = 16, 32
    batch, seq = 2, 8

    key = jax.random.PRNGKey(0)
    pkey, dkey = jax.random.split(key)
    raw = init_params(pkey, n_teams, n_plays)
    params = prepare_params(raw, n_teams, n_plays)

    k1, k2, k3 = jax.random.split(dkey, 3)
    teams = jax.random.randint(k1, (batch, 2), 0, n_teams, dtype=jnp.int32)
    plays = jax.random.randint(k2, (seq, batch), 0, n_plays, dtype=jnp.int32)
    times = jax.random.uniform(k3, (seq, batch, 1), jnp.float32)

    fwd = jax.jit(forward)
    out1, out2 = fwd(params, teams, plays, times)
    jax.block_until_ready((out1, out2))

    assert out1.shape == (seq, batch, n_plays) and out1.dtype == jnp.float32
    assert out2.shape == (seq, batch, 1) and out2.dtype == jnp.float32
    print("KERNEL_OK")
</pallas_src>

<mosaic_0001>
module attributes {stable_mosaic.version = 11 : i64} {
  func.func @_matmul_bias_kernel(%arg0: i32, %arg1: memref<16x221xf32, #tpu.memory_space<vmem>>, %arg2: memref<221x2048xf32, #tpu.memory_space<vmem>>, %arg3: memref<1x2048xf32, #tpu.memory_space<vmem>>, %arg4: memref<16x2048xf32, #tpu.memory_space<vmem>>) attributes {dimension_semantics = [#tpu.dimension_semantics<parallel>], iteration_bounds = array<i64: 1>, scalar_prefetch = 0 : i64, scratch_operands = 0 : i64, tpu.core_type = #tpu.core_type<tc>, window_params = [{transform_indices = @transform_0, window_bounds = array<i64: 16, 221>}, {pipeline_mode = #tpu.pipeline_mode<synchronous>, transform_indices = @transform_1, window_bounds = array<i64: 221, 2048>}, {pipeline_mode = #tpu.pipeline_mode<synchronous>, transform_indices = @transform_2, window_bounds = array<i64: 1, 2048>}, {transform_indices = @transform_3, window_bounds = array<i64: 16, 2048>}]} {
    %c0 = arith.constant 0 : index
    %c0_0 = arith.constant 0 : index
    %0 = vector.load %arg1[%c0, %c0_0] : memref<16x221xf32, #tpu.memory_space<vmem>>, vector<16x221xf32>
    %c0_1 = arith.constant 0 : index
    %c0_2 = arith.constant 0 : index
    %1 = vector.load %arg2[%c0_1, %c0_2] : memref<221x2048xf32, #tpu.memory_space<vmem>>, vector<221x2048xf32>
    %cst = arith.constant dense<0.000000e+00> : vector<16x2048xf32>
    %2 = tpu.matmul %0, %1, %cst {dimension_numbers = #tpu.dot_dimension_numbers<[1], [0], [0], [1], [0, 0, 1, 1], [], []>} : vector<16x221xf32>, vector<221x2048xf32>, vector<16x2048xf32> -> vector<16x2048xf32>
    %c0_3 = arith.constant 0 : index
    %c0_4 = arith.constant 0 : index
    %3 = vector.load %arg3[%c0_3, %c0_4] : memref<1x2048xf32, #tpu.memory_space<vmem>>, vector<1x2048xf32>
    %4 = vector.broadcast %3 : vector<1x2048xf32> to vector<16x2048xf32>
    %5 = arith.addf %2, %4 : vector<16x2048xf32>
    %c0_5 = arith.constant 0 : index
    %c0_6 = arith.constant 0 : index
    %6 = vector.load %arg4[%c0_5, %c0_6] : memref<16x2048xf32, #tpu.memory_space<vmem>>, vector<16x2048xf32>
    tpu.vector_store %arg4[%c0_5, %c0_6], %5 {strides = array<i32>} : memref<16x2048xf32, #tpu.memory_space<vmem>>, vector<16x2048xf32>,
    return
  }
  func.func @transform_0(%arg0: i32) -> (i32, i32) {
    %c0_i32 = arith.constant 0 : i32
    %c0_i32_0 = arith.constant 0 : i32
    return %arg0, %c0_i32 : i32, i32
  }
  func.func @transform_1(%arg0: i32) -> (i32, i32) {
    %c0_i32 = arith.constant 0 : i32
    %c0_i32_0 = arith.constant 0 : i32
    %c0_i32_1 = arith.constant 0 : i32
    return %c0_i32, %c0_i32_0 : i32, i32
  }
  func.func @transform_2(%arg0: i32) -> (i32, i32) {
    %c0_i32 = arith.constant 0 : i32
    %c0_i32_0 = arith.constant 0 : i32
    %c0_i32_1 = arith.constant 0 : i32
    return %c0_i32, %c0_i32_0 : i32, i32
  }
  func.func @transform_3(%arg0: i32) -> (i32, i32) {
    %c0_i32 = arith.constant 0 : i32
    %c0_i32_0 = arith.constant 0 : i32
    return %arg0, %c0_i32 : i32, i32
  }
}

module attributes {stable_mosaic.version = 11 : i64} {
  func.func @_lstm_scan_kernel(%arg0: i32, %arg1: memref<8x2x2048xf32, #tpu.memory_space<vmem>>, %arg2: memref<512x2048xf32, #tpu.memory_space<vmem>>, %arg3: memref<8x2x512xf32, #tpu.memory_space<vmem>>) attributes {dimension_semantics = [#tpu.dimension_semantics<arbitrary>], iteration_bounds = array<i64: 1>, scalar_prefetch = 0 : i64, scratch_operands = 0 : i64, tpu.core_type = #tpu.core_type<tc>, window_params = [{pipeline_mode = #tpu.pipeline_mode<synchronous>, transform_indices = @transform_0, window_bounds = array<i64: 8, 2, 2048>}, {pipeline_mode = #tpu.pipeline_mode<synchronous>, transform_indices = @transform_1, window_bounds = array<i64: 512, 2048>}, {pipeline_mode = #tpu.pipeline_mode<synchronous>, transform_indices = @transform_2, window_bounds = array<i64: 8, 2, 512>}]} {
    %cst = arith.constant 0.000000e+00 : f32
    %0 = vector.broadcast %cst : f32 to vector<2x512xf32>
    %c0_i32 = arith.constant 0 : i32
    %c8_i32 = arith.constant 8 : i32
    %1 = arith.addi %c0_i32, %c8_i32 : i32
    %c1_i32 = arith.constant 1 : i32
    %2:2 = scf.for %arg4 = %c0_i32 to %1 step %c1_i32 iter_args(%arg5 = %0, %arg6 = %0) -> (vector<2x512xf32>, vector<2x512xf32>)  : i32 {
      %3 = arith.index_cast %arg4 : i32 to index
      %c0 = arith.constant 0 : index
      %c0_1 = arith.constant 0 : index
      %4 = vector.load %arg1[%3, %c0, %c0_1] : memref<8x2x2048xf32, #tpu.memory_space<vmem>>, vector<1x2x2048xf32>
      %5 = vector.shape_cast %4 : vector<1x2x2048xf32> to vector<2x2048xf32>
      %c0_2 = arith.constant 0 : index
      %c0_3 = arith.constant 0 : index
      %6 = vector.load %arg2[%c0_2, %c0_3] : memref<512x2048xf32, #tpu.memory_space<vmem>>, vector<512x2048xf32>
      %cst_4 = arith.constant dense<0.000000e+00> : vector<2x2048xf32>
      %7 = tpu.matmul %arg5, %6, %cst_4 {dimension_numbers = #tpu.dot_dimension_numbers<[1], [0], [0], [1], [0, 0, 1, 1], [], []>} : vector<2x512xf32>, vector<512x2048xf32>, vector<2x2048xf32> -> vector<2x2048xf32>
      %8 = arith.addf %5, %7 : vector<2x2048xf32>
      %9 = arith.negf %8 : vector<2x2048xf32>
      %10 = math.exp %9 : vector<2x2048xf32>
      %cst_5 = arith.constant 1.000000e+00 : f32
      %11 = vector.broadcast %cst_5 : f32 to vector<2x2048xf32>
      %12 = arith.addf %11, %10 : vector<2x2048xf32>
      %13 = arith.divf %11, %12 : vector<2x2048xf32>
      %14 = vector.extract_strided_slice %13 {offsets = [0, 0], sizes = [2, 512], strides = [1, 1]} : vector<2x2048xf32> to vector<2x512xf32>
      %15 = vector.extract_strided_slice %13 {offsets = [0, 512], sizes = [2, 512], strides = [1, 1]} : vector<2x2048xf32> to vector<2x512xf32>
      %16 = vector.extract_strided_slice %13 {offsets = [0, 1536], sizes = [2, 512], strides = [1, 1]} : vector<2x2048xf32> to vector<2x512xf32>
      %17 = vector.extract_strided_slice %8 {offsets = [0, 1024], sizes = [2, 512], strides = [1, 1]} : vector<2x2048xf32> to vector<2x512xf32>
      %18 = math.tanh %17 : vector<2x512xf32>
      %19 = arith.mulf %15, %arg6 : vector<2x512xf32>
      %20 = arith.mulf %14, %18 : vector<2x512xf32>
      %21 = arith.addf %19, %20 : vector<2x512xf32>
      %22 = math.tanh %21 : vector<2x512xf32>
      %23 = arith.mulf %16, %22 : vector<2x512xf32>
      %24 = arith.index_cast %arg4 : i32 to index
      %c0_6 = arith.constant 0 : index
      %c0_7 = arith.constant 0 : index
      %25 = vector.load %arg3[%24, %c0_6, %c0_7] : memref<8x2x512xf32, #tpu.memory_space<vmem>>, vector<1x2x512xf32>
      %26 = vector.shape_cast %25 : vector<1x2x512xf32> to vector<2x512xf32>
      %27 = vector.shape_cast %23 : vector<2x512xf32> to vector<1x2x512xf32>
      tpu.vector_store %arg3[%24, %c0_6, %c0_7], %27 {strides = array<i32>} : memref<8x2x512xf32, #tpu.memory_space<vmem>>, vector<1x2x512xf32>,
      scf.yield %23, %21 : vector<2x512xf32>, vector<2x512xf32>
    }
    %c8_i32_0 = arith.constant 8 : i32
    return
  }
  func.func @transform_0(%arg0: i32) -> (i32, i32, i32) {
    %c0_i32 = arith.constant 0 : i32
    %c0_i32_0 = arith.constant 0 : i32
    %c0_i32_1 = arith.constant 0 : i32
    %c0_i32_2 = arith.constant 0 : i32
    return %c0_i32, %c0_i32_0, %c0_i32_1 : i32, i32, i32
  }
  func.func @transform_1(%arg0: i32) -> (i32, i32) {
    %c0_i32 = arith.constant 0 : i32
    %c0_i32_0 = arith.constant 0 : i32
    %c0_i32_1 = arith.constant 0 : i32
    return %c0_i32, %c0_i32_0 : i32, i32
  }
  func.func @transform_2(%arg0: i32) -> (i32, i32, i32) {
    %c0_i32 = arith.constant 0 : i32
    %c0_i32_0 = arith.constant 0 : i32
    %c0_i32_1 = arith.constant 0 : i32
    %c0_i32_2 = arith.constant 0 : i32
    return %c0_i32, %c0_i32_0, %c0_i32_1 : i32, i32, i32
  }
}

module attributes {stable_mosaic.version = 11 : i64} {
  func.func @_matmul_bias_kernel(%arg0: i32, %arg1: memref<16x512xf32, #tpu.memory_space<vmem>>, %arg2: memref<512x2048xf32, #tpu.memory_space<vmem>>, %arg3: memref<1x2048xf32, #tpu.memory_space<vmem>>, %arg4: memref<16x2048xf32, #tpu.memory_space<vmem>>) attributes {dimension_semantics = [#tpu.dimension_semantics<parallel>], iteration_bounds = array<i64: 1>, scalar_prefetch = 0 : i64, scratch_operands = 0 : i64, tpu.core_type = #tpu.core_type<tc>, window_params = [{transform_indices = @transform_0, window_bounds = array<i64: 16, 512>}, {pipeline_mode = #tpu.pipeline_mode<synchronous>, transform_indices = @transform_1, window_bounds = array<i64: 512, 2048>}, {pipeline_mode = #tpu.pipeline_mode<synchronous>, transform_indices = @transform_2, window_bounds = array<i64: 1, 2048>}, {transform_indices = @transform_3, window_bounds = array<i64: 16, 2048>}]} {
    %c0 = arith.constant 0 : index
    %c0_0 = arith.constant 0 : index
    %0 = vector.load %arg1[%c0, %c0_0] : memref<16x512xf32, #tpu.memory_space<vmem>>, vector<16x512xf32>
    %c0_1 = arith.constant 0 : index
    %c0_2 = arith.constant 0 : index
    %1 = vector.load %arg2[%c0_1, %c0_2] : memref<512x2048xf32, #tpu.memory_space<vmem>>, vector<512x2048xf32>
    %cst = arith.constant dense<0.000000e+00> : vector<16x2048xf32>
    %2 = tpu.matmul %0, %1, %cst {dimension_numbers = #tpu.dot_dimension_numbers<[1], [0], [0], [1], [0, 0, 1, 1], [], []>} : vector<16x512xf32>, vector<512x2048xf32>, vector<16x2048xf32> -> vector<16x2048xf32>
    %c0_3 = arith.constant 0 : index
    %c0_4 = arith.constant 0 : index
    %3 = vector.load %arg3[%c0_3, %c0_4] : memref<1x2048xf32, #tpu.memory_space<vmem>>, vector<1x2048xf32>
    %4 = vector.broadcast %3 : vector<1x2048xf32> to vector<16x2048xf32>
    %5 = arith.addf %2, %4 : vector<16x2048xf32>
    %c0_5 = arith.constant 0 : index
    %c0_6 = arith.constant 0 : index
    %6 = vector.load %arg4[%c0_5, %c0_6] : memref<16x2048xf32, #tpu.memory_space<vmem>>, vector<16x2048xf32>
    tpu.vector_store %arg4[%c0_5, %c0_6], %5 {strides = array<i32>} : memref<16x2048xf32, #tpu.memory_space<vmem>>, vector<16x2048xf32>,
    return
  }
  func.func @transform_0(%arg0: i32) -> (i32, i32) {
    %c0_i32 = arith.constant 0 : i32
    %c0_i32_0 = arith.constant 0 : i32
    return %arg0, %c0_i32 : i32, i32
  }
  func.func @transform_1(%arg0: i32) -> (i32, i32) {
    %c0_i32 = arith.constant 0 : i32
    %c0_i32_0 = arith.constant 0 : i32
    %c0_i32_1 = arith.constant 0 : i32
    return %c0_i32, %c0_i32_0 : i32, i32
  }
  func.func @transform_2(%arg0: i32) -> (i32, i32) {
    %c0_i32 = arith.constant 0 : i32
    %c0_i32_0 = arith.constant 0 : i32
    %c0_i32_1 = arith.constant 0 : i32
    return %c0_i32, %c0_i32_0 : i32, i32
  }
  func.func @transform_3(%arg0: i32) -> (i32, i32) {
    %c0_i32 = arith.constant 0 : i32
    %c0_i32_0 = arith.constant 0 : i32
    return %arg0, %c0_i32 : i32, i32
  }
}

module attributes {stable_mosaic.version = 11 : i64} {
  func.func @_lstm_scan_kernel(%arg0: i32, %arg1: memref<8x2x2048xf32, #tpu.memory_space<vmem>>, %arg2: memref<512x2048xf32, #tpu.memory_space<vmem>>, %arg3: memref<8x2x512xf32, #tpu.memory_space<vmem>>) attributes {dimension_semantics = [#tpu.dimension_semantics<arbitrary>], iteration_bounds = array<i64: 1>, scalar_prefetch = 0 : i64, scratch_operands = 0 : i64, tpu.core_type = #tpu.core_type<tc>, window_params = [{pipeline_mode = #tpu.pipeline_mode<synchronous>, transform_indices = @transform_0, window_bounds = array<i64: 8, 2, 2048>}, {pipeline_mode = #tpu.pipeline_mode<synchronous>, transform_indices = @transform_1, window_bounds = array<i64: 512, 2048>}, {pipeline_mode = #tpu.pipeline_mode<synchronous>, transform_indices = @transform_2, window_bounds = array<i64: 8, 2, 512>}]} {
    %cst = arith.constant 0.000000e+00 : f32
    %0 = vector.broadcast %cst : f32 to vector<2x512xf32>
    %c0_i32 = arith.constant 0 : i32
    %c8_i32 = arith.constant 8 : i32
    %1 = arith.addi %c0_i32, %c8_i32 : i32
    %c1_i32 = arith.constant 1 : i32
    %2:2 = scf.for %arg4 = %c0_i32 to %1 step %c1_i32 iter_args(%arg5 = %0, %arg6 = %0) -> (vector<2x512xf32>, vector<2x512xf32>)  : i32 {
      %3 = arith.index_cast %arg4 : i32 to index
      %c0 = arith.constant 0 : index
      %c0_1 = arith.constant 0 : index
      %4 = vector.load %arg1[%3, %c0, %c0_1] : memref<8x2x2048xf32, #tpu.memory_space<vmem>>, vector<1x2x2048xf32>
      %5 = vector.shape_cast %4 : vector<1x2x2048xf32> to vector<2x2048xf32>
      %c0_2 = arith.constant 0 : index
      %c0_3 = arith.constant 0 : index
      %6 = vector.load %arg2[%c0_2, %c0_3] : memref<512x2048xf32, #tpu.memory_space<vmem>>, vector<512x2048xf32>
      %cst_4 = arith.constant dense<0.000000e+00> : vector<2x2048xf32>
      %7 = tpu.matmul %arg5, %6, %cst_4 {dimension_numbers = #tpu.dot_dimension_numbers<[1], [0], [0], [1], [0, 0, 1, 1], [], []>} : vector<2x512xf32>, vector<512x2048xf32>, vector<2x2048xf32> -> vector<2x2048xf32>
      %8 = arith.addf %5, %7 : vector<2x2048xf32>
      %9 = arith.negf %8 : vector<2x2048xf32>
      %10 = math.exp %9 : vector<2x2048xf32>
      %cst_5 = arith.constant 1.000000e+00 : f32
      %11 = vector.broadcast %cst_5 : f32 to vector<2x2048xf32>
      %12 = arith.addf %11, %10 : vector<2x2048xf32>
      %13 = arith.divf %11, %12 : vector<2x2048xf32>
      %14 = vector.extract_strided_slice %13 {offsets = [0, 0], sizes = [2, 512], strides = [1, 1]} : vector<2x2048xf32> to vector<2x512xf32>
      %15 = vector.extract_strided_slice %13 {offsets = [0, 512], sizes = [2, 512], strides = [1, 1]} : vector<2x2048xf32> to vector<2x512xf32>
      %16 = vector.extract_strided_slice %13 {offsets = [0, 1536], sizes = [2, 512], strides = [1, 1]} : vector<2x2048xf32> to vector<2x512xf32>
      %17 = vector.extract_strided_slice %8 {offsets = [0, 1024], sizes = [2, 512], strides = [1, 1]} : vector<2x2048xf32> to vector<2x512xf32>
      %18 = math.tanh %17 : vector<2x512xf32>
      %19 = arith.mulf %15, %arg6 : vector<2x512xf32>
      %20 = arith.mulf %14, %18 : vector<2x512xf32>
      %21 = arith.addf %19, %20 : vector<2x512xf32>
      %22 = math.tanh %21 : vector<2x512xf32>
      %23 = arith.mulf %16, %22 : vector<2x512xf32>
      %24 = arith.index_cast %arg4 : i32 to index
      %c0_6 = arith.constant 0 : index
      %c0_7 = arith.constant 0 : index
      %25 = vector.load %arg3[%24, %c0_6, %c0_7] : memref<8x2x512xf32, #tpu.memory_space<vmem>>, vector<1x2x512xf32>
      %26 = vector.shape_cast %25 : vector<1x2x512xf32> to vector<2x512xf32>
      %27 = vector.shape_cast %23 : vector<2x512xf32> to vector<1x2x512xf32>
      tpu.vector_store %arg3[%24, %c0_6, %c0_7], %27 {strides = array<i32>} : memref<8x2x512xf32, #tpu.memory_space<vmem>>, vector<1x2x512xf32>,
      scf.yield %23, %21 : vector<2x512xf32>, vector<2x512xf32>
    }
    %c8_i32_0 = arith.constant 8 : i32
    return
  }
  func.func @transform_0(%arg0: i32) -> (i32, i32, i32) {
    %c0_i32 = arith.constant 0 : i32
    %c0_i32_0 = arith.constant 0 : i32
    %c0_i32_1 = arith.constant 0 : i32
    %c0_i32_2 = arith.constant 0 : i32
    return %c0_i32, %c0_i32_0, %c0_i32_1 : i32, i32, i32
  }
  func.func @transform_1(%arg0: i32) -> (i32, i32) {
    %c0_i32 = arith.constant 0 : i32
    %c0_i32_0 = arith.constant 0 : i32
    %c0_i32_1 = arith.constant 0 : i32
    return %c0_i32, %c0_i32_0 : i32, i32
  }
  func.func @transform_2(%arg0: i32) -> (i32, i32, i32) {
    %c0_i32 = arith.constant 0 : i32
    %c0_i32_0 = arith.constant 0 : i32
    %c0_i32_1 = arith.constant 0 : i32
    %c0_i32_2 = arith.constant 0 : i32
    return %c0_i32, %c0_i32_0, %c0_i32_1 : i32, i32, i32
  }
}

module attributes {stable_mosaic.version = 11 : i64} {
  func.func @_proj_kernel(%arg0: i32, %arg1: memref<16x512xf32, #tpu.memory_space<vmem>>, %arg2: memref<16x512xf32, #tpu.memory_space<vmem>>, %arg3: memref<512x128xf32, #tpu.memory_space<vmem>>, %arg4: memref<1x128xf32, #tpu.memory_space<vmem>>, %arg5: memref<512x128xf32, #tpu.memory_space<vmem>>, %arg6: memref<1x128xf32, #tpu.memory_space<vmem>>, %arg7: memref<16x128xf32, #tpu.memory_space<vmem>>, %arg8: memref<16x128xf32, #tpu.memory_space<vmem>>, %arg9: memref<16x128xf32, #tpu.memory_space<vmem>>) attributes {dimension_semantics = [#tpu.dimension_semantics<parallel>], iteration_bounds = array<i64: 1>, scalar_prefetch = 0 : i64, scratch_operands = 0 : i64, tpu.core_type = #tpu.core_type<tc>, window_params = [{transform_indices = @transform_0, window_bounds = array<i64: 16, 512>}, {transform_indices = @transform_1, window_bounds = array<i64: 16, 512>}, {pipeline_mode = #tpu.pipeline_mode<synchronous>, transform_indices = @transform_2, window_bounds = array<i64: 512, 128>}, {pipeline_mode = #tpu.pipeline_mode<synchronous>, transform_indices = @transform_3, window_bounds = array<i64: 1, 128>}, {pipeline_mode = #tpu.pipeline_mode<synchronous>, transform_indices = @transform_4, window_bounds = array<i64: 512, 128>}, {pipeline_mode = #tpu.pipeline_mode<synchronous>, transform_indices = @transform_5, window_bounds = array<i64: 1, 128>}, {transform_indices = @transform_6, window_bounds = array<i64: 16, 128>}, {transform_indices = @transform_7, window_bounds = array<i64: 16, 128>}, {transform_indices = @transform_8, window_bounds = array<i64: 16, 128>}]} {
    %c0 = arith.constant 0 : index
    %c0_0 = arith.constant 0 : index
    %0 = vector.load %arg1[%c0, %c0_0] : memref<16x512xf32, #tpu.memory_space<vmem>>, vector<16x512xf32>
    %c0_1 = arith.constant 0 : index
    %c0_2 = arith.constant 0 : index
    %1 = vector.load %arg3[%c0_1, %c0_2] : memref<512x128xf32, #tpu.memory_space<vmem>>, vector<512x128xf32>
    %cst = arith.constant dense<0.000000e+00> : vector<16x128xf32>
    %2 = tpu.matmul %0, %1, %cst {dimension_numbers = #tpu.dot_dimension_numbers<[1], [0], [0], [1], [0, 0, 1, 1], [], []>} : vector<16x512xf32>, vector<512x128xf32>, vector<16x128xf32> -> vector<16x128xf32>
    %c0_3 = arith.constant 0 : index
    %c0_4 = arith.constant 0 : index
    %3 = vector.load %arg4[%c0_3, %c0_4] : memref<1x128xf32, #tpu.memory_space<vmem>>, vector<1x128xf32>
    %4 = vector.broadcast %3 : vector<1x128xf32> to vector<16x128xf32>
    %5 = arith.addf %2, %4 : vector<16x128xf32>
    %c0_5 = arith.constant 0 : index
    %c0_6 = arith.constant 0 : index
    %6 = vector.load %arg7[%c0_5, %c0_6] : memref<16x128xf32, #tpu.memory_space<vmem>>, vector<16x128xf32>
    %7 = arith.mulf %5, %6 : vector<16x128xf32>
    %c0_7 = arith.constant 0 : index
    %c0_8 = arith.constant 0 : index
    %8 = vector.load %arg8[%c0_7, %c0_8] : memref<16x128xf32, #tpu.memory_space<vmem>>, vector<16x128xf32>
    tpu.vector_store %arg8[%c0_7, %c0_8], %7 {strides = array<i32>} : memref<16x128xf32, #tpu.memory_space<vmem>>, vector<16x128xf32>,
    %c0_9 = arith.constant 0 : index
    %c0_10 = arith.constant 0 : index
    %9 = vector.load %arg2[%c0_9, %c0_10] : memref<16x512xf32, #tpu.memory_space<vmem>>, vector<16x512xf32>
    %c0_11 = arith.constant 0 : index
    %c0_12 = arith.constant 0 : index
    %10 = vector.load %arg5[%c0_11, %c0_12] : memref<512x128xf32, #tpu.memory_space<vmem>>, vector<512x128xf32>
    %cst_13 = arith.constant dense<0.000000e+00> : vector<16x128xf32>
    %11 = tpu.matmul %9, %10, %cst_13 {dimension_numbers = #tpu.dot_dimension_numbers<[1], [0], [0], [1], [0, 0, 1, 1], [], []>} : vector<16x512xf32>, vector<512x128xf32>, vector<16x128xf32> -> vector<16x128xf32>
    %c0_14 = arith.constant 0 : index
    %c0_15 = arith.constant 0 : index
    %12 = vector.load %arg6[%c0_14, %c0_15] : memref<1x128xf32, #tpu.memory_space<vmem>>, vector<1x128xf32>
    %13 = vector.broadcast %12 : vector<1x128xf32> to vector<16x128xf32>
    %14 = arith.addf %11, %13 : vector<16x128xf32>
    %c0_16 = arith.constant 0 : index
    %c0_17 = arith.constant 0 : index
    %15 = vector.load %arg9[%c0_16, %c0_17] : memref<16x128xf32, #tpu.memory_space<vmem>>, vector<16x128xf32>
    tpu.vector_store %arg9[%c0_16, %c0_17], %14 {strides = array<i32>} : memref<16x128xf32, #tpu.memory_space<vmem>>, vector<16x128xf32>,
    return
  }
  func.func @transform_0(%arg0: i32) -> (i32, i32) {
    %c0_i32 = arith.constant 0 : i32
    %c0_i32_0 = arith.constant 0 : i32
    return %arg0, %c0_i32 : i32, i32
  }
  func.func @transform_1(%arg0: i32) -> (i32, i32) {
    %c0_i32 = arith.constant 0 : i32
    %c0_i32_0 = arith.constant 0 : i32
    return %arg0, %c0_i32 : i32, i32
  }
  func.func @transform_2(%arg0: i32) -> (i32, i32) {
    %c0_i32 = arith.constant 0 : i32
    %c0_i32_0 = arith.constant 0 : i32
    %c0_i32_1 = arith.constant 0 : i32
    return %c0_i32, %c0_i32_0 : i32, i32
  }
  func.func @transform_3(%arg0: i32) -> (i32, i32) {
    %c0_i32 = arith.constant 0 : i32
    %c0_i32_0 = arith.constant 0 : i32
    %c0_i32_1 = arith.constant 0 : i32
    return %c0_i32, %c0_i32_0 : i32, i32
  }
  func.func @transform_4(%arg0: i32) -> (i32, i32) {
    %c0_i32 = arith.constant 0 : i32
    %c0_i32_0 = arith.constant 0 : i32
    %c0_i32_1 = arith.constant 0 : i32
    return %c0_i32, %c0_i32_0 : i32, i32
  }
  func.func @transform_5(%arg0: i32) -> (i32, i32) {
    %c0_i32 = arith.constant 0 : i32
    %c0_i32_0 = arith.constant 0 : i32
    %c0_i32_1 = arith.constant 0 : i32
    return %c0_i32, %c0_i32_0 : i32, i32
  }
  func.func @transform_6(%arg0: i32) -> (i32, i32) {
    %c0_i32 = arith.constant 0 : i32
    %c0_i32_0 = arith.constant 0 : i32
    return %arg0, %c0_i32 : i32, i32
  }
  func.func @transform_7(%arg0: i32) -> (i32, i32) {
    %c0_i32 = arith.constant 0 : i32
    %c0_i32_0 = arith.constant 0 : i32
    return %arg0, %c0_i32 : i32, i32
  }
  func.func @transform_8(%arg0: i32) -> (i32, i32) {
    %c0_i32 = arith.constant 0 : i32
    %c0_i32_0 = arith.constant 0 : i32
    return %arg0, %c0_i32 : i32, i32
  }
}

</mosaic_0001>

<llo_original>
// kernel: forward.7
$region0: #{forward.7}
  #allocation0 [shape = 'u32[]', space=smem, size = 0x4, offset = 0x4, fixed_abs, tag = 'smem constant byte address 0x4 - core index']
  #allocation1 [shape = 'u32[144,128]{1,0:T(1,128)}', space=vmem, size = 0x12000, scoped, tag = 'internal scratch']
  %s0 = inlined_call_operand.vmem [shape: f32[16,221], index: 0, kind: input, shape index: {}]
  %s1 = inlined_call_operand.hbm [shape: f32[221,2048], index: 1, kind: input, shape index: {}]
  %s2 = inlined_call_operand.hbm [shape: f32[1,2048], index: 2, kind: input, shape index: {}]
  %s3 = inlined_call_operand.vmem [shape: f32[16,2048], index: 3, kind: output, shape index: {}]
  %s4 = sld [smem:[#allocation0]]
  $region30: #{forward.7} parent=0
    _
  %s6 = ssub.s32 1, %s4
  %s7 = scalar_select 0, %s6, %s4
  $region1: #{forward.7} parent=0
    #allocation2 [shape = 'u8[1835008]{0}', space=vmem, size = 0x1c0000, scoped, tag = 'input window, operand 1, single buffered']
    #allocation3 [shape = 's32[1]{0}', space=sflag, size = 0x4, scoped, tag = 'scoped memory for forward.7']
    #allocation4 [shape = 'u8[8192]{0}', space=vmem, size = 0x2000, scoped, tag = 'input window, operand 2, single buffered']
    #allocation5 [shape = 's32[1]{0}', space=sflag, size = 0x4, scoped, tag = 'scoped memory for forward.7']
    %8 = vsyncpa [#allocation3], 0
    %9 = vsyncpa [#allocation5], 0
    // Predicated region
    $region2: #{forward.7} parent=1 // pred_check
      _
    $region3: #{forward.7} parent=1 // pred_check_branch
      %11 = sbr.rel (0) target = $region5
    $region4: #{forward.7} parent=1 // pred_region
      _
    $region5: #{forward.7} parent=1 // pred_fallthru
      _
    // Predicated region
    $region6: #{forward.7} parent=1 // pred_check
      _
    $region7: #{forward.7} parent=1 // pred_check_branch
      %13 = sbr.rel (0) target = $region9
    $region8: #{forward.7} parent=1 // pred_region
      %s15 = ssub.s32 57344, 57344
      %16 = vsyncadd [#allocation3], %s15
      %s17 = sshll.u32 [#allocation2], 4
      %s18 = int_to_ptr.vmem [resolvable:$true] %s17
      %23 = dma.hbm_to_vmem [thread:$0]  %s1, 57344, %s18, [#allocation3], 2048, 2048, 128
    $region9: #{forward.7} parent=1 // pred_fallthru
      _
    // Predicated region
    $region10: #{forward.7} parent=1 // pred_check
      _
    $region11: #{forward.7} parent=1 // pred_check_branch
      %25 = sbr.rel (0) target = $region13
    $region12: #{forward.7} parent=1 // pred_region
      %s27 = ssub.s32 256, 256
      %28 = vsyncadd [#allocation5], %s27
      %s30 = sshll.u32 [#allocation4], 4
      %s31 = int_to_ptr.vmem [resolvable:$true] %s30
      %33 = dma.hbm_to_vmem [thread:$0]  %s2, 256, %s31, [#allocation5]
    $region13: #{forward.7} parent=1 // pred_fallthru
      _
    // Predicated region
    $region14: #{forward.7} parent=1 // pred_check
      _
    $region15: #{forward.7} parent=1 // pred_check_branch
      %35 = sbr.rel (0) target = $region17
    $region16: #{forward.7} parent=1 // pred_region
      %36 = dma.done [#allocation3], 57344
    $region17: #{forward.7} parent=1 // pred_fallthru
      _
    // Predicated region
    $region18: #{forward.7} parent=1 // pred_check
      _
    $region19: #{forward.7} parent=1 // pred_check_branch
      %38 = sbr.rel (0) target = $region21
    $region20: #{forward.7} parent=1 // pred_region
      %39 = dma.done [#allocation5], 256
    $region21: #{forward.7} parent=1 // pred_fallthru
      _
    %v40 = vld [vmem:[%s0] sm:$0xff]
    %v41 = vld [vmem:[%s0 + $0x8] sm:$0xff]
    %v42 = vld [vmem:[%s0 + $0x10] sm:$0xff]
    %v43 = vld [vmem:[%s0 + $0x18] sm:$0xff]
    %v44 = vld [vmem:[#allocation2] sm:$0xff]
    %v45 = vld [vmem:[#allocation2 + $0x8] sm:$0xff]
    %v46 = vld [vmem:[#allocation2 + $0x10] sm:$0xff]
    %v47 = vld [vmem:[#allocation2 + $0x18] sm:$0xff]
    %v48 = vld [vmem:[#allocation2 + $0x20] sm:$0xff]
    %v49 = vld [vmem:[#allocation2 + $0x28] sm:$0xff]
    %v50 = vld [vmem:[#allocation2 + $0x30] sm:$0xff]
    %v51 = vld [vmem:[#allocation2 + $0x38] sm:$0xff]
    %v52 = vld [vmem:[#allocation2 + $0x40] sm:$0xff]
    %v53 = vld [vmem:[#allocation2 + $0x48] sm:$0xff]
    %v54 = vld [vmem:[#allocation2 + $0x50] sm:$0xff]
    %v55 = vld [vmem:[#allocation2 + $0x58] sm:$0xff]
    %v56 = vld [vmem:[#allocation2 + $0x60] sm:$0xff]
    %v57 = vld [vmem:[#allocation2 + $0x68] sm:$0xff]
    %v58 = vld [vmem:[#allocation2 + $0x70] sm:$0xff]
    %v59 = vld [vmem:[#allocation2 + $0x78] sm:$0xff]
    %v60 = vld [vmem:[#allocation2 + $0x80] sm:$0xff]
    %v61 = vld [vmem:[#allocation2 + $0x88] sm:$0xff]
    %v62 = vld [vmem:[#allocation2 + $0x90] sm:$0xff]
    %v63 = vld [vmem:[#allocation2 + $0x98] sm:$0xff]
    %v64 = vld [vmem:[#allocation2 + $0xa0] sm:$0xff]
    %v65 = vld [vmem:[#allocation2 + $0xa8] sm:$0xff]
    %v66 = vld [vmem:[#allocation2 + $0xb0] sm:$0xff]
    %v67 = vld [vmem:[#allocation2 + $0xb8] sm:$0xff]
    %v68 = vld [vmem:[#allocation2 + $0xc0] sm:$0xff]
    %v69 = vld [vmem:[#allocation2 + $0xc8] sm:$0xff]
    %v70 = vld [vmem:[#allocation2 + $0xd0] sm:$0xff]
    %v71 = vld [vmem:[#allocation2 + $0xd8] sm:$0xff]
    %v72 = vld [vmem:[#allocation2 + $0xe0] sm:$0xff]
    %v73 = vld [vmem:[#allocation2 + $0xe8] sm:$0xff]
    %v74 = vld [vmem:[#allocation2 + $0xf0] sm:$0xff]
    %v75 = vld [vmem:[#allocation2 + $0xf8] sm:$0xff]
    %v76 = vld [vmem:[#allocation2 + $0x100] sm:$0xff]
    %v77 = vld [vmem:[#allocation2 + $0x108] sm:$0xff]
    %v78 = vld [vmem:[#allocation2 + $0x110] sm:$0xff]
    %v79 = vld [vmem:[#allocation2 + $0x118] sm:$0xff]
    %v80 = vld [vmem:[#allocation2 + $0x120] sm:$0xff]
    %v81 = vld [vmem:[#allocation2 + $0x128] sm:$0xff]
    %v82 = vld [vmem:[#allocation2 + $0x130] sm:$0xff]
    %v83 = vld [vmem:[#allocation2 + $0x138] sm:$0xff]
    %v84 = vld [vmem:[#allocation2 + $0x140] sm:$0xff]
    %v85 = vld [vmem:[#allocation2 + $0x148] sm:$0xff]
    %v86 = vld [vmem:[#allocation2 + $0x150] sm:$0xff]
    %v87 = vld [vmem:[#allocation2 + $0x158] sm:$0xff]
    %v88 = vld [vmem:[#allocation2 + $0x160] sm:$0xff]
    %v89 = vld [vmem:[#allocation2 + $0x168] sm:$0xff]
    %v90 = vld [vmem:[#allocation2 + $0x170] sm:$0xff]
    %v91 = vld [vmem:[#allocation2 + $0x178] sm:$0xff]
    %v92 = vld [vmem:[#allocation2 + $0x180] sm:$0xff]
    %v93 = vld [vmem:[#allocation2 + $0x188] sm:$0xff]
    %v94 = vld [vmem:[#allocation2 + $0x190] sm:$0xff]
    %v95 = vld [vmem:[#allocation2 + $0x198] sm:$0xff]
    %v96 = vld [vmem:[#allocation2 + $0x1a0] sm:$0xff]
    %v97 = vld [vmem:[#allocation2 + $0x1a8] sm:$0xff]
    %v98 = vld [vmem:[#allocation2 + $0x1b0] sm:$0xff]
    %v99 = vld [vmem:[#allocation2 + $0x1b8] sm:$0xff]
    %v100 = vld [vmem:[#allocation2 + $0x1c0] sm:$0xff]
    %v101 = vld [vmem:[#allocation2 + $0x1c8] sm:$0xff]
    %v102 = vld [vmem:[#allocation2 + $0x1d0] sm:$0xff]
    %v103 = vld [vmem:[#allocation2 + $0x1d8] sm:$0xff]
    %v104 = vld [vmem:[#allocation2 + $0x1e0] sm:$0xff]
    %v105 = vld [vmem:[#allocation2 + $0x1e8] sm:$0xff]
    %v106 = vld [vmem:[#allocation2 + $0x1f0] sm:$0xff]
    %v107 = vld [vmem:[#allocation2 + $0x1f8] sm:$0xff]
    %v108 = vld [vmem:[#allocation2 + $0x200] sm:$0xff]
    %v109 = vld [vmem:[#allocation2 + $0x208] sm:$0xff]
    %v110 = vld [vmem:[#allocation2 + $0x210] sm:$0xff]
    %v111 = vld [vmem:[#allocation2 + $0x218] sm:$0xff]
    %v112 = vld [vmem:[#allocation2 + $0x220] sm:$0xff]
    %v113 = vld [vmem:[#allocation2 + $0x228] sm:$0xff]
    %v114 = vld [vmem:[#allocation2 + $0x230] sm:$0xff]
    %v115 = vld [vmem:[#allocation2 + $0x238] sm:$0xff]
    %v116 = vld [vmem:[#allocation2 + $0x240] sm:$0xff]
    %v117 = vld [vmem:[#allocation2 + $0x248] sm:$0xff]
    %v118 = vld [vmem:[#allocation2 + $0x250] sm:$0xff]
    %v119 = vld [vmem:[#allocation2 + $0x258] sm:$0xff]
    %v120 = vld [vmem:[#allocation2 + $0x260] sm:$0xff]
    %v121 = vld [vmem:[#allocation2 + $0x268] sm:$0xff]
    %v122 = vld [vmem:[#allocation2 + $0x270] sm:$0xff]
    %v123 = vld [vmem:[#allocation2 + $0x278] sm:$0xff]
    %v124 = vld [vmem:[#allocation2 + $0x280] sm:$0xff]
    %v125 = vld [vmem:[#allocation2 + $0x288] sm:$0xff]
    %v126 = vld [vmem:[#allocation2 + $0x290] sm:$0xff]
    %v127 = vld [vmem:[#allocation2 + $0x298] sm:$0xff]
    %v128 = vld [vmem:[#allocation2 + $0x2a0] sm:$0xff]
    %v129 = vld [vmem:[#allocation2 + $0x2a8] sm:$0xff]
    %v130 = vld [vmem:[#allocation2 + $0x2b0] sm:$0xff]
    %v131 = vld [vmem:[#allocation2 + $0x2b8] sm:$0xff]
    %v132 = vld [vmem:[#allocation2 + $0x2c0] sm:$0xff]
    %v133 = vld [vmem:[#allocation2 + $0x2c8] sm:$0xff]
    %v134 = vld [vmem:[#allocation2 + $0x2d0] sm:$0xff]
    %v135 = vld [vmem:[#allocation2 + $0x2d8] sm:$0xff]
    %v136 = vld [vmem:[#allocation2 + $0x2e0] sm:$0xff]
    %v137 = vld [vmem:[#allocation2 + $0x2e8] sm:$0xff]
    %v138 = vld [vmem:[#allocation2 + $0x2f0] sm:$0xff]
    %v139 = vld [vmem:[#allocation2 + $0x2f8] sm:$0xff]
    %v140 = vld [vmem:[#allocation2 + $0x300] sm:$0xff]
    %v141 = vld [vmem:[#allocation2 + $0x308] sm:$0xff]
    %v142 = vld [vmem:[#allocation2 + $0x310] sm:$0xff]
    %v143 = vld [vmem:[#allocation2 + $0x318] sm:$0xff]
    %v144 = vld [vmem:[#allocation2 + $0x320] sm:$0xff]
    %v145 = vld [vmem:[#allocation2 + $0x328] sm:$0xff]
    %v146 = vld [vmem:[#allocation2 + $0x330] sm:$0xff]
    %v147 = vld [vmem:[#allocation2 + $0x338] sm:$0xff]
    %v148 = vld [vmem:[#allocation2 + $0x340] sm:$0xff]
    %v149 = vld [vmem:[#allocation2 + $0x348] sm:$0xff]
    %v150 = vld [vmem:[#allocation2 + $0x350] sm:$0xff]
    %v151 = vld [vmem:[#allocation2 + $0x358] sm:$0xff]
    %v152 = vld [vmem:[#allocation2 + $0x360] sm:$0xff]
    %v153 = vld [vmem:[#allocation2 + $0x368] sm:$0xff]
    %v154 = vld [vmem:[#allocation2 + $0x370] sm:$0xff]
    %v155 = vld [vmem:[#allocation2 + $0x378] sm:$0xff]
    %v156 = vld [vmem:[#allocation2 + $0x380] sm:$0xff]
    %v157 = vld [vmem:[#allocation2 + $0x388] sm:$0xff]
    %v158 = vld [vmem:[#allocation2 + $0x390] sm:$0xff]
    %v159 = vld [vmem:[#allocation2 + $0x398] sm:$0xff]
    %v160 = vld [vmem:[#allocation2 + $0x3a0] sm:$0xff]
    %v161 = vld [vmem:[#allocation2 + $0x3a8] sm:$0xff]
    %v162 = vld [vmem:[#allocation2 + $0x3b0] sm:$0xff]
    %v163 = vld [vmem:[#allocation2 + $0x3b8] sm:$0xff]
    %v164 = vld [vmem:[#allocation2 + $0x3c0] sm:$0xff]
    %v165 = vld [vmem:[#allocation2 + $0x3c8] sm:$0xff]
    %v166 = vld [vmem:[#allocation2 + $0x3d0] sm:$0xff]
    %v167 = vld [vmem:[#allocation2 + $0x3d8] sm:$0xff]
    %v168 = vld [vmem:[#allocation2 + $0x3e0] sm:$0xff]
    %v169 = vld [vmem:[#allocation2 + $0x3e8] sm:$0xff]
    %v170 = vld [vmem:[#allocation2 + $0x3f0] sm:$0xff]
    %v171 = vld [vmem:[#allocation2 + $0x3f8] sm:$0xff]
    %v172 = vld [vmem:[#allocation2 + $0x400] sm:$0xff]
    %v173 = vld [vmem:[#allocation2 + $0x408] sm:$0xff]
    %v174 = vld [vmem:[#allocation2 + $0x410] sm:$0xff]
    %v175 = vld [vmem:[#allocation2 + $0x418] sm:$0xff]
    %v176 = vld [vmem:[#allocation2 + $0x420] sm:$0xff]
    %v177 = vld [vmem:[#allocation2 + $0x428] sm:$0xff]
    %v178 = vld [vmem:[#allocation2 + $0x430] sm:$0xff]
    %v179 = vld [vmem:[#allocation2 + $0x438] sm:$0xff]
    %v180 = vld [vmem:[#allocation2 + $0x440] sm:$0xff]
    %v181 = vld [vmem:[#allocation2 + $0x448] sm:$0xff]
    %v182 = vld [vmem:[#allocation2 + $0x450] sm:$0xff]
    %v183 = vld [vmem:[#allocation2 + $0x458] sm:$0xff]
    %v184 = vld [vmem:[#allocation2 + $0x460] sm:$0xff]
    %v185 = vld [vmem:[#allocation2 + $0x468] sm:$0xff]
    %v186 = vld [vmem:[#allocation2 + $0x470] sm:$0xff]
    %v187 = vld [vmem:[#allocation2 + $0x478] sm:$0xff]
    %v188 = vld [vmem:[#allocation2 + $0x480] sm:$0xff]
    %v189 = vld [vmem:[#allocation2 + $0x488] sm:$0xff]
    %v190 = vld [vmem:[#allocation2 + $0x490] sm:$0xff]
    %v191 = vld [vmem:[#allocation2 + $0x498] sm:$0xff]
    %v192 = vld [vmem:[#allocation2 + $0x4a0] sm:$0xff]
    %v193 = vld [vmem:[#allocation2 + $0x4a8] sm:$0xff]
    %v194 = vld [vmem:[#allocation2 + $0x4b0] sm:$0xff]
    %v195 = vld [vmem:[#allocation2 + $0x4b8] sm:$0xff]
    %v196 = vld [vmem:[#allocation2 + $0x4c0] sm:$0xff]
    %v197 = vld [vmem:[#allocation2 + $0x4c8] sm:$0xff]
    %v198 = vld [vmem:[#allocation2 + $0x4d0] sm:$0xff]
    %v199 = vld [vmem:[#allocation2 + $0x4d8] sm:$0xff]
    %v200 = vld [vmem:[#allocation2 + $0x4e0] sm:$0xff]
    %v201 = vld [vmem:[#allocation2 + $0x4e8] sm:$0xff]
    %v202 = vld [vmem:[#allocation2 + $0x4f0] sm:$0xff]
    %v203 = vld [vmem:[#allocation2 + $0x4f8] sm:$0xff]
    %v204 = vld [vmem:[#allocation2 + $0x500] sm:$0xff]
    %v205 = vld [vmem:[#allocation2 + $0x508] sm:$0xff]
    %v206 = vld [vmem:[#allocation2 + $0x510] sm:$0xff]
    %v207 = vld [vmem:[#allocation2 + $0x518] sm:$0xff]
    %v208 = vld [vmem:[#allocation2 + $0x520] sm:$0xff]
    %v209 = vld [vmem:[#allocation2 + $0x528] sm:$0xff]
    %v210 = vld [vmem:[#allocation2 + $0x530] sm:$0xff]
    %v211 = vld [vmem:[#allocation2 + $0x538] sm:$0xff]
    %v212 = vld [vmem:[#allocation2 + $0x540] sm:$0xff]
    %v213 = vld [vmem:[#allocation2 + $0x548] sm:$0xff]
    %v214 = vld [vmem:[#allocation2 + $0x550] sm:$0xff]
    %v215 = vld [vmem:[#allocation2 + $0x558] sm:$0xff]
    %v216 = vld [vmem:[#allocation2 + $0x560] sm:$0xff]
    %v217 = vld [vmem:[#allocation2 + $0x568] sm:$0xff]
    %v218 = vld [vmem:[#allocation2 + $0x570] sm:$0xff]
    %v219 = vld [vmem:[#allocation2 + $0x578] sm:$0xff]
    %v220 = vld [vmem:[#allocation2 + $0x580] sm:$0xff]
    %v221 = vld [vmem:[#allocation2 + $0x588] sm:$0xff]
    %v222 = vld [vmem:[#allocation2 + $0x590] sm:$0xff]
    %v223 = vld [vmem:[#allocation2 + $0x598] sm:$0xff]
    %v224 = vld [vmem:[#allocation2 + $0x5a0] sm:$0xff]
    %v225 = vld [vmem:[#allocation2 + $0x5a8] sm:$0xff]
    %v226 = vld [vmem:[#allocation2 + $0x5b0] sm:$0xff]
    %v227 = vld [vmem:[#allocation2 + $0x5b8] sm:$0xff]
    %v228 = vld [vmem:[#allocation2 + $0x5c0] sm:$0xff]
    %v229 = vld [vmem:[#allocation2 + $0x5c8] sm:$0xff]
    %v230 = vld [vmem:[#allocation2 + $0x5d0] sm:$0xff]
    %v231 = vld [vmem:[#allocation2 + $0x5d8] sm:$0xff]
    %v232 = vld [vmem:[#allocation2 + $0x5e0] sm:$0xff]
    %v233 = vld [vmem:[#allocation2 + $0x5e8] sm:$0xff]
    %v234 = vld [vmem:[#allocation2 + $0x5f0] sm:$0xff]
    %v235 = vld [vmem:[#allocation2 + $0x5f8] sm:$0xff]
    %v236 = vld [vmem:[#allocation2 + $0x600] sm:$0xff]
    %v237 = vld [vmem:[#allocation2 + $0x608] sm:$0xff]
    %v238 = vld [vmem:[#allocation2 + $0x610] sm:$0xff]
    %v239 = vld [vmem:[#allocation2 + $0x618] sm:$0xff]
    %v240 = vld [vmem:[#allocation2 + $0x620] sm:$0xff]
    %v241 = vld [vmem:[#allocation2 + $0x628] sm:$0xff]
    %v242 = vld [vmem:[#allocation2 + $0x630] sm:$0xff]
    %v243 = vld [vmem:[#allocation2 + $0x638] sm:$0xff]
    %v244 = vld [vmem:[#allocation2 + $0x640] sm:$0xff]
    %v245 = vld [vmem:[#allocation2 + $0x648] sm:$0xff]
    %v246 = vld [vmem:[#allocation2 + $0x650] sm:$0xff]
    %v247 = vld [vmem:[#allocation2 + $0x658] sm:$0xff]
    %v248 = vld [vmem:[#allocation2 + $0x660] sm:$0xff]
    %v249 = vld [vmem:[#allocation2 + $0x668] sm:$0xff]
    %v250 = vld [vmem:[#allocation2 + $0x670] sm:$0xff]
    %v251 = vld [vmem:[#allocation2 + $0x678] sm:$0xff]
    %v252 = vld [vmem:[#allocation2 + $0x680] sm:$0xff]
    %v253 = vld [vmem:[#allocation2 + $0x688] sm:$0xff]
    %v254 = vld [vmem:[#allocation2 + $0x690] sm:$0xff]
    %v255 = vld [vmem:[#allocation2 + $0x698] sm:$0xff]
    %v256 = vld [vmem:[#allocation2 + $0x6a0] sm:$0xff]
    %v257 = vld [vmem:[#allocation2 + $0x6a8] sm:$0xff]
    %v258 = vld [vmem:[#allocation2 + $0x6b0] sm:$0xff]
    %v259 = vld [vmem:[#allocation2 + $0x6b8] sm:$0xff]
    %v260 = vld [vmem:[#allocation2 + $0x6c0] sm:$0xff]
    %v261 = vld [vmem:[#allocation2 + $0x6c8] sm:$0xff]
    %v262 = vld [vmem:[#allocation2 + $0x6d0] sm:$0xff]
    %v263 = vld [vmem:[#allocation2 + $0x6d8] sm:$0xff]
    %v264 = vld [vmem:[#allocation2 + $0x6e0] sm:$0xff]
    %v265 = vld [vmem:[#allocation2 + $0x6e8] sm:$0xff]
    %v266 = vld [vmem:[#allocation2 + $0x6f0] sm:$0xff]
    %v267 = vld [vmem:[#allocation2 + $0x6f8] sm:$0xff]
    %v268 = vld [vmem:[#allocation2 + $0x700] sm:$0xff]
    %v269 = vld [vmem:[#allocation2 + $0x708] sm:$0xff]
    %v270 = vld [vmem:[#allocation2 + $0x710] sm:$0xff]
    %v271 = vld [vmem:[#allocation2 + $0x718] sm:$0xff]
    %v272 = vld [vmem:[#allocation2 + $0x720] sm:$0xff]
    %v273 = vld [vmem:[#allocation2 + $0x728] sm:$0xff]
    %v274 = vld [vmem:[#allocation2 + $0x730] sm:$0xff]
    %v275 = vld [vmem:[#allocation2 + $0x738] sm:$0xff]
    %v276 = vld [vmem:[#allocation2 + $0x740] sm:$0xff]
    %v277 = vld [vmem:[#allocation2 + $0x748] sm:$0xff]
    %v278 = vld [vmem:[#allocation2 + $0x750] sm:$0xff]
    %v279 = vld [vmem:[#allocation2 + $0x758] sm:$0xff]
    %v280 = vld [vmem:[#allocation2 + $0x760] sm:$0xff]
    %v281 = vld [vmem:[#allocation2 + $0x768] sm:$0xff]
    %v282 = vld [vmem:[#allocation2 + $0x770] sm:$0xff]
    %v283 = vld [vmem:[#allocation2 + $0x778] sm:$0xff]
    %v284 = vld [vmem:[#allocation2 + $0x780] sm:$0xff]
    %v285 = vld [vmem:[#allocation2 + $0x788] sm:$0xff]
    %v286 = vld [vmem:[#allocation2 + $0x790] sm:$0xff]
    %v287 = vld [vmem:[#allocation2 + $0x798] sm:$0xff]
    %v288 = vld [vmem:[#allocation2 + $0x7a0] sm:$0xff]
    %v289 = vld [vmem:[#allocation2 + $0x7a8] sm:$0xff]
    %v290 = vld [vmem:[#allocation2 + $0x7b0] sm:$0xff]
    %v291 = vld [vmem:[#allocation2 + $0x7b8] sm:$0xff]
    %v292 = vld [vmem:[#allocation2 + $0x7c0] sm:$0xff]
    %v293 = vld [vmem:[#allocation2 + $0x7c8] sm:$0xff]
    %v294 = vld [vmem:[#allocation2 + $0x7d0] sm:$0xff]
    %v295 = vld [vmem:[#allocation2 + $0x7d8] sm:$0xff]
    %v296 = vld [vmem:[#allocation2 + $0x7e0] sm:$0xff]
    %v297 = vld [vmem:[#allocation2 + $0x7e8] sm:$0xff]
    %v298 = vld [vmem:[#allocation2 + $0x7f0] sm:$0xff]
    %v299 = vld [vmem:[#allocation2 + $0x7f8] sm:$0xff]
    %v300 = vld [vmem:[#allocation2 + $0x800] sm:$0xff]
    %v301 = vld [vmem:[#allocation2 + $0x808] sm:$0xff]
    %v302 = vld [vmem:[#allocation2 + $0x810] sm:$0xff]
    %v303 = vld [vmem:[#allocation2 + $0x818] sm:$0xff]
    %v304 = vld [vmem:[#allocation2 + $0x820] sm:$0xff]
    %v305 = vld [vmem:[#allocation2 + $0x828] sm:$0xff]
    %v306 = vld [vmem:[#allocation2 + $0x830] sm:$0xff]
    %v307 = vld [vmem:[#allocation2 + $0x838] sm:$0xff]
    %v308 = vld [vmem:[#allocation2 + $0x840] sm:$0xff]
    %v309 = vld [vmem:[#allocation2 + $0x848] sm:$0xff]
    %v310 = vld [vmem:[#allocation2 + $0x850] sm:$0xff]
    %v311 = vld [vmem:[#allocation2 + $0x858] sm:$0xff]
    %v312 = vld [vmem:[#allocation2 + $0x860] sm:$0xff]
    %v313 = vld [vmem:[#allocation2 + $0x868] sm:$0xff]
    %v314 = vld [vmem:[#allocation2 + $0x870] sm:$0xff]
    %v315 = vld [vmem:[#allocation2 + $0x878] sm:$0xff]
    %v316 = vld [vmem:[#allocation2 + $0x880] sm:$0xff]
    %v317 = vld [vmem:[#allocation2 + $0x888] sm:$0xff]
    %v318 = vld [vmem:[#allocation2 + $0x890] sm:$0xff]
    %v319 = vld [vmem:[#allocation2 + $0x898] sm:$0xff]
    %v320 = vld [vmem:[#allocation2 + $0x8a0] sm:$0xff]
    %v321 = vld [vmem:[#allocation2 + $0x8a8] sm:$0xff]
    %v322 = vld [vmem:[#allocation2 + $0x8b0] sm:$0xff]
    %v323 = vld [vmem:[#allocation2 + $0x8b8] sm:$0xff]
    %v324 = vld [vmem:[#allocation2 + $0x8c0] sm:$0xff]
    %v325 = vld [vmem:[#allocation2 + $0x8c8] sm:$0xff]
    %v326 = vld [vmem:[#allocation2 + $0x8d0] sm:$0xff]
    %v327 = vld [vmem:[#allocation2 + $0x8d8] sm:$0xff]
    %v328 = vld [vmem:[#allocation2 + $0x8e0] sm:$0xff]
    %v329 = vld [vmem:[#allocation2 + $0x8e8] sm:$0xff]
    %v330 = vld [vmem:[#allocation2 + $0x8f0] sm:$0xff]
    %v331 = vld [vmem:[#allocation2 + $0x8f8] sm:$0xff]
    %v332 = vld [vmem:[#allocation2 + $0x900] sm:$0xff]
    %v333 = vld [vmem:[#allocation2 + $0x908] sm:$0xff]
    %v334 = vld [vmem:[#allocation2 + $0x910] sm:$0xff]
    %v335 = vld [vmem:[#allocation2 + $0x918] sm:$0xff]
    %v336 = vld [vmem:[#allocation2 + $0x920] sm:$0xff]
    %v337 = vld [vmem:[#allocation2 + $0x928] sm:$0xff]
    %v338 = vld [vmem:[#allocation2 + $0x930] sm:$0xff]
    %v339 = vld [vmem:[#allocation2 + $0x938] sm:$0xff]
    %v340 = vld [vmem:[#allocation2 + $0x940] sm:$0xff]
    %v341 = vld [vmem:[#allocation2 + $0x948] sm:$0xff]
    %v342 = vld [vmem:[#allocation2 + $0x950] sm:$0xff]
    %v343 = vld [vmem:[#allocation2 + $0x958] sm:$0xff]
    %v344 = vld [vmem:[#allocation2 + $0x960] sm:$0xff]
    %v345 = vld [vmem:[#allocation2 + $0x968] sm:$0xff]
    %v346 = vld [vmem:[#allocation2 + $0x970] sm:$0xff]
    %v347 = vld [vmem:[#allocation2 + $0x978] sm:$0xff]
    %v348 = vld [vmem:[#allocation2 + $0x980] sm:$0xff]
    %v349 = vld [vmem:[#allocation2 + $0x988] sm:$0xff]
    %v350 = vld [vmem:[#allocation2 + $0x990] sm:$0xff]
    %v351 = vld [vmem:[#allocation2 + $0x998] sm:$0xff]
    %v352 = vld [vmem:[#allocation2 + $0x9a0] sm:$0xff]
    %v353 = vld [vmem:[#allocation2 + $0x9a8] sm:$0xff]
    %v354 = vld [vmem:[#allocation2 + $0x9b0] sm:$0xff]
    %v355 = vld [vmem:[#allocation2 + $0x9b8] sm:$0xff]
    %v356 = vld [vmem:[#allocation2 + $0x9c0] sm:$0xff]
    %v357 = vld [vmem:[#allocation2 + $0x9c8] sm:$0xff]
    %v358 = vld [vmem:[#allocation2 + $0x9d0] sm:$0xff]
    %v359 = vld [vmem:[#allocation2 + $0x9d8] sm:$0xff]
    %v360 = vld [vmem:[#allocation2 + $0x9e0] sm:$0xff]
    %v361 = vld [vmem:[#allocation2 + $0x9e8] sm:$0xff]
    %v362 = vld [vmem:[#allocation2 + $0x9f0] sm:$0xff]
    %v363 = vld [vmem:[#allocation2 + $0x9f8] sm:$0xff]
    %v364 = vld [vmem:[#allocation2 + $0xa00] sm:$0xff]
    %v365 = vld [vmem:[#allocation2 + $0xa08] sm:$0xff]
    %v366 = vld [vmem:[#allocation2 + $0xa10] sm:$0xff]
    %v367 = vld [vmem:[#allocation2 + $0xa18] sm:$0xff]
    %v368 = vld [vmem:[#allocation2 + $0xa20] sm:$0xff]
    %v369 = vld [vmem:[#allocation2 + $0xa28] sm:$0xff]
    %v370 = vld [vmem:[#allocation2 + $0xa30] sm:$0xff]
    %v371 = vld [vmem:[#allocation2 + $0xa38] sm:$0xff]
    %v372 = vld [vmem:[#allocation2 + $0xa40] sm:$0xff]
    %v373 = vld [vmem:[#allocation2 + $0xa48] sm:$0xff]
    %v374 = vld [vmem:[#allocation2 + $0xa50] sm:$0xff]
    %v375 = vld [vmem:[#allocation2 + $0xa58] sm:$0xff]
    %v376 = vld [vmem:[#allocation2 + $0xa60] sm:$0xff]
    %v377 = vld [vmem:[#allocation2 + $0xa68] sm:$0xff]
    %v378 = vld [vmem:[#allocation2 + $0xa70] sm:$0xff]
    %v379 = vld [vmem:[#allocation2 + $0xa78] sm:$0xff]
    %v380 = vld [vmem:[#allocation2 + $0xa80] sm:$0xff]
    %v381 = vld [vmem:[#allocation2 + $0xa88] sm:$0xff]
    %v382 = vld [vmem:[#allocation2 + $0xa90] sm:$0xff]
    %v383 = vld [vmem:[#allocation2 + $0xa98] sm:$0xff]
    %v384 = vld [vmem:[#allocation2 + $0xaa0] sm:$0xff]
    %v385 = vld [vmem:[#allocation2 + $0xaa8] sm:$0xff]
    %v386 = vld [vmem:[#allocation2 + $0xab0] sm:$0xff]
    %v387 = vld [vmem:[#allocation2 + $0xab8] sm:$0xff]
    %v388 = vld [vmem:[#allocation2 + $0xac0] sm:$0xff]
    %v389 = vld [vmem:[#allocation2 + $0xac8] sm:$0xff]
    %v390 = vld [vmem:[#allocation2 + $0xad0] sm:$0xff]
    %v391 = vld [vmem:[#allocation2 + $0xad8] sm:$0xff]
    %v392 = vld [vmem:[#allocation2 + $0xae0] sm:$0xff]
    %v393 = vld [vmem:[#allocation2 + $0xae8] sm:$0xff]
    %v394 = vld [vmem:[#allocation2 + $0xaf0] sm:$0xff]
    %v395 = vld [vmem:[#allocation2 + $0xaf8] sm:$0xff]
    %v396 = vld [vmem:[#allocation2 + $0xb00] sm:$0xff]
    %v397 = vld [vmem:[#allocation2 + $0xb08] sm:$0xff]
    %v398 = vld [vmem:[#allocation2 + $0xb10] sm:$0xff]
    %v399 = vld [vmem:[#allocation2 + $0xb18] sm:$0xff]
    %v400 = vld [vmem:[#allocation2 + $0xb20] sm:$0xff]
    %v401 = vld [vmem:[#allocation2 + $0xb28] sm:$0xff]
    %v402 = vld [vmem:[#allocation2 + $0xb30] sm:$0xff]
    %v403 = vld [vmem:[#allocation2 + $0xb38] sm:$0xff]
    %v404 = vld [vmem:[#allocation2 + $0xb40] sm:$0xff]
    %v405 = vld [vmem:[#allocation2 + $0xb48] sm:$0xff]
    %v406 = vld [vmem:[#allocation2 + $0xb50] sm:$0xff]
    %v407 = vld [vmem:[#allocation2 + $0xb58] sm:$0xff]
    %v408 = vld [vmem:[#allocation2 + $0xb60] sm:$0xff]
    %v409 = vld [vmem:[#allocation2 + $0xb68] sm:$0xff]
    %v410 = vld [vmem:[#allocation2 + $0xb70] sm:$0xff]
    %v411 = vld [vmem:[#allocation2 + $0xb78] sm:$0xff]
    %v412 = vld [vmem:[#allocation2 + $0xb80] sm:$0xff]
    %v413 = vld [vmem:[#allocation2 + $0xb88] sm:$0xff]
    %v414 = vld [vmem:[#allocation2 + $0xb90] sm:$0xff]
    %v415 = vld [vmem:[#allocation2 + $0xb98] sm:$0xff]
    %v416 = vld [vmem:[#allocation2 + $0xba0] sm:$0xff]
    %v417 = vld [vmem:[#allocation2 + $0xba8] sm:$0xff]
    %v418 = vld [vmem:[#allocation2 + $0xbb0] sm:$0xff]
    %v419 = vld [vmem:[#allocation2 + $0xbb8] sm:$0xff]
    %v420 = vld [vmem:[#allocation2 + $0xbc0] sm:$0xff]
    %v421 = vld [vmem:[#allocation2 + $0xbc8] sm:$0xff]
    %v422 = vld [vmem:[#allocation2 + $0xbd0] sm:$0xff]
    %v423 = vld [vmem:[#allocation2 + $0xbd8] sm:$0xff]
    %v424 = vld [vmem:[#allocation2 + $0xbe0] sm:$0xff]
    %v425 = vld [vmem:[#allocation2 + $0xbe8] sm:$0xff]
    %v426 = vld [vmem:[#allocation2 + $0xbf0] sm:$0xff]
    %v427 = vld [vmem:[#allocation2 + $0xbf8] sm:$0xff]
    %v428 = vld [vmem:[#allocation2 + $0xc00] sm:$0xff]
    %v429 = vld [vmem:[#allocation2 + $0xc08] sm:$0xff]
    %v430 = vld [vmem:[#allocation2 + $0xc10] sm:$0xff]
    %v431 = vld [vmem:[#allocation2 + $0xc18] sm:$0xff]
    %v432 = vld [vmem:[#allocation2 + $0xc20] sm:$0xff]
    %v433 = vld [vmem:[#allocation2 + $0xc28] sm:$0xff]
    %v434 = vld [vmem:[#allocation2 + $0xc30] sm:$0xff]
    %v435 = vld [vmem:[#allocation2 + $0xc38] sm:$0xff]
    %v436 = vld [vmem:[#allocation2 + $0xc40] sm:$0xff]
    %v437 = vld [vmem:[#allocation2 + $0xc48] sm:$0xff]
    %v438 = vld [vmem:[#allocation2 + $0xc50] sm:$0xff]
    %v439 = vld [vmem:[#allocation2 + $0xc58] sm:$0xff]
    %v440 = vld [vmem:[#allocation2 + $0xc60] sm:$0xff]
    %v441 = vld [vmem:[#allocation2 + $0xc68] sm:$0xff]
    %v442 = vld [vmem:[#allocation2 + $0xc70] sm:$0xff]
    %v443 = vld [vmem:[#allocation2 + $0xc78] sm:$0xff]
    %v444 = vld [vmem:[#allocation2 + $0xc80] sm:$0xff]
    %v445 = vld [vmem:[#allocation2 + $0xc88] sm:$0xff]
    %v446 = vld [vmem:[#allocation2 + $0xc90] sm:$0xff]
    %v447 = vld [vmem:[#allocation2 + $0xc98] sm:$0xff]
    %v448 = vld [vmem:[#allocation2 + $0xca0] sm:$0xff]
    %v449 = vld [vmem:[#allocation2 + $0xca8] sm:$0xff]
    %v450 = vld [vmem:[#allocation2 + $0xcb0] sm:$0xff]
    %v451 = vld [vmem:[#allocation2 + $0xcb8] sm:$0xff]
    %v452 = vld [vmem:[#allocation2 + $0xcc0] sm:$0xff]
    %v453 = vld [vmem:[#allocation2 + $0xcc8] sm:$0xff]
    %v454 = vld [vmem:[#allocation2 + $0xcd0] sm:$0xff]
    %v455 = vld [vmem:[#allocation2 + $0xcd8] sm:$0xff]
    %v456 = vld [vmem:[#allocation2 + $0xce0] sm:$0xff]
    %v457 = vld [vmem:[#allocation2 + $0xce8] sm:$0xff]
    %v458 = vld [vmem:[#allocation2 + $0xcf0] sm:$0xff]
    %v459 = vld [vmem:[#allocation2 + $0xcf8] sm:$0xff]
    %v460 = vld [vmem:[#allocation2 + $0xd00] sm:$0xff]
    %v461 = vld [vmem:[#allocation2 + $0xd08] sm:$0xff]
    %v462 = vld [vmem:[#allocation2 + $0xd10] sm:$0xff]
    %v463 = vld [vmem:[#allocation2 + $0xd18] sm:$0xff]
    %v464 = vld [vmem:[#allocation2 + $0xd20] sm:$0xff]
    %v465 = vld [vmem:[#allocation2 + $0xd28] sm:$0xff]
    %v466 = vld [vmem:[#allocation2 + $0xd30] sm:$0xff]
    %v467 = vld [vmem:[#allocation2 + $0xd38] sm:$0xff]
    %v468 = vld [vmem:[#allocation2 + $0xd40] sm:$0xff]
    %v469 = vld [vmem:[#allocation2 + $0xd48] sm:$0xff]
    %v470 = vld [vmem:[#allocation2 + $0xd50] sm:$0xff]
    %v471 = vld [vmem:[#allocation2 + $0xd58] sm:$0xff]
    %v472 = vld [vmem:[#allocation2 + $0xd60] sm:$0xff]
    %v473 = vld [vmem:[#allocation2 + $0xd68] sm:$0xff]
    %v474 = vld [vmem:[#allocation2 + $0xd70] sm:$0xff]
    %v475 = vld [vmem:[#allocation2 + $0xd78] sm:$0xff]
    %v476 = vld [vmem:[#allocation2 + $0xd80] sm:$0x1f]
    %v477 = vld [vmem:[#allocation2 + $0xd88] sm:$0x1f]
    %v478 = vld [vmem:[#allocation2 + $0xd90] sm:$0x1f]
    %v479 = vld [vmem:[#allocation2 + $0xd98] sm:$0x1f]
    %v480 = vld [vmem:[#allocation2 + $0xda0] sm:$0x1f]
    %v481 = vld [vmem:[#allocation2 + $0xda8] sm:$0x1f]
    %v482 = vld [vmem:[#allocation2 + $0xdb0] sm:$0x1f]
    %v483 = vld [vmem:[#allocation2 + $0xdb8] sm:$0x1f]
    %v484 = vld [vmem:[#allocation2 + $0xdc0] sm:$0x1f]
    %v485 = vld [vmem:[#allocation2 + $0xdc8] sm:$0x1f]
    %v486 = vld [vmem:[#allocation2 + $0xdd0] sm:$0x1f]
    %v487 = vld [vmem:[#allocation2 + $0xdd8] sm:$0x1f]
    %v488 = vld [vmem:[#allocation2 + $0xde0] sm:$0x1f]
    %v489 = vld [vmem:[#allocation2 + $0xde8] sm:$0x1f]
    %v490 = vld [vmem:[#allocation2 + $0xdf0] sm:$0x1f]
    %v491 = vld [vmem:[#allocation2 + $0xdf8] sm:$0x1f]
    %v492 = vld [vmem:[#allocation4] sm:$0xff]
    %v493 = vld [vmem:[#allocation4 + $0x8] sm:$0xff]
    %v496 = vlaneseq
    %v497 = vshrl.u32 %v496, 7
    %v498 = vsub.s32 0, %v497
    %v499 = vrot.slane %v492, %v498
    %v500 = vlaneseq
    %v501 = vshrl.u32 %v500, 7
    %v502 = vsub.s32 1, %v501
    %v503 = vrot.slane %v492, %v502
    %v504 = vlaneseq
    %v505 = vshrl.u32 %v504, 7
    %v506 = vsub.s32 2, %v505
    %v507 = vrot.slane %v492, %v506
    %v508 = vlaneseq
    %v509 = vshrl.u32 %v508, 7
    %v510 = vsub.s32 3, %v509
    %v511 = vrot.slane %v492, %v510
    %v512 = vlaneseq
    %v513 = vshrl.u32 %v512, 7
    %v514 = vsub.s32 4, %v513
    %v515 = vrot.slane %v492, %v514
    %v516 = vlaneseq
    %v517 = vshrl.u32 %v516, 7
    %v518 = vsub.s32 5, %v517
    %v519 = vrot.slane %v492, %v518
    %v520 = vlaneseq
    %v521 = vshrl.u32 %v520, 7
    %v522 = vsub.s32 6, %v521
    %v523 = vrot.slane %v492, %v522
    %v524 = vlaneseq
    %v525 = vshrl.u32 %v524, 7
    %v526 = vsub.s32 7, %v525
    %v527 = vrot.slane %v492, %v526
    %v528 = vlaneseq
    %v529 = vshrl.u32 %v528, 7
    %v530 = vsub.s32 0, %v529
    %v531 = vrot.slane %v493, %v530
    %v532 = vlaneseq
    %v533 = vshrl.u32 %v532, 7
    %v534 = vsub.s32 1, %v533
    %v535 = vrot.slane %v493, %v534
    %v536 = vlaneseq
    %v537 = vshrl.u32 %v536, 7
    %v538 = vsub.s32 2, %v537
    %v539 = vrot.slane %v493, %v538
    %v540 = vlaneseq
    %v541 = vshrl.u32 %v540, 7
    %v542 = vsub.s32 3, %v541
    %v543 = vrot.slane %v493, %v542
    %v544 = vlaneseq
    %v545 = vshrl.u32 %v544, 7
    %v546 = vsub.s32 4, %v545
    %v547 = vrot.slane %v493, %v546
    %v548 = vlaneseq
    %v549 = vshrl.u32 %v548, 7
    %v550 = vsub.s32 5, %v549
    %v551 = vrot.slane %v493, %v550
    %v552 = vlaneseq
    %v553 = vshrl.u32 %v552, 7
    %v554 = vsub.s32 6, %v553
    %v555 = vrot.slane %v493, %v554
    %v556 = vlaneseq
    %v557 = vshrl.u32 %v556, 7
    %v558 = vsub.s32 7, %v557
    %v559 = vrot.slane %v493, %v558
    %vm576 = vcmask 760832
    %v578 = vsel %vm576, %v41, 0
    %v581 = vsel %vm576, %v43, 0
    %vm583 = vcmask 1044480
    %v585 = vsel %vm583, %v476, 0
    %v588 = vsel %vm583, %v477, 0
    %v591 = vsel %vm583, %v478, 0
    %v594 = vsel %vm583, %v479, 0
    %v597 = vsel %vm583, %v480, 0
    %v600 = vsel %vm583, %v481, 0
    %v603 = vsel %vm583, %v482, 0
    %v606 = vsel %vm583, %v483, 0
    %v609 = vsel %vm583, %v484, 0
    %v612 = vsel %vm583, %v485, 0
    %v615 = vsel %vm583, %v486, 0
    %v618 = vsel %vm583, %v487, 0
    %v621 = vsel %vm583, %v488, 0
    %v624 = vsel %vm583, %v489, 0
    %v627 = vsel %vm583, %v490, 0
    %v630 = vsel %vm583, %v491, 0
    %632 = vmatprep.subr.mxu0 %v45
    %633 = vmatpush1.msra.mxu0 %v44
    %634 = vmatprep.subr.mxu0 %v61
    %635 = vmatpush1.msra.mxu0 %v60
    %636 = vmatprep.subr.mxu0 %v77
    %637 = vmatpush1.msra.mxu0 %v76
    %638 = vmatprep.subr.mxu0 %v93
    %639 = vmatpush1.msra.mxu0 %v92
    %640 = vmatprep.subr.mxu0 %v109
    %641 = vmatpush1.msra.mxu0 %v108
    %642 = vmatprep.subr.mxu0 %v125
    %643 = vmatpush1.msra.mxu0 %v124
    %644 = vmatprep.subr.mxu0 %v141
    %645 = vmatpush1.msra.mxu0 %v140
    %646 = vmatprep.subr.mxu0 %v157
    %647 = vmatpush1.msra.mxu0 %v156
    %648 = vmatprep.subr.mxu0 %v173
    %649 = vmatpush1.msra.mxu0 %v172
    %650 = vmatprep.subr.mxu0 %v189
    %651 = vmatpush1.msra.mxu0 %v188
    %652 = vmatprep.subr.mxu0 %v205
    %653 = vmatpush1.msra.mxu0 %v204
    %654 = vmatprep.subr.mxu0 %v221
    %655 = vmatpush1.msra.mxu0 %v220
    %656 = vmatprep.subr.mxu0 %v237
    %657 = vmatpush1.msra.mxu0 %v236
    %658 = vmatprep.subr.mxu0 %v253
    %659 = vmatpush1.msra.mxu0 %v252
    %660 = vmatprep.subr.mxu0 %v269
    %661 = vmatpush1.msra.mxu0 %v268
    %662 = vmatprep.subr.mxu0 %v285
    %663 = vmatpush1.msra.mxu0 %v284
    %664 = vmatprep.subr.mxu0 %v301
    %665 = vmatpush1.msra.mxu0 %v300
    %666 = vmatprep.subr.mxu0 %v317
    %667 = vmatpush1.msra.mxu0 %v316
    %668 = vmatprep.subr.mxu0 %v333
    %669 = vmatpush1.msra.mxu0 %v332
    %670 = vmatprep.subr.mxu0 %v349
    %671 = vmatpush1.msra.mxu0 %v348
    %672 = vmatprep.subr.mxu0 %v365
    %673 = vmatpush1.msra.mxu0 %v364
    %674 = vmatprep.subr.mxu0 %v381
    %675 = vmatpush1.msra.mxu0 %v380
    %676 = vmatprep.subr.mxu0 %v397
    %677 = vmatpush1.msra.mxu0 %v396
    %678 = vmatprep.subr.mxu0 %v413
    %679 = vmatpush1.msra.mxu0 %v412
    %680 = vmatprep.subr.mxu0 %v429
    %681 = vmatpush1.msra.mxu0 %v428
    %682 = vmatprep.subr.mxu0 %v445
    %683 = vmatpush1.msra.mxu0 %v444
    %684 = vmatprep.subr.mxu0 %v461
    %685 = vmatpush1.msra.mxu0 %v460
    %686 = vmatprep.subr.mxu0 %v588
    %687 = vmatpush1.msra.mxu0 %v585
    %688 = vmatprep.subr.mxu0 0.0
    %689 = vmatpush1.msra.mxu0 0.0
    %690 = vmatprep.subr.mxu0 0.0
    %691 = vmatpush1.msra.mxu0 0.0
    %692 = vmatprep.subr.mxu0 0.0
    %693 = vmatpush1.msra.mxu0 0.0
    %694 = vmatprep.subr.mxu0 0.0
    %695 = vmatpush1.msra.mxu0 0.0
    %696 = vmatprep.mubr.f32.mxu0 %v578
    %697 = vmatmul.mubr.f32.gmra.mrb[0].mxu0 %v40
    %v698 = vpop.f32.mrb[0].mxu0
    %v699 = vadd.f32 %v499, %v698
    %v700 = vpop.f32.mrb[0].mxu0
    %v701 = vadd.f32 %v503, %v700
    %702 = vmatprep.mubr.f32.mxu0 %v581
    %703 = vmatmul.mubr.f32.gmra.mrb[0].mxu0 %v42
    %v704 = vpop.f32.mrb[0].mxu0
    %v705 = vadd.f32 %v499, %v704
    %v706 = vpop.f32.mrb[0].mxu0
    %v707 = vadd.f32 %v503, %v706
    %708 = vdwg.mxu0
    %709 = vmatprep.subr.mxu0 %v47
    %710 = vmatpush1.msra.mxu0 %v46
    %711 = vmatprep.subr.mxu0 %v63
    %712 = vmatpush1.msra.mxu0 %v62
    %713 = vmatprep.subr.mxu0 %v79
    %714 = vmatpush1.msra.mxu0 %v78
    %715 = vmatprep.subr.mxu0 %v95
    %716 = vmatpush1.msra.mxu0 %v94
    %717 = vmatprep.subr.mxu0 %v111
    %718 = vmatpush1.msra.mxu0 %v110
    %719 = vmatprep.subr.mxu0 %v127
    %720 = vmatpush1.msra.mxu0 %v126
    %721 = vmatprep.subr.mxu0 %v143
    %722 = vmatpush1.msra.mxu0 %v142
    %723 = vmatprep.subr.mxu0 %v159
    %724 = vmatpush1.msra.mxu0 %v158
    %725 = vmatprep.subr.mxu0 %v175
    %726 = vmatpush1.msra.mxu0 %v174
    %727 = vmatprep.subr.mxu0 %v191
    %728 = vmatpush1.msra.mxu0 %v190
    %729 = vmatprep.subr.mxu0 %v207
    %730 = vmatpush1.msra.mxu0 %v206
    %731 = vmatprep.subr.mxu0 %v223
    %732 = vmatpush1.msra.mxu0 %v222
    %733 = vmatprep.subr.mxu0 %v239
    %734 = vmatpush1.msra.mxu0 %v238
    %735 = vmatprep.subr.mxu0 %v255
    %736 = vmatpush1.msra.mxu0 %v254
    %737 = vmatprep.subr.mxu0 %v271
    %738 = vmatpush1.msra.mxu0 %v270
    %739 = vmatprep.subr.mxu0 %v287
    %740 = vmatpush1.msra.mxu0 %v286
    %741 = vmatprep.subr.mxu0 %v303
    %742 = vmatpush1.msra.mxu0 %v302
    %743 = vmatprep.subr.mxu0 %v319
    %744 = vmatpush1.msra.mxu0 %v318
    %745 = vmatprep.subr.mxu0 %v335
    %746 = vmatpush1.msra.mxu0 %v334
    %747 = vmatprep.subr.mxu0 %v351
    %748 = vmatpush1.msra.mxu0 %v350
    %749 = vmatprep.subr.mxu0 %v367
    %750 = vmatpush1.msra.mxu0 %v366
    %751 = vmatprep.subr.mxu0 %v383
    %752 = vmatpush1.msra.mxu0 %v382
    %753 = vmatprep.subr.mxu0 %v399
    %754 = vmatpush1.msra.mxu0 %v398
    %755 = vmatprep.subr.mxu0 %v415
    %756 = vmatpush1.msra.mxu0 %v414
    %757 = vmatprep.subr.mxu0 %v431
    %758 = vmatpush1.msra.mxu0 %v430
    %759 = vmatprep.subr.mxu0 %v447
    %760 = vmatpush1.msra.mxu0 %v446
    %761 = vmatprep.subr.mxu0 %v463
    %762 = vmatpush1.msra.mxu0 %v462
    %763 = vmatprep.subr.mxu0 %v594
    %764 = vmatpush1.msra.mxu0 %v591
    %765 = vmatprep.subr.mxu0 0.0
    %766 = vmatpush1.msra.mxu0 0.0
    %767 = vmatprep.subr.mxu0 0.0
    %768 = vmatpush1.msra.mxu0 0.0
    %769 = vmatprep.subr.mxu0 0.0
    %770 = vmatpush1.msra.mxu0 0.0
    %771 = vmatprep.subr.mxu0 0.0
    %772 = vmatpush1.msra.mxu0 0.0
    %773 = vmatprep.mubr.f32.mxu0 %v578
    %774 = vmatmul.mubr.f32.gmra.mrb[0].mxu0 %v40
    %v775 = vpop.f32.mrb[0].mxu0
    %v776 = vadd.f32 %v507, %v775
    %v777 = vpop.f32.mrb[0].mxu0
    %v778 = vadd.f32 %v511, %v777
    %779 = vmatprep.mubr.f32.mxu0 %v581
    %780 = vmatmul.mubr.f32.gmra.mrb[0].mxu0 %v42
    %v781 = vpop.f32.mrb[0].mxu0
    %v782 = vadd.f32 %v507, %v781
    %v783 = vpop.f32.mrb[0].mxu0
    %v784 = vadd.f32 %v511, %v783
    %785 = vdwg.mxu0
    %786 = vmatprep.subr.mxu0 %v49
    %787 = vmatpush1.msra.mxu0 %v48
    %788 = vmatprep.subr.mxu0 %v65
    %789 = vmatpush1.msra.mxu0 %v64
    %790 = vmatprep.subr.mxu0 %v81
    %791 = vmatpush1.msra.mxu0 %v80
    %792 = vmatprep.subr.mxu0 %v97
    %793 = vmatpush1.msra.mxu0 %v96
    %794 = vmatprep.subr.mxu0 %v113
    %795 = vmatpush1.msra.mxu0 %v112
    %796 = vmatprep.subr.mxu0 %v129
    %797 = vmatpush1.msra.mxu0 %v128
    %798 = vmatprep.subr.mxu0 %v145
    %799 = vmatpush1.msra.mxu0 %v144
    %800 = vmatprep.subr.mxu0 %v161
    %801 = vmatpush1.msra.mxu0 %v160
    %802 = vmatprep.subr.mxu0 %v177
    %803 = vmatpush1.msra.mxu0 %v176
    %804 = vmatprep.subr.mxu0 %v193
    %805 = vmatpush1.msra.mxu0 %v192
    %806 = vmatprep.subr.mxu0 %v209
    %807 = vmatpush1.msra.mxu0 %v208
    %808 = vmatprep.subr.mxu0 %v225
    %809 = vmatpush1.msra.mxu0 %v224
    %810 = vmatprep.subr.mxu0 %v241
    %811 = vmatpush1.msra.mxu0 %v240
    %812 = vmatprep.subr.mxu0 %v257
    %813 = vmatpush1.msra.mxu0 %v256
    %814 = vmatprep.subr.mxu0 %v273
    %815 = vmatpush1.msra.mxu0 %v272
    %816 = vmatprep.subr.mxu0 %v289
    %817 = vmatpush1.msra.mxu0 %v288
    %818 = vmatprep.subr.mxu0 %v305
    %819 = vmatpush1.msra.mxu0 %v304
    %820 = vmatprep.subr.mxu0 %v321
    %821 = vmatpush1.msra.mxu0 %v320
    %822 = vmatprep.subr.mxu0 %v337
    %823 = vmatpush1.msra.mxu0 %v336
    %824 = vmatprep.subr.mxu0 %v353
    %825 = vmatpush1.msra.mxu0 %v352
    %826 = vmatprep.subr.mxu0 %v369
    %827 = vmatpush1.msra.mxu0 %v368
    %828 = vmatprep.subr.mxu0 %v385
    %829 = vmatpush1.msra.mxu0 %v384
    %830 = vmatprep.subr.mxu0 %v401
    %831 = vmatpush1.msra.mxu0 %v400
    %832 = vmatprep.subr.mxu0 %v417
    %833 = vmatpush1.msra.mxu0 %v416
    %834 = vmatprep.subr.mxu0 %v433
    %835 = vmatpush1.msra.mxu0 %v432
    %836 = vmatprep.subr.mxu0 %v449
    %837 = vmatpush1.msra.mxu0 %v448
    %838 = vmatprep.subr.mxu0 %v465
    %839 = vmatpush1.msra.mxu0 %v464
    %840 = vmatprep.subr.mxu0 %v600
    %841 = vmatpush1.msra.mxu0 %v597
    %842 = vmatprep.subr.mxu0 0.0
    %843 = vmatpush1.msra.mxu0 0.0
    %844 = vmatprep.subr.mxu0 0.0
    %845 = vmatpush1.msra.mxu0 0.0
    %846 = vmatprep.subr.mxu0 0.0
    %847 = vmatpush1.msra.mxu0 0.0
    %848 = vmatprep.subr.mxu0 0.0
    %849 = vmatpush1.msra.mxu0 0.0
    %850 = vmatprep.mubr.f32.mxu0 %v578
    %851 = vmatmul.mubr.f32.gmra.mrb[0].mxu0 %v40
    %v852 = vpop.f32.mrb[0].mxu0
    %v853 = vadd.f32 %v515, %v852
    %v854 = vpop.f32.mrb[0].mxu0
    %v855 = vadd.f32 %v519, %v854
    %856 = vmatprep.mubr.f32.mxu0 %v581
    %857 = vmatmul.mubr.f32.gmra.mrb[0].mxu0 %v42
    %v858 = vpop.f32.mrb[0].mxu0
    %v859 = vadd.f32 %v515, %v858
    %v860 = vpop.f32.mrb[0].mxu0
    %v861 = vadd.f32 %v519, %v860
    %862 = vdwg.mxu0
    %863 = vmatprep.subr.mxu0 %v51
    %864 = vmatpush1.msra.mxu0 %v50
    %865 = vmatprep.subr.mxu0 %v67
    %866 = vmatpush1.msra.mxu0 %v66
    %867 = vmatprep.subr.mxu0 %v83
    %868 = vmatpush1.msra.mxu0 %v82
    %869 = vmatprep.subr.mxu0 %v99
    %870 = vmatpush1.msra.mxu0 %v98
    %871 = vmatprep.subr.mxu0 %v115
    %872 = vmatpush1.msra.mxu0 %v114
    %873 = vmatprep.subr.mxu0 %v131
    %874 = vmatpush1.msra.mxu0 %v130
    %875 = vmatprep.subr.mxu0 %v147
    %876 = vmatpush1.msra.mxu0 %v146
    %877 = vmatprep.subr.mxu0 %v163
    %878 = vmatpush1.msra.mxu0 %v162
    %879 = vmatprep.subr.mxu0 %v179
    %880 = vmatpush1.msra.mxu0 %v178
    %881 = vmatprep.subr.mxu0 %v195
    %882 = vmatpush1.msra.mxu0 %v194
    %883 = vmatprep.subr.mxu0 %v211
    %884 = vmatpush1.msra.mxu0 %v210
    %885 = vmatprep.subr.mxu0 %v227
    %886 = vmatpush1.msra.mxu0 %v226
    %887 = vmatprep.subr.mxu0 %v243
    %888 = vmatpush1.msra.mxu0 %v242
    %889 = vmatprep.subr.mxu0 %v259
    %890 = vmatpush1.msra.mxu0 %v258
    %891 = vmatprep.subr.mxu0 %v275
    %892 = vmatpush1.msra.mxu0 %v274
    %893 = vmatprep.subr.mxu0 %v291
    %894 = vmatpush1.msra.mxu0 %v290
    %895 = vmatprep.subr.mxu0 %v307
    %896 = vmatpush1.msra.mxu0 %v306
    %897 = vmatprep.subr.mxu0 %v323
    %898 = vmatpush1.msra.mxu0 %v322
    %899 = vmatprep.subr.mxu0 %v339
    %900 = vmatpush1.msra.mxu0 %v338
    %901 = vmatprep.subr.mxu0 %v355
    %902 = vmatpush1.msra.mxu0 %v354
    %903 = vmatprep.subr.mxu0 %v371
    %904 = vmatpush1.msra.mxu0 %v370
    %905 = vmatprep.subr.mxu0 %v387
    %906 = vmatpush1.msra.mxu0 %v386
    %907 = vmatprep.subr.mxu0 %v403
    %908 = vmatpush1.msra.mxu0 %v402
    %909 = vmatprep.subr.mxu0 %v419
    %910 = vmatpush1.msra.mxu0 %v418
    %911 = vmatprep.subr.mxu0 %v435
    %912 = vmatpush1.msra.mxu0 %v434
    %913 = vmatprep.subr.mxu0 %v451
    %914 = vmatpush1.msra.mxu0 %v450
    %915 = vmatprep.subr.mxu0 %v467
    %916 = vmatpush1.msra.mxu0 %v466
    %917 = vmatprep.subr.mxu0 %v606
    %918 = vmatpush1.msra.mxu0 %v603
    %919 = vmatprep.subr.mxu0 0.0
    %920 = vmatpush1.msra.mxu0 0.0
    %921 = vmatprep.subr.mxu0 0.0
    %922 = vmatpush1.msra.mxu0 0.0
    %923 = vmatprep.subr.mxu0 0.0
    %924 = vmatpush1.msra.mxu0 0.0
    %925 = vmatprep.subr.mxu0 0.0
    %926 = vmatpush1.msra.mxu0 0.0
    %927 = vmatprep.mubr.f32.mxu0 %v578
    %928 = vmatmul.mubr.f32.gmra.mrb[0].mxu0 %v40
    %v929 = vpop.f32.mrb[0].mxu0
    %v930 = vadd.f32 %v523, %v929
    %v931 = vpop.f32.mrb[0].mxu0
    %v932 = vadd.f32 %v527, %v931
    %933 = vmatprep.mubr.f32.mxu0 %v581
    %934 = vmatmul.mubr.f32.gmra.mrb[0].mxu0 %v42
    %v935 = vpop.f32.mrb[0].mxu0
    %v936 = vadd.f32 %v523, %v935
    %v937 = vpop.f32.mrb[0].mxu0
    %v938 = vadd.f32 %v527, %v937
    %939 = vdwg.mxu0
    %940 = vmatprep.subr.mxu0 %v53
    %941 = vmatpush1.msra.mxu0 %v52
    %942 = vmatprep.subr.mxu0 %v69
    %943 = vmatpush1.msra.mxu0 %v68
    %944 = vmatprep.subr.mxu0 %v85
    %945 = vmatpush1.msra.mxu0 %v84
    %946 = vmatprep.subr.mxu0 %v101
    %947 = vmatpush1.msra.mxu0 %v100
    %948 = vmatprep.subr.mxu0 %v117
    %949 = vmatpush1.msra.mxu0 %v116
    %950 = vmatprep.subr.mxu0 %v133
    %951 = vmatpush1.msra.mxu0 %v132
    %952 = vmatprep.subr.mxu0 %v149
    %953 = vmatpush1.msra.mxu0 %v148
    %954 = vmatprep.subr.mxu0 %v165
    %955 = vmatpush1.msra.mxu0 %v164
    %956 = vmatprep.subr.mxu0 %v181
    %957 = vmatpush1.msra.mxu0 %v180
    %958 = vmatprep.subr.mxu0 %v197
    %959 = vmatpush1.msra.mxu0 %v196
    %960 = vmatprep.subr.mxu0 %v213
    %961 = vmatpush1.msra.mxu0 %v212
    %962 = vmatprep.subr.mxu0 %v229
    %963 = vmatpush1.msra.mxu0 %v228
    %964 = vmatprep.subr.mxu0 %v245
    %965 = vmatpush1.msra.mxu0 %v244
    %966 = vmatprep.subr.mxu0 %v261
    %967 = vmatpush1.msra.mxu0 %v260
    %968 = vmatprep.subr.mxu0 %v277
    %969 = vmatpush1.msra.mxu0 %v276
    %970 = vmatprep.subr.mxu0 %v293
    %971 = vmatpush1.msra.mxu0 %v292
    %972 = vmatprep.subr.mxu0 %v309
    %973 = vmatpush1.msra.mxu0 %v308
    %974 = vmatprep.subr.mxu0 %v325
    %975 = vmatpush1.msra.mxu0 %v324
    %976 = vmatprep.subr.mxu0 %v341
    %977 = vmatpush1.msra.mxu0 %v340
    %978 = vmatprep.subr.mxu0 %v357
    %979 = vmatpush1.msra.mxu0 %v356
    %980 = vmatprep.subr.mxu0 %v373
    %981 = vmatpush1.msra.mxu0 %v372
    %982 = vmatprep.subr.mxu0 %v389
    %983 = vmatpush1.msra.mxu0 %v388
    %984 = vmatprep.subr.mxu0 %v405
    %985 = vmatpush1.msra.mxu0 %v404
    %986 = vmatprep.subr.mxu0 %v421
    %987 = vmatpush1.msra.mxu0 %v420
    %988 = vmatprep.subr.mxu0 %v437
    %989 = vmatpush1.msra.mxu0 %v436
    %990 = vmatprep.subr.mxu0 %v453
    %991 = vmatpush1.msra.mxu0 %v452
    %992 = vmatprep.subr.mxu0 %v469
    %993 = vmatpush1.msra.mxu0 %v468
    %994 = vmatprep.subr.mxu0 %v612
    %995 = vmatpush1.msra.mxu0 %v609
    %996 = vmatprep.subr.mxu0 0.0
    %997 = vmatpush1.msra.mxu0 0.0
    %998 = vmatprep.subr.mxu0 0.0
    %999 = vmatpush1.msra.mxu0 0.0
    %1000 = vmatprep.subr.mxu0 0.0
    %1001 = vmatpush1.msra.mxu0 0.0
    %1002 = vmatprep.subr.mxu0 0.0
    %1003 = vmatpush1.msra.mxu0 0.0
    %1004 = vmatprep.mubr.f32.mxu0 %v578
    %1005 = vmatmul.mubr.f32.gmra.mrb[0].mxu0 %v40
    %v1006 = vpop.f32.mrb[0].mxu0
    %v1007 = vadd.f32 %v531, %v1006
    %v1008 = vpop.f32.mrb[0].mxu0
    %v1009 = vadd.f32 %v535, %v1008
    %1010 = vmatprep.mubr.f32.mxu0 %v581
    %1011 = vmatmul.mubr.f32.gmra.mrb[0].mxu0 %v42
    %v1012 = vpop.f32.mrb[0].mxu0
    %v1013 = vadd.f32 %v531, %v1012
    %v1014 = vpop.f32.mrb[0].mxu0
    %v1015 = vadd.f32 %v535, %v1014
    %1016 = vdwg.mxu0
    %1017 = vmatprep.subr.mxu0 %v55
    %1018 = vmatpush1.msra.mxu0 %v54
    %1019 = vmatprep.subr.mxu0 %v71
    %1020 = vmatpush1.msra.mxu0 %v70
    %1021 = vmatprep.subr.mxu0 %v87
    %1022 = vmatpush1.msra.mxu0 %v86
    %1023 = vmatprep.subr.mxu0 %v103
    %1024 = vmatpush1.msra.mxu0 %v102
    %1025 = vmatprep.subr.mxu0 %v119
    %1026 = vmatpush1.msra.mxu0 %v118
    %1027 = vmatprep.subr.mxu0 %v135
    %1028 = vmatpush1.msra.mxu0 %v134
    %1029 = vmatprep.subr.mxu0 %v151
    %1030 = vmatpush1.msra.mxu0 %v150
    %1031 = vmatprep.subr.mxu0 %v167
    %1032 = vmatpush1.msra.mxu0 %v166
    %1033 = vmatprep.subr.mxu0 %v183
    %1034 = vmatpush1.msra.mxu0 %v182
    %1035 = vmatprep.subr.mxu0 %v199
    %1036 = vmatpush1.msra.mxu0 %v198
    %1037 = vmatprep.subr.mxu0 %v215
    %1038 = vmatpush1.msra.mxu0 %v214
    %1039 = vmatprep.subr.mxu0 %v231
    %1040 = vmatpush1.msra.mxu0 %v230
    %1041 = vmatprep.subr.mxu0 %v247
    %1042 = vmatpush1.msra.mxu0 %v246
    %1043 = vmatprep.subr.mxu0 %v263
    %1044 = vmatpush1.msra.mxu0 %v262
    %1045 = vmatprep.subr.mxu0 %v279
    %1046 = vmatpush1.msra.mxu0 %v278
    %1047 = vmatprep.subr.mxu0 %v295
    %1048 = vmatpush1.msra.mxu0 %v294
    %1049 = vmatprep.subr.mxu0 %v311
    %1050 = vmatpush1.msra.mxu0 %v310
    %1051 = vmatprep.subr.mxu0 %v327
    %1052 = vmatpush1.msra.mxu0 %v326
    %1053 = vmatprep.subr.mxu0 %v343
    %1054 = vmatpush1.msra.mxu0 %v342
    %1055 = vmatprep.subr.mxu0 %v359
    %1056 = vmatpush1.msra.mxu0 %v358
    %1057 = vmatprep.subr.mxu0 %v375
    %1058 = vmatpush1.msra.mxu0 %v374
    %1059 = vmatprep.subr.mxu0 %v391
    %1060 = vmatpush1.msra.mxu0 %v390
    %1061 = vmatprep.subr.mxu0 %v407
    %1062 = vmatpush1.msra.mxu0 %v406
    %1063 = vmatprep.subr.mxu0 %v423
    %1064 = vmatpush1.msra.mxu0 %v422
    %1065 = vmatprep.subr.mxu0 %v439
    %1066 = vmatpush1.msra.mxu0 %v438
    %1067 = vmatprep.subr.mxu0 %v455
    %1068 = vmatpush1.msra.mxu0 %v454
    %1069 = vmatprep.subr.mxu0 %v471
    %1070 = vmatpush1.msra.mxu0 %v470
    %1071 = vmatprep.subr.mxu0 %v618
    %1072 = vmatpush1.msra.mxu0 %v615
    %1073 = vmatprep.subr.mxu0 0.0
    %1074 = vmatpush1.msra.mxu0 0.0
    %1075 = vmatprep.subr.mxu0 0.0
    %1076 = vmatpush1.msra.mxu0 0.0
    %1077 = vmatprep.subr.mxu0 0.0
    %1078 = vmatpush1.msra.mxu0 0.0
    %1079 = vmatprep.subr.mxu0 0.0
    %1080 = vmatpush1.msra.mxu0 0.0
    %1081 = vmatprep.mubr.f32.mxu0 %v578
    %1082 = vmatmul.mubr.f32.gmra.mrb[0].mxu0 %v40
    %v1083 = vpop.f32.mrb[0].mxu0
    %v1084 = vadd.f32 %v539, %v1083
    %v1085 = vpop.f32.mrb[0].mxu0
    %v1086 = vadd.f32 %v543, %v1085
    %1087 = vmatprep.mubr.f32.mxu0 %v581
    %1088 = vmatmul.mubr.f32.gmra.mrb[0].mxu0 %v42
    %v1089 = vpop.f32.mrb[0].mxu0
    %v1090 = vadd.f32 %v539, %v1089
    %v1091 = vpop.f32.mrb[0].mxu0
    %v1092 = vadd.f32 %v543, %v1091
    %1093 = vdwg.mxu0
    %1094 = vmatprep.subr.mxu0 %v57
    %1095 = vmatpush1.msra.mxu0 %v56
    %1096 = vmatprep.subr.mxu0 %v73
    %1097 = vmatpush1.msra.mxu0 %v72
    %1098 = vmatprep.subr.mxu0 %v89
    %1099 = vmatpush1.msra.mxu0 %v88
    %1100 = vmatprep.subr.mxu0 %v105
    %1101 = vmatpush1.msra.mxu0 %v104
    %1102 = vmatprep.subr.mxu0 %v121
    %1103 = vmatpush1.msra.mxu0 %v120
    %1104 = vmatprep.subr.mxu0 %v137
    %1105 = vmatpush1.msra.mxu0 %v136
    %1106 = vmatprep.subr.mxu0 %v153
    %1107 = vmatpush1.msra.mxu0 %v152
    %1108 = vmatprep.subr.mxu0 %v169
    %1109 = vmatpush1.msra.mxu0 %v168
    %1110 = vmatprep.subr.mxu0 %v185
    %1111 = vmatpush1.msra.mxu0 %v184
    %1112 = vmatprep.subr.mxu0 %v201
    %1113 = vmatpush1.msra.mxu0 %v200
    %1114 = vmatprep.subr.mxu0 %v217
    %1115 = vmatpush1.msra.mxu0 %v216
    %1116 = vmatprep.subr.mxu0 %v233
    %1117 = vmatpush1.msra.mxu0 %v232
    %1118 = vmatprep.subr.mxu0 %v249
    %1119 = vmatpush1.msra.mxu0 %v248
    %1120 = vmatprep.subr.mxu0 %v265
    %1121 = vmatpush1.msra.mxu0 %v264
    %1122 = vmatprep.subr.mxu0 %v281
    %1123 = vmatpush1.msra.mxu0 %v280
    %1124 = vmatprep.subr.mxu0 %v297
    %1125 = vmatpush1.msra.mxu0 %v296
    %1126 = vmatprep.subr.mxu0 %v313
    %1127 = vmatpush1.msra.mxu0 %v312
    %1128 = vmatprep.subr.mxu0 %v329
    %1129 = vmatpush1.msra.mxu0 %v328
    %1130 = vmatprep.subr.mxu0 %v345
    %1131 = vmatpush1.msra.mxu0 %v344
    %1132 = vmatprep.subr.mxu0 %v361
    %1133 = vmatpush1.msra.mxu0 %v360
    %1134 = vmatprep.subr.mxu0 %v377
    %1135 = vmatpush1.msra.mxu0 %v376
    %1136 = vmatprep.subr.mxu0 %v393
    %1137 = vmatpush1.msra.mxu0 %v392
    %1138 = vmatprep.subr.mxu0 %v409
    %1139 = vmatpush1.msra.mxu0 %v408
    %1140 = vmatprep.subr.mxu0 %v425
    %1141 = vmatpush1.msra.mxu0 %v424
    %1142 = vmatprep.subr.mxu0 %v441
    %1143 = vmatpush1.msra.mxu0 %v440
    %1144 = vmatprep.subr.mxu0 %v457
    %1145 = vmatpush1.msra.mxu0 %v456
    %1146 = vmatprep.subr.mxu0 %v473
    %1147 = vmatpush1.msra.mxu0 %v472
    %1148 = vmatprep.subr.mxu0 %v624
    %1149 = vmatpush1.msra.mxu0 %v621
    %1150 = vmatprep.subr.mxu0 0.0
    %1151 = vmatpush1.msra.mxu0 0.0
    %1152 = vmatprep.subr.mxu0 0.0
    %1153 = vmatpush1.msra.mxu0 0.0
    %1154 = vmatprep.subr.mxu0 0.0
    %1155 = vmatpush1.msra.mxu0 0.0
    %1156 = vmatprep.subr.mxu0 0.0
    %1157 = vmatpush1.msra.mxu0 0.0
    %1158 = vmatprep.mubr.f32.mxu0 %v578
    %1159 = vmatmul.mubr.f32.gmra.mrb[0].mxu0 %v40
    %v1160 = vpop.f32.mrb[0].mxu0
    %v1161 = vadd.f32 %v547, %v1160
    %v1162 = vpop.f32.mrb[0].mxu0
    %v1163 = vadd.f32 %v551, %v1162
    %1164 = vmatprep.mubr.f32.mxu0 %v581
    %1165 = vmatmul.mubr.f32.gmra.mrb[0].mxu0 %v42
    %v1166 = vpop.f32.mrb[0].mxu0
    %v1167 = vadd.f32 %v547, %v1166
    %v1168 = vpop.f32.mrb[0].mxu0
    %v1169 = vadd.f32 %v551, %v1168
    %1170 = vdwg.mxu0
    %1171 = vmatprep.subr.mxu0 %v59
    %1172 = vmatpush1.msra.mxu0 %v58
    %1173 = vmatprep.subr.mxu0 %v75
    %1174 = vmatpush1.msra.mxu0 %v74
    %1175 = vmatprep.subr.mxu0 %v91
    %1176 = vmatpush1.msra.mxu0 %v90
    %1177 = vmatprep.subr.mxu0 %v107
    %1178 = vmatpush1.msra.mxu0 %v106
    %1179 = vmatprep.subr.mxu0 %v123
    %1180 = vmatpush1.msra.mxu0 %v122
    %1181 = vmatprep.subr.mxu0 %v139
    %1182 = vmatpush1.msra.mxu0 %v138
    %1183 = vmatprep.subr.mxu0 %v155
    %1184 = vmatpush1.msra.mxu0 %v154
    %1185 = vmatprep.subr.mxu0 %v171
    %1186 = vmatpush1.msra.mxu0 %v170
    %1187 = vmatprep.subr.mxu0 %v187
    %1188 = vmatpush1.msra.mxu0 %v186
    %1189 = vmatprep.subr.mxu0 %v203
    %1190 = vmatpush1.msra.mxu0 %v202
    %1191 = vmatprep.subr.mxu0 %v219
    %1192 = vmatpush1.msra.mxu0 %v218
    %1193 = vmatprep.subr.mxu0 %v235
    %1194 = vmatpush1.msra.mxu0 %v234
    %1195 = vmatprep.subr.mxu0 %v251
    %1196 = vmatpush1.msra.mxu0 %v250
    %1197 = vmatprep.subr.mxu0 %v267
    %1198 = vmatpush1.msra.mxu0 %v266
    %1199 = vmatprep.subr.mxu0 %v283
    %1200 = vmatpush1.msra.mxu0 %v282
    %1201 = vmatprep.subr.mxu0 %v299
    %1202 = vmatpush1.msra.mxu0 %v298
    %1203 = vmatprep.subr.mxu0 %v315
    %1204 = vmatpush1.msra.mxu0 %v314
    %1205 = vmatprep.subr.mxu0 %v331
    %1206 = vmatpush1.msra.mxu0 %v330
    %1207 = vmatprep.subr.mxu0 %v347
    %1208 = vmatpush1.msra.mxu0 %v346
    %1209 = vmatprep.subr.mxu0 %v363
    %1210 = vmatpush1.msra.mxu0 %v362
    %1211 = vmatprep.subr.mxu0 %v379
    %1212 = vmatpush1.msra.mxu0 %v378
    %1213 = vmatprep.subr.mxu0 %v395
    %1214 = vmatpush1.msra.mxu0 %v394
    %1215 = vmatprep.subr.mxu0 %v411
    %1216 = vmatpush1.msra.mxu0 %v410
    %1217 = vmatprep.subr.mxu0 %v427
    %1218 = vmatpush1.msra.mxu0 %v426
    %1219 = vmatprep.subr.mxu0 %v443
    %1220 = vmatpush1.msra.mxu0 %v442
    %1221 = vmatprep.subr.mxu0 %v459
    %1222 = vmatpush1.msra.mxu0 %v458
    %1223 = vmatprep.subr.mxu0 %v475
    %1224 = vmatpush1.msra.mxu0 %v474
    %1225 = vmatprep.subr.mxu0 %v630
    %1226 = vmatpush1.msra.mxu0 %v627
    %1227 = vmatprep.subr.mxu0 0.0
    %1228 = vmatpush1.msra.mxu0 0.0
    %1229 = vmatprep.subr.mxu0 0.0
    %1230 = vmatpush1.msra.mxu0 0.0
    %1231 = vmatprep.subr.mxu0 0.0
    %1232 = vmatpush1.msra.mxu0 0.0
    %1233 = vmatprep.subr.mxu0 0.0
    %1234 = vmatpush1.msra.mxu0 0.0
    %1235 = vmatprep.mubr.f32.mxu0 %v578
    %1236 = vmatmul.mubr.f32.gmra.mrb[0].mxu0 %v40
    %v1237 = vpop.f32.mrb[0].mxu0
    %v1238 = vadd.f32 %v555, %v1237
    %v1239 = vpop.f32.mrb[0].mxu0
    %v1240 = vadd.f32 %v559, %v1239
    %1241 = vmatprep.mubr.f32.mxu0 %v581
    %1242 = vmatmul.mubr.f32.gmra.mrb[0].mxu0 %v42
    %v1243 = vpop.f32.mrb[0].mxu0
    %v1244 = vadd.f32 %v555, %v1243
    %v1245 = vpop.f32.mrb[0].mxu0
    %v1246 = vadd.f32 %v559, %v1245
    %1247 = vdwg.mxu0
    %1248 = vst [vmem:[%s3] sm:$0xff] %v699
    %1249 = vst [vmem:[%s3 + $0x8] sm:$0xff] %v701
    %1250 = vst [vmem:[%s3 + $0x10] sm:$0xff] %v776
    %1251 = vst [vmem:[%s3 + $0x18] sm:$0xff] %v778
    %1252 = vst [vmem:[%s3 + $0x20] sm:$0xff] %v853
    %1253 = vst [vmem:[%s3 + $0x28] sm:$0xff] %v855
    %1254 = vst [vmem:[%s3 + $0x30] sm:$0xff] %v930
    %1255 = vst [vmem:[%s3 + $0x38] sm:$0xff] %v932
    %1256 = vst [vmem:[%s3 + $0x40] sm:$0xff] %v1007
    %1257 = vst [vmem:[%s3 + $0x48] sm:$0xff] %v1009
    %1258 = vst [vmem:[%s3 + $0x50] sm:$0xff] %v1084
    %1259 = vst [vmem:[%s3 + $0x58] sm:$0xff] %v1086
    %1260 = vst [vmem:[%s3 + $0x60] sm:$0xff] %v1161
    %1261 = vst [vmem:[%s3 + $0x68] sm:$0xff] %v1163
    %1262 = vst [vmem:[%s3 + $0x70] sm:$0xff] %v1238
    %1263 = vst [vmem:[%s3 + $0x78] sm:$0xff] %v1240
    %1264 = vst [vmem:[%s3 + $0x80] sm:$0xff] %v705
    %1265 = vst [vmem:[%s3 + $0x88] sm:$0xff] %v707
    %1266 = vst [vmem:[%s3 + $0x90] sm:$0xff] %v782
    %1267 = vst [vmem:[%s3 + $0x98] sm:$0xff] %v784
    %1268 = vst [vmem:[%s3 + $0xa0] sm:$0xff] %v859
    %1269 = vst [vmem:[%s3 + $0xa8] sm:$0xff] %v861
    %1270 = vst [vmem:[%s3 + $0xb0] sm:$0xff] %v936
    %1271 = vst [vmem:[%s3 + $0xb8] sm:$0xff] %v938
    %1272 = vst [vmem:[%s3 + $0xc0] sm:$0xff] %v1013
    %1273 = vst [vmem:[%s3 + $0xc8] sm:$0xff] %v1015
    %1274 = vst [vmem:[%s3 + $0xd0] sm:$0xff] %v1090
    %1275 = vst [vmem:[%s3 + $0xd8] sm:$0xff] %v1092
    %1276 = vst [vmem:[%s3 + $0xe0] sm:$0xff] %v1167
    %1277 = vst [vmem:[%s3 + $0xe8] sm:$0xff] %v1169
    %1278 = vst [vmem:[%s3 + $0xf0] sm:$0xff] %v1244
    %1279 = vst [vmem:[%s3 + $0xf8] sm:$0xff] %v1246
    // Predicated region
    $region22: #{forward.7} parent=1 // pred_check
      _
    $region23: #{forward.7} parent=1 // pred_check_branch
      %1281 = sbr.rel (0) target = $region25
    $region24: #{forward.7} parent=1 // pred_region
      _
    $region25: #{forward.7} parent=1 // pred_fallthru
      _
    // Predicated region
    $region26: #{forward.7} parent=1 // pred_check
      _
    $region27: #{forward.7} parent=1 // pred_check_branch
      %1283 = sbr.rel (0) target = $region29
    $region28: #{forward.7} parent=1 // pred_region
      _
    $region29: #{forward.7} parent=1 // pred_fallthru
      _
    %1284 = vsyncpa [#allocation3], 1
    %1285 = vsyncpa [#allocation5], 1

// kernel: forward.8
$region0: #{forward.8}
  #allocation0 [shape = 'u32[]', space=smem, size = 0x4, offset = 0x4, fixed_abs, tag = 'smem constant byte address 0x4 - core index']
  #allocation1 [shape = 'u32[144,128]{1,0:T(1,128)}', space=vmem, size = 0x12000, scoped, tag = 'internal scratch']
  %s0 = inlined_call_operand.vmem [shape: f32[8,2,2048], index: 0, kind: input, shape index: {}]
  %s1 = inlined_call_operand.hbm [shape: f32[512,2048], index: 1, kind: input, shape index: {}]
  %s2 = inlined_call_operand.vmem [shape: f32[8,2,512], index: 2, kind: output, shape index: {}]
  %s3 = sld [smem:[#allocation0]]
  $region29: #{forward.8} parent=0
    _
  %s5 = ssub.s32 1, %s3
  %s6 = scalar_select 0, %s5, %s3
  $region1: #{forward.8} parent=0
    #allocation2 [shape = 'u8[4194304]{0}', space=vmem, size = 0x400000, scoped, tag = 'input window, operand 1, single buffered']
    #allocation3 [shape = 's32[1]{0}', space=sflag, size = 0x4, scoped, tag = 'scoped memory for forward.8']
    %7 = vsyncpa [#allocation3], 0
    // Predicated region
    $region2: #{forward.8} parent=1 // pred_check
      _
    $region3: #{forward.8} parent=1 // pred_check_branch
      %9 = sbr.rel (0) target = $region5
    $region4: #{forward.8} parent=1 // pred_region
      _
    $region5: #{forward.8} parent=1 // pred_fallthru
      _
    // Predicated region
    $region6: #{forward.8} parent=1 // pred_check
      _
    $region7: #{forward.8} parent=1 // pred_check_branch
      %11 = sbr.rel (0) target = $region9
    $region8: #{forward.8} parent=1 // pred_region
      %s13 = ssub.s32 131072, 131072
      %14 = vsyncadd [#allocation3], %s13
      %s15 = sshll.u32 [#allocation2], 4
      %s16 = int_to_ptr.vmem [resolvable:$true] %s15
      %21 = dma.hbm_to_vmem [thread:$0]  %s1, 131072, %s16, [#allocation3], 2048, 2048, 128
    $region9: #{forward.8} parent=1 // pred_fallthru
      _
    // Predicated region
    $region10: #{forward.8} parent=1 // pred_check
      _
    $region11: #{forward.8} parent=1 // pred_check_branch
      %23 = sbr.rel (0) target = $region13
    $region12: #{forward.8} parent=1 // pred_region
      %24 = dma.done [#allocation3], 131072
    $region13: #{forward.8} parent=1 // pred_fallthru
      _
    loop: start=0, step=1, limit=8
    $region14: #{forward.8} parent=1 // loop_pre_header
      _
    $region15: #{forward.8} parent=1 // loop_header
      %s26 = sphi 0, %s30
      %p27 = scmp.ge.s32.totalorder %s26, 8
      %v31 = vphi 0.0, %v2337
      %v32 = vphi 0.0, %v2335
    $region16: #{forward.8} parent=1 // loop_header_branch
      %29 = sbr.rel (%p27) target = $region20
    $region17: #{forward.8} parent=1 // loop_body
      %s33 = smul.u32 %s26, 16
      %s34 = smul.addr %s33, 2
      %s35 = scalar_lea.vmem %s0, %s34
      %v36 = vld [vmem:[%s35] sm:$0xff]
      %v37 = vld [vmem:[%s35 + $0x8] sm:$0xff]
      %v38 = vld [vmem:[%s35 + $0x10] sm:$0xff]
      %v39 = vld [vmem:[%s35 + $0x18] sm:$0xff]
      %v40 = vld [vmem:[#allocation2] sm:$0xff]
      %v41 = vld [vmem:[#allocation2 + $0x8] sm:$0xff]
      %v42 = vld [vmem:[#allocation2 + $0x10] sm:$0xff]
      %v43 = vld [vmem:[#allocation2 + $0x18] sm:$0xff]
      %v44 = vld [vmem:[#allocation2 + $0x20] sm:$0xff]
      %v45 = vld [vmem:[#allocation2 + $0x28] sm:$0xff]
      %v46 = vld [vmem:[#allocation2 + $0x30] sm:$0xff]
      %v47 = vld [vmem:[#allocation2 + $0x38] sm:$0xff]
      %v48 = vld [vmem:[#allocation2 + $0x40] sm:$0xff]
      %v49 = vld [vmem:[#allocation2 + $0x48] sm:$0xff]
      %v50 = vld [vmem:[#allocation2 + $0x50] sm:$0xff]
      %v51 = vld [vmem:[#allocation2 + $0x58] sm:$0xff]
      %v52 = vld [vmem:[#allocation2 + $0x60] sm:$0xff]
      %v53 = vld [vmem:[#allocation2 + $0x68] sm:$0xff]
      %v54 = vld [vmem:[#allocation2 + $0x70] sm:$0xff]
      %v55 = vld [vmem:[#allocation2 + $0x78] sm:$0xff]
      %v56 = vld [vmem:[#allocation2 + $0x80] sm:$0xff]
      %v57 = vld [vmem:[#allocation2 + $0x88] sm:$0xff]
      %v58 = vld [vmem:[#allocation2 + $0x90] sm:$0xff]
      %v59 = vld [vmem:[#allocation2 + $0x98] sm:$0xff]
      %v60 = vld [vmem:[#allocation2 + $0xa0] sm:$0xff]
      %v61 = vld [vmem:[#allocation2 + $0xa8] sm:$0xff]
      %v62 = vld [vmem:[#allocation2 + $0xb0] sm:$0xff]
      %v63 = vld [vmem:[#allocation2 + $0xb8] sm:$0xff]
      %v64 = vld [vmem:[#allocation2 + $0xc0] sm:$0xff]
      %v65 = vld [vmem:[#allocation2 + $0xc8] sm:$0xff]
      %v66 = vld [vmem:[#allocation2 + $0xd0] sm:$0xff]
      %v67 = vld [vmem:[#allocation2 + $0xd8] sm:$0xff]
      %v68 = vld [vmem:[#allocation2 + $0xe0] sm:$0xff]
      %v69 = vld [vmem:[#allocation2 + $0xe8] sm:$0xff]
      %v70 = vld [vmem:[#allocation2 + $0xf0] sm:$0xff]
      %v71 = vld [vmem:[#allocation2 + $0xf8] sm:$0xff]
      %v72 = vld [vmem:[#allocation2 + $0x100] sm:$0xff]
      %v73 = vld [vmem:[#allocation2 + $0x108] sm:$0xff]
      %v74 = vld [vmem:[#allocation2 + $0x110] sm:$0xff]
      %v75 = vld [vmem:[#allocation2 + $0x118] sm:$0xff]
      %v76 = vld [vmem:[#allocation2 + $0x120] sm:$0xff]
      %v77 = vld [vmem:[#allocation2 + $0x128] sm:$0xff]
      %v78 = vld [vmem:[#allocation2 + $0x130] sm:$0xff]
      %v79 = vld [vmem:[#allocation2 + $0x138] sm:$0xff]
      %v80 = vld [vmem:[#allocation2 + $0x140] sm:$0xff]
      %v81 = vld [vmem:[#allocation2 + $0x148] sm:$0xff]
      %v82 = vld [vmem:[#allocation2 + $0x150] sm:$0xff]
      %v83 = vld [vmem:[#allocation2 + $0x158] sm:$0xff]
      %v84 = vld [vmem:[#allocation2 + $0x160] sm:$0xff]
      %v85 = vld [vmem:[#allocation2 + $0x168] sm:$0xff]
      %v86 = vld [vmem:[#allocation2 + $0x170] sm:$0xff]
      %v87 = vld [vmem:[#allocation2 + $0x178] sm:$0xff]
      %v88 = vld [vmem:[#allocation2 + $0x180] sm:$0xff]
      %v89 = vld [vmem:[#allocation2 + $0x188] sm:$0xff]
      %v90 = vld [vmem:[#allocation2 + $0x190] sm:$0xff]
      %v91 = vld [vmem:[#allocation2 + $0x198] sm:$0xff]
      %v92 = vld [vmem:[#allocation2 + $0x1a0] sm:$0xff]
      %v93 = vld [vmem:[#allocation2 + $0x1a8] sm:$0xff]
      %v94 = vld [vmem:[#allocation2 + $0x1b0] sm:$0xff]
      %v95 = vld [vmem:[#allocation2 + $0x1b8] sm:$0xff]
      %v96 = vld [vmem:[#allocation2 + $0x1c0] sm:$0xff]
      %v97 = vld [vmem:[#allocation2 + $0x1c8] sm:$0xff]
      %v98 = vld [vmem:[#allocation2 + $0x1d0] sm:$0xff]
      %v99 = vld [vmem:[#allocation2 + $0x1d8] sm:$0xff]
      %v100 = vld [vmem:[#allocation2 + $0x1e0] sm:$0xff]
      %v101 = vld [vmem:[#allocation2 + $0x1e8] sm:$0xff]
      %v102 = vld [vmem:[#allocation2 + $0x1f0] sm:$0xff]
      %v103 = vld [vmem:[#allocation2 + $0x1f8] sm:$0xff]
      %v104 = vld [vmem:[#allocation2 + $0x200] sm:$0xff]
      %v105 = vld [vmem:[#allocation2 + $0x208] sm:$0xff]
      %v106 = vld [vmem:[#allocation2 + $0x210] sm:$0xff]
      %v107 = vld [vmem:[#allocation2 + $0x218] sm:$0xff]
      %v108 = vld [vmem:[#allocation2 + $0x220] sm:$0xff]
      %v109 = vld [vmem:[#allocation2 + $0x228] sm:$0xff]
      %v110 = vld [vmem:[#allocation2 + $0x230] sm:$0xff]
      %v111 = vld [vmem:[#allocation2 + $0x238] sm:$0xff]
      %v112 = vld [vmem:[#allocation2 + $0x240] sm:$0xff]
      %v113 = vld [vmem:[#allocation2 + $0x248] sm:$0xff]
      %v114 = vld [vmem:[#allocation2 + $0x250] sm:$0xff]
      %v115 = vld [vmem:[#allocation2 + $0x258] sm:$0xff]
      %v116 = vld [vmem:[#allocation2 + $0x260] sm:$0xff]
      %v117 = vld [vmem:[#allocation2 + $0x268] sm:$0xff]
      %v118 = vld [vmem:[#allocation2 + $0x270] sm:$0xff]
      %v119 = vld [vmem:[#allocation2 + $0x278] sm:$0xff]
      %v120 = vld [vmem:[#allocation2 + $0x280] sm:$0xff]
      %v121 = vld [vmem:[#allocation2 + $0x288] sm:$0xff]
      %v122 = vld [vmem:[#allocation2 + $0x290] sm:$0xff]
      %v123 = vld [vmem:[#allocation2 + $0x298] sm:$0xff]
      %v124 = vld [vmem:[#allocation2 + $0x2a0] sm:$0xff]
      %v125 = vld [vmem:[#allocation2 + $0x2a8] sm:$0xff]
      %v126 = vld [vmem:[#allocation2 + $0x2b0] sm:$0xff]
      %v127 = vld [vmem:[#allocation2 + $0x2b8] sm:$0xff]
      %v128 = vld [vmem:[#allocation2 + $0x2c0] sm:$0xff]
      %v129 = vld [vmem:[#allocation2 + $0x2c8] sm:$0xff]
      %v130 = vld [vmem:[#allocation2 + $0x2d0] sm:$0xff]
      %v131 = vld [vmem:[#allocation2 + $0x2d8] sm:$0xff]
      %v132 = vld [vmem:[#allocation2 + $0x2e0] sm:$0xff]
      %v133 = vld [vmem:[#allocation2 + $0x2e8] sm:$0xff]
      %v134 = vld [vmem:[#allocation2 + $0x2f0] sm:$0xff]
      %v135 = vld [vmem:[#allocation2 + $0x2f8] sm:$0xff]
      %v136 = vld [vmem:[#allocation2 + $0x300] sm:$0xff]
      %v137 = vld [vmem:[#allocation2 + $0x308] sm:$0xff]
      %v138 = vld [vmem:[#allocation2 + $0x310] sm:$0xff]
      %v139 = vld [vmem:[#allocation2 + $0x318] sm:$0xff]
      %v140 = vld [vmem:[#allocation2 + $0x320] sm:$0xff]
      %v141 = vld [vmem:[#allocation2 + $0x328] sm:$0xff]
      %v142 = vld [vmem:[#allocation2 + $0x330] sm:$0xff]
      %v143 = vld [vmem:[#allocation2 + $0x338] sm:$0xff]
      %v144 = vld [vmem:[#allocation2 + $0x340] sm:$0xff]
      %v145 = vld [vmem:[#allocation2 + $0x348] sm:$0xff]
      %v146 = vld [vmem:[#allocation2 + $0x350] sm:$0xff]
      %v147 = vld [vmem:[#allocation2 + $0x358] sm:$0xff]
      %v148 = vld [vmem:[#allocation2 + $0x360] sm:$0xff]
      %v149 = vld [vmem:[#allocation2 + $0x368] sm:$0xff]
      %v150 = vld [vmem:[#allocation2 + $0x370] sm:$0xff]
      %v151 = vld [vmem:[#allocation2 + $0x378] sm:$0xff]
      %v152 = vld [vmem:[#allocation2 + $0x380] sm:$0xff]
      %v153 = vld [vmem:[#allocation2 + $0x388] sm:$0xff]
      %v154 = vld [vmem:[#allocation2 + $0x390] sm:$0xff]
      %v155 = vld [vmem:[#allocation2 + $0x398] sm:$0xff]
      %v156 = vld [vmem:[#allocation2 + $0x3a0] sm:$0xff]
      %v157 = vld [vmem:[#allocation2 + $0x3a8] sm:$0xff]
      %v158 = vld [vmem:[#allocation2 + $0x3b0] sm:$0xff]
      %v159 = vld [vmem:[#allocation2 + $0x3b8] sm:$0xff]
      %v160 = vld [vmem:[#allocation2 + $0x3c0] sm:$0xff]
      %v161 = vld [vmem:[#allocation2 + $0x3c8] sm:$0xff]
      %v162 = vld [vmem:[#allocation2 + $0x3d0] sm:$0xff]
      %v163 = vld [vmem:[#allocation2 + $0x3d8] sm:$0xff]
      %v164 = vld [vmem:[#allocation2 + $0x3e0] sm:$0xff]
      %v165 = vld [vmem:[#allocation2 + $0x3e8] sm:$0xff]
      %v166 = vld [vmem:[#allocation2 + $0x3f0] sm:$0xff]
      %v167 = vld [vmem:[#allocation2 + $0x3f8] sm:$0xff]
      %v168 = vld [vmem:[#allocation2 + $0x400] sm:$0xff]
      %v169 = vld [vmem:[#allocation2 + $0x408] sm:$0xff]
      %v170 = vld [vmem:[#allocation2 + $0x410] sm:$0xff]
      %v171 = vld [vmem:[#allocation2 + $0x418] sm:$0xff]
      %v172 = vld [vmem:[#allocation2 + $0x420] sm:$0xff]
      %v173 = vld [vmem:[#allocation2 + $0x428] sm:$0xff]
      %v174 = vld [vmem:[#allocation2 + $0x430] sm:$0xff]
      %v175 = vld [vmem:[#allocation2 + $0x438] sm:$0xff]
      %v176 = vld [vmem:[#allocation2 + $0x440] sm:$0xff]
      %v177 = vld [vmem:[#allocation2 + $0x448] sm:$0xff]
      %v178 = vld [vmem:[#allocation2 + $0x450] sm:$0xff]
      %v179 = vld [vmem:[#allocation2 + $0x458] sm:$0xff]
      %v180 = vld [vmem:[#allocation2 + $0x460] sm:$0xff]
      %v181 = vld [vmem:[#allocation2 + $0x468] sm:$0xff]
      %v182 = vld [vmem:[#allocation2 + $0x470] sm:$0xff]
      %v183 = vld [vmem:[#allocation2 + $0x478] sm:$0xff]
      %v184 = vld [vmem:[#allocation2 + $0x480] sm:$0xff]
      %v185 = vld [vmem:[#allocation2 + $0x488] sm:$0xff]
      %v186 = vld [vmem:[#allocation2 + $0x490] sm:$0xff]
      %v187 = vld [vmem:[#allocation2 + $0x498] sm:$0xff]
      %v188 = vld [vmem:[#allocation2 + $0x4a0] sm:$0xff]
      %v189 = vld [vmem:[#allocation2 + $0x4a8] sm:$0xff]
      %v190 = vld [vmem:[#allocation2 + $0x4b0] sm:$0xff]
      %v191 = vld [vmem:[#allocation2 + $0x4b8] sm:$0xff]
      %v192 = vld [vmem:[#allocation2 + $0x4c0] sm:$0xff]
      %v193 = vld [vmem:[#allocation2 + $0x4c8] sm:$0xff]
      %v194 = vld [vmem:[#allocation2 + $0x4d0] sm:$0xff]
      %v195 = vld [vmem:[#allocation2 + $0x4d8] sm:$0xff]
      %v196 = vld [vmem:[#allocation2 + $0x4e0] sm:$0xff]
      %v197 = vld [vmem:[#allocation2 + $0x4e8] sm:$0xff]
      %v198 = vld [vmem:[#allocation2 + $0x4f0] sm:$0xff]
      %v199 = vld [vmem:[#allocation2 + $0x4f8] sm:$0xff]
      %v200 = vld [vmem:[#allocation2 + $0x500] sm:$0xff]
      %v201 = vld [vmem:[#allocation2 + $0x508] sm:$0xff]
      %v202 = vld [vmem:[#allocation2 + $0x510] sm:$0xff]
      %v203 = vld [vmem:[#allocation2 + $0x518] sm:$0xff]
      %v204 = vld [vmem:[#allocation2 + $0x520] sm:$0xff]
      %v205 = vld [vmem:[#allocation2 + $0x528] sm:$0xff]
      %v206 = vld [vmem:[#allocation2 + $0x530] sm:$0xff]
      %v207 = vld [vmem:[#allocation2 + $0x538] sm:$0xff]
      %v208 = vld [vmem:[#allocation2 + $0x540] sm:$0xff]
      %v209 = vld [vmem:[#allocation2 + $0x548] sm:$0xff]
      %v210 = vld [vmem:[#allocation2 + $0x550] sm:$0xff]
      %v211 = vld [vmem:[#allocation2 + $0x558] sm:$0xff]
      %v212 = vld [vmem:[#allocation2 + $0x560] sm:$0xff]
      %v213 = vld [vmem:[#allocation2 + $0x568] sm:$0xff]
      %v214 = vld [vmem:[#allocation2 + $0x570] sm:$0xff]
      %v215 = vld [vmem:[#allocation2 + $0x578] sm:$0xff]
      %v216 = vld [vmem:[#allocation2 + $0x580] sm:$0xff]
      %v217 = vld [vmem:[#allocation2 + $0x588] sm:$0xff]
      %v218 = vld [vmem:[#allocation2 + $0x590] sm:$0xff]
      %v219 = vld [vmem:[#allocation2 + $0x598] sm:$0xff]
      %v220 = vld [vmem:[#allocation2 + $0x5a0] sm:$0xff]
      %v221 = vld [vmem:[#allocation2 + $0x5a8] sm:$0xff]
      %v222 = vld [vmem:[#allocation2 + $0x5b0] sm:$0xff]
      %v223 = vld [vmem:[#allocation2 + $0x5b8] sm:$0xff]
      %v224 = vld [vmem:[#allocation2 + $0x5c0] sm:$0xff]
      %v225 = vld [vmem:[#allocation2 + $0x5c8] sm:$0xff]
      %v226 = vld [vmem:[#allocation2 + $0x5d0] sm:$0xff]
      %v227 = vld [vmem:[#allocation2 + $0x5d8] sm:$0xff]
      %v228 = vld [vmem:[#allocation2 + $0x5e0] sm:$0xff]
      %v229 = vld [vmem:[#allocation2 + $0x5e8] sm:$0xff]
      %v230 = vld [vmem:[#allocation2 + $0x5f0] sm:$0xff]
      %v231 = vld [vmem:[#allocation2 + $0x5f8] sm:$0xff]
      %v232 = vld [vmem:[#allocation2 + $0x600] sm:$0xff]
      %v233 = vld [vmem:[#allocation2 + $0x608] sm:$0xff]
      %v234 = vld [vmem:[#allocation2 + $0x610] sm:$0xff]
      %v235 = vld [vmem:[#allocation2 + $0x618] sm:$0xff]
      %v236 = vld [vmem:[#allocation2 + $0x620] sm:$0xff]
      %v237 = vld [vmem:[#allocation2 + $0x628] sm:$0xff]
      %v238 = vld [vmem:[#allocation2 + $0x630] sm:$0xff]
      %v239 = vld [vmem:[#allocation2 + $0x638] sm:$0xff]
      %v240 = vld [vmem:[#allocation2 + $0x640] sm:$0xff]
      %v241 = vld [vmem:[#allocation2 + $0x648] sm:$0xff]
      %v242 = vld [vmem:[#allocation2 + $0x650] sm:$0xff]
      %v243 = vld [vmem:[#allocation2 + $0x658] sm:$0xff]
      %v244 = vld [vmem:[#allocation2 + $0x660] sm:$0xff]
      %v245 = vld [vmem:[#allocation2 + $0x668] sm:$0xff]
      %v246 = vld [vmem:[#allocation2 + $0x670] sm:$0xff]
      %v247 = vld [vmem:[#allocation2 + $0x678] sm:$0xff]
      %v248 = vld [vmem:[#allocation2 + $0x680] sm:$0xff]
      %v249 = vld [vmem:[#allocation2 + $0x688] sm:$0xff]
      %v250 = vld [vmem:[#allocation2 + $0x690] sm:$0xff]
      %v251 = vld [vmem:[#allocation2 + $0x698] sm:$0xff]
      %v252 = vld [vmem:[#allocation2 + $0x6a0] sm:$0xff]
      %v253 = vld [vmem:[#allocation2 + $0x6a8] sm:$0xff]
      %v254 = vld [vmem:[#allocation2 + $0x6b0] sm:$0xff]
      %v255 = vld [vmem:[#allocation2 + $0x6b8] sm:$0xff]
      %v256 = vld [vmem:[#allocation2 + $0x6c0] sm:$0xff]
      %v257 = vld [vmem:[#allocation2 + $0x6c8] sm:$0xff]
      %v258 = vld [vmem:[#allocation2 + $0x6d0] sm:$0xff]
      %v259 = vld [vmem:[#allocation2 + $0x6d8] sm:$0xff]
      %v260 = vld [vmem:[#allocation2 + $0x6e0] sm:$0xff]
      %v261 = vld [vmem:[#allocation2 + $0x6e8] sm:$0xff]
      %v262 = vld [vmem:[#allocation2 + $0x6f0] sm:$0xff]
      %v263 = vld [vmem:[#allocation2 + $0x6f8] sm:$0xff]
      %v264 = vld [vmem:[#allocation2 + $0x700] sm:$0xff]
      %v265 = vld [vmem:[#allocation2 + $0x708] sm:$0xff]
      %v266 = vld [vmem:[#allocation2 + $0x710] sm:$0xff]
      %v267 = vld [vmem:[#allocation2 + $0x718] sm:$0xff]
      %v268 = vld [vmem:[#allocation2 + $0x720] sm:$0xff]
      %v269 = vld [vmem:[#allocation2 + $0x728] sm:$0xff]
      %v270 = vld [vmem:[#allocation2 + $0x730] sm:$0xff]
      %v271 = vld [vmem:[#allocation2 + $0x738] sm:$0xff]
      %v272 = vld [vmem:[#allocation2 + $0x740] sm:$0xff]
      %v273 = vld [vmem:[#allocation2 + $0x748] sm:$0xff]
      %v274 = vld [vmem:[#allocation2 + $0x750] sm:$0xff]
      %v275 = vld [vmem:[#allocation2 + $0x758] sm:$0xff]
      %v276 = vld [vmem:[#allocation2 + $0x760] sm:$0xff]
      %v277 = vld [vmem:[#allocation2 + $0x768] sm:$0xff]
      %v278 = vld [vmem:[#allocation2 + $0x770] sm:$0xff]
      %v279 = vld [vmem:[#allocation2 + $0x778] sm:$0xff]
      %v280 = vld [vmem:[#allocation2 + $0x780] sm:$0xff]
      %v281 = vld [vmem:[#allocation2 + $0x788] sm:$0xff]
      %v282 = vld [vmem:[#allocation2 + $0x790] sm:$0xff]
      %v283 = vld [vmem:[#allocation2 + $0x798] sm:$0xff]
      %v284 = vld [vmem:[#allocation2 + $0x7a0] sm:$0xff]
      %v285 = vld [vmem:[#allocation2 + $0x7a8] sm:$0xff]
      %v286 = vld [vmem:[#allocation2 + $0x7b0] sm:$0xff]
      %v287 = vld [vmem:[#allocation2 + $0x7b8] sm:$0xff]
      %v288 = vld [vmem:[#allocation2 + $0x7c0] sm:$0xff]
      %v289 = vld [vmem:[#allocation2 + $0x7c8] sm:$0xff]
      %v290 = vld [vmem:[#allocation2 + $0x7d0] sm:$0xff]
      %v291 = vld [vmem:[#allocation2 + $0x7d8] sm:$0xff]
      %v292 = vld [vmem:[#allocation2 + $0x7e0] sm:$0xff]
      %v293 = vld [vmem:[#allocation2 + $0x7e8] sm:$0xff]
      %v294 = vld [vmem:[#allocation2 + $0x7f0] sm:$0xff]
      %v295 = vld [vmem:[#allocation2 + $0x7f8] sm:$0xff]
      %v296 = vld [vmem:[#allocation2 + $0x800] sm:$0xff]
      %v297 = vld [vmem:[#allocation2 + $0x808] sm:$0xff]
      %v298 = vld [vmem:[#allocation2 + $0x810] sm:$0xff]
      %v299 = vld [vmem:[#allocation2 + $0x818] sm:$0xff]
      %v300 = vld [vmem:[#allocation2 + $0x820] sm:$0xff]
      %v301 = vld [vmem:[#allocation2 + $0x828] sm:$0xff]
      %v302 = vld [vmem:[#allocation2 + $0x830] sm:$0xff]
      %v303 = vld [vmem:[#allocation2 + $0x838] sm:$0xff]
      %v304 = vld [vmem:[#allocation2 + $0x840] sm:$0xff]
      %v305 = vld [vmem:[#allocation2 + $0x848] sm:$0xff]
      %v306 = vld [vmem:[#allocation2 + $0x850] sm:$0xff]
      %v307 = vld [vmem:[#allocation2 + $0x858] sm:$0xff]
      %v308 = vld [vmem:[#allocation2 + $0x860] sm:$0xff]
      %v309 = vld [vmem:[#allocation2 + $0x868] sm:$0xff]
      %v310 = vld [vmem:[#allocation2 + $0x870] sm:$0xff]
      %v311 = vld [vmem:[#allocation2 + $0x878] sm:$0xff]
      %v312 = vld [vmem:[#allocation2 + $0x880] sm:$0xff]
      %v313 = vld [vmem:[#allocation2 + $0x888] sm:$0xff]
      %v314 = vld [vmem:[#allocation2 + $0x890] sm:$0xff]
      %v315 = vld [vmem:[#allocation2 + $0x898] sm:$0xff]
      %v316 = vld [vmem:[#allocation2 + $0x8a0] sm:$0xff]
      %v317 = vld [vmem:[#allocation2 + $0x8a8] sm:$0xff]
      %v318 = vld [vmem:[#allocation2 + $0x8b0] sm:$0xff]
      %v319 = vld [vmem:[#allocation2 + $0x8b8] sm:$0xff]
      %v320 = vld [vmem:[#allocation2 + $0x8c0] sm:$0xff]
      %v321 = vld [vmem:[#allocation2 + $0x8c8] sm:$0xff]
      %v322 = vld [vmem:[#allocation2 + $0x8d0] sm:$0xff]
      %v323 = vld [vmem:[#allocation2 + $0x8d8] sm:$0xff]
      %v324 = vld [vmem:[#allocation2 + $0x8e0] sm:$0xff]
      %v325 = vld [vmem:[#allocation2 + $0x8e8] sm:$0xff]
      %v326 = vld [vmem:[#allocation2 + $0x8f0] sm:$0xff]
      %v327 = vld [vmem:[#allocation2 + $0x8f8] sm:$0xff]
      %v328 = vld [vmem:[#allocation2 + $0x900] sm:$0xff]
      %v329 = vld [vmem:[#allocation2 + $0x908] sm:$0xff]
      %v330 = vld [vmem:[#allocation2 + $0x910] sm:$0xff]
      %v331 = vld [vmem:[#allocation2 + $0x918] sm:$0xff]
      %v332 = vld [vmem:[#allocation2 + $0x920] sm:$0xff]
      %v333 = vld [vmem:[#allocation2 + $0x928] sm:$0xff]
      %v334 = vld [vmem:[#allocation2 + $0x930] sm:$0xff]
      %v335 = vld [vmem:[#allocation2 + $0x938] sm:$0xff]
      %v336 = vld [vmem:[#allocation2 + $0x940] sm:$0xff]
      %v337 = vld [vmem:[#allocation2 + $0x948] sm:$0xff]
      %v338 = vld [vmem:[#allocation2 + $0x950] sm:$0xff]
      %v339 = vld [vmem:[#allocation2 + $0x958] sm:$0xff]
      %v340 = vld [vmem:[#allocation2 + $0x960] sm:$0xff]
      %v341 = vld [vmem:[#allocation2 + $0x968] sm:$0xff]
      %v342 = vld [vmem:[#allocation2 + $0x970] sm:$0xff]
      %v343 = vld [vmem:[#allocation2 + $0x978] sm:$0xff]
      %v344 = vld [vmem:[#allocation2 + $0x980] sm:$0xff]
      %v345 = vld [vmem:[#allocation2 + $0x988] sm:$0xff]
      %v346 = vld [vmem:[#allocation2 + $0x990] sm:$0xff]
      %v347 = vld [vmem:[#allocation2 + $0x998] sm:$0xff]
      %v348 = vld [vmem:[#allocation2 + $0x9a0] sm:$0xff]
      %v349 = vld [vmem:[#allocation2 + $0x9a8] sm:$0xff]
      %v350 = vld [vmem:[#allocation2 + $0x9b0] sm:$0xff]
      %v351 = vld [vmem:[#allocation2 + $0x9b8] sm:$0xff]
      %v352 = vld [vmem:[#allocation2 + $0x9c0] sm:$0xff]
      %v353 = vld [vmem:[#allocation2 + $0x9c8] sm:$0xff]
      %v354 = vld [vmem:[#allocation2 + $0x9d0] sm:$0xff]
      %v355 = vld [vmem:[#allocation2 + $0x9d8] sm:$0xff]
      %v356 = vld [vmem:[#allocation2 + $0x9e0] sm:$0xff]
      %v357 = vld [vmem:[#allocation2 + $0x9e8] sm:$0xff]
      %v358 = vld [vmem:[#allocation2 + $0x9f0] sm:$0xff]
      %v359 = vld [vmem:[#allocation2 + $0x9f8] sm:$0xff]
      %v360 = vld [vmem:[#allocation2 + $0xa00] sm:$0xff]
      %v361 = vld [vmem:[#allocation2 + $0xa08] sm:$0xff]
      %v362 = vld [vmem:[#allocation2 + $0xa10] sm:$0xff]
      %v363 = vld [vmem:[#allocation2 + $0xa18] sm:$0xff]
      %v364 = vld [vmem:[#allocation2 + $0xa20] sm:$0xff]
      %v365 = vld [vmem:[#allocation2 + $0xa28] sm:$0xff]
      %v366 = vld [vmem:[#allocation2 + $0xa30] sm:$0xff]
      %v367 = vld [vmem:[#allocation2 + $0xa38] sm:$0xff]
      %v368 = vld [vmem:[#allocation2 + $0xa40] sm:$0xff]
      %v369 = vld [vmem:[#allocation2 + $0xa48] sm:$0xff]
      %v370 = vld [vmem:[#allocation2 + $0xa50] sm:$0xff]
      %v371 = vld [vmem:[#allocation2 + $0xa58] sm:$0xff]
      %v372 = vld [vmem:[#allocation2 + $0xa60] sm:$0xff]
      %v373 = vld [vmem:[#allocation2 + $0xa68] sm:$0xff]
      %v374 = vld [vmem:[#allocation2 + $0xa70] sm:$0xff]
      %v375 = vld [vmem:[#allocation2 + $0xa78] sm:$0xff]
      %v376 = vld [vmem:[#allocation2 + $0xa80] sm:$0xff]
      %v377 = vld [vmem:[#allocation2 + $0xa88] sm:$0xff]
      %v378 = vld [vmem:[#allocation2 + $0xa90] sm:$0xff]
      %v379 = vld [vmem:[#allocation2 + $0xa98] sm:$0xff]
      %v380 = vld [vmem:[#allocation2 + $0xaa0] sm:$0xff]
      %v381 = vld [vmem:[#allocation2 + $0xaa8] sm:$0xff]
      %v382 = vld [vmem:[#allocation2 + $0xab0] sm:$0xff]
      %v383 = vld [vmem:[#allocation2 + $0xab8] sm:$0xff]
      %v384 = vld [vmem:[#allocation2 + $0xac0] sm:$0xff]
      %v385 = vld [vmem:[#allocation2 + $0xac8] sm:$0xff]
      %v386 = vld [vmem:[#allocation2 + $0xad0] sm:$0xff]
      %v387 = vld [vmem:[#allocation2 + $0xad8] sm:$0xff]
      %v388 = vld [vmem:[#allocation2 + $0xae0] sm:$0xff]
      %v389 = vld [vmem:[#allocation2 + $0xae8] sm:$0xff]
      %v390 = vld [vmem:[#allocation2 + $0xaf0] sm:$0xff]
      %v391 = vld [vmem:[#allocation2 + $0xaf8] sm:$0xff]
      %v392 = vld [vmem:[#allocation2 + $0xb00] sm:$0xff]
      %v393 = vld [vmem:[#allocation2 + $0xb08] sm:$0xff]
      %v394 = vld [vmem:[#allocation2 + $0xb10] sm:$0xff]
      %v395 = vld [vmem:[#allocation2 + $0xb18] sm:$0xff]
      %v396 = vld [vmem:[#allocation2 + $0xb20] sm:$0xff]
      %v397 = vld [vmem:[#allocation2 + $0xb28] sm:$0xff]
      %v398 = vld [vmem:[#allocation2 + $0xb30] sm:$0xff]
      %v399 = vld [vmem:[#allocation2 + $0xb38] sm:$0xff]
      %v400 = vld [vmem:[#allocation2 + $0xb40] sm:$0xff]
      %v401 = vld [vmem:[#allocation2 + $0xb48] sm:$0xff]
      %v402 = vld [vmem:[#allocation2 + $0xb50] sm:$0xff]
      %v403 = vld [vmem:[#allocation2 + $0xb58] sm:$0xff]
      %v404 = vld [vmem:[#allocation2 + $0xb60] sm:$0xff]
      %v405 = vld [vmem:[#allocation2 + $0xb68] sm:$0xff]
      %v406 = vld [vmem:[#allocation2 + $0xb70] sm:$0xff]
      %v407 = vld [vmem:[#allocation2 + $0xb78] sm:$0xff]
      %v408 = vld [vmem:[#allocation2 + $0xb80] sm:$0xff]
      %v409 = vld [vmem:[#allocation2 + $0xb88] sm:$0xff]
      %v410 = vld [vmem:[#allocation2 + $0xb90] sm:$0xff]
      %v411 = vld [vmem:[#allocation2 + $0xb98] sm:$0xff]
      %v412 = vld [vmem:[#allocation2 + $0xba0] sm:$0xff]
      %v413 = vld [vmem:[#allocation2 + $0xba8] sm:$0xff]
      %v414 = vld [vmem:[#allocation2 + $0xbb0] sm:$0xff]
      %v415 = vld [vmem:[#allocation2 + $0xbb8] sm:$0xff]
      %v416 = vld [vmem:[#allocation2 + $0xbc0] sm:$0xff]
      %v417 = vld [vmem:[#allocation2 + $0xbc8] sm:$0xff]
      %v418 = vld [vmem:[#allocation2 + $0xbd0] sm:$0xff]
      %v419 = vld [vmem:[#allocation2 + $0xbd8] sm:$0xff]
      %v420 = vld [vmem:[#allocation2 + $0xbe0] sm:$0xff]
      %v421 = vld [vmem:[#allocation2 + $0xbe8] sm:$0xff]
      %v422 = vld [vmem:[#allocation2 + $0xbf0] sm:$0xff]
      %v423 = vld [vmem:[#allocation2 + $0xbf8] sm:$0xff]
      %v424 = vld [vmem:[#allocation2 + $0xc00] sm:$0xff]
      %v425 = vld [vmem:[#allocation2 + $0xc08] sm:$0xff]
      %v426 = vld [vmem:[#allocation2 + $0xc10] sm:$0xff]
      %v427 = vld [vmem:[#allocation2 + $0xc18] sm:$0xff]
      %v428 = vld [vmem:[#allocation2 + $0xc20] sm:$0xff]
      %v429 = vld [vmem:[#allocation2 + $0xc28] sm:$0xff]
      %v430 = vld [vmem:[#allocation2 + $0xc30] sm:$0xff]
      %v431 = vld [vmem:[#allocation2 + $0xc38] sm:$0xff]
      %v432 = vld [vmem:[#allocation2 + $0xc40] sm:$0xff]
      %v433 = vld [vmem:[#allocation2 + $0xc48] sm:$0xff]
      %v434 = vld [vmem:[#allocation2 + $0xc50] sm:$0xff]
      %v435 = vld [vmem:[#allocation2 + $0xc58] sm:$0xff]
      %v436 = vld [vmem:[#allocation2 + $0xc60] sm:$0xff]
      %v437 = vld [vmem:[#allocation2 + $0xc68] sm:$0xff]
      %v438 = vld [vmem:[#allocation2 + $0xc70] sm:$0xff]
      %v439 = vld [vmem:[#allocation2 + $0xc78] sm:$0xff]
      %v440 = vld [vmem:[#allocation2 + $0xc80] sm:$0xff]
      %v441 = vld [vmem:[#allocation2 + $0xc88] sm:$0xff]
      %v442 = vld [vmem:[#allocation2 + $0xc90] sm:$0xff]
      %v443 = vld [vmem:[#allocation2 + $0xc98] sm:$0xff]
      %v444 = vld [vmem:[#allocation2 + $0xca0] sm:$0xff]
      %v445 = vld [vmem:[#allocation2 + $0xca8] sm:$0xff]
      %v446 = vld [vmem:[#allocation2 + $0xcb0] sm:$0xff]
      %v447 = vld [vmem:[#allocation2 + $0xcb8] sm:$0xff]
      %v448 = vld [vmem:[#allocation2 + $0xcc0] sm:$0xff]
      %v449 = vld [vmem:[#allocation2 + $0xcc8] sm:$0xff]
      %v450 = vld [vmem:[#allocation2 + $0xcd0] sm:$0xff]
      %v451 = vld [vmem:[#allocation2 + $0xcd8] sm:$0xff]
      %v452 = vld [vmem:[#allocation2 + $0xce0] sm:$0xff]
      %v453 = vld [vmem:[#allocation2 + $0xce8] sm:$0xff]
      %v454 = vld [vmem:[#allocation2 + $0xcf0] sm:$0xff]
      %v455 = vld [vmem:[#allocation2 + $0xcf8] sm:$0xff]
      %v456 = vld [vmem:[#allocation2 + $0xd00] sm:$0xff]
      %v457 = vld [vmem:[#allocation2 + $0xd08] sm:$0xff]
      %v458 = vld [vmem:[#allocation2 + $0xd10] sm:$0xff]
      %v459 = vld [vmem:[#allocation2 + $0xd18] sm:$0xff]
      %v460 = vld [vmem:[#allocation2 + $0xd20] sm:$0xff]
      %v461 = vld [vmem:[#allocation2 + $0xd28] sm:$0xff]
      %v462 = vld [vmem:[#allocation2 + $0xd30] sm:$0xff]
      %v463 = vld [vmem:[#allocation2 + $0xd38] sm:$0xff]
      %v464 = vld [vmem:[#allocation2 + $0xd40] sm:$0xff]
      %v465 = vld [vmem:[#allocation2 + $0xd48] sm:$0xff]
      %v466 = vld [vmem:[#allocation2 + $0xd50] sm:$0xff]
      %v467 = vld [vmem:[#allocation2 + $0xd58] sm:$0xff]
      %v468 = vld [vmem:[#allocation2 + $0xd60] sm:$0xff]
      %v469 = vld [vmem:[#allocation2 + $0xd68] sm:$0xff]
      %v470 = vld [vmem:[#allocation2 + $0xd70] sm:$0xff]
      %v471 = vld [vmem:[#allocation2 + $0xd78] sm:$0xff]
      %v472 = vld [vmem:[#allocation2 + $0xd80] sm:$0xff]
      %v473 = vld [vmem:[#allocation2 + $0xd88] sm:$0xff]
      %v474 = vld [vmem:[#allocation2 + $0xd90] sm:$0xff]
      %v475 = vld [vmem:[#allocation2 + $0xd98] sm:$0xff]
      %v476 = vld [vmem:[#allocation2 + $0xda0] sm:$0xff]
      %v477 = vld [vmem:[#allocation2 + $0xda8] sm:$0xff]
      %v478 = vld [vmem:[#allocation2 + $0xdb0] sm:$0xff]
      %v479 = vld [vmem:[#allocation2 + $0xdb8] sm:$0xff]
      %v480 = vld [vmem:[#allocation2 + $0xdc0] sm:$0xff]
      %v481 = vld [vmem:[#allocation2 + $0xdc8] sm:$0xff]
      %v482 = vld [vmem:[#allocation2 + $0xdd0] sm:$0xff]
      %v483 = vld [vmem:[#allocation2 + $0xdd8] sm:$0xff]
      %v484 = vld [vmem:[#allocation2 + $0xde0] sm:$0xff]
      %v485 = vld [vmem:[#allocation2 + $0xde8] sm:$0xff]
      %v486 = vld [vmem:[#allocation2 + $0xdf0] sm:$0xff]
      %v487 = vld [vmem:[#allocation2 + $0xdf8] sm:$0xff]
      %v488 = vld [vmem:[#allocation2 + $0xe00] sm:$0xff]
      %v489 = vld [vmem:[#allocation2 + $0xe08] sm:$0xff]
      %v490 = vld [vmem:[#allocation2 + $0xe10] sm:$0xff]
      %v491 = vld [vmem:[#allocation2 + $0xe18] sm:$0xff]
      %v492 = vld [vmem:[#allocation2 + $0xe20] sm:$0xff]
      %v493 = vld [vmem:[#allocation2 + $0xe28] sm:$0xff]
      %v494 = vld [vmem:[#allocation2 + $0xe30] sm:$0xff]
      %v495 = vld [vmem:[#allocation2 + $0xe38] sm:$0xff]
      %v496 = vld [vmem:[#allocation2 + $0xe40] sm:$0xff]
      %v497 = vld [vmem:[#allocation2 + $0xe48] sm:$0xff]
      %v498 = vld [vmem:[#allocation2 + $0xe50] sm:$0xff]
      %v499 = vld [vmem:[#allocation2 + $0xe58] sm:$0xff]
      %v500 = vld [vmem:[#allocation2 + $0xe60] sm:$0xff]
      %v501 = vld [vmem:[#allocation2 + $0xe68] sm:$0xff]
      %v502 = vld [vmem:[#allocation2 + $0xe70] sm:$0xff]
      %v503 = vld [vmem:[#allocation2 + $0xe78] sm:$0xff]
      %v504 = vld [vmem:[#allocation2 + $0xe80] sm:$0xff]
      %v505 = vld [vmem:[#allocation2 + $0xe88] sm:$0xff]
      %v506 = vld [vmem:[#allocation2 + $0xe90] sm:$0xff]
      %v507 = vld [vmem:[#allocation2 + $0xe98] sm:$0xff]
      %v508 = vld [vmem:[#allocation2 + $0xea0] sm:$0xff]
      %v509 = vld [vmem:[#allocation2 + $0xea8] sm:$0xff]
      %v510 = vld [vmem:[#allocation2 + $0xeb0] sm:$0xff]
      %v511 = vld [vmem:[#allocation2 + $0xeb8] sm:$0xff]
      %v512 = vld [vmem:[#allocation2 + $0xec0] sm:$0xff]
      %v513 = vld [vmem:[#allocation2 + $0xec8] sm:$0xff]
      %v514 = vld [vmem:[#allocation2 + $0xed0] sm:$0xff]
      %v515 = vld [vmem:[#allocation2 + $0xed8] sm:$0xff]
      %v516 = vld [vmem:[#allocation2 + $0xee0] sm:$0xff]
      %v517 = vld [vmem:[#allocation2 + $0xee8] sm:$0xff]
      %v518 = vld [vmem:[#allocation2 + $0xef0] sm:$0xff]
      %v519 = vld [vmem:[#allocation2 + $0xef8] sm:$0xff]
      %v520 = vld [vmem:[#allocation2 + $0xf00] sm:$0xff]
      %v521 = vld [vmem:[#allocation2 + $0xf08] sm:$0xff]
      %v522 = vld [vmem:[#allocation2 + $0xf10] sm:$0xff]
      %v523 = vld [vmem:[#allocation2 + $0xf18] sm:$0xff]
      %v524 = vld [vmem:[#allocation2 + $0xf20] sm:$0xff]
      %v525 = vld [vmem:[#allocation2 + $0xf28] sm:$0xff]
      %v526 = vld [vmem:[#allocation2 + $0xf30] sm:$0xff]
      %v527 = vld [vmem:[#allocation2 + $0xf38] sm:$0xff]
      %v528 = vld [vmem:[#allocation2 + $0xf40] sm:$0xff]
      %v529 = vld [vmem:[#allocation2 + $0xf48] sm:$0xff]
      %v530 = vld [vmem:[#allocation2 + $0xf50] sm:$0xff]
      %v531 = vld [vmem:[#allocation2 + $0xf58] sm:$0xff]
      %v532 = vld [vmem:[#allocation2 + $0xf60] sm:$0xff]
      %v533 = vld [vmem:[#allocation2 + $0xf68] sm:$0xff]
      %v534 = vld [vmem:[#allocation2 + $0xf70] sm:$0xff]
      %v535 = vld [vmem:[#allocation2 + $0xf78] sm:$0xff]
      %v536 = vld [vmem:[#allocation2 + $0xf80] sm:$0xff]
      %v537 = vld [vmem:[#allocation2 + $0xf88] sm:$0xff]
      %v538 = vld [vmem:[#allocation2 + $0xf90] sm:$0xff]
      %v539 = vld [vmem:[#allocation2 + $0xf98] sm:$0xff]
      %v540 = vld [vmem:[#allocation2 + $0xfa0] sm:$0xff]
      %v541 = vld [vmem:[#allocation2 + $0xfa8] sm:$0xff]
      %v542 = vld [vmem:[#allocation2 + $0xfb0] sm:$0xff]
      %v543 = vld [vmem:[#allocation2 + $0xfb8] sm:$0xff]
      %v544 = vld [vmem:[#allocation2 + $0xfc0] sm:$0xff]
      %v545 = vld [vmem:[#allocation2 + $0xfc8] sm:$0xff]
      %v546 = vld [vmem:[#allocation2 + $0xfd0] sm:$0xff]
      %v547 = vld [vmem:[#allocation2 + $0xfd8] sm:$0xff]
      %v548 = vld [vmem:[#allocation2 + $0xfe0] sm:$0xff]
      %v549 = vld [vmem:[#allocation2 + $0xfe8] sm:$0xff]
      %v550 = vld [vmem:[#allocation2 + $0xff0] sm:$0xff]
      %v551 = vld [vmem:[#allocation2 + $0xff8] sm:$0xff]
      %v552 = vld [vmem:[#allocation2 + $0x1000] sm:$0xff]
      %v553 = vld [vmem:[#allocation2 + $0x1008] sm:$0xff]
      %v554 = vld [vmem:[#allocation2 + $0x1010] sm:$0xff]
      %v555 = vld [vmem:[#allocation2 + $0x1018] sm:$0xff]
      %v556 = vld [vmem:[#allocation2 + $0x1020] sm:$0xff]
      %v557 = vld [vmem:[#allocation2 + $0x1028] sm:$0xff]
      %v558 = vld [vmem:[#allocation2 + $0x1030] sm:$0xff]
      %v559 = vld [vmem:[#allocation2 + $0x1038] sm:$0xff]
      %v560 = vld [vmem:[#allocation2 + $0x1040] sm:$0xff]
      %v561 = vld [vmem:[#allocation2 + $0x1048] sm:$0xff]
      %v562 = vld [vmem:[#allocation2 + $0x1050] sm:$0xff]
      %v563 = vld [vmem:[#allocation2 + $0x1058] sm:$0xff]
      %v564 = vld [vmem:[#allocation2 + $0x1060] sm:$0xff]
      %v565 = vld [vmem:[#allocation2 + $0x1068] sm:$0xff]
      %v566 = vld [vmem:[#allocation2 + $0x1070] sm:$0xff]
      %v567 = vld [vmem:[#allocation2 + $0x1078] sm:$0xff]
      %v568 = vld [vmem:[#allocation2 + $0x1080] sm:$0xff]
      %v569 = vld [vmem:[#allocation2 + $0x1088] sm:$0xff]
      %v570 = vld [vmem:[#allocation2 + $0x1090] sm:$0xff]
      %v571 = vld [vmem:[#allocation2 + $0x1098] sm:$0xff]
      %v572 = vld [vmem:[#allocation2 + $0x10a0] sm:$0xff]
      %v573 = vld [vmem:[#allocation2 + $0x10a8] sm:$0xff]
      %v574 = vld [vmem:[#allocation2 + $0x10b0] sm:$0xff]
      %v575 = vld [vmem:[#allocation2 + $0x10b8] sm:$0xff]
      %v576 = vld [vmem:[#allocation2 + $0x10c0] sm:$0xff]
      %v577 = vld [vmem:[#allocation2 + $0x10c8] sm:$0xff]
      %v578 = vld [vmem:[#allocation2 + $0x10d0] sm:$0xff]
      %v579 = vld [vmem:[#allocation2 + $0x10d8] sm:$0xff]
      %v580 = vld [vmem:[#allocation2 + $0x10e0] sm:$0xff]
      %v581 = vld [vmem:[#allocation2 + $0x10e8] sm:$0xff]
      %v582 = vld [vmem:[#allocation2 + $0x10f0] sm:$0xff]
      %v583 = vld [vmem:[#allocation2 + $0x10f8] sm:$0xff]
      %v584 = vld [vmem:[#allocation2 + $0x1100] sm:$0xff]
      %v585 = vld [vmem:[#allocation2 + $0x1108] sm:$0xff]
      %v586 = vld [vmem:[#allocation2 + $0x1110] sm:$0xff]
      %v587 = vld [vmem:[#allocation2 + $0x1118] sm:$0xff]
      %v588 = vld [vmem:[#allocation2 + $0x1120] sm:$0xff]
      %v589 = vld [vmem:[#allocation2 + $0x1128] sm:$0xff]
      %v590 = vld [vmem:[#allocation2 + $0x1130] sm:$0xff]
      %v591 = vld [vmem:[#allocation2 + $0x1138] sm:$0xff]
      %v592 = vld [vmem:[#allocation2 + $0x1140] sm:$0xff]
      %v593 = vld [vmem:[#allocation2 + $0x1148] sm:$0xff]
      %v594 = vld [vmem:[#allocation2 + $0x1150] sm:$0xff]
      %v595 = vld [vmem:[#allocation2 + $0x1158] sm:$0xff]
      %v596 = vld [vmem:[#allocation2 + $0x1160] sm:$0xff]
      %v597 = vld [vmem:[#allocation2 + $0x1168] sm:$0xff]
      %v598 = vld [vmem:[#allocation2 + $0x1170] sm:$0xff]
      %v599 = vld [vmem:[#allocation2 + $0x1178] sm:$0xff]
      %v600 = vld [vmem:[#allocation2 + $0x1180] sm:$0xff]
      %v601 = vld [vmem:[#allocation2 + $0x1188] sm:$0xff]
      %v602 = vld [vmem:[#allocation2 + $0x1190] sm:$0xff]
      %v603 = vld [vmem:[#allocation2 + $0x1198] sm:$0xff]
      %v604 = vld [vmem:[#allocation2 + $0x11a0] sm:$0xff]
      %v605 = vld [vmem:[#allocation2 + $0x11a8] sm:$0xff]
      %v606 = vld [vmem:[#allocation2 + $0x11b0] sm:$0xff]
      %v607 = vld [vmem:[#allocation2 + $0x11b8] sm:$0xff]
      %v608 = vld [vmem:[#allocation2 + $0x11c0] sm:$0xff]
      %v609 = vld [vmem:[#allocation2 + $0x11c8] sm:$0xff]
      %v610 = vld [vmem:[#allocation2 + $0x11d0] sm:$0xff]
      %v611 = vld [vmem:[#allocation2 + $0x11d8] sm:$0xff]
      %v612 = vld [vmem:[#allocation2 + $0x11e0] sm:$0xff]
      %v613 = vld [vmem:[#allocation2 + $0x11e8] sm:$0xff]
      %v614 = vld [vmem:[#allocation2 + $0x11f0] sm:$0xff]
      %v615 = vld [vmem:[#allocation2 + $0x11f8] sm:$0xff]
      %v616 = vld [vmem:[#allocation2 + $0x1200] sm:$0xff]
      %v617 = vld [vmem:[#allocation2 + $0x1208] sm:$0xff]
      %v618 = vld [vmem:[#allocation2 + $0x1210] sm:$0xff]
      %v619 = vld [vmem:[#allocation2 + $0x1218] sm:$0xff]
      %v620 = vld [vmem:[#allocation2 + $0x1220] sm:$0xff]
      %v621 = vld [vmem:[#allocation2 + $0x1228] sm:$0xff]
      %v622 = vld [vmem:[#allocation2 + $0x1230] sm:$0xff]
      %v623 = vld [vmem:[#allocation2 + $0x1238] sm:$0xff]
      %v624 = vld [vmem:[#allocation2 + $0x1240] sm:$0xff]
      %v625 = vld [vmem:[#allocation2 + $0x1248] sm:$0xff]
      %v626 = vld [vmem:[#allocation2 + $0x1250] sm:$0xff]
      %v627 = vld [vmem:[#allocation2 + $0x1258] sm:$0xff]
      %v628 = vld [vmem:[#allocation2 + $0x1260] sm:$0xff]
      %v629 = vld [vmem:[#allocation2 + $0x1268] sm:$0xff]
      %v630 = vld [vmem:[#allocation2 + $0x1270] sm:$0xff]
      %v631 = vld [vmem:[#allocation2 + $0x1278] sm:$0xff]
      %v632 = vld [vmem:[#allocation2 + $0x1280] sm:$0xff]
      %v633 = vld [vmem:[#allocation2 + $0x1288] sm:$0xff]
      %v634 = vld [vmem:[#allocation2 + $0x1290] sm:$0xff]
      %v635 = vld [vmem:[#allocation2 + $0x1298] sm:$0xff]
      %v636 = vld [vmem:[#allocation2 + $0x12a0] sm:$0xff]
      %v637 = vld [vmem:[#allocation2 + $0x12a8] sm:$0xff]
      %v638 = vld [vmem:[#allocation2 + $0x12b0] sm:$0xff]
      %v639 = vld [vmem:[#allocation2 + $0x12b8] sm:$0xff]
      %v640 = vld [vmem:[#allocation2 + $0x12c0] sm:$0xff]
      %v641 = vld [vmem:[#allocation2 + $0x12c8] sm:$0xff]
      %v642 = vld [vmem:[#allocation2 + $0x12d0] sm:$0xff]
      %v643 = vld [vmem:[#allocation2 + $0x12d8] sm:$0xff]
      %v644 = vld [vmem:[#allocation2 + $0x12e0] sm:$0xff]
      %v645 = vld [vmem:[#allocation2 + $0x12e8] sm:$0xff]
      %v646 = vld [vmem:[#allocation2 + $0x12f0] sm:$0xff]
      %v647 = vld [vmem:[#allocation2 + $0x12f8] sm:$0xff]
      %v648 = vld [vmem:[#allocation2 + $0x1300] sm:$0xff]
      %v649 = vld [vmem:[#allocation2 + $0x1308] sm:$0xff]
      %v650 = vld [vmem:[#allocation2 + $0x1310] sm:$0xff]
      %v651 = vld [vmem:[#allocation2 + $0x1318] sm:$0xff]
      %v652 = vld [vmem:[#allocation2 + $0x1320] sm:$0xff]
      %v653 = vld [vmem:[#allocation2 + $0x1328] sm:$0xff]
      %v654 = vld [vmem:[#allocation2 + $0x1330] sm:$0xff]
      %v655 = vld [vmem:[#allocation2 + $0x1338] sm:$0xff]
      %v656 = vld [vmem:[#allocation2 + $0x1340] sm:$0xff]
      %v657 = vld [vmem:[#allocation2 + $0x1348] sm:$0xff]
      %v658 = vld [vmem:[#allocation2 + $0x1350] sm:$0xff]
      %v659 = vld [vmem:[#allocation2 + $0x1358] sm:$0xff]
      %v660 = vld [vmem:[#allocation2 + $0x1360] sm:$0xff]
      %v661 = vld [vmem:[#allocation2 + $0x1368] sm:$0xff]
      %v662 = vld [vmem:[#allocation2 + $0x1370] sm:$0xff]
      %v663 = vld [vmem:[#allocation2 + $0x1378] sm:$0xff]
      %v664 = vld [vmem:[#allocation2 + $0x1380] sm:$0xff]
      %v665 = vld [vmem:[#allocation2 + $0x1388] sm:$0xff]
      %v666 = vld [vmem:[#allocation2 + $0x1390] sm:$0xff]
      %v667 = vld [vmem:[#allocation2 + $0x1398] sm:$0xff]
      %v668 = vld [vmem:[#allocation2 + $0x13a0] sm:$0xff]
      %v669 = vld [vmem:[#allocation2 + $0x13a8] sm:$0xff]
      %v670 = vld [vmem:[#allocation2 + $0x13b0] sm:$0xff]
      %v671 = vld [vmem:[#allocation2 + $0x13b8] sm:$0xff]
      %v672 = vld [vmem:[#allocation2 + $0x13c0] sm:$0xff]
      %v673 = vld [vmem:[#allocation2 + $0x13c8] sm:$0xff]
      %v674 = vld [vmem:[#allocation2 + $0x13d0] sm:$0xff]
      %v675 = vld [vmem:[#allocation2 + $0x13d8] sm:$0xff]
      %v676 = vld [vmem:[#allocation2 + $0x13e0] sm:$0xff]
      %v677 = vld [vmem:[#allocation2 + $0x13e8] sm:$0xff]
      %v678 = vld [vmem:[#allocation2 + $0x13f0] sm:$0xff]
      %v679 = vld [vmem:[#allocation2 + $0x13f8] sm:$0xff]
      %v680 = vld [vmem:[#allocation2 + $0x1400] sm:$0xff]
      %v681 = vld [vmem:[#allocation2 + $0x1408] sm:$0xff]
      %v682 = vld [vmem:[#allocation2 + $0x1410] sm:$0xff]
      %v683 = vld [vmem:[#allocation2 + $0x1418] sm:$0xff]
      %v684 = vld [vmem:[#allocation2 + $0x1420] sm:$0xff]
      %v685 = vld [vmem:[#allocation2 + $0x1428] sm:$0xff]
      %v686 = vld [vmem:[#allocation2 + $0x1430] sm:$0xff]
      %v687 = vld [vmem:[#allocation2 + $0x1438] sm:$0xff]
      %v688 = vld [vmem:[#allocation2 + $0x1440] sm:$0xff]
      %v689 = vld [vmem:[#allocation2 + $0x1448] sm:$0xff]
      %v690 = vld [vmem:[#allocation2 + $0x1450] sm:$0xff]
      %v691 = vld [vmem:[#allocation2 + $0x1458] sm:$0xff]
      %v692 = vld [vmem:[#allocation2 + $0x1460] sm:$0xff]
      %v693 = vld [vmem:[#allocation2 + $0x1468] sm:$0xff]
      %v694 = vld [vmem:[#allocation2 + $0x1470] sm:$0xff]
      %v695 = vld [vmem:[#allocation2 + $0x1478] sm:$0xff]
      %v696 = vld [vmem:[#allocation2 + $0x1480] sm:$0xff]
      %v697 = vld [vmem:[#allocation2 + $0x1488] sm:$0xff]
      %v698 = vld [vmem:[#allocation2 + $0x1490] sm:$0xff]
      %v699 = vld [vmem:[#allocation2 + $0x1498] sm:$0xff]
      %v700 = vld [vmem:[#allocation2 + $0x14a0] sm:$0xff]
      %v701 = vld [vmem:[#allocation2 + $0x14a8] sm:$0xff]
      %v702 = vld [vmem:[#allocation2 + $0x14b0] sm:$0xff]
      %v703 = vld [vmem:[#allocation2 + $0x14b8] sm:$0xff]
      %v704 = vld [vmem:[#allocation2 + $0x14c0] sm:$0xff]
      %v705 = vld [vmem:[#allocation2 + $0x14c8] sm:$0xff]
      %v706 = vld [vmem:[#allocation2 + $0x14d0] sm:$0xff]
      %v707 = vld [vmem:[#allocation2 + $0x14d8] sm:$0xff]
      %v708 = vld [vmem:[#allocation2 + $0x14e0] sm:$0xff]
      %v709 = vld [vmem:[#allocation2 + $0x14e8] sm:$0xff]
      %v710 = vld [vmem:[#allocation2 + $0x14f0] sm:$0xff]
      %v711 = vld [vmem:[#allocation2 + $0x14f8] sm:$0xff]
      %v712 = vld [vmem:[#allocation2 + $0x1500] sm:$0xff]
      %v713 = vld [vmem:[#allocation2 + $0x1508] sm:$0xff]
      %v714 = vld [vmem:[#allocation2 + $0x1510] sm:$0xff]
      %v715 = vld [vmem:[#allocation2 + $0x1518] sm:$0xff]
      %v716 = vld [vmem:[#allocation2 + $0x1520] sm:$0xff]
      %v717 = vld [vmem:[#allocation2 + $0x1528] sm:$0xff]
      %v718 = vld [vmem:[#allocation2 + $0x1530] sm:$0xff]
      %v719 = vld [vmem:[#allocation2 + $0x1538] sm:$0xff]
      %v720 = vld [vmem:[#allocation2 + $0x1540] sm:$0xff]
      %v721 = vld [vmem:[#allocation2 + $0x1548] sm:$0xff]
      %v722 = vld [vmem:[#allocation2 + $0x1550] sm:$0xff]
      %v723 = vld [vmem:[#allocation2 + $0x1558] sm:$0xff]
      %v724 = vld [vmem:[#allocation2 + $0x1560] sm:$0xff]
      %v725 = vld [vmem:[#allocation2 + $0x1568] sm:$0xff]
      %v726 = vld [vmem:[#allocation2 + $0x1570] sm:$0xff]
      %v727 = vld [vmem:[#allocation2 + $0x1578] sm:$0xff]
      %v728 = vld [vmem:[#allocation2 + $0x1580] sm:$0xff]
      %v729 = vld [vmem:[#allocation2 + $0x1588] sm:$0xff]
      %v730 = vld [vmem:[#allocation2 + $0x1590] sm:$0xff]
      %v731 = vld [vmem:[#allocation2 + $0x1598] sm:$0xff]
      %v732 = vld [vmem:[#allocation2 + $0x15a0] sm:$0xff]
      %v733 = vld [vmem:[#allocation2 + $0x15a8] sm:$0xff]
      %v734 = vld [vmem:[#allocation2 + $0x15b0] sm:$0xff]
      %v735 = vld [vmem:[#allocation2 + $0x15b8] sm:$0xff]
      %v736 = vld [vmem:[#allocation2 + $0x15c0] sm:$0xff]
      %v737 = vld [vmem:[#allocation2 + $0x15c8] sm:$0xff]
      %v738 = vld [vmem:[#allocation2 + $0x15d0] sm:$0xff]
      %v739 = vld [vmem:[#allocation2 + $0x15d8] sm:$0xff]
      %v740 = vld [vmem:[#allocation2 + $0x15e0] sm:$0xff]
      %v741 = vld [vmem:[#allocation2 + $0x15e8] sm:$0xff]
      %v742 = vld [vmem:[#allocation2 + $0x15f0] sm:$0xff]
      %v743 = vld [vmem:[#allocation2 + $0x15f8] sm:$0xff]
      %v744 = vld [vmem:[#allocation2 + $0x1600] sm:$0xff]
      %v745 = vld [vmem:[#allocation2 + $0x1608] sm:$0xff]
      %v746 = vld [vmem:[#allocation2 + $0x1610] sm:$0xff]
      %v747 = vld [vmem:[#allocation2 + $0x1618] sm:$0xff]
      %v748 = vld [vmem:[#allocation2 + $0x1620] sm:$0xff]
      %v749 = vld [vmem:[#allocation2 + $0x1628] sm:$0xff]
      %v750 = vld [vmem:[#allocation2 + $0x1630] sm:$0xff]
      %v751 = vld [vmem:[#allocation2 + $0x1638] sm:$0xff]
      %v752 = vld [vmem:[#allocation2 + $0x1640] sm:$0xff]
      %v753 = vld [vmem:[#allocation2 + $0x1648] sm:$0xff]
      %v754 = vld [vmem:[#allocation2 + $0x1650] sm:$0xff]
      %v755 = vld [vmem:[#allocation2 + $0x1658] sm:$0xff]
      %v756 = vld [vmem:[#allocation2 + $0x1660] sm:$0xff]
      %v757 = vld [vmem:[#allocation2 + $0x1668] sm:$0xff]
      %v758 = vld [vmem:[#allocation2 + $0x1670] sm:$0xff]
      %v759 = vld [vmem:[#allocation2 + $0x1678] sm:$0xff]
      %v760 = vld [vmem:[#allocation2 + $0x1680] sm:$0xff]
      %v761 = vld [vmem:[#allocation2 + $0x1688] sm:$0xff]
      %v762 = vld [vmem:[#allocation2 + $0x1690] sm:$0xff]
      %v763 = vld [vmem:[#allocation2 + $0x1698] sm:$0xff]
      %v764 = vld [vmem:[#allocation2 + $0x16a0] sm:$0xff]
      %v765 = vld [vmem:[#allocation2 + $0x16a8] sm:$0xff]
      %v766 = vld [vmem:[#allocation2 + $0x16b0] sm:$0xff]
      %v767 = vld [vmem:[#allocation2 + $0x16b8] sm:$0xff]
      %v768 = vld [vmem:[#allocation2 + $0x16c0] sm:$0xff]
      %v769 = vld [vmem:[#allocation2 + $0x16c8] sm:$0xff]
      %v770 = vld [vmem:[#allocation2 + $0x16d0] sm:$0xff]
      %v771 = vld [vmem:[#allocation2 + $0x16d8] sm:$0xff]
      %v772 = vld [vmem:[#allocation2 + $0x16e0] sm:$0xff]
      %v773 = vld [vmem:[#allocation2 + $0x16e8] sm:$0xff]
      %v774 = vld [vmem:[#allocation2 + $0x16f0] sm:$0xff]
      %v775 = vld [vmem:[#allocation2 + $0x16f8] sm:$0xff]
      %v776 = vld [vmem:[#allocation2 + $0x1700] sm:$0xff]
      %v777 = vld [vmem:[#allocation2 + $0x1708] sm:$0xff]
      %v778 = vld [vmem:[#allocation2 + $0x1710] sm:$0xff]
      %v779 = vld [vmem:[#allocation2 + $0x1718] sm:$0xff]
      %v780 = vld [vmem:[#allocation2 + $0x1720] sm:$0xff]
      %v781 = vld [vmem:[#allocation2 + $0x1728] sm:$0xff]
      %v782 = vld [vmem:[#allocation2 + $0x1730] sm:$0xff]
      %v783 = vld [vmem:[#allocation2 + $0x1738] sm:$0xff]
      %v784 = vld [vmem:[#allocation2 + $0x1740] sm:$0xff]
      %v785 = vld [vmem:[#allocation2 + $0x1748] sm:$0xff]
      %v786 = vld [vmem:[#allocation2 + $0x1750] sm:$0xff]
      %v787 = vld [vmem:[#allocation2 + $0x1758] sm:$0xff]
      %v788 = vld [vmem:[#allocation2 + $0x1760] sm:$0xff]
      %v789 = vld [vmem:[#allocation2 + $0x1768] sm:$0xff]
      %v790 = vld [vmem:[#allocation2 + $0x1770] sm:$0xff]
      %v791 = vld [vmem:[#allocation2 + $0x1778] sm:$0xff]
      %v792 = vld [vmem:[#allocation2 + $0x1780] sm:$0xff]
      %v793 = vld [vmem:[#allocation2 + $0x1788] sm:$0xff]
      %v794 = vld [vmem:[#allocation2 + $0x1790] sm:$0xff]
      %v795 = vld [vmem:[#allocation2 + $0x1798] sm:$0xff]
      %v796 = vld [vmem:[#allocation2 + $0x17a0] sm:$0xff]
      %v797 = vld [vmem:[#allocation2 + $0x17a8] sm:$0xff]
      %v798 = vld [vmem:[#allocation2 + $0x17b0] sm:$0xff]
      %v799 = vld [vmem:[#allocation2 + $0x17b8] sm:$0xff]
      %v800 = vld [vmem:[#allocation2 + $0x17c0] sm:$0xff]
      %v801 = vld [vmem:[#allocation2 + $0x17c8] sm:$0xff]
      %v802 = vld [vmem:[#allocation2 + $0x17d0] sm:$0xff]
      %v803 = vld [vmem:[#allocation2 + $0x17d8] sm:$0xff]
      %v804 = vld [vmem:[#allocation2 + $0x17e0] sm:$0xff]
      %v805 = vld [vmem:[#allocation2 + $0x17e8] sm:$0xff]
      %v806 = vld [vmem:[#allocation2 + $0x17f0] sm:$0xff]
      %v807 = vld [vmem:[#allocation2 + $0x17f8] sm:$0xff]
      %v808 = vld [vmem:[#allocation2 + $0x1800] sm:$0xff]
      %v809 = vld [vmem:[#allocation2 + $0x1808] sm:$0xff]
      %v810 = vld [vmem:[#allocation2 + $0x1810] sm:$0xff]
      %v811 = vld [vmem:[#allocation2 + $0x1818] sm:$0xff]
      %v812 = vld [vmem:[#allocation2 + $0x1820] sm:$0xff]
      %v813 = vld [vmem:[#allocation2 + $0x1828] sm:$0xff]
      %v814 = vld [vmem:[#allocation2 + $0x1830] sm:$0xff]
      %v815 = vld [vmem:[#allocation2 + $0x1838] sm:$0xff]
      %v816 = vld [vmem:[#allocation2 + $0x1840] sm:$0xff]
      %v817 = vld [vmem:[#allocation2 + $0x1848] sm:$0xff]
      %v818 = vld [vmem:[#allocation2 + $0x1850] sm:$0xff]
      %v819 = vld [vmem:[#allocation2 + $0x1858] sm:$0xff]
      %v820 = vld [vmem:[#allocation2 + $0x1860] sm:$0xff]
      %v821 = vld [vmem:[#allocation2 + $0x1868] sm:$0xff]
      %v822 = vld [vmem:[#allocation2 + $0x1870] sm:$0xff]
      %v823 = vld [vmem:[#allocation2 + $0x1878] sm:$0xff]
      %v824 = vld [vmem:[#allocation2 + $0x1880] sm:$0xff]
      %v825 = vld [vmem:[#allocation2 + $0x1888] sm:$0xff]
      %v826 = vld [vmem:[#allocation2 + $0x1890] sm:$0xff]
      %v827 = vld [vmem:[#allocation2 + $0x1898] sm:$0xff]
      %v828 = vld [vmem:[#allocation2 + $0x18a0] sm:$0xff]
      %v829 = vld [vmem:[#allocation2 + $0x18a8] sm:$0xff]
      %v830 = vld [vmem:[#allocation2 + $0x18b0] sm:$0xff]
      %v831 = vld [vmem:[#allocation2 + $0x18b8] sm:$0xff]
      %v832 = vld [vmem:[#allocation2 + $0x18c0] sm:$0xff]
      %v833 = vld [vmem:[#allocation2 + $0x18c8] sm:$0xff]
      %v834 = vld [vmem:[#allocation2 + $0x18d0] sm:$0xff]
      %v835 = vld [vmem:[#allocation2 + $0x18d8] sm:$0xff]
      %v836 = vld [vmem:[#allocation2 + $0x18e0] sm:$0xff]
      %v837 = vld [vmem:[#allocation2 + $0x18e8] sm:$0xff]
      %v838 = vld [vmem:[#allocation2 + $0x18f0] sm:$0xff]
      %v839 = vld [vmem:[#allocation2 + $0x18f8] sm:$0xff]
      %v840 = vld [vmem:[#allocation2 + $0x1900] sm:$0xff]
      %v841 = vld [vmem:[#allocation2 + $0x1908] sm:$0xff]
      %v842 = vld [vmem:[#allocation2 + $0x1910] sm:$0xff]
      %v843 = vld [vmem:[#allocation2 + $0x1918] sm:$0xff]
      %v844 = vld [vmem:[#allocation2 + $0x1920] sm:$0xff]
      %v845 = vld [vmem:[#allocation2 + $0x1928] sm:$0xff]
      %v846 = vld [vmem:[#allocation2 + $0x1930] sm:$0xff]
      %v847 = vld [vmem:[#allocation2 + $0x1938] sm:$0xff]
      %v848 = vld [vmem:[#allocation2 + $0x1940] sm:$0xff]
      %v849 = vld [vmem:[#allocation2 + $0x1948] sm:$0xff]
      %v850 = vld [vmem:[#allocation2 + $0x1950] sm:$0xff]
      %v851 = vld [vmem:[#allocation2 + $0x1958] sm:$0xff]
      %v852 = vld [vmem:[#allocation2 + $0x1960] sm:$0xff]
      %v853 = vld [vmem:[#allocation2 + $0x1968] sm:$0xff]
      %v854 = vld [vmem:[#allocation2 + $0x1970] sm:$0xff]
      %v855 = vld [vmem:[#allocation2 + $0x1978] sm:$0xff]
      %v856 = vld [vmem:[#allocation2 + $0x1980] sm:$0xff]
      %v857 = vld [vmem:[#allocation2 + $0x1988] sm:$0xff]
      %v858 = vld [vmem:[#allocation2 + $0x1990] sm:$0xff]
      %v859 = vld [vmem:[#allocation2 + $0x1998] sm:$0xff]
      %v860 = vld [vmem:[#allocation2 + $0x19a0] sm:$0xff]
      %v861 = vld [vmem:[#allocation2 + $0x19a8] sm:$0xff]
      %v862 = vld [vmem:[#allocation2 + $0x19b0] sm:$0xff]
      %v863 = vld [vmem:[#allocation2 + $0x19b8] sm:$0xff]
      %v864 = vld [vmem:[#allocation2 + $0x19c0] sm:$0xff]
      %v865 = vld [vmem:[#allocation2 + $0x19c8] sm:$0xff]
      %v866 = vld [vmem:[#allocation2 + $0x19d0] sm:$0xff]
      %v867 = vld [vmem:[#allocation2 + $0x19d8] sm:$0xff]
      %v868 = vld [vmem:[#allocation2 + $0x19e0] sm:$0xff]
      %v869 = vld [vmem:[#allocation2 + $0x19e8] sm:$0xff]
      %v870 = vld [vmem:[#allocation2 + $0x19f0] sm:$0xff]
      %v871 = vld [vmem:[#allocation2 + $0x19f8] sm:$0xff]
      %v872 = vld [vmem:[#allocation2 + $0x1a00] sm:$0xff]
      %v873 = vld [vmem:[#allocation2 + $0x1a08] sm:$0xff]
      %v874 = vld [vmem:[#allocation2 + $0x1a10] sm:$0xff]
      %v875 = vld [vmem:[#allocation2 + $0x1a18] sm:$0xff]
      %v876 = vld [vmem:[#allocation2 + $0x1a20] sm:$0xff]
      %v877 = vld [vmem:[#allocation2 + $0x1a28] sm:$0xff]
      %v878 = vld [vmem:[#allocation2 + $0x1a30] sm:$0xff]
      %v879 = vld [vmem:[#allocation2 + $0x1a38] sm:$0xff]
      %v880 = vld [vmem:[#allocation2 + $0x1a40] sm:$0xff]
      %v881 = vld [vmem:[#allocation2 + $0x1a48] sm:$0xff]
      %v882 = vld [vmem:[#allocation2 + $0x1a50] sm:$0xff]
      %v883 = vld [vmem:[#allocation2 + $0x1a58] sm:$0xff]
      %v884 = vld [vmem:[#allocation2 + $0x1a60] sm:$0xff]
      %v885 = vld [vmem:[#allocation2 + $0x1a68] sm:$0xff]
      %v886 = vld [vmem:[#allocation2 + $0x1a70] sm:$0xff]
      %v887 = vld [vmem:[#allocation2 + $0x1a78] sm:$0xff]
      %v888 = vld [vmem:[#allocation2 + $0x1a80] sm:$0xff]
      %v889 = vld [vmem:[#allocation2 + $0x1a88] sm:$0xff]
      %v890 = vld [vmem:[#allocation2 + $0x1a90] sm:$0xff]
      %v891 = vld [vmem:[#allocation2 + $0x1a98] sm:$0xff]
      %v892 = vld [vmem:[#allocation2 + $0x1aa0] sm:$0xff]
      %v893 = vld [vmem:[#allocation2 + $0x1aa8] sm:$0xff]
      %v894 = vld [vmem:[#allocation2 + $0x1ab0] sm:$0xff]
      %v895 = vld [vmem:[#allocation2 + $0x1ab8] sm:$0xff]
      %v896 = vld [vmem:[#allocation2 + $0x1ac0] sm:$0xff]
      %v897 = vld [vmem:[#allocation2 + $0x1ac8] sm:$0xff]
      %v898 = vld [vmem:[#allocation2 + $0x1ad0] sm:$0xff]
      %v899 = vld [vmem:[#allocation2 + $0x1ad8] sm:$0xff]
      %v900 = vld [vmem:[#allocation2 + $0x1ae0] sm:$0xff]
      %v901 = vld [vmem:[#allocation2 + $0x1ae8] sm:$0xff]
      %v902 = vld [vmem:[#allocation2 + $0x1af0] sm:$0xff]
      %v903 = vld [vmem:[#allocation2 + $0x1af8] sm:$0xff]
      %v904 = vld [vmem:[#allocation2 + $0x1b00] sm:$0xff]
      %v905 = vld [vmem:[#allocation2 + $0x1b08] sm:$0xff]
      %v906 = vld [vmem:[#allocation2 + $0x1b10] sm:$0xff]
      %v907 = vld [vmem:[#allocation2 + $0x1b18] sm:$0xff]
      %v908 = vld [vmem:[#allocation2 + $0x1b20] sm:$0xff]
      %v909 = vld [vmem:[#allocation2 + $0x1b28] sm:$0xff]
      %v910 = vld [vmem:[#allocation2 + $0x1b30] sm:$0xff]
      %v911 = vld [vmem:[#allocation2 + $0x1b38] sm:$0xff]
      %v912 = vld [vmem:[#allocation2 + $0x1b40] sm:$0xff]
      %v913 = vld [vmem:[#allocation2 + $0x1b48] sm:$0xff]
      %v914 = vld [vmem:[#allocation2 + $0x1b50] sm:$0xff]
      %v915 = vld [vmem:[#allocation2 + $0x1b58] sm:$0xff]
      %v916 = vld [vmem:[#allocation2 + $0x1b60] sm:$0xff]
      %v917 = vld [vmem:[#allocation2 + $0x1b68] sm:$0xff]
      %v918 = vld [vmem:[#allocation2 + $0x1b70] sm:$0xff]
      %v919 = vld [vmem:[#allocation2 + $0x1b78] sm:$0xff]
      %v920 = vld [vmem:[#allocation2 + $0x1b80] sm:$0xff]
      %v921 = vld [vmem:[#allocation2 + $0x1b88] sm:$0xff]
      %v922 = vld [vmem:[#allocation2 + $0x1b90] sm:$0xff]
      %v923 = vld [vmem:[#allocation2 + $0x1b98] sm:$0xff]
      %v924 = vld [vmem:[#allocation2 + $0x1ba0] sm:$0xff]
      %v925 = vld [vmem:[#allocation2 + $0x1ba8] sm:$0xff]
      %v926 = vld [vmem:[#allocation2 + $0x1bb0] sm:$0xff]
      %v927 = vld [vmem:[#allocation2 + $0x1bb8] sm:$0xff]
      %v928 = vld [vmem:[#allocation2 + $0x1bc0] sm:$0xff]
      %v929 = vld [vmem:[#allocation2 + $0x1bc8] sm:$0xff]
      %v930 = vld [vmem:[#allocation2 + $0x1bd0] sm:$0xff]
      %v931 = vld [vmem:[#allocation2 + $0x1bd8] sm:$0xff]
      %v932 = vld [vmem:[#allocation2 + $0x1be0] sm:$0xff]
      %v933 = vld [vmem:[#allocation2 + $0x1be8] sm:$0xff]
      %v934 = vld [vmem:[#allocation2 + $0x1bf0] sm:$0xff]
      %v935 = vld [vmem:[#allocation2 + $0x1bf8] sm:$0xff]
      %v936 = vld [vmem:[#allocation2 + $0x1c00] sm:$0xff]
      %v937 = vld [vmem:[#allocation2 + $0x1c08] sm:$0xff]
      %v938 = vld [vmem:[#allocation2 + $0x1c10] sm:$0xff]
      %v939 = vld [vmem:[#allocation2 + $0x1c18] sm:$0xff]
      %v940 = vld [vmem:[#allocation2 + $0x1c20] sm:$0xff]
      %v941 = vld [vmem:[#allocation2 + $0x1c28] sm:$0xff]
      %v942 = vld [vmem:[#allocation2 + $0x1c30] sm:$0xff]
      %v943 = vld [vmem:[#allocation2 + $0x1c38] sm:$0xff]
      %v944 = vld [vmem:[#allocation2 + $0x1c40] sm:$0xff]
      %v945 = vld [vmem:[#allocation2 + $0x1c48] sm:$0xff]
      %v946 = vld [vmem:[#allocation2 + $0x1c50] sm:$0xff]
      %v947 = vld [vmem:[#allocation2 + $0x1c58] sm:$0xff]
      %v948 = vld [vmem:[#allocation2 + $0x1c60] sm:$0xff]
      %v949 = vld [vmem:[#allocation2 + $0x1c68] sm:$0xff]
      %v950 = vld [vmem:[#allocation2 + $0x1c70] sm:$0xff]
      %v951 = vld [vmem:[#allocation2 + $0x1c78] sm:$0xff]
      %v952 = vld [vmem:[#allocation2 + $0x1c80] sm:$0xff]
      %v953 = vld [vmem:[#allocation2 + $0x1c88] sm:$0xff]
      %v954 = vld [vmem:[#allocation2 + $0x1c90] sm:$0xff]
      %v955 = vld [vmem:[#allocation2 + $0x1c98] sm:$0xff]
      %v956 = vld [vmem:[#allocation2 + $0x1ca0] sm:$0xff]
      %v957 = vld [vmem:[#allocation2 + $0x1ca8] sm:$0xff]
      %v958 = vld [vmem:[#allocation2 + $0x1cb0] sm:$0xff]
      %v959 = vld [vmem:[#allocation2 + $0x1cb8] sm:$0xff]
      %v960 = vld [vmem:[#allocation2 + $0x1cc0] sm:$0xff]
      %v961 = vld [vmem:[#allocation2 + $0x1cc8] sm:$0xff]
      %v962 = vld [vmem:[#allocation2 + $0x1cd0] sm:$0xff]
      %v963 = vld [vmem:[#allocation2 + $0x1cd8] sm:$0xff]
      %v964 = vld [vmem:[#allocation2 + $0x1ce0] sm:$0xff]
      %v965 = vld [vmem:[#allocation2 + $0x1ce8] sm:$0xff]
      %v966 = vld [vmem:[#allocation2 + $0x1cf0] sm:$0xff]
      %v967 = vld [vmem:[#allocation2 + $0x1cf8] sm:$0xff]
      %v968 = vld [vmem:[#allocation2 + $0x1d00] sm:$0xff]
      %v969 = vld [vmem:[#allocation2 + $0x1d08] sm:$0xff]
      %v970 = vld [vmem:[#allocation2 + $0x1d10] sm:$0xff]
      %v971 = vld [vmem:[#allocation2 + $0x1d18] sm:$0xff]
      %v972 = vld [vmem:[#allocation2 + $0x1d20] sm:$0xff]
      %v973 = vld [vmem:[#allocation2 + $0x1d28] sm:$0xff]
      %v974 = vld [vmem:[#allocation2 + $0x1d30] sm:$0xff]
      %v975 = vld [vmem:[#allocation2 + $0x1d38] sm:$0xff]
      %v976 = vld [vmem:[#allocation2 + $0x1d40] sm:$0xff]
      %v977 = vld [vmem:[#allocation2 + $0x1d48] sm:$0xff]
      %v978 = vld [vmem:[#allocation2 + $0x1d50] sm:$0xff]
      %v979 = vld [vmem:[#allocation2 + $0x1d58] sm:$0xff]
      %v980 = vld [vmem:[#allocation2 + $0x1d60] sm:$0xff]
      %v981 = vld [vmem:[#allocation2 + $0x1d68] sm:$0xff]
      %v982 = vld [vmem:[#allocation2 + $0x1d70] sm:$0xff]
      %v983 = vld [vmem:[#allocation2 + $0x1d78] sm:$0xff]
      %v984 = vld [vmem:[#allocation2 + $0x1d80] sm:$0xff]
      %v985 = vld [vmem:[#allocation2 + $0x1d88] sm:$0xff]
      %v986 = vld [vmem:[#allocation2 + $0x1d90] sm:$0xff]
      %v987 = vld [vmem:[#allocation2 + $0x1d98] sm:$0xff]
      %v988 = vld [vmem:[#allocation2 + $0x1da0] sm:$0xff]
      %v989 = vld [vmem:[#allocation2 + $0x1da8] sm:$0xff]
      %v990 = vld [vmem:[#allocation2 + $0x1db0] sm:$0xff]
      %v991 = vld [vmem:[#allocation2 + $0x1db8] sm:$0xff]
      %v992 = vld [vmem:[#allocation2 + $0x1dc0] sm:$0xff]
      %v993 = vld [vmem:[#allocation2 + $0x1dc8] sm:$0xff]
      %v994 = vld [vmem:[#allocation2 + $0x1dd0] sm:$0xff]
      %v995 = vld [vmem:[#allocation2 + $0x1dd8] sm:$0xff]
      %v996 = vld [vmem:[#allocation2 + $0x1de0] sm:$0xff]
      %v997 = vld [vmem:[#allocation2 + $0x1de8] sm:$0xff]
      %v998 = vld [vmem:[#allocation2 + $0x1df0] sm:$0xff]
      %v999 = vld [vmem:[#allocation2 + $0x1df8] sm:$0xff]
      %v1000 = vld [vmem:[#allocation2 + $0x1e00] sm:$0xff]
      %v1001 = vld [vmem:[#allocation2 + $0x1e08] sm:$0xff]
      %v1002 = vld [vmem:[#allocation2 + $0x1e10] sm:$0xff]
      %v1003 = vld [vmem:[#allocation2 + $0x1e18] sm:$0xff]
      %v1004 = vld [vmem:[#allocation2 + $0x1e20] sm:$0xff]
      %v1005 = vld [vmem:[#allocation2 + $0x1e28] sm:$0xff]
      %v1006 = vld [vmem:[#allocation2 + $0x1e30] sm:$0xff]
      %v1007 = vld [vmem:[#allocation2 + $0x1e38] sm:$0xff]
      %v1008 = vld [vmem:[#allocation2 + $0x1e40] sm:$0xff]
      %v1009 = vld [vmem:[#allocation2 + $0x1e48] sm:$0xff]
      %v1010 = vld [vmem:[#allocation2 + $0x1e50] sm:$0xff]
      %v1011 = vld [vmem:[#allocation2 + $0x1e58] sm:$0xff]
      %v1012 = vld [vmem:[#allocation2 + $0x1e60] sm:$0xff]
      %v1013 = vld [vmem:[#allocation2 + $0x1e68] sm:$0xff]
      %v1014 = vld [vmem:[#allocation2 + $0x1e70] sm:$0xff]
      %v1015 = vld [vmem:[#allocation2 + $0x1e78] sm:$0xff]
      %v1016 = vld [vmem:[#allocation2 + $0x1e80] sm:$0xff]
      %v1017 = vld [vmem:[#allocation2 + $0x1e88] sm:$0xff]
      %v1018 = vld [vmem:[#allocation2 + $0x1e90] sm:$0xff]
      %v1019 = vld [vmem:[#allocation2 + $0x1e98] sm:$0xff]
      %v1020 = vld [vmem:[#allocation2 + $0x1ea0] sm:$0xff]
      %v1021 = vld [vmem:[#allocation2 + $0x1ea8] sm:$0xff]
      %v1022 = vld [vmem:[#allocation2 + $0x1eb0] sm:$0xff]
      %v1023 = vld [vmem:[#allocation2 + $0x1eb8] sm:$0xff]
      %v1024 = vld [vmem:[#allocation2 + $0x1ec0] sm:$0xff]
      %v1025 = vld [vmem:[#allocation2 + $0x1ec8] sm:$0xff]
      %v1026 = vld [vmem:[#allocation2 + $0x1ed0] sm:$0xff]
      %v1027 = vld [vmem:[#allocation2 + $0x1ed8] sm:$0xff]
      %v1028 = vld [vmem:[#allocation2 + $0x1ee0] sm:$0xff]
      %v1029 = vld [vmem:[#allocation2 + $0x1ee8] sm:$0xff]
      %v1030 = vld [vmem:[#allocation2 + $0x1ef0] sm:$0xff]
      %v1031 = vld [vmem:[#allocation2 + $0x1ef8] sm:$0xff]
      %v1032 = vld [vmem:[#allocation2 + $0x1f00] sm:$0xff]
      %v1033 = vld [vmem:[#allocation2 + $0x1f08] sm:$0xff]
      %v1034 = vld [vmem:[#allocation2 + $0x1f10] sm:$0xff]
      %v1035 = vld [vmem:[#allocation2 + $0x1f18] sm:$0xff]
      %v1036 = vld [vmem:[#allocation2 + $0x1f20] sm:$0xff]
      %v1037 = vld [vmem:[#allocation2 + $0x1f28] sm:$0xff]
      %v1038 = vld [vmem:[#allocation2 + $0x1f30] sm:$0xff]
      %v1039 = vld [vmem:[#allocation2 + $0x1f38] sm:$0xff]
      %v1040 = vld [vmem:[#allocation2 + $0x1f40] sm:$0xff]
      %v1041 = vld [vmem:[#allocation2 + $0x1f48] sm:$0xff]
      %v1042 = vld [vmem:[#allocation2 + $0x1f50] sm:$0xff]
      %v1043 = vld [vmem:[#allocation2 + $0x1f58] sm:$0xff]
      %v1044 = vld [vmem:[#allocation2 + $0x1f60] sm:$0xff]
      %v1045 = vld [vmem:[#allocation2 + $0x1f68] sm:$0xff]
      %v1046 = vld [vmem:[#allocation2 + $0x1f70] sm:$0xff]
      %v1047 = vld [vmem:[#allocation2 + $0x1f78] sm:$0xff]
      %v1048 = vld [vmem:[#allocation2 + $0x1f80] sm:$0xff]
      %v1049 = vld [vmem:[#allocation2 + $0x1f88] sm:$0xff]
      %v1050 = vld [vmem:[#allocation2 + $0x1f90] sm:$0xff]
      %v1051 = vld [vmem:[#allocation2 + $0x1f98] sm:$0xff]
      %v1052 = vld [vmem:[#allocation2 + $0x1fa0] sm:$0xff]
      %v1053 = vld [vmem:[#allocation2 + $0x1fa8] sm:$0xff]
      %v1054 = vld [vmem:[#allocation2 + $0x1fb0] sm:$0xff]
      %v1055 = vld [vmem:[#allocation2 + $0x1fb8] sm:$0xff]
      %v1056 = vld [vmem:[#allocation2 + $0x1fc0] sm:$0xff]
      %v1057 = vld [vmem:[#allocation2 + $0x1fc8] sm:$0xff]
      %v1058 = vld [vmem:[#allocation2 + $0x1fd0] sm:$0xff]
      %v1059 = vld [vmem:[#allocation2 + $0x1fd8] sm:$0xff]
      %v1060 = vld [vmem:[#allocation2 + $0x1fe0] sm:$0xff]
      %v1061 = vld [vmem:[#allocation2 + $0x1fe8] sm:$0xff]
      %v1062 = vld [vmem:[#allocation2 + $0x1ff0] sm:$0xff]
      %v1063 = vld [vmem:[#allocation2 + $0x1ff8] sm:$0xff]
      %v1065 = vcombine.high %v31, %v31
      %v1067 = vunpack.c.l.s4 1983009808
      %v1068 = vunpack.c.0.s8 %v1067
      %v1069 = vlaneseq
      %v1070 = vshrl.u32 %v1069, 7
      %v1071 = vsub.s32 %v1068, %v1070
      %v1072 = vrot.slane %v31, %v1071
      %v1074 = vunpack.c.l.s4 1983009808
      %v1075 = vunpack.c.0.s8 %v1074
      %v1076 = vlaneseq
      %v1077 = vshrl.u32 %v1076, 7
      %v1078 = vsub.s32 %v1075, %v1077
      %v1079 = vrot.slane %v1065, %v1078
      %v1080 = vcombine.high %v1072, %v1072
      %v1081 = vcombine.high %v1079, %v1079
      %1086 = vmatprep.subr.mxu0 %v41
      %1087 = vmatpush1.msra.mxu0 %v40
      %1088 = vmatprep.subr.mxu0 %v57
      %1089 = vmatpush1.msra.mxu0 %v56
      %1090 = vmatprep.subr.mxu0 %v73
      %1091 = vmatpush1.msra.mxu0 %v72
      %1092 = vmatprep.subr.mxu0 %v89
      %1093 = vmatpush1.msra.mxu0 %v88
      %1094 = vmatprep.subr.mxu0 %v105
      %1095 = vmatpush1.msra.mxu0 %v104
      %1096 = vmatprep.subr.mxu0 %v121
      %1097 = vmatpush1.msra.mxu0 %v120
      %1098 = vmatprep.subr.mxu0 %v137
      %1099 = vmatpush1.msra.mxu0 %v136
      %1100 = vmatprep.subr.mxu0 %v153
      %1101 = vmatpush1.msra.mxu0 %v152
      %1102 = vmatprep.subr.mxu0 %v169
      %1103 = vmatpush1.msra.mxu0 %v168
      %1104 = vmatprep.subr.mxu0 %v185
      %1105 = vmatpush1.msra.mxu0 %v184
      %1106 = vmatprep.subr.mxu0 %v201
      %1107 = vmatpush1.msra.mxu0 %v200
      %1108 = vmatprep.subr.mxu0 %v217
      %1109 = vmatpush1.msra.mxu0 %v216
      %1110 = vmatprep.subr.mxu0 %v233
      %1111 = vmatpush1.msra.mxu0 %v232
      %1112 = vmatprep.subr.mxu0 %v249
      %1113 = vmatpush1.msra.mxu0 %v248
      %1114 = vmatprep.subr.mxu0 %v265
      %1115 = vmatpush1.msra.mxu0 %v264
      %1116 = vmatprep.subr.mxu0 %v281
      %1117 = vmatpush1.msra.mxu0 %v280
      %1118 = vmatprep.subr.mxu0 %v297
      %1119 = vmatpush1.msra.mxu0 %v296
      %1120 = vmatprep.subr.mxu0 %v313
      %1121 = vmatpush1.msra.mxu0 %v312
      %1122 = vmatprep.subr.mxu0 %v329
      %1123 = vmatpush1.msra.mxu0 %v328
      %1124 = vmatprep.subr.mxu0 %v345
      %1125 = vmatpush1.msra.mxu0 %v344
      %1126 = vmatprep.subr.mxu0 %v361
      %1127 = vmatpush1.msra.mxu0 %v360
      %1128 = vmatprep.subr.mxu0 %v377
      %1129 = vmatpush1.msra.mxu0 %v376
      %1130 = vmatprep.subr.mxu0 %v393
      %1131 = vmatpush1.msra.mxu0 %v392
      %1132 = vmatprep.subr.mxu0 %v409
      %1133 = vmatpush1.msra.mxu0 %v408
      %1134 = vmatprep.subr.mxu0 %v425
      %1135 = vmatpush1.msra.mxu0 %v424
      %1136 = vmatprep.subr.mxu0 %v441
      %1137 = vmatpush1.msra.mxu0 %v440
      %1138 = vmatprep.subr.mxu0 %v457
      %1139 = vmatpush1.msra.mxu0 %v456
      %1140 = vmatprep.subr.mxu0 %v473
      %1141 = vmatpush1.msra.mxu0 %v472
      %1142 = vmatprep.subr.mxu0 %v489
      %1143 = vmatpush1.msra.mxu0 %v488
      %1144 = vmatprep.subr.mxu0 %v505
      %1145 = vmatpush1.msra.mxu0 %v504
      %1146 = vmatprep.subr.mxu0 %v521
      %1147 = vmatpush1.msra.mxu0 %v520
      %1148 = vmatprep.subr.mxu0 %v537
      %1149 = vmatpush1.msra.mxu0 %v536
      %1150 = vmatprep.mubr.f32.mxu0 %v1080
      %1151 = vmatmul.mubr.f32.gmra.mrb[0].mxu0 %v1072
      %v1152 = vpop.f32.mrb[0].mxu0
      %v1153 = vadd.f32 0.0, %v1152
      %v1154 = vpop.f32.mrb[0].mxu0
      %v1155 = vadd.f32 0.0, %v1154
      %1156 = vdwg.mxu0
      %1157 = vmatprep.subr.mxu0 %v553
      %1158 = vmatpush1.msra.mxu0 %v552
      %1159 = vmatprep.subr.mxu0 %v569
      %1160 = vmatpush1.msra.mxu0 %v568
      %1161 = vmatprep.subr.mxu0 %v585
      %1162 = vmatpush1.msra.mxu0 %v584
      %1163 = vmatprep.subr.mxu0 %v601
      %1164 = vmatpush1.msra.mxu0 %v600
      %1165 = vmatprep.subr.mxu0 %v617
      %1166 = vmatpush1.msra.mxu0 %v616
      %1167 = vmatprep.subr.mxu0 %v633
      %1168 = vmatpush1.msra.mxu0 %v632
      %1169 = vmatprep.subr.mxu0 %v649
      %1170 = vmatpush1.msra.mxu0 %v648
      %1171 = vmatprep.subr.mxu0 %v665
      %1172 = vmatpush1.msra.mxu0 %v664
      %1173 = vmatprep.subr.mxu0 %v681
      %1174 = vmatpush1.msra.mxu0 %v680
      %1175 = vmatprep.subr.mxu0 %v697
      %1176 = vmatpush1.msra.mxu0 %v696
      %1177 = vmatprep.subr.mxu0 %v713
      %1178 = vmatpush1.msra.mxu0 %v712
      %1179 = vmatprep.subr.mxu0 %v729
      %1180 = vmatpush1.msra.mxu0 %v728
      %1181 = vmatprep.subr.mxu0 %v745
      %1182 = vmatpush1.msra.mxu0 %v744
      %1183 = vmatprep.subr.mxu0 %v761
      %1184 = vmatpush1.msra.mxu0 %v760
      %1185 = vmatprep.subr.mxu0 %v777
      %1186 = vmatpush1.msra.mxu0 %v776
      %1187 = vmatprep.subr.mxu0 %v793
      %1188 = vmatpush1.msra.mxu0 %v792
      %1189 = vmatprep.subr.mxu0 %v809
      %1190 = vmatpush1.msra.mxu0 %v808
      %1191 = vmatprep.subr.mxu0 %v825
      %1192 = vmatpush1.msra.mxu0 %v824
      %1193 = vmatprep.subr.mxu0 %v841
      %1194 = vmatpush1.msra.mxu0 %v840
      %1195 = vmatprep.subr.mxu0 %v857
      %1196 = vmatpush1.msra.mxu0 %v856
      %1197 = vmatprep.subr.mxu0 %v873
      %1198 = vmatpush1.msra.mxu0 %v872
      %1199 = vmatprep.subr.mxu0 %v889
      %1200 = vmatpush1.msra.mxu0 %v888
      %1201 = vmatprep.subr.mxu0 %v905
      %1202 = vmatpush1.msra.mxu0 %v904
      %1203 = vmatprep.subr.mxu0 %v921
      %1204 = vmatpush1.msra.mxu0 %v920
      %1205 = vmatprep.subr.mxu0 %v937
      %1206 = vmatpush1.msra.mxu0 %v936
      %1207 = vmatprep.subr.mxu0 %v953
      %1208 = vmatpush1.msra.mxu0 %v952
      %1209 = vmatprep.subr.mxu0 %v969
      %1210 = vmatpush1.msra.mxu0 %v968
      %1211 = vmatprep.subr.mxu0 %v985
      %1212 = vmatpush1.msra.mxu0 %v984
      %1213 = vmatprep.subr.mxu0 %v1001
      %1214 = vmatpush1.msra.mxu0 %v1000
      %1215 = vmatprep.subr.mxu0 %v1017
      %1216 = vmatpush1.msra.mxu0 %v1016
      %1217 = vmatprep.subr.mxu0 %v1033
      %1218 = vmatpush1.msra.mxu0 %v1032
      %1219 = vmatprep.subr.mxu0 %v1049
      %1220 = vmatpush1.msra.mxu0 %v1048
      %1221 = vmatprep.mubr.f32.mxu0 %v1081
      %1222 = vmatmul.mubr.f32.gmra.mrb[0].mxu0 %v1079
      %v1223 = vpop.f32.mrb[0].mxu0
      %v1224 = vadd.f32 %v1153, %v1223
      %v1225 = vpop.f32.mrb[0].mxu0
      %v1226 = vadd.f32 %v1155, %v1225
      %1227 = vdwg.mxu0
      %1228 = vmatprep.subr.mxu0 %v43
      %1229 = vmatpush1.msra.mxu0 %v42
      %1230 = vmatprep.subr.mxu0 %v59
      %1231 = vmatpush1.msra.mxu0 %v58
      %1232 = vmatprep.subr.mxu0 %v75
      %1233 = vmatpush1.msra.mxu0 %v74
      %1234 = vmatprep.subr.mxu0 %v91
      %1235 = vmatpush1.msra.mxu0 %v90
      %1236 = vmatprep.subr.mxu0 %v107
      %1237 = vmatpush1.msra.mxu0 %v106
      %1238 = vmatprep.subr.mxu0 %v123
      %1239 = vmatpush1.msra.mxu0 %v122
      %1240 = vmatprep.subr.mxu0 %v139
      %1241 = vmatpush1.msra.mxu0 %v138
      %1242 = vmatprep.subr.mxu0 %v155
      %1243 = vmatpush1.msra.mxu0 %v154
      %1244 = vmatprep.subr.mxu0 %v171
      %1245 = vmatpush1.msra.mxu0 %v170
      %1246 = vmatprep.subr.mxu0 %v187
      %1247 = vmatpush1.msra.mxu0 %v186
      %1248 = vmatprep.subr.mxu0 %v203
      %1249 = vmatpush1.msra.mxu0 %v202
      %1250 = vmatprep.subr.mxu0 %v219
      %1251 = vmatpush1.msra.mxu0 %v218
      %1252 = vmatprep.subr.mxu0 %v235
      %1253 = vmatpush1.msra.mxu0 %v234
      %1254 = vmatprep.subr.mxu0 %v251
      %1255 = vmatpush1.msra.mxu0 %v250
      %1256 = vmatprep.subr.mxu0 %v267
      %1257 = vmatpush1.msra.mxu0 %v266
      %1258 = vmatprep.subr.mxu0 %v283
      %1259 = vmatpush1.msra.mxu0 %v282
      %1260 = vmatprep.subr.mxu0 %v299
      %1261 = vmatpush1.msra.mxu0 %v298
      %1262 = vmatprep.subr.mxu0 %v315
      %1263 = vmatpush1.msra.mxu0 %v314
      %1264 = vmatprep.subr.mxu0 %v331
      %1265 = vmatpush1.msra.mxu0 %v330
      %1266 = vmatprep.subr.mxu0 %v347
      %1267 = vmatpush1.msra.mxu0 %v346
      %1268 = vmatprep.subr.mxu0 %v363
      %1269 = vmatpush1.msra.mxu0 %v362
      %1270 = vmatprep.subr.mxu0 %v379
      %1271 = vmatpush1.msra.mxu0 %v378
      %1272 = vmatprep.subr.mxu0 %v395
      %1273 = vmatpush1.msra.mxu0 %v394
      %1274 = vmatprep.subr.mxu0 %v411
      %1275 = vmatpush1.msra.mxu0 %v410
      %1276 = vmatprep.subr.mxu0 %v427
      %1277 = vmatpush1.msra.mxu0 %v426
      %1278 = vmatprep.subr.mxu0 %v443
      %1279 = vmatpush1.msra.mxu0 %v442
      %1280 = vmatprep.subr.mxu0 %v459
      %1281 = vmatpush1.msra.mxu0 %v458
      %1282 = vmatprep.subr.mxu0 %v475
      %1283 = vmatpush1.msra.mxu0 %v474
      %1284 = vmatprep.subr.mxu0 %v491
      %1285 = vmatpush1.msra.mxu0 %v490
      %1286 = vmatprep.subr.mxu0 %v507
      %1287 = vmatpush1.msra.mxu0 %v506
      %1288 = vmatprep.subr.mxu0 %v523
      %1289 = vmatpush1.msra.mxu0 %v522
      %1290 = vmatprep.subr.mxu0 %v539
      %1291 = vmatpush1.msra.mxu0 %v538
      %1292 = vmatprep.mubr.f32.mxu0 %v1080
      %1293 = vmatmul.mubr.f32.gmra.mrb[0].mxu0 %v1072
      %v1294 = vpop.f32.mrb[0].mxu0
      %v1295 = vadd.f32 0.0, %v1294
      %v1296 = vpop.f32.mrb[0].mxu0
      %v1297 = vadd.f32 0.0, %v1296
      %1298 = vdwg.mxu0
      %1299 = vmatprep.subr.mxu0 %v555
      %1300 = vmatpush1.msra.mxu0 %v554
      %1301 = vmatprep.subr.mxu0 %v571
      %1302 = vmatpush1.msra.mxu0 %v570
      %1303 = vmatprep.subr.mxu0 %v587
      %1304 = vmatpush1.msra.mxu0 %v586
      %1305 = vmatprep.subr.mxu0 %v603
      %1306 = vmatpush1.msra.mxu0 %v602
      %1307 = vmatprep.subr.mxu0 %v619
      %1308 = vmatpush1.msra.mxu0 %v618
      %1309 = vmatprep.subr.mxu0 %v635
      %1310 = vmatpush1.msra.mxu0 %v634
      %1311 = vmatprep.subr.mxu0 %v651
      %1312 = vmatpush1.msra.mxu0 %v650
      %1313 = vmatprep.subr.mxu0 %v667
      %1314 = vmatpush1.msra.mxu0 %v666
      %1315 = vmatprep.subr.mxu0 %v683
      %1316 = vmatpush1.msra.mxu0 %v682
      %1317 = vmatprep.subr.mxu0 %v699
      %1318 = vmatpush1.msra.mxu0 %v698
      %1319 = vmatprep.subr.mxu0 %v715
      %1320 = vmatpush1.msra.mxu0 %v714
      %1321 = vmatprep.subr.mxu0 %v731
      %1322 = vmatpush1.msra.mxu0 %v730
      %1323 = vmatprep.subr.mxu0 %v747
      %1324 = vmatpush1.msra.mxu0 %v746
      %1325 = vmatprep.subr.mxu0 %v763
      %1326 = vmatpush1.msra.mxu0 %v762
      %1327 = vmatprep.subr.mxu0 %v779
      %1328 = vmatpush1.msra.mxu0 %v778
      %1329 = vmatprep.subr.mxu0 %v795
      %1330 = vmatpush1.msra.mxu0 %v794
      %1331 = vmatprep.subr.mxu0 %v811
      %1332 = vmatpush1.msra.mxu0 %v810
      %1333 = vmatprep.subr.mxu0 %v827
      %1334 = vmatpush1.msra.mxu0 %v826
      %1335 = vmatprep.subr.mxu0 %v843
      %1336 = vmatpush1.msra.mxu0 %v842
      %1337 = vmatprep.subr.mxu0 %v859
      %1338 = vmatpush1.msra.mxu0 %v858
      %1339 = vmatprep.subr.mxu0 %v875
      %1340 = vmatpush1.msra.mxu0 %v874
      %1341 = vmatprep.subr.mxu0 %v891
      %1342 = vmatpush1.msra.mxu0 %v890
      %1343 = vmatprep.subr.mxu0 %v907
      %1344 = vmatpush1.msra.mxu0 %v906
      %1345 = vmatprep.subr.mxu0 %v923
      %1346 = vmatpush1.msra.mxu0 %v922
      %1347 = vmatprep.subr.mxu0 %v939
      %1348 = vmatpush1.msra.mxu0 %v938
      %1349 = vmatprep.subr.mxu0 %v955
      %1350 = vmatpush1.msra.mxu0 %v954
      %1351 = vmatprep.subr.mxu0 %v971
      %1352 = vmatpush1.msra.mxu0 %v970
      %1353 = vmatprep.subr.mxu0 %v987
      %1354 = vmatpush1.msra.mxu0 %v986
      %1355 = vmatprep.subr.mxu0 %v1003
      %1356 = vmatpush1.msra.mxu0 %v1002
      %1357 = vmatprep.subr.mxu0 %v1019
      %1358 = vmatpush1.msra.mxu0 %v1018
      %1359 = vmatprep.subr.mxu0 %v1035
      %1360 = vmatpush1.msra.mxu0 %v1034
      %1361 = vmatprep.subr.mxu0 %v1051
      %1362 = vmatpush1.msra.mxu0 %v1050
      %1363 = vmatprep.mubr.f32.mxu0 %v1081
      %1364 = vmatmul.mubr.f32.gmra.mrb[0].mxu0 %v1079
      %v1365 = vpop.f32.mrb[0].mxu0
      %v1366 = vadd.f32 %v1295, %v1365
      %v1367 = vpop.f32.mrb[0].mxu0
      %v1368 = vadd.f32 %v1297, %v1367
      %1369 = vdwg.mxu0
      %1370 = vmatprep.subr.mxu0 %v45
      %1371 = vmatpush1.msra.mxu0 %v44
      %1372 = vmatprep.subr.mxu0 %v61
      %1373 = vmatpush1.msra.mxu0 %v60
      %1374 = vmatprep.subr.mxu0 %v77
      %1375 = vmatpush1.msra.mxu0 %v76
      %1376 = vmatprep.subr.mxu0 %v93
      %1377 = vmatpush1.msra.mxu0 %v92
      %1378 = vmatprep.subr.mxu0 %v109
      %1379 = vmatpush1.msra.mxu0 %v108
      %1380 = vmatprep.subr.mxu0 %v125
      %1381 = vmatpush1.msra.mxu0 %v124
      %1382 = vmatprep.subr.mxu0 %v141
      %1383 = vmatpush1.msra.mxu0 %v140
      %1384 = vmatprep.subr.mxu0 %v157
      %1385 = vmatpush1.msra.mxu0 %v156
      %1386 = vmatprep.subr.mxu0 %v173
      %1387 = vmatpush1.msra.mxu0 %v172
      %1388 = vmatprep.subr.mxu0 %v189
      %1389 = vmatpush1.msra.mxu0 %v188
      %1390 = vmatprep.subr.mxu0 %v205
      %1391 = vmatpush1.msra.mxu0 %v204
      %1392 = vmatprep.subr.mxu0 %v221
      %1393 = vmatpush1.msra.mxu0 %v220
      %1394 = vmatprep.subr.mxu0 %v237
      %1395 = vmatpush1.msra.mxu0 %v236
      %1396 = vmatprep.subr.mxu0 %v253
      %1397 = vmatpush1.msra.mxu0 %v252
      %1398 = vmatprep.subr.mxu0 %v269
      %1399 = vmatpush1.msra.mxu0 %v268
      %1400 = vmatprep.subr.mxu0 %v285
      %1401 = vmatpush1.msra.mxu0 %v284
      %1402 = vmatprep.subr.mxu0 %v301
      %1403 = vmatpush1.msra.mxu0 %v300
      %1404 = vmatprep.subr.mxu0 %v317
      %1405 = vmatpush1.msra.mxu0 %v316
      %1406 = vmatprep.subr.mxu0 %v333
      %1407 = vmatpush1.msra.mxu0 %v332
      %1408 = vmatprep.subr.mxu0 %v349
      %1409 = vmatpush1.msra.mxu0 %v348
      %1410 = vmatprep.subr.mxu0 %v365
      %1411 = vmatpush1.msra.mxu0 %v364
      %1412 = vmatprep.subr.mxu0 %v381
      %1413 = vmatpush1.msra.mxu0 %v380
      %1414 = vmatprep.subr.mxu0 %v397
      %1415 = vmatpush1.msra.mxu0 %v396
      %1416 = vmatprep.subr.mxu0 %v413
      %1417 = vmatpush1.msra.mxu0 %v412
      %1418 = vmatprep.subr.mxu0 %v429
      %1419 = vmatpush1.msra.mxu0 %v428
      %1420 = vmatprep.subr.mxu0 %v445
      %1421 = vmatpush1.msra.mxu0 %v444
      %1422 = vmatprep.subr.mxu0 %v461
      %1423 = vmatpush1.msra.mxu0 %v460
      %1424 = vmatprep.subr.mxu0 %v477
      %1425 = vmatpush1.msra.mxu0 %v476
      %1426 = vmatprep.subr.mxu0 %v493
      %1427 = vmatpush1.msra.mxu0 %v492
      %1428 = vmatprep.subr.mxu0 %v509
      %1429 = vmatpush1.msra.mxu0 %v508
      %1430 = vmatprep.subr.mxu0 %v525
      %1431 = vmatpush1.msra.mxu0 %v524
      %1432 = vmatprep.subr.mxu0 %v541
      %1433 = vmatpush1.msra.mxu0 %v540
      %1434 = vmatprep.mubr.f32.mxu0 %v1080
      %1435 = vmatmul.mubr.f32.gmra.mrb[0].mxu0 %v1072
      %v1436 = vpop.f32.mrb[0].mxu0
      %v1437 = vadd.f32 0.0, %v1436
      %v1438 = vpop.f32.mrb[0].mxu0
      %v1439 = vadd.f32 0.0, %v1438
      %1440 = vdwg.mxu0
      %1441 = vmatprep.subr.mxu0 %v557
      %1442 = vmatpush1.msra.mxu0 %v556
      %1443 = vmatprep.subr.mxu0 %v573
      %1444 = vmatpush1.msra.mxu0 %v572
      %1445 = vmatprep.subr.mxu0 %v589
      %1446 = vmatpush1.msra.mxu0 %v588
      %1447 = vmatprep.subr.mxu0 %v605
      %1448 = vmatpush1.msra.mxu0 %v604
      %1449 = vmatprep.subr.mxu0 %v621
      %1450 = vmatpush1.msra.mxu0 %v620
      %1451 = vmatprep.subr.mxu0 %v637
      %1452 = vmatpush1.msra.mxu0 %v636
      %1453 = vmatprep.subr.mxu0 %v653
      %1454 = vmatpush1.msra.mxu0 %v652
      %1455 = vmatprep.subr.mxu0 %v669
      %1456 = vmatpush1.msra.mxu0 %v668
      %1457 = vmatprep.subr.mxu0 %v685
      %1458 = vmatpush1.msra.mxu0 %v684
      %1459 = vmatprep.subr.mxu0 %v701
      %1460 = vmatpush1.msra.mxu0 %v700
      %1461 = vmatprep.subr.mxu0 %v717
      %1462 = vmatpush1.msra.mxu0 %v716
      %1463 = vmatprep.subr.mxu0 %v733
      %1464 = vmatpush1.msra.mxu0 %v732
      %1465 = vmatprep.subr.mxu0 %v749
      %1466 = vmatpush1.msra.mxu0 %v748
      %1467 = vmatprep.subr.mxu0 %v765
      %1468 = vmatpush1.msra.mxu0 %v764
      %1469 = vmatprep.subr.mxu0 %v781
      %1470 = vmatpush1.msra.mxu0 %v780
      %1471 = vmatprep.subr.mxu0 %v797
      %1472 = vmatpush1.msra.mxu0 %v796
      %1473 = vmatprep.subr.mxu0 %v813
      %1474 = vmatpush1.msra.mxu0 %v812
      %1475 = vmatprep.subr.mxu0 %v829
      %1476 = vmatpush1.msra.mxu0 %v828
      %1477 = vmatprep.subr.mxu0 %v845
      %1478 = vmatpush1.msra.mxu0 %v844
      %1479 = vmatprep.subr.mxu0 %v861
      %1480 = vmatpush1.msra.mxu0 %v860
      %1481 = vmatprep.subr.mxu0 %v877
      %1482 = vmatpush1.msra.mxu0 %v876
      %1483 = vmatprep.subr.mxu0 %v893
      %1484 = vmatpush1.msra.mxu0 %v892
      %1485 = vmatprep.subr.mxu0 %v909
      %1486 = vmatpush1.msra.mxu0 %v908
      %1487 = vmatprep.subr.mxu0 %v925
      %1488 = vmatpush1.msra.mxu0 %v924
      %1489 = vmatprep.subr.mxu0 %v941
      %1490 = vmatpush1.msra.mxu0 %v940
      %1491 = vmatprep.subr.mxu0 %v957
      %1492 = vmatpush1.msra.mxu0 %v956
      %1493 = vmatprep.subr.mxu0 %v973
      %1494 = vmatpush1.msra.mxu0 %v972
      %1495 = vmatprep.subr.mxu0 %v989
      %1496 = vmatpush1.msra.mxu0 %v988
      %1497 = vmatprep.subr.mxu0 %v1005
      %1498 = vmatpush1.msra.mxu0 %v1004
      %1499 = vmatprep.subr.mxu0 %v1021
      %1500 = vmatpush1.msra.mxu0 %v1020
      %1501 = vmatprep.subr.mxu0 %v1037
      %1502 = vmatpush1.msra.mxu0 %v1036
      %1503 = vmatprep.subr.mxu0 %v1053
      %1504 = vmatpush1.msra.mxu0 %v1052
      %1505 = vmatprep.mubr.f32.mxu0 %v1081
      %1506 = vmatmul.mubr.f32.gmra.mrb[0].mxu0 %v1079
      %v1507 = vpop.f32.mrb[0].mxu0
      %v1508 = vadd.f32 %v1437, %v1507
      %v1509 = vpop.f32.mrb[0].mxu0
      %v1510 = vadd.f32 %v1439, %v1509
      %1511 = vdwg.mxu0
      %1512 = vmatprep.subr.mxu0 %v47
      %1513 = vmatpush1.msra.mxu0 %v46
      %1514 = vmatprep.subr.mxu0 %v63
      %1515 = vmatpush1.msra.mxu0 %v62
      %1516 = vmatprep.subr.mxu0 %v79
      %1517 = vmatpush1.msra.mxu0 %v78
      %1518 = vmatprep.subr.mxu0 %v95
      %1519 = vmatpush1.msra.mxu0 %v94
      %1520 = vmatprep.subr.mxu0 %v111
      %1521 = vmatpush1.msra.mxu0 %v110
      %1522 = vmatprep.subr.mxu0 %v127
      %1523 = vmatpush1.msra.mxu0 %v126
      %1524 = vmatprep.subr.mxu0 %v143
      %1525 = vmatpush1.msra.mxu0 %v142
      %1526 = vmatprep.subr.mxu0 %v159
      %1527 = vmatpush1.msra.mxu0 %v158
      %1528 = vmatprep.subr.mxu0 %v175
      %1529 = vmatpush1.msra.mxu0 %v174
      %1530 = vmatprep.subr.mxu0 %v191
      %1531 = vmatpush1.msra.mxu0 %v190
      %1532 = vmatprep.subr.mxu0 %v207
      %1533 = vmatpush1.msra.mxu0 %v206
      %1534 = vmatprep.subr.mxu0 %v223
      %1535 = vmatpush1.msra.mxu0 %v222
      %1536 = vmatprep.subr.mxu0 %v239
      %1537 = vmatpush1.msra.mxu0 %v238
      %1538 = vmatprep.subr.mxu0 %v255
      %1539 = vmatpush1.msra.mxu0 %v254
      %1540 = vmatprep.subr.mxu0 %v271
      %1541 = vmatpush1.msra.mxu0 %v270
      %1542 = vmatprep.subr.mxu0 %v287
      %1543 = vmatpush1.msra.mxu0 %v286
      %1544 = vmatprep.subr.mxu0 %v303
      %1545 = vmatpush1.msra.mxu0 %v302
      %1546 = vmatprep.subr.mxu0 %v319
      %1547 = vmatpush1.msra.mxu0 %v318
      %1548 = vmatprep.subr.mxu0 %v335
      %1549 = vmatpush1.msra.mxu0 %v334
      %1550 = vmatprep.subr.mxu0 %v351
      %1551 = vmatpush1.msra.mxu0 %v350
      %1552 = vmatprep.subr.mxu0 %v367
      %1553 = vmatpush1.msra.mxu0 %v366
      %1554 = vmatprep.subr.mxu0 %v383
      %1555 = vmatpush1.msra.mxu0 %v382
      %1556 = vmatprep.subr.mxu0 %v399
      %1557 = vmatpush1.msra.mxu0 %v398
      %1558 = vmatprep.subr.mxu0 %v415
      %1559 = vmatpush1.msra.mxu0 %v414
      %1560 = vmatprep.subr.mxu0 %v431
      %1561 = vmatpush1.msra.mxu0 %v430
      %1562 = vmatprep.subr.mxu0 %v447
      %1563 = vmatpush1.msra.mxu0 %v446
      %1564 = vmatprep.subr.mxu0 %v463
      %1565 = vmatpush1.msra.mxu0 %v462
      %1566 = vmatprep.subr.mxu0 %v479
      %1567 = vmatpush1.msra.mxu0 %v478
      %1568 = vmatprep.subr.mxu0 %v495
      %1569 = vmatpush1.msra.mxu0 %v494
      %1570 = vmatprep.subr.mxu0 %v511
      %1571 = vmatpush1.msra.mxu0 %v510
      %1572 = vmatprep.subr.mxu0 %v527
      %1573 = vmatpush1.msra.mxu0 %v526
      %1574 = vmatprep.subr.mxu0 %v543
      %1575 = vmatpush1.msra.mxu0 %v542
      %1576 = vmatprep.mubr.f32.mxu0 %v1080
      %1577 = vmatmul.mubr.f32.gmra.mrb[0].mxu0 %v1072
      %v1578 = vpop.f32.mrb[0].mxu0
      %v1579 = vadd.f32 0.0, %v1578
      %v1580 = vpop.f32.mrb[0].mxu0
      %v1581 = vadd.f32 0.0, %v1580
      %1582 = vdwg.mxu0
      %1583 = vmatprep.subr.mxu0 %v559
      %1584 = vmatpush1.msra.mxu0 %v558
      %1585 = vmatprep.subr.mxu0 %v575
      %1586 = vmatpush1.msra.mxu0 %v574
      %1587 = vmatprep.subr.mxu0 %v591
      %1588 = vmatpush1.msra.mxu0 %v590
      %1589 = vmatprep.subr.mxu0 %v607
      %1590 = vmatpush1.msra.mxu0 %v606
      %1591 = vmatprep.subr.mxu0 %v623
      %1592 = vmatpush1.msra.mxu0 %v622
      %1593 = vmatprep.subr.mxu0 %v639
      %1594 = vmatpush1.msra.mxu0 %v638
      %1595 = vmatprep.subr.mxu0 %v655
      %1596 = vmatpush1.msra.mxu0 %v654
      %1597 = vmatprep.subr.mxu0 %v671
      %1598 = vmatpush1.msra.mxu0 %v670
      %1599 = vmatprep.subr.mxu0 %v687
      %1600 = vmatpush1.msra.mxu0 %v686
      %1601 = vmatprep.subr.mxu0 %v703
      %1602 = vmatpush1.msra.mxu0 %v702
      %1603 = vmatprep.subr.mxu0 %v719
      %1604 = vmatpush1.msra.mxu0 %v718
      %1605 = vmatprep.subr.mxu0 %v735
      %1606 = vmatpush1.msra.mxu0 %v734
      %1607 = vmatprep.subr.mxu0 %v751
      %1608 = vmatpush1.msra.mxu0 %v750
      %1609 = vmatprep.subr.mxu0 %v767
      %1610 = vmatpush1.msra.mxu0 %v766
      %1611 = vmatprep.subr.mxu0 %v783
      %1612 = vmatpush1.msra.mxu0 %v782
      %1613 = vmatprep.subr.mxu0 %v799
      %1614 = vmatpush1.msra.mxu0 %v798
      %1615 = vmatprep.subr.mxu0 %v815
      %1616 = vmatpush1.msra.mxu0 %v814
      %1617 = vmatprep.subr.mxu0 %v831
      %1618 = vmatpush1.msra.mxu0 %v830
      %1619 = vmatprep.subr.mxu0 %v847
      %1620 = vmatpush1.msra.mxu0 %v846
      %1621 = vmatprep.subr.mxu0 %v863
      %1622 = vmatpush1.msra.mxu0 %v862
      %1623 = vmatprep.subr.mxu0 %v879
      %1624 = vmatpush1.msra.mxu0 %v878
      %1625 = vmatprep.subr.mxu0 %v895
      %1626 = vmatpush1.msra.mxu0 %v894
      %1627 = vmatprep.subr.mxu0 %v911
      %1628 = vmatpush1.msra.mxu0 %v910
      %1629 = vmatprep.subr.mxu0 %v927
      %1630 = vmatpush1.msra.mxu0 %v926
      %1631 = vmatprep.subr.mxu0 %v943
      %1632 = vmatpush1.msra.mxu0 %v942
      %1633 = vmatprep.subr.mxu0 %v959
      %1634 = vmatpush1.msra.mxu0 %v958
      %1635 = vmatprep.subr.mxu0 %v975
      %1636 = vmatpush1.msra.mxu0 %v974
      %1637 = vmatprep.subr.mxu0 %v991
      %1638 = vmatpush1.msra.mxu0 %v990
      %1639 = vmatprep.subr.mxu0 %v1007
      %1640 = vmatpush1.msra.mxu0 %v1006
      %1641 = vmatprep.subr.mxu0 %v1023
      %1642 = vmatpush1.msra.mxu0 %v1022
      %1643 = vmatprep.subr.mxu0 %v1039
      %1644 = vmatpush1.msra.mxu0 %v1038
      %1645 = vmatprep.subr.mxu0 %v1055
      %1646 = vmatpush1.msra.mxu0 %v1054
      %1647 = vmatprep.mubr.f32.mxu0 %v1081
      %1648 = vmatmul.mubr.f32.gmra.mrb[0].mxu0 %v1079
      %v1649 = vpop.f32.mrb[0].mxu0
      %v1650 = vadd.f32 %v1579, %v1649
      %v1651 = vpop.f32.mrb[0].mxu0
      %v1652 = vadd.f32 %v1581, %v1651
      %1653 = vdwg.mxu0
      %1654 = vmatprep.subr.mxu0 %v49
      %1655 = vmatpush1.msra.mxu0 %v48
      %1656 = vmatprep.subr.mxu0 %v65
      %1657 = vmatpush1.msra.mxu0 %v64
      %1658 = vmatprep.subr.mxu0 %v81
      %1659 = vmatpush1.msra.mxu0 %v80
      %1660 = vmatprep.subr.mxu0 %v97
      %1661 = vmatpush1.msra.mxu0 %v96
      %1662 = vmatprep.subr.mxu0 %v113
      %1663 = vmatpush1.msra.mxu0 %v112
      %1664 = vmatprep.subr.mxu0 %v129
      %1665 = vmatpush1.msra.mxu0 %v128
      %1666 = vmatprep.subr.mxu0 %v145
      %1667 = vmatpush1.msra.mxu0 %v144
      %1668 = vmatprep.subr.mxu0 %v161
      %1669 = vmatpush1.msra.mxu0 %v160
      %1670 = vmatprep.subr.mxu0 %v177
      %1671 = vmatpush1.msra.mxu0 %v176
      %1672 = vmatprep.subr.mxu0 %v193
      %1673 = vmatpush1.msra.mxu0 %v192
      %1674 = vmatprep.subr.mxu0 %v209
      %1675 = vmatpush1.msra.mxu0 %v208
      %1676 = vmatprep.subr.mxu0 %v225
      %1677 = vmatpush1.msra.mxu0 %v224
      %1678 = vmatprep.subr.mxu0 %v241
      %1679 = vmatpush1.msra.mxu0 %v240
      %1680 = vmatprep.subr.mxu0 %v257
      %1681 = vmatpush1.msra.mxu0 %v256
      %1682 = vmatprep.subr.mxu0 %v273
      %1683 = vmatpush1.msra.mxu0 %v272
      %1684 = vmatprep.subr.mxu0 %v289
      %1685 = vmatpush1.msra.mxu0 %v288
      %1686 = vmatprep.subr.mxu0 %v305
      %1687 = vmatpush1.msra.mxu0 %v304
      %1688 = vmatprep.subr.mxu0 %v321
      %1689 = vmatpush1.msra.mxu0 %v320
      %1690 = vmatprep.subr.mxu0 %v337
      %1691 = vmatpush1.msra.mxu0 %v336
      %1692 = vmatprep.subr.mxu0 %v353
      %1693 = vmatpush1.msra.mxu0 %v352
      %1694 = vmatprep.subr.mxu0 %v369
      %1695 = vmatpush1.msra.mxu0 %v368
      %1696 = vmatprep.subr.mxu0 %v385
      %1697 = vmatpush1.msra.mxu0 %v384
      %1698 = vmatprep.subr.mxu0 %v401
      %1699 = vmatpush1.msra.mxu0 %v400
      %1700 = vmatprep.subr.mxu0 %v417
      %1701 = vmatpush1.msra.mxu0 %v416
      %1702 = vmatprep.subr.mxu0 %v433
      %1703 = vmatpush1.msra.mxu0 %v432
      %1704 = vmatprep.subr.mxu0 %v449
      %1705 = vmatpush1.msra.mxu0 %v448
      %1706 = vmatprep.subr.mxu0 %v465
      %1707 = vmatpush1.msra.mxu0 %v464
      %1708 = vmatprep.subr.mxu0 %v481
      %1709 = vmatpush1.msra.mxu0 %v480
      %1710 = vmatprep.subr.mxu0 %v497
      %1711 = vmatpush1.msra.mxu0 %v496
      %1712 = vmatprep.subr.mxu0 %v513
      %1713 = vmatpush1.msra.mxu0 %v512
      %1714 = vmatprep.subr.mxu0 %v529
      %1715 = vmatpush1.msra.mxu0 %v528
      %1716 = vmatprep.subr.mxu0 %v545
      %1717 = vmatpush1.msra.mxu0 %v544
      %1718 = vmatprep.mubr.f32.mxu0 %v1080
      %1719 = vmatmul.mubr.f32.gmra.mrb[0].mxu0 %v1072
      %v1720 = vpop.f32.mrb[0].mxu0
      %v1721 = vadd.f32 0.0, %v1720
      %v1722 = vpop.f32.mrb[0].mxu0
      %v1723 = vadd.f32 0.0, %v1722
      %1724 = vdwg.mxu0
      %1725 = vmatprep.subr.mxu0 %v561
      %1726 = vmatpush1.msra.mxu0 %v560
      %1727 = vmatprep.subr.mxu0 %v577
      %1728 = vmatpush1.msra.mxu0 %v576
      %1729 = vmatprep.subr.mxu0 %v593
      %1730 = vmatpush1.msra.mxu0 %v592
      %1731 = vmatprep.subr.mxu0 %v609
      %1732 = vmatpush1.msra.mxu0 %v608
      %1733 = vmatprep.subr.mxu0 %v625
      %1734 = vmatpush1.msra.mxu0 %v624
      %1735 = vmatprep.subr.mxu0 %v641
      %1736 = vmatpush1.msra.mxu0 %v640
      %1737 = vmatprep.subr.mxu0 %v657
      %1738 = vmatpush1.msra.mxu0 %v656
      %1739 = vmatprep.subr.mxu0 %v673
      %1740 = vmatpush1.msra.mxu0 %v672
      %1741 = vmatprep.subr.mxu0 %v689
      %1742 = vmatpush1.msra.mxu0 %v688
      %1743 = vmatprep.subr.mxu0 %v705
      %1744 = vmatpush1.msra.mxu0 %v704
      %1745 = vmatprep.subr.mxu0 %v721
      %1746 = vmatpush1.msra.mxu0 %v720
      %1747 = vmatprep.subr.mxu0 %v737
      %1748 = vmatpush1.msra.mxu0 %v736
      %1749 = vmatprep.subr.mxu0 %v753
      %1750 = vmatpush1.msra.mxu0 %v752
      %1751 = vmatprep.subr.mxu0 %v769
      %1752 = vmatpush1.msra.mxu0 %v768
      %1753 = vmatprep.subr.mxu0 %v785
      %1754 = vmatpush1.msra.mxu0 %v784
      %1755 = vmatprep.subr.mxu0 %v801
      %1756 = vmatpush1.msra.mxu0 %v800
      %1757 = vmatprep.subr.mxu0 %v817
      %1758 = vmatpush1.msra.mxu0 %v816
      %1759 = vmatprep.subr.mxu0 %v833
      %1760 = vmatpush1.msra.mxu0 %v832
      %1761 = vmatprep.subr.mxu0 %v849
      %1762 = vmatpush1.msra.mxu0 %v848
      %1763 = vmatprep.subr.mxu0 %v865
      %1764 = vmatpush1.msra.mxu0 %v864
      %1765 = vmatprep.subr.mxu0 %v881
      %1766 = vmatpush1.msra.mxu0 %v880
      %1767 = vmatprep.subr.mxu0 %v897
      %1768 = vmatpush1.msra.mxu0 %v896
      %1769 = vmatprep.subr.mxu0 %v913
      %1770 = vmatpush1.msra.mxu0 %v912
      %1771 = vmatprep.subr.mxu0 %v929
      %1772 = vmatpush1.msra.mxu0 %v928
      %1773 = vmatprep.subr.mxu0 %v945
      %1774 = vmatpush1.msra.mxu0 %v944
      %1775 = vmatprep.subr.mxu0 %v961
      %1776 = vmatpush1.msra.mxu0 %v960
      %1777 = vmatprep.subr.mxu0 %v977
      %1778 = vmatpush1.msra.mxu0 %v976
      %1779 = vmatprep.subr.mxu0 %v993
      %1780 = vmatpush1.msra.mxu0 %v992
      %1781 = vmatprep.subr.mxu0 %v1009
      %1782 = vmatpush1.msra.mxu0 %v1008
      %1783 = vmatprep.subr.mxu0 %v1025
      %1784 = vmatpush1.msra.mxu0 %v1024
      %1785 = vmatprep.subr.mxu0 %v1041
      %1786 = vmatpush1.msra.mxu0 %v1040
      %1787 = vmatprep.subr.mxu0 %v1057
      %1788 = vmatpush1.msra.mxu0 %v1056
      %1789 = vmatprep.mubr.f32.mxu0 %v1081
      %1790 = vmatmul.mubr.f32.gmra.mrb[0].mxu0 %v1079
      %v1791 = vpop.f32.mrb[0].mxu0
      %v1792 = vadd.f32 %v1721, %v1791
      %v1793 = vpop.f32.mrb[0].mxu0
      %v1794 = vadd.f32 %v1723, %v1793
      %1795 = vdwg.mxu0
      %1796 = vmatprep.subr.mxu0 %v51
      %1797 = vmatpush1.msra.mxu0 %v50
      %1798 = vmatprep.subr.mxu0 %v67
      %1799 = vmatpush1.msra.mxu0 %v66
      %1800 = vmatprep.subr.mxu0 %v83
      %1801 = vmatpush1.msra.mxu0 %v82
      %1802 = vmatprep.subr.mxu0 %v99
      %1803 = vmatpush1.msra.mxu0 %v98
      %1804 = vmatprep.subr.mxu0 %v115
      %1805 = vmatpush1.msra.mxu0 %v114
      %1806 = vmatprep.subr.mxu0 %v131
      %1807 = vmatpush1.msra.mxu0 %v130
      %1808 = vmatprep.subr.mxu0 %v147
      %1809 = vmatpush1.msra.mxu0 %v146
      %1810 = vmatprep.subr.mxu0 %v163
      %1811 = vmatpush1.msra.mxu0 %v162
      %1812 = vmatprep.subr.mxu0 %v179
      %1813 = vmatpush1.msra.mxu0 %v178
      %1814 = vmatprep.subr.mxu0 %v195
      %1815 = vmatpush1.msra.mxu0 %v194
      %1816 = vmatprep.subr.mxu0 %v211
      %1817 = vmatpush1.msra.mxu0 %v210
      %1818 = vmatprep.subr.mxu0 %v227
      %1819 = vmatpush1.msra.mxu0 %v226
      %1820 = vmatprep.subr.mxu0 %v243
      %1821 = vmatpush1.msra.mxu0 %v242
      %1822 = vmatprep.subr.mxu0 %v259
      %1823 = vmatpush1.msra.mxu0 %v258
      %1824 = vmatprep.subr.mxu0 %v275
      %1825 = vmatpush1.msra.mxu0 %v274
      %1826 = vmatprep.subr.mxu0 %v291
      %1827 = vmatpush1.msra.mxu0 %v290
      %1828 = vmatprep.subr.mxu0 %v307
      %1829 = vmatpush1.msra.mxu0 %v306
      %1830 = vmatprep.subr.mxu0 %v323
      %1831 = vmatpush1.msra.mxu0 %v322
      %1832 = vmatprep.subr.mxu0 %v339
      %1833 = vmatpush1.msra.mxu0 %v338
      %1834 = vmatprep.subr.mxu0 %v355
      %1835 = vmatpush1.msra.mxu0 %v354
      %1836 = vmatprep.subr.mxu0 %v371
      %1837 = vmatpush1.msra.mxu0 %v370
      %1838 = vmatprep.subr.mxu0 %v387
      %1839 = vmatpush1.msra.mxu0 %v386
      %1840 = vmatprep.subr.mxu0 %v403
      %1841 = vmatpush1.msra.mxu0 %v402
      %1842 = vmatprep.subr.mxu0 %v419
      %1843 = vmatpush1.msra.mxu0 %v418
      %1844 = vmatprep.subr.mxu0 %v435
      %1845 = vmatpush1.msra.mxu0 %v434
      %1846 = vmatprep.subr.mxu0 %v451
      %1847 = vmatpush1.msra.mxu0 %v450
      %1848 = vmatprep.subr.mxu0 %v467
      %1849 = vmatpush1.msra.mxu0 %v466
      %1850 = vmatprep.subr.mxu0 %v483
      %1851 = vmatpush1.msra.mxu0 %v482
      %1852 = vmatprep.subr.mxu0 %v499
      %1853 = vmatpush1.msra.mxu0 %v498
      %1854 = vmatprep.subr.mxu0 %v515
      %1855 = vmatpush1.msra.mxu0 %v514
      %1856 = vmatprep.subr.mxu0 %v531
      %1857 = vmatpush1.msra.mxu0 %v530
      %1858 = vmatprep.subr.mxu0 %v547
      %1859 = vmatpush1.msra.mxu0 %v546
      %1860 = vmatprep.mubr.f32.mxu0 %v1080
      %1861 = vmatmul.mubr.f32.gmra.mrb[0].mxu0 %v1072
      %v1862 = vpop.f32.mrb[0].mxu0
      %v1863 = vadd.f32 0.0, %v1862
      %v1864 = vpop.f32.mrb[0].mxu0
      %v1865 = vadd.f32 0.0, %v1864
      %1866 = vdwg.mxu0
      %1867 = vmatprep.subr.mxu0 %v563
      %1868 = vmatpush1.msra.mxu0 %v562
      %1869 = vmatprep.subr.mxu0 %v579
      %1870 = vmatpush1.msra.mxu0 %v578
      %1871 = vmatprep.subr.mxu0 %v595
      %1872 = vmatpush1.msra.mxu0 %v594
      %1873 = vmatprep.subr.mxu0 %v611
      %1874 = vmatpush1.msra.mxu0 %v610
      %1875 = vmatprep.subr.mxu0 %v627
      %1876 = vmatpush1.msra.mxu0 %v626
      %1877 = vmatprep.subr.mxu0 %v643
      %1878 = vmatpush1.msra.mxu0 %v642
      %1879 = vmatprep.subr.mxu0 %v659
      %1880 = vmatpush1.msra.mxu0 %v658
      %1881 = vmatprep.subr.mxu0 %v675
      %1882 = vmatpush1.msra.mxu0 %v674
      %1883 = vmatprep.subr.mxu0 %v691
      %1884 = vmatpush1.msra.mxu0 %v690
      %1885 = vmatprep.subr.mxu0 %v707
      %1886 = vmatpush1.msra.mxu0 %v706
      %1887 = vmatprep.subr.mxu0 %v723
      %1888 = vmatpush1.msra.mxu0 %v722
      %1889 = vmatprep.subr.mxu0 %v739
      %1890 = vmatpush1.msra.mxu0 %v738
      %1891 = vmatprep.subr.mxu0 %v755
      %1892 = vmatpush1.msra.mxu0 %v754
      %1893 = vmatprep.subr.mxu0 %v771
      %1894 = vmatpush1.msra.mxu0 %v770
      %1895 = vmatprep.subr.mxu0 %v787
      %1896 = vmatpush1.msra.mxu0 %v786
      %1897 = vmatprep.subr.mxu0 %v803
      %1898 = vmatpush1.msra.mxu0 %v802
      %1899 = vmatprep.subr.mxu0 %v819
      %1900 = vmatpush1.msra.mxu0 %v818
      %1901 = vmatprep.subr.mxu0 %v835
      %1902 = vmatpush1.msra.mxu0 %v834
      %1903 = vmatprep.subr.mxu0 %v851
      %1904 = vmatpush1.msra.mxu0 %v850
      %1905 = vmatprep.subr.mxu0 %v867
      %1906 = vmatpush1.msra.mxu0 %v866
      %1907 = vmatprep.subr.mxu0 %v883
      %1908 = vmatpush1.msra.mxu0 %v882
      %1909 = vmatprep.subr.mxu0 %v899
      %1910 = vmatpush1.msra.mxu0 %v898
      %1911 = vmatprep.subr.mxu0 %v915
      %1912 = vmatpush1.msra.mxu0 %v914
      %1913 = vmatprep.subr.mxu0 %v931
      %1914 = vmatpush1.msra.mxu0 %v930
      %1915 = vmatprep.subr.mxu0 %v947
      %1916 = vmatpush1.msra.mxu0 %v946
      %1917 = vmatprep.subr.mxu0 %v963
      %1918 = vmatpush1.msra.mxu0 %v962
      %1919 = vmatprep.subr.mxu0 %v979
      %1920 = vmatpush1.msra.mxu0 %v978
      %1921 = vmatprep.subr.mxu0 %v995
      %1922 = vmatpush1.msra.mxu0 %v994
      %1923 = vmatprep.subr.mxu0 %v1011
      %1924 = vmatpush1.msra.mxu0 %v1010
      %1925 = vmatprep.subr.mxu0 %v1027
      %1926 = vmatpush1.msra.mxu0 %v1026
      %1927 = vmatprep.subr.mxu0 %v1043
      %1928 = vmatpush1.msra.mxu0 %v1042
      %1929 = vmatprep.subr.mxu0 %v1059
      %1930 = vmatpush1.msra.mxu0 %v1058
      %1931 = vmatprep.mubr.f32.mxu0 %v1081
      %1932 = vmatmul.mubr.f32.gmra.mrb[0].mxu0 %v1079
      %v1933 = vpop.f32.mrb[0].mxu0
      %v1934 = vadd.f32 %v1863, %v1933
      %v1935 = vpop.f32.mrb[0].mxu0
      %v1936 = vadd.f32 %v1865, %v1935
      %1937 = vdwg.mxu0
      %1938 = vmatprep.subr.mxu0 %v53
      %1939 = vmatpush1.msra.mxu0 %v52
      %1940 = vmatprep.subr.mxu0 %v69
      %1941 = vmatpush1.msra.mxu0 %v68
      %1942 = vmatprep.subr.mxu0 %v85
      %1943 = vmatpush1.msra.mxu0 %v84
      %1944 = vmatprep.subr.mxu0 %v101
      %1945 = vmatpush1.msra.mxu0 %v100
      %1946 = vmatprep.subr.mxu0 %v117
      %1947 = vmatpush1.msra.mxu0 %v116
      %1948 = vmatprep.subr.mxu0 %v133
      %1949 = vmatpush1.msra.mxu0 %v132
      %1950 = vmatprep.subr.mxu0 %v149
      %1951 = vmatpush1.msra.mxu0 %v148
      %1952 = vmatprep.subr.mxu0 %v165
      %1953 = vmatpush1.msra.mxu0 %v164
      %1954 = vmatprep.subr.mxu0 %v181
      %1955 = vmatpush1.msra.mxu0 %v180
      %1956 = vmatprep.subr.mxu0 %v197
      %1957 = vmatpush1.msra.mxu0 %v196
      %1958 = vmatprep.subr.mxu0 %v213
      %1959 = vmatpush1.msra.mxu0 %v212
      %1960 = vmatprep.subr.mxu0 %v229
      %1961 = vmatpush1.msra.mxu0 %v228
      %1962 = vmatprep.subr.mxu0 %v245
      %1963 = vmatpush1.msra.mxu0 %v244
      %1964 = vmatprep.subr.mxu0 %v261
      %1965 = vmatpush1.msra.mxu0 %v260
      %1966 = vmatprep.subr.mxu0 %v277
      %1967 = vmatpush1.msra.mxu0 %v276
      %1968 = vmatprep.subr.mxu0 %v293
      %1969 = vmatpush1.msra.mxu0 %v292
      %1970 = vmatprep.subr.mxu0 %v309
      %1971 = vmatpush1.msra.mxu0 %v308
      %1972 = vmatprep.subr.mxu0 %v325
      %1973 = vmatpush1.msra.mxu0 %v324
      %1974 = vmatprep.subr.mxu0 %v341
      %1975 = vmatpush1.msra.mxu0 %v340
      %1976 = vmatprep.subr.mxu0 %v357
      %1977 = vmatpush1.msra.mxu0 %v356
      %1978 = vmatprep.subr.mxu0 %v373
      %1979 = vmatpush1.msra.mxu0 %v372
      %1980 = vmatprep.subr.mxu0 %v389
      %1981 = vmatpush1.msra.mxu0 %v388
      %1982 = vmatprep.subr.mxu0 %v405
      %1983 = vmatpush1.msra.mxu0 %v404
      %1984 = vmatprep.subr.mxu0 %v421
      %1985 = vmatpush1.msra.mxu0 %v420
      %1986 = vmatprep.subr.mxu0 %v437
      %1987 = vmatpush1.msra.mxu0 %v436
      %1988 = vmatprep.subr.mxu0 %v453
      %1989 = vmatpush1.msra.mxu0 %v452
      %1990 = vmatprep.subr.mxu0 %v469
      %1991 = vmatpush1.msra.mxu0 %v468
      %1992 = vmatprep.subr.mxu0 %v485
      %1993 = vmatpush1.msra.mxu0 %v484
      %1994 = vmatprep.subr.mxu0 %v501
      %1995 = vmatpush1.msra.mxu0 %v500
      %1996 = vmatprep.subr.mxu0 %v517
      %1997 = vmatpush1.msra.mxu0 %v516
      %1998 = vmatprep.subr.mxu0 %v533
      %1999 = vmatpush1.msra.mxu0 %v532
      %2000 = vmatprep.subr.mxu0 %v549
      %2001 = vmatpush1.msra.mxu0 %v548
      %2002 = vmatprep.mubr.f32.mxu0 %v1080
      %2003 = vmatmul.mubr.f32.gmra.mrb[0].mxu0 %v1072
      %v2004 = vpop.f32.mrb[0].mxu0
      %v2005 = vadd.f32 0.0, %v2004
      %v2006 = vpop.f32.mrb[0].mxu0
      %v2007 = vadd.f32 0.0, %v2006
      %2008 = vdwg.mxu0
      %2009 = vmatprep.subr.mxu0 %v565
      %2010 = vmatpush1.msra.mxu0 %v564
      %2011 = vmatprep.subr.mxu0 %v581
      %2012 = vmatpush1.msra.mxu0 %v580
      %2013 = vmatprep.subr.mxu0 %v597
      %2014 = vmatpush1.msra.mxu0 %v596
      %2015 = vmatprep.subr.mxu0 %v613
      %2016 = vmatpush1.msra.mxu0 %v612
      %2017 = vmatprep.subr.mxu0 %v629
      %2018 = vmatpush1.msra.mxu0 %v628
      %2019 = vmatprep.subr.mxu0 %v645
      %2020 = vmatpush1.msra.mxu0 %v644
      %2021 = vmatprep.subr.mxu0 %v661
      %2022 = vmatpush1.msra.mxu0 %v660
      %2023 = vmatprep.subr.mxu0 %v677
      %2024 = vmatpush1.msra.mxu0 %v676
      %2025 = vmatprep.subr.mxu0 %v693
      %2026 = vmatpush1.msra.mxu0 %v692
      %2027 = vmatprep.subr.mxu0 %v709
      %2028 = vmatpush1.msra.mxu0 %v708
      %2029 = vmatprep.subr.mxu0 %v725
      %2030 = vmatpush1.msra.mxu0 %v724
      %2031 = vmatprep.subr.mxu0 %v741
      %2032 = vmatpush1.msra.mxu0 %v740
      %2033 = vmatprep.subr.mxu0 %v757
      %2034 = vmatpush1.msra.mxu0 %v756
      %2035 = vmatprep.subr.mxu0 %v773
      %2036 = vmatpush1.msra.mxu0 %v772
      %2037 = vmatprep.subr.mxu0 %v789
      %2038 = vmatpush1.msra.mxu0 %v788
      %2039 = vmatprep.subr.mxu0 %v805
      %2040 = vmatpush1.msra.mxu0 %v804
      %2041 = vmatprep.subr.mxu0 %v821
      %2042 = vmatpush1.msra.mxu0 %v820
      %2043 = vmatprep.subr.mxu0 %v837
      %2044 = vmatpush1.msra.mxu0 %v836
      %2045 = vmatprep.subr.mxu0 %v853
      %2046 = vmatpush1.msra.mxu0 %v852
      %2047 = vmatprep.subr.mxu0 %v869
      %2048 = vmatpush1.msra.mxu0 %v868
      %2049 = vmatprep.subr.mxu0 %v885
      %2050 = vmatpush1.msra.mxu0 %v884
      %2051 = vmatprep.subr.mxu0 %v901
      %2052 = vmatpush1.msra.mxu0 %v900
      %2053 = vmatprep.subr.mxu0 %v917
      %2054 = vmatpush1.msra.mxu0 %v916
      %2055 = vmatprep.subr.mxu0 %v933
      %2056 = vmatpush1.msra.mxu0 %v932
      %2057 = vmatprep.subr.mxu0 %v949
      %2058 = vmatpush1.msra.mxu0 %v948
      %2059 = vmatprep.subr.mxu0 %v965
      %2060 = vmatpush1.msra.mxu0 %v964
      %2061 = vmatprep.subr.mxu0 %v981
      %2062 = vmatpush1.msra.mxu0 %v980
      %2063 = vmatprep.subr.mxu0 %v997
      %2064 = vmatpush1.msra.mxu0 %v996
      %2065 = vmatprep.subr.mxu0 %v1013
      %2066 = vmatpush1.msra.mxu0 %v1012
      %2067 = vmatprep.subr.mxu0 %v1029
      %2068 = vmatpush1.msra.mxu0 %v1028
      %2069 = vmatprep.subr.mxu0 %v1045
      %2070 = vmatpush1.msra.mxu0 %v1044
      %2071 = vmatprep.subr.mxu0 %v1061
      %2072 = vmatpush1.msra.mxu0 %v1060
      %2073 = vmatprep.mubr.f32.mxu0 %v1081
      %2074 = vmatmul.mubr.f32.gmra.mrb[0].mxu0 %v1079
      %v2075 = vpop.f32.mrb[0].mxu0
      %v2076 = vadd.f32 %v2005, %v2075
      %v2077 = vpop.f32.mrb[0].mxu0
      %v2078 = vadd.f32 %v2007, %v2077
      %2079 = vdwg.mxu0
      %2080 = vmatprep.subr.mxu0 %v55
      %2081 = vmatpush1.msra.mxu0 %v54
      %2082 = vmatprep.subr.mxu0 %v71
      %2083 = vmatpush1.msra.mxu0 %v70
      %2084 = vmatprep.subr.mxu0 %v87
      %2085 = vmatpush1.msra.mxu0 %v86
      %2086 = vmatprep.subr.mxu0 %v103
      %2087 = vmatpush1.msra.mxu0 %v102
      %2088 = vmatprep.subr.mxu0 %v119
      %2089 = vmatpush1.msra.mxu0 %v118
      %2090 = vmatprep.subr.mxu0 %v135
      %2091 = vmatpush1.msra.mxu0 %v134
      %2092 = vmatprep.subr.mxu0 %v151
      %2093 = vmatpush1.msra.mxu0 %v150
      %2094 = vmatprep.subr.mxu0 %v167
      %2095 = vmatpush1.msra.mxu0 %v166
      %2096 = vmatprep.subr.mxu0 %v183
      %2097 = vmatpush1.msra.mxu0 %v182
      %2098 = vmatprep.subr.mxu0 %v199
      %2099 = vmatpush1.msra.mxu0 %v198
      %2100 = vmatprep.subr.mxu0 %v215
      %2101 = vmatpush1.msra.mxu0 %v214
      %2102 = vmatprep.subr.mxu0 %v231
      %2103 = vmatpush1.msra.mxu0 %v230
      %2104 = vmatprep.subr.mxu0 %v247
      %2105 = vmatpush1.msra.mxu0 %v246
      %2106 = vmatprep.subr.mxu0 %v263
      %2107 = vmatpush1.msra.mxu0 %v262
      %2108 = vmatprep.subr.mxu0 %v279
      %2109 = vmatpush1.msra.mxu0 %v278
      %2110 = vmatprep.subr.mxu0 %v295
      %2111 = vmatpush1.msra.mxu0 %v294
      %2112 = vmatprep.subr.mxu0 %v311
      %2113 = vmatpush1.msra.mxu0 %v310
      %2114 = vmatprep.subr.mxu0 %v327
      %2115 = vmatpush1.msra.mxu0 %v326
      %2116 = vmatprep.subr.mxu0 %v343
      %2117 = vmatpush1.msra.mxu0 %v342
      %2118 = vmatprep.subr.mxu0 %v359
      %2119 = vmatpush1.msra.mxu0 %v358
      %2120 = vmatprep.subr.mxu0 %v375
      %2121 = vmatpush1.msra.mxu0 %v374
      %2122 = vmatprep.subr.mxu0 %v391
      %2123 = vmatpush1.msra.mxu0 %v390
      %2124 = vmatprep.subr.mxu0 %v407
      %2125 = vmatpush1.msra.mxu0 %v406
      %2126 = vmatprep.subr.mxu0 %v423
      %2127 = vmatpush1.msra.mxu0 %v422
      %2128 = vmatprep.subr.mxu0 %v439
      %2129 = vmatpush1.msra.mxu0 %v438
      %2130 = vmatprep.subr.mxu0 %v455
      %2131 = vmatpush1.msra.mxu0 %v454
      %2132 = vmatprep.subr.mxu0 %v471
      %2133 = vmatpush1.msra.mxu0 %v470
      %2134 = vmatprep.subr.mxu0 %v487
      %2135 = vmatpush1.msra.mxu0 %v486
      %2136 = vmatprep.subr.mxu0 %v503
      %2137 = vmatpush1.msra.mxu0 %v502
      %2138 = vmatprep.subr.mxu0 %v519
      %2139 = vmatpush1.msra.mxu0 %v518
      %2140 = vmatprep.subr.mxu0 %v535
      %2141 = vmatpush1.msra.mxu0 %v534
      %2142 = vmatprep.subr.mxu0 %v551
      %2143 = vmatpush1.msra.mxu0 %v550
      %2144 = vmatprep.mubr.f32.mxu0 %v1080
      %2145 = vmatmul.mubr.f32.gmra.mrb[0].mxu0 %v1072
      %v2146 = vpop.f32.mrb[0].mxu0
      %v2147 = vadd.f32 0.0, %v2146
      %v2148 = vpop.f32.mrb[0].mxu0
      %v2149 = vadd.f32 0.0, %v2148
      %2150 = vdwg.mxu0
      %2151 = vmatprep.subr.mxu0 %v567
      %2152 = vmatpush1.msra.mxu0 %v566
      %2153 = vmatprep.subr.mxu0 %v583
      %2154 = vmatpush1.msra.mxu0 %v582
      %2155 = vmatprep.subr.mxu0 %v599
      %2156 = vmatpush1.msra.mxu0 %v598
      %2157 = vmatprep.subr.mxu0 %v615
      %2158 = vmatpush1.msra.mxu0 %v614
      %2159 = vmatprep.subr.mxu0 %v631
      %2160 = vmatpush1.msra.mxu0 %v630
      %2161 = vmatprep.subr.mxu0 %v647
      %2162 = vmatpush1.msra.mxu0 %v646
      %2163 = vmatprep.subr.mxu0 %v663
      %2164 = vmatpush1.msra.mxu0 %v662
      %2165 = vmatprep.subr.mxu0 %v679
      %2166 = vmatpush1.msra.mxu0 %v678
      %2167 = vmatprep.subr.mxu0 %v695
      %2168 = vmatpush1.msra.mxu0 %v694
      %2169 = vmatprep.subr.mxu0 %v711
      %2170 = vmatpush1.msra.mxu0 %v710
      %2171 = vmatprep.subr.mxu0 %v727
      %2172 = vmatpush1.msra.mxu0 %v726
      %2173 = vmatprep.subr.mxu0 %v743
      %2174 = vmatpush1.msra.mxu0 %v742
      %2175 = vmatprep.subr.mxu0 %v759
      %2176 = vmatpush1.msra.mxu0 %v758
      %2177 = vmatprep.subr.mxu0 %v775
      %2178 = vmatpush1.msra.mxu0 %v774
      %2179 = vmatprep.subr.mxu0 %v791
      %2180 = vmatpush1.msra.mxu0 %v790
      %2181 = vmatprep.subr.mxu0 %v807
      %2182 = vmatpush1.msra.mxu0 %v806
      %2183 = vmatprep.subr.mxu0 %v823
      %2184 = vmatpush1.msra.mxu0 %v822
      %2185 = vmatprep.subr.mxu0 %v839
      %2186 = vmatpush1.msra.mxu0 %v838
      %2187 = vmatprep.subr.mxu0 %v855
      %2188 = vmatpush1.msra.mxu0 %v854
      %2189 = vmatprep.subr.mxu0 %v871
      %2190 = vmatpush1.msra.mxu0 %v870
      %2191 = vmatprep.subr.mxu0 %v887
      %2192 = vmatpush1.msra.mxu0 %v886
      %2193 = vmatprep.subr.mxu0 %v903
      %2194 = vmatpush1.msra.mxu0 %v902
      %2195 = vmatprep.subr.mxu0 %v919
      %2196 = vmatpush1.msra.mxu0 %v918
      %2197 = vmatprep.subr.mxu0 %v935
      %2198 = vmatpush1.msra.mxu0 %v934
      %2199 = vmatprep.subr.mxu0 %v951
      %2200 = vmatpush1.msra.mxu0 %v950
      %2201 = vmatprep.subr.mxu0 %v967
      %2202 = vmatpush1.msra.mxu0 %v966
      %2203 = vmatprep.subr.mxu0 %v983
      %2204 = vmatpush1.msra.mxu0 %v982
      %2205 = vmatprep.subr.mxu0 %v999
      %2206 = vmatpush1.msra.mxu0 %v998
      %2207 = vmatprep.subr.mxu0 %v1015
      %2208 = vmatpush1.msra.mxu0 %v1014
      %2209 = vmatprep.subr.mxu0 %v1031
      %2210 = vmatpush1.msra.mxu0 %v1030
      %2211 = vmatprep.subr.mxu0 %v1047
      %2212 = vmatpush1.msra.mxu0 %v1046
      %2213 = vmatprep.subr.mxu0 %v1063
      %2214 = vmatpush1.msra.mxu0 %v1062
      %2215 = vmatprep.mubr.f32.mxu0 %v1081
      %2216 = vmatmul.mubr.f32.gmra.mrb[0].mxu0 %v1079
      %v2217 = vpop.f32.mrb[0].mxu0
      %v2218 = vadd.f32 %v2147, %v2217
      %v2219 = vpop.f32.mrb[0].mxu0
      %v2220 = vadd.f32 %v2149, %v2219
      %2221 = vdwg.mxu0
      %v2238 = vcombine.low %v1224, %v1226
      %v2239 = vcombine.low %v1366, %v1368
      %v2241 = vunpack.c.l.s4 1983009808
      %v2242 = vunpack.c.0.s8 %v2241
      %v2243 = vlaneseq
      %v2244 = vshrl.u32 %v2243, 7
      %v2245 = vsub.s32 %v2242, %v2244
      %v2246 = vrot.slane %v2238, %v2245
      %v2248 = vunpack.c.l.s4 1983009808
      %v2249 = vunpack.c.0.s8 %v2248
      %v2250 = vlaneseq
      %v2251 = vshrl.u32 %v2250, 7
      %v2252 = vsub.s32 %v2249, %v2251
      %v2253 = vrot.slane %v2239, %v2252
      %v2254 = vcombine.low %v2246, %v2253
      %v2255 = vcombine.low %v1508, %v1510
      %v2256 = vcombine.low %v1650, %v1652
      %v2258 = vunpack.c.l.s4 1983009808
      %v2259 = vunpack.c.0.s8 %v2258
      %v2260 = vlaneseq
      %v2261 = vshrl.u32 %v2260, 7
      %v2262 = vsub.s32 %v2259, %v2261
      %v2263 = vrot.slane %v2255, %v2262
      %v2265 = vunpack.c.l.s4 1983009808
      %v2266 = vunpack.c.0.s8 %v2265
      %v2267 = vlaneseq
      %v2268 = vshrl.u32 %v2267, 7
      %v2269 = vsub.s32 %v2266, %v2268
      %v2270 = vrot.slane %v2256, %v2269
      %v2271 = vcombine.low %v2263, %v2270
      %v2272 = vcombine.low %v1792, %v1794
      %v2273 = vcombine.low %v1934, %v1936
      %v2275 = vunpack.c.l.s4 1983009808
      %v2276 = vunpack.c.0.s8 %v2275
      %v2277 = vlaneseq
      %v2278 = vshrl.u32 %v2277, 7
      %v2279 = vsub.s32 %v2276, %v2278
      %v2280 = vrot.slane %v2272, %v2279
      %v2282 = vunpack.c.l.s4 1983009808
      %v2283 = vunpack.c.0.s8 %v2282
      %v2284 = vlaneseq
      %v2285 = vshrl.u32 %v2284, 7
      %v2286 = vsub.s32 %v2283, %v2285
      %v2287 = vrot.slane %v2273, %v2286
      %v2288 = vcombine.low %v2280, %v2287
      %v2289 = vcombine.low %v2076, %v2078
      %v2290 = vcombine.low %v2218, %v2220
      %v2292 = vunpack.c.l.s4 1983009808
      %v2293 = vunpack.c.0.s8 %v2292
      %v2294 = vlaneseq
      %v2295 = vshrl.u32 %v2294, 7
      %v2296 = vsub.s32 %v2293, %v2295
      %v2297 = vrot.slane %v2289, %v2296
      %v2299 = vunpack.c.l.s4 1983009808
      %v2300 = vunpack.c.0.s8 %v2299
      %v2301 = vlaneseq
      %v2302 = vshrl.u32 %v2301, 7
      %v2303 = vsub.s32 %v2300, %v2302
      %v2304 = vrot.slane %v2290, %v2303
      %v2305 = vcombine.low %v2297, %v2304
      %v2310 = vadd.f32 %v36, %v2254
      %v2311 = vadd.f32 %v37, %v2271
      %v2312 = vadd.f32 %v38, %v2288
      %v2313 = vadd.f32 %v39, %v2305
      %v2314 = vxor.u32 %v2310, 2147483648
      %v2315 = vxor.u32 %v2311, 2147483648
      %v2316 = vxor.u32 %v2313, 2147483648
      %v2317 = vmul.f32 %v2314, 1.442695
      %v2318 = vpow.pop %v2317
      %v2319 = vmul.f32 %v2315, 1.442695
      %v2320 = vpow.pop %v2319
      %v2321 = vmul.f32 %v2316, 1.442695
      %v2322 = vpow.pop %v2321
      %v2323 = vadd.f32 %v2318, 1.0
      %v2324 = vadd.f32 %v2320, 1.0
      %v2325 = vadd.f32 %v2322, 1.0
      %v2326 = vrcp.pop %v2323
      %v2327 = vmul.f32 1.0, %v2326
      %v2328 = vrcp.pop %v2324
      %v2329 = vmul.f32 1.0, %v2328
      %v2330 = vrcp.pop %v2325
      %v2331 = vmul.f32 1.0, %v2330
      %v2332 = vtanh.pop %v2312
      %v2333 = vmul.f32 %v2329, %v32
      %v2334 = vmul.f32 %v2327, %v2332
      %v2335 = vadd.f32 %v2333, %v2334
      %v2336 = vtanh.pop %v2335
      %v2337 = vmul.f32 %v2331, %v2336
      %s2338 = smul.u32 %s26, 4
      %s2339 = smul.addr %s2338, 2
      %s2340 = scalar_lea.vmem %s2, %s2339
      %2341 = vst [vmem:[%s2340] sm:$0xff] %v2337
    $region18: #{forward.8} parent=1 // loop_footer
      %s30 = sadd.s32 1, %s26
    $region19: #{forward.8} parent=1 // loop_footer_branch
      %25 = sbr.rel target = $region15
    $region20: #{forward.8} parent=1 // loop_exit
      _
    // Predicated region
    $region21: #{forward.8} parent=1 // pred_check
      _
    $region22: #{forward.8} parent=1 // pred_check_branch
      %2343 = sbr.rel (0) target = $region24
    $region23: #{forward.8} parent=1 // pred_region
      _
    $region24: #{forward.8} parent=1 // pred_fallthru
      _
    // Predicated region
    $region25: #{forward.8} parent=1 // pred_check
      _
    $region26: #{forward.8} parent=1 // pred_check_branch
      %2345 = sbr.rel (0) target = $region28
    $region27: #{forward.8} parent=1 // pred_region
      _
    $region28: #{forward.8} parent=1 // pred_fallthru
      _
    %2346 = vsyncpa [#allocation3], 1

// kernel: forward.9
$region0: #{forward.9}
  #allocation0 [shape = 'u32[]', space=smem, size = 0x4, offset = 0x4, fixed_abs, tag = 'smem constant byte address 0x4 - core index']
  #allocation1 [shape = 'u32[144,128]{1,0:T(1,128)}', space=vmem, size = 0x12000, scoped, tag = 'internal scratch']
  %s0 = inlined_call_operand.vmem [shape: f32[16,512], index: 0, kind: input, shape index: {}]
  %s1 = inlined_call_operand.vmem [shape: f32[512,2048], index: 1, kind: input, shape index: {}]
  %s2 = inlined_call_operand.vmem [shape: f32[1,2048], index: 2, kind: input, shape index: {}]
  %s3 = inlined_call_operand.vmem [shape: f32[16,2048], index: 3, kind: output, shape index: {}]
  %s4 = sld [smem:[#allocation0]]
  $region22: #{forward.9} parent=0
    _
  %s6 = ssub.s32 1, %s4
  %s7 = scalar_select 0, %s6, %s4
  // Predicated region
  $region2: #{forward.9} parent=0 // pred_check
    _
  $region3: #{forward.9} parent=0 // pred_check_branch
    %9 = sbr.rel (0) target = $region5
  $region4: #{forward.9} parent=0 // pred_region
    _
  $region5: #{forward.9} parent=0 // pred_fallthru
    _
  // Predicated region
  $region6: #{forward.9} parent=0 // pred_check
    _
  $region7: #{forward.9} parent=0 // pred_check_branch
    %11 = sbr.rel (0) target = $region9
  $region8: #{forward.9} parent=0 // pred_region
    _
  $region9: #{forward.9} parent=0 // pred_fallthru
    _
  // Predicated region
  $region10: #{forward.9} parent=0 // pred_check
    _
  $region11: #{forward.9} parent=0 // pred_check_branch
    %13 = sbr.rel (0) target = $region13
  $region12: #{forward.9} parent=0 // pred_region
    _
  $region13: #{forward.9} parent=0 // pred_fallthru
    _
  %v14 = vld [vmem:[%s0] sm:$0xff]
  %v15 = vld [vmem:[%s0 + $0x8] sm:$0xff]
  %v16 = vld [vmem:[%s0 + $0x10] sm:$0xff]
  %v17 = vld [vmem:[%s0 + $0x18] sm:$0xff]
  %v18 = vld [vmem:[%s0 + $0x20] sm:$0xff]
  %v19 = vld [vmem:[%s0 + $0x28] sm:$0xff]
  %v20 = vld [vmem:[%s0 + $0x30] sm:$0xff]
  %v21 = vld [vmem:[%s0 + $0x38] sm:$0xff]
  %v22 = vld [vmem:[%s1] sm:$0xff]
  %v23 = vld [vmem:[%s1 + $0x8] sm:$0xff]
  %v24 = vld [vmem:[%s1 + $0x10] sm:$0xff]
  %v25 = vld [vmem:[%s1 + $0x18] sm:$0xff]
  %v26 = vld [vmem:[%s1 + $0x20] sm:$0xff]
  %v27 = vld [vmem:[%s1 + $0x28] sm:$0xff]
  %v28 = vld [vmem:[%s1 + $0x30] sm:$0xff]
  %v29 = vld [vmem:[%s1 + $0x38] sm:$0xff]
  %v30 = vld [vmem:[%s1 + $0x40] sm:$0xff]
  %v31 = vld [vmem:[%s1 + $0x48] sm:$0xff]
  %v32 = vld [vmem:[%s1 + $0x50] sm:$0xff]
  %v33 = vld [vmem:[%s1 + $0x58] sm:$0xff]
  %v34 = vld [vmem:[%s1 + $0x60] sm:$0xff]
  %v35 = vld [vmem:[%s1 + $0x68] sm:$0xff]
  %v36 = vld [vmem:[%s1 + $0x70] sm:$0xff]
  %v37 = vld [vmem:[%s1 + $0x78] sm:$0xff]
  %v38 = vld [vmem:[%s1 + $0x80] sm:$0xff]
  %v39 = vld [vmem:[%s1 + $0x88] sm:$0xff]
  %v40 = vld [vmem:[%s1 + $0x90] sm:$0xff]
  %v41 = vld [vmem:[%s1 + $0x98] sm:$0xff]
  %v42 = vld [vmem:[%s1 + $0xa0] sm:$0xff]
  %v43 = vld [vmem:[%s1 + $0xa8] sm:$0xff]
  %v44 = vld [vmem:[%s1 + $0xb0] sm:$0xff]
  %v45 = vld [vmem:[%s1 + $0xb8] sm:$0xff]
  %v46 = vld [vmem:[%s1 + $0xc0] sm:$0xff]
  %v47 = vld [vmem:[%s1 + $0xc8] sm:$0xff]
  %v48 = vld [vmem:[%s1 + $0xd0] sm:$0xff]
  %v49 = vld [vmem:[%s1 + $0xd8] sm:$0xff]
  %v50 = vld [vmem:[%s1 + $0xe0] sm:$0xff]
  %v51 = vld [vmem:[%s1 + $0xe8] sm:$0xff]
  %v52 = vld [vmem:[%s1 + $0xf0] sm:$0xff]
  %v53 = vld [vmem:[%s1 + $0xf8] sm:$0xff]
  %v54 = vld [vmem:[%s1 + $0x100] sm:$0xff]
  %v55 = vld [vmem:[%s1 + $0x108] sm:$0xff]
  %v56 = vld [vmem:[%s1 + $0x110] sm:$0xff]
  %v57 = vld [vmem:[%s1 + $0x118] sm:$0xff]
  %v58 = vld [vmem:[%s1 + $0x120] sm:$0xff]
  %v59 = vld [vmem:[%s1 + $0x128] sm:$0xff]
  %v60 = vld [vmem:[%s1 + $0x130] sm:$0xff]
  %v61 = vld [vmem:[%s1 + $0x138] sm:$0xff]
  %v62 = vld [vmem:[%s1 + $0x140] sm:$0xff]
  %v63 = vld [vmem:[%s1 + $0x148] sm:$0xff]
  %v64 = vld [vmem:[%s1 + $0x150] sm:$0xff]
  %v65 = vld [vmem:[%s1 + $0x158] sm:$0xff]
  %v66 = vld [vmem:[%s1 + $0x160] sm:$0xff]
  %v67 = vld [vmem:[%s1 + $0x168] sm:$0xff]
  %v68 = vld [vmem:[%s1 + $0x170] sm:$0xff]
  %v69 = vld [vmem:[%s1 + $0x178] sm:$0xff]
  %v70 = vld [vmem:[%s1 + $0x180] sm:$0xff]
  %v71 = vld [vmem:[%s1 + $0x188] sm:$0xff]
  %v72 = vld [vmem:[%s1 + $0x190] sm:$0xff]
  %v73 = vld [vmem:[%s1 + $0x198] sm:$0xff]
  %v74 = vld [vmem:[%s1 + $0x1a0] sm:$0xff]
  %v75 = vld [vmem:[%s1 + $0x1a8] sm:$0xff]
  %v76 = vld [vmem:[%s1 + $0x1b0] sm:$0xff]
  %v77 = vld [vmem:[%s1 + $0x1b8] sm:$0xff]
  %v78 = vld [vmem:[%s1 + $0x1c0] sm:$0xff]
  %v79 = vld [vmem:[%s1 + $0x1c8] sm:$0xff]
  %v80 = vld [vmem:[%s1 + $0x1d0] sm:$0xff]
  %v81 = vld [vmem:[%s1 + $0x1d8] sm:$0xff]
  %v82 = vld [vmem:[%s1 + $0x1e0] sm:$0xff]
  %v83 = vld [vmem:[%s1 + $0x1e8] sm:$0xff]
  %v84 = vld [vmem:[%s1 + $0x1f0] sm:$0xff]
  %v85 = vld [vmem:[%s1 + $0x1f8] sm:$0xff]
  %v86 = vld [vmem:[%s1 + $0x200] sm:$0xff]
  %v87 = vld [vmem:[%s1 + $0x208] sm:$0xff]
  %v88 = vld [vmem:[%s1 + $0x210] sm:$0xff]
  %v89 = vld [vmem:[%s1 + $0x218] sm:$0xff]
  %v90 = vld [vmem:[%s1 + $0x220] sm:$0xff]
  %v91 = vld [vmem:[%s1 + $0x228] sm:$0xff]
  %v92 = vld [vmem:[%s1 + $0x230] sm:$0xff]
  %v93 = vld [vmem:[%s1 + $0x238] sm:$0xff]
  %v94 = vld [vmem:[%s1 + $0x240] sm:$0xff]
  %v95 = vld [vmem:[%s1 + $0x248] sm:$0xff]
  %v96 = vld [vmem:[%s1 + $0x250] sm:$0xff]
  %v97 = vld [vmem:[%s1 + $0x258] sm:$0xff]
  %v98 = vld [vmem:[%s1 + $0x260] sm:$0xff]
  %v99 = vld [vmem:[%s1 + $0x268] sm:$0xff]
  %v100 = vld [vmem:[%s1 + $0x270] sm:$0xff]
  %v101 = vld [vmem:[%s1 + $0x278] sm:$0xff]
  %v102 = vld [vmem:[%s1 + $0x280] sm:$0xff]
  %v103 = vld [vmem:[%s1 + $0x288] sm:$0xff]
  %v104 = vld [vmem:[%s1 + $0x290] sm:$0xff]
  %v105 = vld [vmem:[%s1 + $0x298] sm:$0xff]
  %v106 = vld [vmem:[%s1 + $0x2a0] sm:$0xff]
  %v107 = vld [vmem:[%s1 + $0x2a8] sm:$0xff]
  %v108 = vld [vmem:[%s1 + $0x2b0] sm:$0xff]
  %v109 = vld [vmem:[%s1 + $0x2b8] sm:$0xff]
  %v110 = vld [vmem:[%s1 + $0x2c0] sm:$0xff]
  %v111 = vld [vmem:[%s1 + $0x2c8] sm:$0xff]
  %v112 = vld [vmem:[%s1 + $0x2d0] sm:$0xff]
  %v113 = vld [vmem:[%s1 + $0x2d8] sm:$0xff]
  %v114 = vld [vmem:[%s1 + $0x2e0] sm:$0xff]
  %v115 = vld [vmem:[%s1 + $0x2e8] sm:$0xff]
  %v116 = vld [vmem:[%s1 + $0x2f0] sm:$0xff]
  %v117 = vld [vmem:[%s1 + $0x2f8] sm:$0xff]
  %v118 = vld [vmem:[%s1 + $0x300] sm:$0xff]
  %v119 = vld [vmem:[%s1 + $0x308] sm:$0xff]
  %v120 = vld [vmem:[%s1 + $0x310] sm:$0xff]
  %v121 = vld [vmem:[%s1 + $0x318] sm:$0xff]
  %v122 = vld [vmem:[%s1 + $0x320] sm:$0xff]
  %v123 = vld [vmem:[%s1 + $0x328] sm:$0xff]
  %v124 = vld [vmem:[%s1 + $0x330] sm:$0xff]
  %v125 = vld [vmem:[%s1 + $0x338] sm:$0xff]
  %v126 = vld [vmem:[%s1 + $0x340] sm:$0xff]
  %v127 = vld [vmem:[%s1 + $0x348] sm:$0xff]
  %v128 = vld [vmem:[%s1 + $0x350] sm:$0xff]
  %v129 = vld [vmem:[%s1 + $0x358] sm:$0xff]
  %v130 = vld [vmem:[%s1 + $0x360] sm:$0xff]
  %v131 = vld [vmem:[%s1 + $0x368] sm:$0xff]
  %v132 = vld [vmem:[%s1 + $0x370] sm:$0xff]
  %v133 = vld [vmem:[%s1 + $0x378] sm:$0xff]
  %v134 = vld [vmem:[%s1 + $0x380] sm:$0xff]
  %v135 = vld [vmem:[%s1 + $0x388] sm:$0xff]
  %v136 = vld [vmem:[%s1 + $0x390] sm:$0xff]
  %v137 = vld [vmem:[%s1 + $0x398] sm:$0xff]
  %v138 = vld [vmem:[%s1 + $0x3a0] sm:$0xff]
  %v139 = vld [vmem:[%s1 + $0x3a8] sm:$0xff]
  %v140 = vld [vmem:[%s1 + $0x3b0] sm:$0xff]
  %v141 = vld [vmem:[%s1 + $0x3b8] sm:$0xff]
  %v142 = vld [vmem:[%s1 + $0x3c0] sm:$0xff]
  %v143 = vld [vmem:[%s1 + $0x3c8] sm:$0xff]
  %v144 = vld [vmem:[%s1 + $0x3d0] sm:$0xff]
  %v145 = vld [vmem:[%s1 + $0x3d8] sm:$0xff]
  %v146 = vld [vmem:[%s1 + $0x3e0] sm:$0xff]
  %v147 = vld [vmem:[%s1 + $0x3e8] sm:$0xff]
  %v148 = vld [vmem:[%s1 + $0x3f0] sm:$0xff]
  %v149 = vld [vmem:[%s1 + $0x3f8] sm:$0xff]
  %v150 = vld [vmem:[%s1 + $0x400] sm:$0xff]
  %v151 = vld [vmem:[%s1 + $0x408] sm:$0xff]
  %v152 = vld [vmem:[%s1 + $0x410] sm:$0xff]
  %v153 = vld [vmem:[%s1 + $0x418] sm:$0xff]
  %v154 = vld [vmem:[%s1 + $0x420] sm:$0xff]
  %v155 = vld [vmem:[%s1 + $0x428] sm:$0xff]
  %v156 = vld [vmem:[%s1 + $0x430] sm:$0xff]
  %v157 = vld [vmem:[%s1 + $0x438] sm:$0xff]
  %v158 = vld [vmem:[%s1 + $0x440] sm:$0xff]
  %v159 = vld [vmem:[%s1 + $0x448] sm:$0xff]
  %v160 = vld [vmem:[%s1 + $0x450] sm:$0xff]
  %v161 = vld [vmem:[%s1 + $0x458] sm:$0xff]
  %v162 = vld [vmem:[%s1 + $0x460] sm:$0xff]
  %v163 = vld [vmem:[%s1 + $0x468] sm:$0xff]
  %v164 = vld [vmem:[%s1 + $0x470] sm:$0xff]
  %v165 = vld [vmem:[%s1 + $0x478] sm:$0xff]
  %v166 = vld [vmem:[%s1 + $0x480] sm:$0xff]
  %v167 = vld [vmem:[%s1 + $0x488] sm:$0xff]
  %v168 = vld [vmem:[%s1 + $0x490] sm:$0xff]
  %v169 = vld [vmem:[%s1 + $0x498] sm:$0xff]
  %v170 = vld [vmem:[%s1 + $0x4a0] sm:$0xff]
  %v171 = vld [vmem:[%s1 + $0x4a8] sm:$0xff]
  %v172 = vld [vmem:[%s1 + $0x4b0] sm:$0xff]
  %v173 = vld [vmem:[%s1 + $0x4b8] sm:$0xff]
  %v174 = vld [vmem:[%s1 + $0x4c0] sm:$0xff]
  %v175 = vld [vmem:[%s1 + $0x4c8] sm:$0xff]
  %v176 = vld [vmem:[%s1 + $0x4d0] sm:$0xff]
  %v177 = vld [vmem:[%s1 + $0x4d8] sm:$0xff]
  %v178 = vld [vmem:[%s1 + $0x4e0] sm:$0xff]
  %v179 = vld [vmem:[%s1 + $0x4e8] sm:$0xff]
  %v180 = vld [vmem:[%s1 + $0x4f0] sm:$0xff]
  %v181 = vld [vmem:[%s1 + $0x4f8] sm:$0xff]
  %v182 = vld [vmem:[%s1 + $0x500] sm:$0xff]
  %v183 = vld [vmem:[%s1 + $0x508] sm:$0xff]
  %v184 = vld [vmem:[%s1 + $0x510] sm:$0xff]
  %v185 = vld [vmem:[%s1 + $0x518] sm:$0xff]
  %v186 = vld [vmem:[%s1 + $0x520] sm:$0xff]
  %v187 = vld [vmem:[%s1 + $0x528] sm:$0xff]
  %v188 = vld [vmem:[%s1 + $0x530] sm:$0xff]
  %v189 = vld [vmem:[%s1 + $0x538] sm:$0xff]
  %v190 = vld [vmem:[%s1 + $0x540] sm:$0xff]
  %v191 = vld [vmem:[%s1 + $0x548] sm:$0xff]
  %v192 = vld [vmem:[%s1 + $0x550] sm:$0xff]
  %v193 = vld [vmem:[%s1 + $0x558] sm:$0xff]
  %v194 = vld [vmem:[%s1 + $0x560] sm:$0xff]
  %v195 = vld [vmem:[%s1 + $0x568] sm:$0xff]
  %v196 = vld [vmem:[%s1 + $0x570] sm:$0xff]
  %v197 = vld [vmem:[%s1 + $0x578] sm:$0xff]
  %v198 = vld [vmem:[%s1 + $0x580] sm:$0xff]
  %v199 = vld [vmem:[%s1 + $0x588] sm:$0xff]
  %v200 = vld [vmem:[%s1 + $0x590] sm:$0xff]
  %v201 = vld [vmem:[%s1 + $0x598] sm:$0xff]
  %v202 = vld [vmem:[%s1 + $0x5a0] sm:$0xff]
  %v203 = vld [vmem:[%s1 + $0x5a8] sm:$0xff]
  %v204 = vld [vmem:[%s1 + $0x5b0] sm:$0xff]
  %v205 = vld [vmem:[%s1 + $0x5b8] sm:$0xff]
  %v206 = vld [vmem:[%s1 + $0x5c0] sm:$0xff]
  %v207 = vld [vmem:[%s1 + $0x5c8] sm:$0xff]
  %v208 = vld [vmem:[%s1 + $0x5d0] sm:$0xff]
  %v209 = vld [vmem:[%s1 + $0x5d8] sm:$0xff]
  %v210 = vld [vmem:[%s1 + $0x5e0] sm:$0xff]
  %v211 = vld [vmem:[%s1 + $0x5e8] sm:$0xff]
  %v212 = vld [vmem:[%s1 + $0x5f0] sm:$0xff]
  %v213 = vld [vmem:[%s1 + $0x5f8] sm:$0xff]
  %v214 = vld [vmem:[%s1 + $0x600] sm:$0xff]
  %v215 = vld [vmem:[%s1 + $0x608] sm:$0xff]
  %v216 = vld [vmem:[%s1 + $0x610] sm:$0xff]
  %v217 = vld [vmem:[%s1 + $0x618] sm:$0xff]
  %v218 = vld [vmem:[%s1 + $0x620] sm:$0xff]
  %v219 = vld [vmem:[%s1 + $0x628] sm:$0xff]
  %v220 = vld [vmem:[%s1 + $0x630] sm:$0xff]
  %v221 = vld [vmem:[%s1 + $0x638] sm:$0xff]
  %v222 = vld [vmem:[%s1 + $0x640] sm:$0xff]
  %v223 = vld [vmem:[%s1 + $0x648] sm:$0xff]
  %v224 = vld [vmem:[%s1 + $0x650] sm:$0xff]
  %v225 = vld [vmem:[%s1 + $0x658] sm:$0xff]
  %v226 = vld [vmem:[%s1 + $0x660] sm:$0xff]
  %v227 = vld [vmem:[%s1 + $0x668] sm:$0xff]
  %v228 = vld [vmem:[%s1 + $0x670] sm:$0xff]
  %v229 = vld [vmem:[%s1 + $0x678] sm:$0xff]
  %v230 = vld [vmem:[%s1 + $0x680] sm:$0xff]
  %v231 = vld [vmem:[%s1 + $0x688] sm:$0xff]
  %v232 = vld [vmem:[%s1 + $0x690] sm:$0xff]
  %v233 = vld [vmem:[%s1 + $0x698] sm:$0xff]
  %v234 = vld [vmem:[%s1 + $0x6a0] sm:$0xff]
  %v235 = vld [vmem:[%s1 + $0x6a8] sm:$0xff]
  %v236 = vld [vmem:[%s1 + $0x6b0] sm:$0xff]
  %v237 = vld [vmem:[%s1 + $0x6b8] sm:$0xff]
  %v238 = vld [vmem:[%s1 + $0x6c0] sm:$0xff]
  %v239 = vld [vmem:[%s1 + $0x6c8] sm:$0xff]
  %v240 = vld [vmem:[%s1 + $0x6d0] sm:$0xff]
  %v241 = vld [vmem:[%s1 + $0x6d8] sm:$0xff]
  %v242 = vld [vmem:[%s1 + $0x6e0] sm:$0xff]
  %v243 = vld [vmem:[%s1 + $0x6e8] sm:$0xff]
  %v244 = vld [vmem:[%s1 + $0x6f0] sm:$0xff]
  %v245 = vld [vmem:[%s1 + $0x6f8] sm:$0xff]
  %v246 = vld [vmem:[%s1 + $0x700] sm:$0xff]
  %v247 = vld [vmem:[%s1 + $0x708] sm:$0xff]
  %v248 = vld [vmem:[%s1 + $0x710] sm:$0xff]
  %v249 = vld [vmem:[%s1 + $0x718] sm:$0xff]
  %v250 = vld [vmem:[%s1 + $0x720] sm:$0xff]
  %v251 = vld [vmem:[%s1 + $0x728] sm:$0xff]
  %v252 = vld [vmem:[%s1 + $0x730] sm:$0xff]
  %v253 = vld [vmem:[%s1 + $0x738] sm:$0xff]
  %v254 = vld [vmem:[%s1 + $0x740] sm:$0xff]
  %v255 = vld [vmem:[%s1 + $0x748] sm:$0xff]
  %v256 = vld [vmem:[%s1 + $0x750] sm:$0xff]
  %v257 = vld [vmem:[%s1 + $0x758] sm:$0xff]
  %v258 = vld [vmem:[%s1 + $0x760] sm:$0xff]
  %v259 = vld [vmem:[%s1 + $0x768] sm:$0xff]
  %v260 = vld [vmem:[%s1 + $0x770] sm:$0xff]
  %v261 = vld [vmem:[%s1 + $0x778] sm:$0xff]
  %v262 = vld [vmem:[%s1 + $0x780] sm:$0xff]
  %v263 = vld [vmem:[%s1 + $0x788] sm:$0xff]
  %v264 = vld [vmem:[%s1 + $0x790] sm:$0xff]
  %v265 = vld [vmem:[%s1 + $0x798] sm:$0xff]
  %v266 = vld [vmem:[%s1 + $0x7a0] sm:$0xff]
  %v267 = vld [vmem:[%s1 + $0x7a8] sm:$0xff]
  %v268 = vld [vmem:[%s1 + $0x7b0] sm:$0xff]
  %v269 = vld [vmem:[%s1 + $0x7b8] sm:$0xff]
  %v270 = vld [vmem:[%s1 + $0x7c0] sm:$0xff]
  %v271 = vld [vmem:[%s1 + $0x7c8] sm:$0xff]
  %v272 = vld [vmem:[%s1 + $0x7d0] sm:$0xff]
  %v273 = vld [vmem:[%s1 + $0x7d8] sm:$0xff]
  %v274 = vld [vmem:[%s1 + $0x7e0] sm:$0xff]
  %v275 = vld [vmem:[%s1 + $0x7e8] sm:$0xff]
  %v276 = vld [vmem:[%s1 + $0x7f0] sm:$0xff]
  %v277 = vld [vmem:[%s1 + $0x7f8] sm:$0xff]
  %v278 = vld [vmem:[%s1 + $0x800] sm:$0xff]
  %v279 = vld [vmem:[%s1 + $0x808] sm:$0xff]
  %v280 = vld [vmem:[%s1 + $0x810] sm:$0xff]
  %v281 = vld [vmem:[%s1 + $0x818] sm:$0xff]
  %v282 = vld [vmem:[%s1 + $0x820] sm:$0xff]
  %v283 = vld [vmem:[%s1 + $0x828] sm:$0xff]
  %v284 = vld [vmem:[%s1 + $0x830] sm:$0xff]
  %v285 = vld [vmem:[%s1 + $0x838] sm:$0xff]
  %v286 = vld [vmem:[%s1 + $0x840] sm:$0xff]
  %v287 = vld [vmem:[%s1 + $0x848] sm:$0xff]
  %v288 = vld [vmem:[%s1 + $0x850] sm:$0xff]
  %v289 = vld [vmem:[%s1 + $0x858] sm:$0xff]
  %v290 = vld [vmem:[%s1 + $0x860] sm:$0xff]
  %v291 = vld [vmem:[%s1 + $0x868] sm:$0xff]
  %v292 = vld [vmem:[%s1 + $0x870] sm:$0xff]
  %v293 = vld [vmem:[%s1 + $0x878] sm:$0xff]
  %v294 = vld [vmem:[%s1 + $0x880] sm:$0xff]
  %v295 = vld [vmem:[%s1 + $0x888] sm:$0xff]
  %v296 = vld [vmem:[%s1 + $0x890] sm:$0xff]
  %v297 = vld [vmem:[%s1 + $0x898] sm:$0xff]
  %v298 = vld [vmem:[%s1 + $0x8a0] sm:$0xff]
  %v299 = vld [vmem:[%s1 + $0x8a8] sm:$0xff]
  %v300 = vld [vmem:[%s1 + $0x8b0] sm:$0xff]
  %v301 = vld [vmem:[%s1 + $0x8b8] sm:$0xff]
  %v302 = vld [vmem:[%s1 + $0x8c0] sm:$0xff]
  %v303 = vld [vmem:[%s1 + $0x8c8] sm:$0xff]
  %v304 = vld [vmem:[%s1 + $0x8d0] sm:$0xff]
  %v305 = vld [vmem:[%s1 + $0x8d8] sm:$0xff]
  %v306 = vld [vmem:[%s1 + $0x8e0] sm:$0xff]
  %v307 = vld [vmem:[%s1 + $0x8e8] sm:$0xff]
  %v308 = vld [vmem:[%s1 + $0x8f0] sm:$0xff]
  %v309 = vld [vmem:[%s1 + $0x8f8] sm:$0xff]
  %v310 = vld [vmem:[%s1 + $0x900] sm:$0xff]
  %v311 = vld [vmem:[%s1 + $0x908] sm:$0xff]
  %v312 = vld [vmem:[%s1 + $0x910] sm:$0xff]
  %v313 = vld [vmem:[%s1 + $0x918] sm:$0xff]
  %v314 = vld [vmem:[%s1 + $0x920] sm:$0xff]
  %v315 = vld [vmem:[%s1 + $0x928] sm:$0xff]
  %v316 = vld [vmem:[%s1 + $0x930] sm:$0xff]
  %v317 = vld [vmem:[%s1 + $0x938] sm:$0xff]
  %v318 = vld [vmem:[%s1 + $0x940] sm:$0xff]
  %v319 = vld [vmem:[%s1 + $0x948] sm:$0xff]
  %v320 = vld [vmem:[%s1 + $0x950] sm:$0xff]
  %v321 = vld [vmem:[%s1 + $0x958] sm:$0xff]
  %v322 = vld [vmem:[%s1 + $0x960] sm:$0xff]
  %v323 = vld [vmem:[%s1 + $0x968] sm:$0xff]
  %v324 = vld [vmem:[%s1 + $0x970] sm:$0xff]
  %v325 = vld [vmem:[%s1 + $0x978] sm:$0xff]
  %v326 = vld [vmem:[%s1 + $0x980] sm:$0xff]
  %v327 = vld [vmem:[%s1 + $0x988] sm:$0xff]
  %v328 = vld [vmem:[%s1 + $0x990] sm:$0xff]
  %v329 = vld [vmem:[%s1 + $0x998] sm:$0xff]
  %v330 = vld [vmem:[%s1 + $0x9a0] sm:$0xff]
  %v331 = vld [vmem:[%s1 + $0x9a8] sm:$0xff]
  %v332 = vld [vmem:[%s1 + $0x9b0] sm:$0xff]
  %v333 = vld [vmem:[%s1 + $0x9b8] sm:$0xff]
  %v334 = vld [vmem:[%s1 + $0x9c0] sm:$0xff]
  %v335 = vld [vmem:[%s1 + $0x9c8] sm:$0xff]
  %v336 = vld [vmem:[%s1 + $0x9d0] sm:$0xff]
  %v337 = vld [vmem:[%s1 + $0x9d8] sm:$0xff]
  %v338 = vld [vmem:[%s1 + $0x9e0] sm:$0xff]
  %v339 = vld [vmem:[%s1 + $0x9e8] sm:$0xff]
  %v340 = vld [vmem:[%s1 + $0x9f0] sm:$0xff]
  %v341 = vld [vmem:[%s1 + $0x9f8] sm:$0xff]
  %v342 = vld [vmem:[%s1 + $0xa00] sm:$0xff]
  %v343 = vld [vmem:[%s1 + $0xa08] sm:$0xff]
  %v344 = vld [vmem:[%s1 + $0xa10] sm:$0xff]
  %v345 = vld [vmem:[%s1 + $0xa18] sm:$0xff]
  %v346 = vld [vmem:[%s1 + $0xa20] sm:$0xff]
  %v347 = vld [vmem:[%s1 + $0xa28] sm:$0xff]
  %v348 = vld [vmem:[%s1 + $0xa30] sm:$0xff]
  %v349 = vld [vmem:[%s1 + $0xa38] sm:$0xff]
  %v350 = vld [vmem:[%s1 + $0xa40] sm:$0xff]
  %v351 = vld [vmem:[%s1 + $0xa48] sm:$0xff]
  %v352 = vld [vmem:[%s1 + $0xa50] sm:$0xff]
  %v353 = vld [vmem:[%s1 + $0xa58] sm:$0xff]
  %v354 = vld [vmem:[%s1 + $0xa60] sm:$0xff]
  %v355 = vld [vmem:[%s1 + $0xa68] sm:$0xff]
  %v356 = vld [vmem:[%s1 + $0xa70] sm:$0xff]
  %v357 = vld [vmem:[%s1 + $0xa78] sm:$0xff]
  %v358 = vld [vmem:[%s1 + $0xa80] sm:$0xff]
  %v359 = vld [vmem:[%s1 + $0xa88] sm:$0xff]
  %v360 = vld [vmem:[%s1 + $0xa90] sm:$0xff]
  %v361 = vld [vmem:[%s1 + $0xa98] sm:$0xff]
  %v362 = vld [vmem:[%s1 + $0xaa0] sm:$0xff]
  %v363 = vld [vmem:[%s1 + $0xaa8] sm:$0xff]
  %v364 = vld [vmem:[%s1 + $0xab0] sm:$0xff]
  %v365 = vld [vmem:[%s1 + $0xab8] sm:$0xff]
  %v366 = vld [vmem:[%s1 + $0xac0] sm:$0xff]
  %v367 = vld [vmem:[%s1 + $0xac8] sm:$0xff]
  %v368 = vld [vmem:[%s1 + $0xad0] sm:$0xff]
  %v369 = vld [vmem:[%s1 + $0xad8] sm:$0xff]
  %v370 = vld [vmem:[%s1 + $0xae0] sm:$0xff]
  %v371 = vld [vmem:[%s1 + $0xae8] sm:$0xff]
  %v372 = vld [vmem:[%s1 + $0xaf0] sm:$0xff]
  %v373 = vld [vmem:[%s1 + $0xaf8] sm:$0xff]
  %v374 = vld [vmem:[%s1 + $0xb00] sm:$0xff]
  %v375 = vld [vmem:[%s1 + $0xb08] sm:$0xff]
  %v376 = vld [vmem:[%s1 + $0xb10] sm:$0xff]
  %v377 = vld [vmem:[%s1 + $0xb18] sm:$0xff]
  %v378 = vld [vmem:[%s1 + $0xb20] sm:$0xff]
  %v379 = vld [vmem:[%s1 + $0xb28] sm:$0xff]
  %v380 = vld [vmem:[%s1 + $0xb30] sm:$0xff]
  %v381 = vld [vmem:[%s1 + $0xb38] sm:$0xff]
  %v382 = vld [vmem:[%s1 + $0xb40] sm:$0xff]
  %v383 = vld [vmem:[%s1 + $0xb48] sm:$0xff]
  %v384 = vld [vmem:[%s1 + $0xb50] sm:$0xff]
  %v385 = vld [vmem:[%s1 + $0xb58] sm:$0xff]
  %v386 = vld [vmem:[%s1 + $0xb60] sm:$0xff]
  %v387 = vld [vmem:[%s1 + $0xb68] sm:$0xff]
  %v388 = vld [vmem:[%s1 + $0xb70] sm:$0xff]
  %v389 = vld [vmem:[%s1 + $0xb78] sm:$0xff]
  %v390 = vld [vmem:[%s1 + $0xb80] sm:$0xff]
  %v391 = vld [vmem:[%s1 + $0xb88] sm:$0xff]
  %v392 = vld [vmem:[%s1 + $0xb90] sm:$0xff]
  %v393 = vld [vmem:[%s1 + $0xb98] sm:$0xff]
  %v394 = vld [vmem:[%s1 + $0xba0] sm:$0xff]
  %v395 = vld [vmem:[%s1 + $0xba8] sm:$0xff]
  %v396 = vld [vmem:[%s1 + $0xbb0] sm:$0xff]
  %v397 = vld [vmem:[%s1 + $0xbb8] sm:$0xff]
  %v398 = vld [vmem:[%s1 + $0xbc0] sm:$0xff]
  %v399 = vld [vmem:[%s1 + $0xbc8] sm:$0xff]
  %v400 = vld [vmem:[%s1 + $0xbd0] sm:$0xff]
  %v401 = vld [vmem:[%s1 + $0xbd8] sm:$0xff]
  %v402 = vld [vmem:[%s1 + $0xbe0] sm:$0xff]
  %v403 = vld [vmem:[%s1 + $0xbe8] sm:$0xff]
  %v404 = vld [vmem:[%s1 + $0xbf0] sm:$0xff]
  %v405 = vld [vmem:[%s1 + $0xbf8] sm:$0xff]
  %v406 = vld [vmem:[%s1 + $0xc00] sm:$0xff]
  %v407 = vld [vmem:[%s1 + $0xc08] sm:$0xff]
  %v408 = vld [vmem:[%s1 + $0xc10] sm:$0xff]
  %v409 = vld [vmem:[%s1 + $0xc18] sm:$0xff]
  %v410 = vld [vmem:[%s1 + $0xc20] sm:$0xff]
  %v411 = vld [vmem:[%s1 + $0xc28] sm:$0xff]
  %v412 = vld [vmem:[%s1 + $0xc30] sm:$0xff]
  %v413 = vld [vmem:[%s1 + $0xc38] sm:$0xff]
  %v414 = vld [vmem:[%s1 + $0xc40] sm:$0xff]
  %v415 = vld [vmem:[%s1 + $0xc48] sm:$0xff]
  %v416 = vld [vmem:[%s1 + $0xc50] sm:$0xff]
  %v417 = vld [vmem:[%s1 + $0xc58] sm:$0xff]
  %v418 = vld [vmem:[%s1 + $0xc60] sm:$0xff]
  %v419 = vld [vmem:[%s1 + $0xc68] sm:$0xff]
  %v420 = vld [vmem:[%s1 + $0xc70] sm:$0xff]
  %v421 = vld [vmem:[%s1 + $0xc78] sm:$0xff]
  %v422 = vld [vmem:[%s1 + $0xc80] sm:$0xff]
  %v423 = vld [vmem:[%s1 + $0xc88] sm:$0xff]
  %v424 = vld [vmem:[%s1 + $0xc90] sm:$0xff]
  %v425 = vld [vmem:[%s1 + $0xc98] sm:$0xff]
  %v426 = vld [vmem:[%s1 + $0xca0] sm:$0xff]
  %v427 = vld [vmem:[%s1 + $0xca8] sm:$0xff]
  %v428 = vld [vmem:[%s1 + $0xcb0] sm:$0xff]
  %v429 = vld [vmem:[%s1 + $0xcb8] sm:$0xff]
  %v430 = vld [vmem:[%s1 + $0xcc0] sm:$0xff]
  %v431 = vld [vmem:[%s1 + $0xcc8] sm:$0xff]
  %v432 = vld [vmem:[%s1 + $0xcd0] sm:$0xff]
  %v433 = vld [vmem:[%s1 + $0xcd8] sm:$0xff]
  %v434 = vld [vmem:[%s1 + $0xce0] sm:$0xff]
  %v435 = vld [vmem:[%s1 + $0xce8] sm:$0xff]
  %v436 = vld [vmem:[%s1 + $0xcf0] sm:$0xff]
  %v437 = vld [vmem:[%s1 + $0xcf8] sm:$0xff]
  %v438 = vld [vmem:[%s1 + $0xd00] sm:$0xff]
  %v439 = vld [vmem:[%s1 + $0xd08] sm:$0xff]
  %v440 = vld [vmem:[%s1 + $0xd10] sm:$0xff]
  %v441 = vld [vmem:[%s1 + $0xd18] sm:$0xff]
  %v442 = vld [vmem:[%s1 + $0xd20] sm:$0xff]
  %v443 = vld [vmem:[%s1 + $0xd28] sm:$0xff]
  %v444 = vld [vmem:[%s1 + $0xd30] sm:$0xff]
  %v445 = vld [vmem:[%s1 + $0xd38] sm:$0xff]
  %v446 = vld [vmem:[%s1 + $0xd40] sm:$0xff]
  %v447 = vld [vmem:[%s1 + $0xd48] sm:$0xff]
  %v448 = vld [vmem:[%s1 + $0xd50] sm:$0xff]
  %v449 = vld [vmem:[%s1 + $0xd58] sm:$0xff]
  %v450 = vld [vmem:[%s1 + $0xd60] sm:$0xff]
  %v451 = vld [vmem:[%s1 + $0xd68] sm:$0xff]
  %v452 = vld [vmem:[%s1 + $0xd70] sm:$0xff]
  %v453 = vld [vmem:[%s1 + $0xd78] sm:$0xff]
  %v454 = vld [vmem:[%s1 + $0xd80] sm:$0xff]
  %v455 = vld [vmem:[%s1 + $0xd88] sm:$0xff]
  %v456 = vld [vmem:[%s1 + $0xd90] sm:$0xff]
  %v457 = vld [vmem:[%s1 + $0xd98] sm:$0xff]
  %v458 = vld [vmem:[%s1 + $0xda0] sm:$0xff]
  %v459 = vld [vmem:[%s1 + $0xda8] sm:$0xff]
  %v460 = vld [vmem:[%s1 + $0xdb0] sm:$0xff]
  %v461 = vld [vmem:[%s1 + $0xdb8] sm:$0xff]
  %v462 = vld [vmem:[%s1 + $0xdc0] sm:$0xff]
  %v463 = vld [vmem:[%s1 + $0xdc8] sm:$0xff]
  %v464 = vld [vmem:[%s1 + $0xdd0] sm:$0xff]
  %v465 = vld [vmem:[%s1 + $0xdd8] sm:$0xff]
  %v466 = vld [vmem:[%s1 + $0xde0] sm:$0xff]
  %v467 = vld [vmem:[%s1 + $0xde8] sm:$0xff]
  %v468 = vld [vmem:[%s1 + $0xdf0] sm:$0xff]
  %v469 = vld [vmem:[%s1 + $0xdf8] sm:$0xff]
  %v470 = vld [vmem:[%s1 + $0xe00] sm:$0xff]
  %v471 = vld [vmem:[%s1 + $0xe08] sm:$0xff]
  %v472 = vld [vmem:[%s1 + $0xe10] sm:$0xff]
  %v473 = vld [vmem:[%s1 + $0xe18] sm:$0xff]
  %v474 = vld [vmem:[%s1 + $0xe20] sm:$0xff]
  %v475 = vld [vmem:[%s1 + $0xe28] sm:$0xff]
  %v476 = vld [vmem:[%s1 + $0xe30] sm:$0xff]
  %v477 = vld [vmem:[%s1 + $0xe38] sm:$0xff]
  %v478 = vld [vmem:[%s1 + $0xe40] sm:$0xff]
  %v479 = vld [vmem:[%s1 + $0xe48] sm:$0xff]
  %v480 = vld [vmem:[%s1 + $0xe50] sm:$0xff]
  %v481 = vld [vmem:[%s1 + $0xe58] sm:$0xff]
  %v482 = vld [vmem:[%s1 + $0xe60] sm:$0xff]
  %v483 = vld [vmem:[%s1 + $0xe68] sm:$0xff]
  %v484 = vld [vmem:[%s1 + $0xe70] sm:$0xff]
  %v485 = vld [vmem:[%s1 + $0xe78] sm:$0xff]
  %v486 = vld [vmem:[%s1 + $0xe80] sm:$0xff]
  %v487 = vld [vmem:[%s1 + $0xe88] sm:$0xff]
  %v488 = vld [vmem:[%s1 + $0xe90] sm:$0xff]
  %v489 = vld [vmem:[%s1 + $0xe98] sm:$0xff]
  %v490 = vld [vmem:[%s1 + $0xea0] sm:$0xff]
  %v491 = vld [vmem:[%s1 + $0xea8] sm:$0xff]
  %v492 = vld [vmem:[%s1 + $0xeb0] sm:$0xff]
  %v493 = vld [vmem:[%s1 + $0xeb8] sm:$0xff]
  %v494 = vld [vmem:[%s1 + $0xec0] sm:$0xff]
  %v495 = vld [vmem:[%s1 + $0xec8] sm:$0xff]
  %v496 = vld [vmem:[%s1 + $0xed0] sm:$0xff]
  %v497 = vld [vmem:[%s1 + $0xed8] sm:$0xff]
  %v498 = vld [vmem:[%s1 + $0xee0] sm:$0xff]
  %v499 = vld [vmem:[%s1 + $0xee8] sm:$0xff]
  %v500 = vld [vmem:[%s1 + $0xef0] sm:$0xff]
  %v501 = vld [vmem:[%s1 + $0xef8] sm:$0xff]
  %v502 = vld [vmem:[%s1 + $0xf00] sm:$0xff]
  %v503 = vld [vmem:[%s1 + $0xf08] sm:$0xff]
  %v504 = vld [vmem:[%s1 + $0xf10] sm:$0xff]
  %v505 = vld [vmem:[%s1 + $0xf18] sm:$0xff]
  %v506 = vld [vmem:[%s1 + $0xf20] sm:$0xff]
  %v507 = vld [vmem:[%s1 + $0xf28] sm:$0xff]
  %v508 = vld [vmem:[%s1 + $0xf30] sm:$0xff]
  %v509 = vld [vmem:[%s1 + $0xf38] sm:$0xff]
  %v510 = vld [vmem:[%s1 + $0xf40] sm:$0xff]
  %v511 = vld [vmem:[%s1 + $0xf48] sm:$0xff]
  %v512 = vld [vmem:[%s1 + $0xf50] sm:$0xff]
  %v513 = vld [vmem:[%s1 + $0xf58] sm:$0xff]
  %v514 = vld [vmem:[%s1 + $0xf60] sm:$0xff]
  %v515 = vld [vmem:[%s1 + $0xf68] sm:$0xff]
  %v516 = vld [vmem:[%s1 + $0xf70] sm:$0xff]
  %v517 = vld [vmem:[%s1 + $0xf78] sm:$0xff]
  %v518 = vld [vmem:[%s1 + $0xf80] sm:$0xff]
  %v519 = vld [vmem:[%s1 + $0xf88] sm:$0xff]
  %v520 = vld [vmem:[%s1 + $0xf90] sm:$0xff]
  %v521 = vld [vmem:[%s1 + $0xf98] sm:$0xff]
  %v522 = vld [vmem:[%s1 + $0xfa0] sm:$0xff]
  %v523 = vld [vmem:[%s1 + $0xfa8] sm:$0xff]
  %v524 = vld [vmem:[%s1 + $0xfb0] sm:$0xff]
  %v525 = vld [vmem:[%s1 + $0xfb8] sm:$0xff]
  %v526 = vld [vmem:[%s1 + $0xfc0] sm:$0xff]
  %v527 = vld [vmem:[%s1 + $0xfc8] sm:$0xff]
  %v528 = vld [vmem:[%s1 + $0xfd0] sm:$0xff]
  %v529 = vld [vmem:[%s1 + $0xfd8] sm:$0xff]
  %v530 = vld [vmem:[%s1 + $0xfe0] sm:$0xff]
  %v531 = vld [vmem:[%s1 + $0xfe8] sm:$0xff]
  %v532 = vld [vmem:[%s1 + $0xff0] sm:$0xff]
  %v533 = vld [vmem:[%s1 + $0xff8] sm:$0xff]
  %v534 = vld [vmem:[%s1 + $0x1000] sm:$0xff]
  %v535 = vld [vmem:[%s1 + $0x1008] sm:$0xff]
  %v536 = vld [vmem:[%s1 + $0x1010] sm:$0xff]
  %v537 = vld [vmem:[%s1 + $0x1018] sm:$0xff]
  %v538 = vld [vmem:[%s1 + $0x1020] sm:$0xff]
  %v539 = vld [vmem:[%s1 + $0x1028] sm:$0xff]
  %v540 = vld [vmem:[%s1 + $0x1030] sm:$0xff]
  %v541 = vld [vmem:[%s1 + $0x1038] sm:$0xff]
  %v542 = vld [vmem:[%s1 + $0x1040] sm:$0xff]
  %v543 = vld [vmem:[%s1 + $0x1048] sm:$0xff]
  %v544 = vld [vmem:[%s1 + $0x1050] sm:$0xff]
  %v545 = vld [vmem:[%s1 + $0x1058] sm:$0xff]
  %v546 = vld [vmem:[%s1 + $0x1060] sm:$0xff]
  %v547 = vld [vmem:[%s1 + $0x1068] sm:$0xff]
  %v548 = vld [vmem:[%s1 + $0x1070] sm:$0xff]
  %v549 = vld [vmem:[%s1 + $0x1078] sm:$0xff]
  %v550 = vld [vmem:[%s1 + $0x1080] sm:$0xff]
  %v551 = vld [vmem:[%s1 + $0x1088] sm:$0xff]
  %v552 = vld [vmem:[%s1 + $0x1090] sm:$0xff]
  %v553 = vld [vmem:[%s1 + $0x1098] sm:$0xff]
  %v554 = vld [vmem:[%s1 + $0x10a0] sm:$0xff]
  %v555 = vld [vmem:[%s1 + $0x10a8] sm:$0xff]
  %v556 = vld [vmem:[%s1 + $0x10b0] sm:$0xff]
  %v557 = vld [vmem:[%s1 + $0x10b8] sm:$0xff]
  %v558 = vld [vmem:[%s1 + $0x10c0] sm:$0xff]
  %v559 = vld [vmem:[%s1 + $0x10c8] sm:$0xff]
  %v560 = vld [vmem:[%s1 + $0x10d0] sm:$0xff]
  %v561 = vld [vmem:[%s1 + $0x10d8] sm:$0xff]
  %v562 = vld [vmem:[%s1 + $0x10e0] sm:$0xff]
  %v563 = vld [vmem:[%s1 + $0x10e8] sm:$0xff]
  %v564 = vld [vmem:[%s1 + $0x10f0] sm:$0xff]
  %v565 = vld [vmem:[%s1 + $0x10f8] sm:$0xff]
  %v566 = vld [vmem:[%s1 + $0x1100] sm:$0xff]
  %v567 = vld [vmem:[%s1 + $0x1108] sm:$0xff]
  %v568 = vld [vmem:[%s1 + $0x1110] sm:$0xff]
  %v569 = vld [vmem:[%s1 + $0x1118] sm:$0xff]
  %v570 = vld [vmem:[%s1 + $0x1120] sm:$0xff]
  %v571 = vld [vmem:[%s1 + $0x1128] sm:$0xff]
  %v572 = vld [vmem:[%s1 + $0x1130] sm:$0xff]
  %v573 = vld [vmem:[%s1 + $0x1138] sm:$0xff]
  %v574 = vld [vmem:[%s1 + $0x1140] sm:$0xff]
  %v575 = vld [vmem:[%s1 + $0x1148] sm:$0xff]
  %v576 = vld [vmem:[%s1 + $0x1150] sm:$0xff]
  %v577 = vld [vmem:[%s1 + $0x1158] sm:$0xff]
  %v578 = vld [vmem:[%s1 + $0x1160] sm:$0xff]
  %v579 = vld [vmem:[%s1 + $0x1168] sm:$0xff]
  %v580 = vld [vmem:[%s1 + $0x1170] sm:$0xff]
  %v581 = vld [vmem:[%s1 + $0x1178] sm:$0xff]
  %v582 = vld [vmem:[%s1 + $0x1180] sm:$0xff]
  %v583 = vld [vmem:[%s1 + $0x1188] sm:$0xff]
  %v584 = vld [vmem:[%s1 + $0x1190] sm:$0xff]
  %v585 = vld [vmem:[%s1 + $0x1198] sm:$0xff]
  %v586 = vld [vmem:[%s1 + $0x11a0] sm:$0xff]
  %v587 = vld [vmem:[%s1 + $0x11a8] sm:$0xff]
  %v588 = vld [vmem:[%s1 + $0x11b0] sm:$0xff]
  %v589 = vld [vmem:[%s1 + $0x11b8] sm:$0xff]
  %v590 = vld [vmem:[%s1 + $0x11c0] sm:$0xff]
  %v591 = vld [vmem:[%s1 + $0x11c8] sm:$0xff]
  %v592 = vld [vmem:[%s1 + $0x11d0] sm:$0xff]
  %v593 = vld [vmem:[%s1 + $0x11d8] sm:$0xff]
  %v594 = vld [vmem:[%s1 + $0x11e0] sm:$0xff]
  %v595 = vld [vmem:[%s1 + $0x11e8] sm:$0xff]
  %v596 = vld [vmem:[%s1 + $0x11f0] sm:$0xff]
  %v597 = vld [vmem:[%s1 + $0x11f8] sm:$0xff]
  %v598 = vld [vmem:[%s1 + $0x1200] sm:$0xff]
  %v599 = vld [vmem:[%s1 + $0x1208] sm:$0xff]
  %v600 = vld [vmem:[%s1 + $0x1210] sm:$0xff]
  %v601 = vld [vmem:[%s1 + $0x1218] sm:$0xff]
  %v602 = vld [vmem:[%s1 + $0x1220] sm:$0xff]
  %v603 = vld [vmem:[%s1 + $0x1228] sm:$0xff]
  %v604 = vld [vmem:[%s1 + $0x1230] sm:$0xff]
  %v605 = vld [vmem:[%s1 + $0x1238] sm:$0xff]
  %v606 = vld [vmem:[%s1 + $0x1240] sm:$0xff]
  %v607 = vld [vmem:[%s1 + $0x1248] sm:$0xff]
  %v608 = vld [vmem:[%s1 + $0x1250] sm:$0xff]
  %v609 = vld [vmem:[%s1 + $0x1258] sm:$0xff]
  %v610 = vld [vmem:[%s1 + $0x1260] sm:$0xff]
  %v611 = vld [vmem:[%s1 + $0x1268] sm:$0xff]
  %v612 = vld [vmem:[%s1 + $0x1270] sm:$0xff]
  %v613 = vld [vmem:[%s1 + $0x1278] sm:$0xff]
  %v614 = vld [vmem:[%s1 + $0x1280] sm:$0xff]
  %v615 = vld [vmem:[%s1 + $0x1288] sm:$0xff]
  %v616 = vld [vmem:[%s1 + $0x1290] sm:$0xff]
  %v617 = vld [vmem:[%s1 + $0x1298] sm:$0xff]
  %v618 = vld [vmem:[%s1 + $0x12a0] sm:$0xff]
  %v619 = vld [vmem:[%s1 + $0x12a8] sm:$0xff]
  %v620 = vld [vmem:[%s1 + $0x12b0] sm:$0xff]
  %v621 = vld [vmem:[%s1 + $0x12b8] sm:$0xff]
  %v622 = vld [vmem:[%s1 + $0x12c0] sm:$0xff]
  %v623 = vld [vmem:[%s1 + $0x12c8] sm:$0xff]
  %v624 = vld [vmem:[%s1 + $0x12d0] sm:$0xff]
  %v625 = vld [vmem:[%s1 + $0x12d8] sm:$0xff]
  %v626 = vld [vmem:[%s1 + $0x12e0] sm:$0xff]
  %v627 = vld [vmem:[%s1 + $0x12e8] sm:$0xff]
  %v628 = vld [vmem:[%s1 + $0x12f0] sm:$0xff]
  %v629 = vld [vmem:[%s1 + $0x12f8] sm:$0xff]
  %v630 = vld [vmem:[%s1 + $0x1300] sm:$0xff]
  %v631 = vld [vmem:[%s1 + $0x1308] sm:$0xff]
  %v632 = vld [vmem:[%s1 + $0x1310] sm:$0xff]
  %v633 = vld [vmem:[%s1 + $0x1318] sm:$0xff]
  %v634 = vld [vmem:[%s1 + $0x1320] sm:$0xff]
  %v635 = vld [vmem:[%s1 + $0x1328] sm:$0xff]
  %v636 = vld [vmem:[%s1 + $0x1330] sm:$0xff]
  %v637 = vld [vmem:[%s1 + $0x1338] sm:$0xff]
  %v638 = vld [vmem:[%s1 + $0x1340] sm:$0xff]
  %v639 = vld [vmem:[%s1 + $0x1348] sm:$0xff]
  %v640 = vld [vmem:[%s1 + $0x1350] sm:$0xff]
  %v641 = vld [vmem:[%s1 + $0x1358] sm:$0xff]
  %v642 = vld [vmem:[%s1 + $0x1360] sm:$0xff]
  %v643 = vld [vmem:[%s1 + $0x1368] sm:$0xff]
  %v644 = vld [vmem:[%s1 + $0x1370] sm:$0xff]
  %v645 = vld [vmem:[%s1 + $0x1378] sm:$0xff]
  %v646 = vld [vmem:[%s1 + $0x1380] sm:$0xff]
  %v647 = vld [vmem:[%s1 + $0x1388] sm:$0xff]
  %v648 = vld [vmem:[%s1 + $0x1390] sm:$0xff]
  %v649 = vld [vmem:[%s1 + $0x1398] sm:$0xff]
  %v650 = vld [vmem:[%s1 + $0x13a0] sm:$0xff]
  %v651 = vld [vmem:[%s1 + $0x13a8] sm:$0xff]
  %v652 = vld [vmem:[%s1 + $0x13b0] sm:$0xff]
  %v653 = vld [vmem:[%s1 + $0x13b8] sm:$0xff]
  %v654 = vld [vmem:[%s1 + $0x13c0] sm:$0xff]
  %v655 = vld [vmem:[%s1 + $0x13c8] sm:$0xff]
  %v656 = vld [vmem:[%s1 + $0x13d0] sm:$0xff]
  %v657 = vld [vmem:[%s1 + $0x13d8] sm:$0xff]
  %v658 = vld [vmem:[%s1 + $0x13e0] sm:$0xff]
  %v659 = vld [vmem:[%s1 + $0x13e8] sm:$0xff]
  %v660 = vld [vmem:[%s1 + $0x13f0] sm:$0xff]
  %v661 = vld [vmem:[%s1 + $0x13f8] sm:$0xff]
  %v662 = vld [vmem:[%s1 + $0x1400] sm:$0xff]
  %v663 = vld [vmem:[%s1 + $0x1408] sm:$0xff]
  %v664 = vld [vmem:[%s1 + $0x1410] sm:$0xff]
  %v665 = vld [vmem:[%s1 + $0x1418] sm:$0xff]
  %v666 = vld [vmem:[%s1 + $0x1420] sm:$0xff]
  %v667 = vld [vmem:[%s1 + $0x1428] sm:$0xff]
  %v668 = vld [vmem:[%s1 + $0x1430] sm:$0xff]
  %v669 = vld [vmem:[%s1 + $0x1438] sm:$0xff]
  %v670 = vld [vmem:[%s1 + $0x1440] sm:$0xff]
  %v671 = vld [vmem:[%s1 + $0x1448] sm:$0xff]
  %v672 = vld [vmem:[%s1 + $0x1450] sm:$0xff]
  %v673 = vld [vmem:[%s1 + $0x1458] sm:$0xff]
  %v674 = vld [vmem:[%s1 + $0x1460] sm:$0xff]
  %v675 = vld [vmem:[%s1 + $0x1468] sm:$0xff]
  %v676 = vld [vmem:[%s1 + $0x1470] sm:$0xff]
  %v677 = vld [vmem:[%s1 + $0x1478] sm:$0xff]
  %v678 = vld [vmem:[%s1 + $0x1480] sm:$0xff]
  %v679 = vld [vmem:[%s1 + $0x1488] sm:$0xff]
  %v680 = vld [vmem:[%s1 + $0x1490] sm:$0xff]
  %v681 = vld [vmem:[%s1 + $0x1498] sm:$0xff]
  %v682 = vld [vmem:[%s1 + $0x14a0] sm:$0xff]
  %v683 = vld [vmem:[%s1 + $0x14a8] sm:$0xff]
  %v684 = vld [vmem:[%s1 + $0x14b0] sm:$0xff]
  %v685 = vld [vmem:[%s1 + $0x14b8] sm:$0xff]
  %v686 = vld [vmem:[%s1 + $0x14c0] sm:$0xff]
  %v687 = vld [vmem:[%s1 + $0x14c8] sm:$0xff]
  %v688 = vld [vmem:[%s1 + $0x14d0] sm:$0xff]
  %v689 = vld [vmem:[%s1 + $0x14d8] sm:$0xff]
  %v690 = vld [vmem:[%s1 + $0x14e0] sm:$0xff]
  %v691 = vld [vmem:[%s1 + $0x14e8] sm:$0xff]
  %v692 = vld [vmem:[%s1 + $0x14f0] sm:$0xff]
  %v693 = vld [vmem:[%s1 + $0x14f8] sm:$0xff]
  %v694 = vld [vmem:[%s1 + $0x1500] sm:$0xff]
  %v695 = vld [vmem:[%s1 + $0x1508] sm:$0xff]
  %v696 = vld [vmem:[%s1 + $0x1510] sm:$0xff]
  %v697 = vld [vmem:[%s1 + $0x1518] sm:$0xff]
  %v698 = vld [vmem:[%s1 + $0x1520] sm:$0xff]
  %v699 = vld [vmem:[%s1 + $0x1528] sm:$0xff]
  %v700 = vld [vmem:[%s1 + $0x1530] sm:$0xff]
  %v701 = vld [vmem:[%s1 + $0x1538] sm:$0xff]
  %v702 = vld [vmem:[%s1 + $0x1540] sm:$0xff]
  %v703 = vld [vmem:[%s1 + $0x1548] sm:$0xff]
  %v704 = vld [vmem:[%s1 + $0x1550] sm:$0xff]
  %v705 = vld [vmem:[%s1 + $0x1558] sm:$0xff]
  %v706 = vld [vmem:[%s1 + $0x1560] sm:$0xff]
  %v707 = vld [vmem:[%s1 + $0x1568] sm:$0xff]
  %v708 = vld [vmem:[%s1 + $0x1570] sm:$0xff]
  %v709 = vld [vmem:[%s1 + $0x1578] sm:$0xff]
  %v710 = vld [vmem:[%s1 + $0x1580] sm:$0xff]
  %v711 = vld [vmem:[%s1 + $0x1588] sm:$0xff]
  %v712 = vld [vmem:[%s1 + $0x1590] sm:$0xff]
  %v713 = vld [vmem:[%s1 + $0x1598] sm:$0xff]
  %v714 = vld [vmem:[%s1 + $0x15a0] sm:$0xff]
  %v715 = vld [vmem:[%s1 + $0x15a8] sm:$0xff]
  %v716 = vld [vmem:[%s1 + $0x15b0] sm:$0xff]
  %v717 = vld [vmem:[%s1 + $0x15b8] sm:$0xff]
  %v718 = vld [vmem:[%s1 + $0x15c0] sm:$0xff]
  %v719 = vld [vmem:[%s1 + $0x15c8] sm:$0xff]
  %v720 = vld [vmem:[%s1 + $0x15d0] sm:$0xff]
  %v721 = vld [vmem:[%s1 + $0x15d8] sm:$0xff]
  %v722 = vld [vmem:[%s1 + $0x15e0] sm:$0xff]
  %v723 = vld [vmem:[%s1 + $0x15e8] sm:$0xff]
  %v724 = vld [vmem:[%s1 + $0x15f0] sm:$0xff]
  %v725 = vld [vmem:[%s1 + $0x15f8] sm:$0xff]
  %v726 = vld [vmem:[%s1 + $0x1600] sm:$0xff]
  %v727 = vld [vmem:[%s1 + $0x1608] sm:$0xff]
  %v728 = vld [vmem:[%s1 + $0x1610] sm:$0xff]
  %v729 = vld [vmem:[%s1 + $0x1618] sm:$0xff]
  %v730 = vld [vmem:[%s1 + $0x1620] sm:$0xff]
  %v731 = vld [vmem:[%s1 + $0x1628] sm:$0xff]
  %v732 = vld [vmem:[%s1 + $0x1630] sm:$0xff]
  %v733 = vld [vmem:[%s1 + $0x1638] sm:$0xff]
  %v734 = vld [vmem:[%s1 + $0x1640] sm:$0xff]
  %v735 = vld [vmem:[%s1 + $0x1648] sm:$0xff]
  %v736 = vld [vmem:[%s1 + $0x1650] sm:$0xff]
  %v737 = vld [vmem:[%s1 + $0x1658] sm:$0xff]
  %v738 = vld [vmem:[%s1 + $0x1660] sm:$0xff]
  %v739 = vld [vmem:[%s1 + $0x1668] sm:$0xff]
  %v740 = vld [vmem:[%s1 + $0x1670] sm:$0xff]
  %v741 = vld [vmem:[%s1 + $0x1678] sm:$0xff]
  %v742 = vld [vmem:[%s1 + $0x1680] sm:$0xff]
  %v743 = vld [vmem:[%s1 + $0x1688] sm:$0xff]
  %v744 = vld [vmem:[%s1 + $0x1690] sm:$0xff]
  %v745 = vld [vmem:[%s1 + $0x1698] sm:$0xff]
  %v746 = vld [vmem:[%s1 + $0x16a0] sm:$0xff]
  %v747 = vld [vmem:[%s1 + $0x16a8] sm:$0xff]
  %v748 = vld [vmem:[%s1 + $0x16b0] sm:$0xff]
  %v749 = vld [vmem:[%s1 + $0x16b8] sm:$0xff]
  %v750 = vld [vmem:[%s1 + $0x16c0] sm:$0xff]
  %v751 = vld [vmem:[%s1 + $0x16c8] sm:$0xff]
  %v752 = vld [vmem:[%s1 + $0x16d0] sm:$0xff]
  %v753 = vld [vmem:[%s1 + $0x16d8] sm:$0xff]
  %v754 = vld [vmem:[%s1 + $0x16e0] sm:$0xff]
  %v755 = vld [vmem:[%s1 + $0x16e8] sm:$0xff]
  %v756 = vld [vmem:[%s1 + $0x16f0] sm:$0xff]
  %v757 = vld [vmem:[%s1 + $0x16f8] sm:$0xff]
  %v758 = vld [vmem:[%s1 + $0x1700] sm:$0xff]
  %v759 = vld [vmem:[%s1 + $0x1708] sm:$0xff]
  %v760 = vld [vmem:[%s1 + $0x1710] sm:$0xff]
  %v761 = vld [vmem:[%s1 + $0x1718] sm:$0xff]
  %v762 = vld [vmem:[%s1 + $0x1720] sm:$0xff]
  %v763 = vld [vmem:[%s1 + $0x1728] sm:$0xff]
  %v764 = vld [vmem:[%s1 + $0x1730] sm:$0xff]
  %v765 = vld [vmem:[%s1 + $0x1738] sm:$0xff]
  %v766 = vld [vmem:[%s1 + $0x1740] sm:$0xff]
  %v767 = vld [vmem:[%s1 + $0x1748] sm:$0xff]
  %v768 = vld [vmem:[%s1 + $0x1750] sm:$0xff]
  %v769 = vld [vmem:[%s1 + $0x1758] sm:$0xff]
  %v770 = vld [vmem:[%s1 + $0x1760] sm:$0xff]
  %v771 = vld [vmem:[%s1 + $0x1768] sm:$0xff]
  %v772 = vld [vmem:[%s1 + $0x1770] sm:$0xff]
  %v773 = vld [vmem:[%s1 + $0x1778] sm:$0xff]
  %v774 = vld [vmem:[%s1 + $0x1780] sm:$0xff]
  %v775 = vld [vmem:[%s1 + $0x1788] sm:$0xff]
  %v776 = vld [vmem:[%s1 + $0x1790] sm:$0xff]
  %v777 = vld [vmem:[%s1 + $0x1798] sm:$0xff]
  %v778 = vld [vmem:[%s1 + $0x17a0] sm:$0xff]
  %v779 = vld [vmem:[%s1 + $0x17a8] sm:$0xff]
  %v780 = vld [vmem:[%s1 + $0x17b0] sm:$0xff]
  %v781 = vld [vmem:[%s1 + $0x17b8] sm:$0xff]
  %v782 = vld [vmem:[%s1 + $0x17c0] sm:$0xff]
  %v783 = vld [vmem:[%s1 + $0x17c8] sm:$0xff]
  %v784 = vld [vmem:[%s1 + $0x17d0] sm:$0xff]
  %v785 = vld [vmem:[%s1 + $0x17d8] sm:$0xff]
  %v786 = vld [vmem:[%s1 + $0x17e0] sm:$0xff]
  %v787 = vld [vmem:[%s1 + $0x17e8] sm:$0xff]
  %v788 = vld [vmem:[%s1 + $0x17f0] sm:$0xff]
  %v789 = vld [vmem:[%s1 + $0x17f8] sm:$0xff]
  %v790 = vld [vmem:[%s1 + $0x1800] sm:$0xff]
  %v791 = vld [vmem:[%s1 + $0x1808] sm:$0xff]
  %v792 = vld [vmem:[%s1 + $0x1810] sm:$0xff]
  %v793 = vld [vmem:[%s1 + $0x1818] sm:$0xff]
  %v794 = vld [vmem:[%s1 + $0x1820] sm:$0xff]
  %v795 = vld [vmem:[%s1 + $0x1828] sm:$0xff]
  %v796 = vld [vmem:[%s1 + $0x1830] sm:$0xff]
  %v797 = vld [vmem:[%s1 + $0x1838] sm:$0xff]
  %v798 = vld [vmem:[%s1 + $0x1840] sm:$0xff]
  %v799 = vld [vmem:[%s1 + $0x1848] sm:$0xff]
  %v800 = vld [vmem:[%s1 + $0x1850] sm:$0xff]
  %v801 = vld [vmem:[%s1 + $0x1858] sm:$0xff]
  %v802 = vld [vmem:[%s1 + $0x1860] sm:$0xff]
  %v803 = vld [vmem:[%s1 + $0x1868] sm:$0xff]
  %v804 = vld [vmem:[%s1 + $0x1870] sm:$0xff]
  %v805 = vld [vmem:[%s1 + $0x1878] sm:$0xff]
  %v806 = vld [vmem:[%s1 + $0x1880] sm:$0xff]
  %v807 = vld [vmem:[%s1 + $0x1888] sm:$0xff]
  %v808 = vld [vmem:[%s1 + $0x1890] sm:$0xff]
  %v809 = vld [vmem:[%s1 + $0x1898] sm:$0xff]
  %v810 = vld [vmem:[%s1 + $0x18a0] sm:$0xff]
  %v811 = vld [vmem:[%s1 + $0x18a8] sm:$0xff]
  %v812 = vld [vmem:[%s1 + $0x18b0] sm:$0xff]
  %v813 = vld [vmem:[%s1 + $0x18b8] sm:$0xff]
  %v814 = vld [vmem:[%s1 + $0x18c0] sm:$0xff]
  %v815 = vld [vmem:[%s1 + $0x18c8] sm:$0xff]
  %v816 = vld [vmem:[%s1 + $0x18d0] sm:$0xff]
  %v817 = vld [vmem:[%s1 + $0x18d8] sm:$0xff]
  %v818 = vld [vmem:[%s1 + $0x18e0] sm:$0xff]
  %v819 = vld [vmem:[%s1 + $0x18e8] sm:$0xff]
  %v820 = vld [vmem:[%s1 + $0x18f0] sm:$0xff]
  %v821 = vld [vmem:[%s1 + $0x18f8] sm:$0xff]
  %v822 = vld [vmem:[%s1 + $0x1900] sm:$0xff]
  %v823 = vld [vmem:[%s1 + $0x1908] sm:$0xff]
  %v824 = vld [vmem:[%s1 + $0x1910] sm:$0xff]
  %v825 = vld [vmem:[%s1 + $0x1918] sm:$0xff]
  %v826 = vld [vmem:[%s1 + $0x1920] sm:$0xff]
  %v827 = vld [vmem:[%s1 + $0x1928] sm:$0xff]
  %v828 = vld [vmem:[%s1 + $0x1930] sm:$0xff]
  %v829 = vld [vmem:[%s1 + $0x1938] sm:$0xff]
  %v830 = vld [vmem:[%s1 + $0x1940] sm:$0xff]
  %v831 = vld [vmem:[%s1 + $0x1948] sm:$0xff]
  %v832 = vld [vmem:[%s1 + $0x1950] sm:$0xff]
  %v833 = vld [vmem:[%s1 + $0x1958] sm:$0xff]
  %v834 = vld [vmem:[%s1 + $0x1960] sm:$0xff]
  %v835 = vld [vmem:[%s1 + $0x1968] sm:$0xff]
  %v836 = vld [vmem:[%s1 + $0x1970] sm:$0xff]
  %v837 = vld [vmem:[%s1 + $0x1978] sm:$0xff]
  %v838 = vld [vmem:[%s1 + $0x1980] sm:$0xff]
  %v839 = vld [vmem:[%s1 + $0x1988] sm:$0xff]
  %v840 = vld [vmem:[%s1 + $0x1990] sm:$0xff]
  %v841 = vld [vmem:[%s1 + $0x1998] sm:$0xff]
  %v842 = vld [vmem:[%s1 + $0x19a0] sm:$0xff]
  %v843 = vld [vmem:[%s1 + $0x19a8] sm:$0xff]
  %v844 = vld [vmem:[%s1 + $0x19b0] sm:$0xff]
  %v845 = vld [vmem:[%s1 + $0x19b8] sm:$0xff]
  %v846 = vld [vmem:[%s1 + $0x19c0] sm:$0xff]
  %v847 = vld [vmem:[%s1 + $0x19c8] sm:$0xff]
  %v848 = vld [vmem:[%s1 + $0x19d0] sm:$0xff]
  %v849 = vld [vmem:[%s1 + $0x19d8] sm:$0xff]
  %v850 = vld [vmem:[%s1 + $0x19e0] sm:$0xff]
  %v851 = vld [vmem:[%s1 + $0x19e8] sm:$0xff]
  %v852 = vld [vmem:[%s1 + $0x19f0] sm:$0xff]
  %v853 = vld [vmem:[%s1 + $0x19f8] sm:$0xff]
  %v854 = vld [vmem:[%s1 + $0x1a00] sm:$0xff]
  %v855 = vld [vmem:[%s1 + $0x1a08] sm:$0xff]
  %v856 = vld [vmem:[%s1 + $0x1a10] sm:$0xff]
  %v857 = vld [vmem:[%s1 + $0x1a18] sm:$0xff]
  %v858 = vld [vmem:[%s1 + $0x1a20] sm:$0xff]
  %v859 = vld [vmem:[%s1 + $0x1a28] sm:$0xff]
  %v860 = vld [vmem:[%s1 + $0x1a30] sm:$0xff]
  %v861 = vld [vmem:[%s1 + $0x1a38] sm:$0xff]
  %v862 = vld [vmem:[%s1 + $0x1a40] sm:$0xff]
  %v863 = vld [vmem:[%s1 + $0x1a48] sm:$0xff]
  %v864 = vld [vmem:[%s1 + $0x1a50] sm:$0xff]
  %v865 = vld [vmem:[%s1 + $0x1a58] sm:$0xff]
  %v866 = vld [vmem:[%s1 + $0x1a60] sm:$0xff]
  %v867 = vld [vmem:[%s1 + $0x1a68] sm:$0xff]
  %v868 = vld [vmem:[%s1 + $0x1a70] sm:$0xff]
  %v869 = vld [vmem:[%s1 + $0x1a78] sm:$0xff]
  %v870 = vld [vmem:[%s1 + $0x1a80] sm:$0xff]
  %v871 = vld [vmem:[%s1 + $0x1a88] sm:$0xff]
  %v872 = vld [vmem:[%s1 + $0x1a90] sm:$0xff]
  %v873 = vld [vmem:[%s1 + $0x1a98] sm:$0xff]
  %v874 = vld [vmem:[%s1 + $0x1aa0] sm:$0xff]
  %v875 = vld [vmem:[%s1 + $0x1aa8] sm:$0xff]
  %v876 = vld [vmem:[%s1 + $0x1ab0] sm:$0xff]
  %v877 = vld [vmem:[%s1 + $0x1ab8] sm:$0xff]
  %v878 = vld [vmem:[%s1 + $0x1ac0] sm:$0xff]
  %v879 = vld [vmem:[%s1 + $0x1ac8] sm:$0xff]
  %v880 = vld [vmem:[%s1 + $0x1ad0] sm:$0xff]
  %v881 = vld [vmem:[%s1 + $0x1ad8] sm:$0xff]
  %v882 = vld [vmem:[%s1 + $0x1ae0] sm:$0xff]
  %v883 = vld [vmem:[%s1 + $0x1ae8] sm:$0xff]
  %v884 = vld [vmem:[%s1 + $0x1af0] sm:$0xff]
  %v885 = vld [vmem:[%s1 + $0x1af8] sm:$0xff]
  %v886 = vld [vmem:[%s1 + $0x1b00] sm:$0xff]
  %v887 = vld [vmem:[%s1 + $0x1b08] sm:$0xff]
  %v888 = vld [vmem:[%s1 + $0x1b10] sm:$0xff]
  %v889 = vld [vmem:[%s1 + $0x1b18] sm:$0xff]
  %v890 = vld [vmem:[%s1 + $0x1b20] sm:$0xff]
  %v891 = vld [vmem:[%s1 + $0x1b28] sm:$0xff]
  %v892 = vld [vmem:[%s1 + $0x1b30] sm:$0xff]
  %v893 = vld [vmem:[%s1 + $0x1b38] sm:$0xff]
  %v894 = vld [vmem:[%s1 + $0x1b40] sm:$0xff]
  %v895 = vld [vmem:[%s1 + $0x1b48] sm:$0xff]
  %v896 = vld [vmem:[%s1 + $0x1b50] sm:$0xff]
  %v897 = vld [vmem:[%s1 + $0x1b58] sm:$0xff]
  %v898 = vld [vmem:[%s1 + $0x1b60] sm:$0xff]
  %v899 = vld [vmem:[%s1 + $0x1b68] sm:$0xff]
  %v900 = vld [vmem:[%s1 + $0x1b70] sm:$0xff]
  %v901 = vld [vmem:[%s1 + $0x1b78] sm:$0xff]
  %v902 = vld [vmem:[%s1 + $0x1b80] sm:$0xff]
  %v903 = vld [vmem:[%s1 + $0x1b88] sm:$0xff]
  %v904 = vld [vmem:[%s1 + $0x1b90] sm:$0xff]
  %v905 = vld [vmem:[%s1 + $0x1b98] sm:$0xff]
  %v906 = vld [vmem:[%s1 + $0x1ba0] sm:$0xff]
  %v907 = vld [vmem:[%s1 + $0x1ba8] sm:$0xff]
  %v908 = vld [vmem:[%s1 + $0x1bb0] sm:$0xff]
  %v909 = vld [vmem:[%s1 + $0x1bb8] sm:$0xff]
  %v910 = vld [vmem:[%s1 + $0x1bc0] sm:$0xff]
  %v911 = vld [vmem:[%s1 + $0x1bc8] sm:$0xff]
  %v912 = vld [vmem:[%s1 + $0x1bd0] sm:$0xff]
  %v913 = vld [vmem:[%s1 + $0x1bd8] sm:$0xff]
  %v914 = vld [vmem:[%s1 + $0x1be0] sm:$0xff]
  %v915 = vld [vmem:[%s1 + $0x1be8] sm:$0xff]
  %v916 = vld [vmem:[%s1 + $0x1bf0] sm:$0xff]
  %v917 = vld [vmem:[%s1 + $0x1bf8] sm:$0xff]
  %v918 = vld [vmem:[%s1 + $0x1c00] sm:$0xff]
  %v919 = vld [vmem:[%s1 + $0x1c08] sm:$0xff]
  %v920 = vld [vmem:[%s1 + $0x1c10] sm:$0xff]
  %v921 = vld [vmem:[%s1 + $0x1c18] sm:$0xff]
  %v922 = vld [vmem:[%s1 + $0x1c20] sm:$0xff]
  %v923 = vld [vmem:[%s1 + $0x1c28] sm:$0xff]
  %v924 = vld [vmem:[%s1 + $0x1c30] sm:$0xff]
  %v925 = vld [vmem:[%s1 + $0x1c38] sm:$0xff]
  %v926 = vld [vmem:[%s1 + $0x1c40] sm:$0xff]
  %v927 = vld [vmem:[%s1 + $0x1c48] sm:$0xff]
  %v928 = vld [vmem:[%s1 + $0x1c50] sm:$0xff]
  %v929 = vld [vmem:[%s1 + $0x1c58] sm:$0xff]
  %v930 = vld [vmem:[%s1 + $0x1c60] sm:$0xff]
  %v931 = vld [vmem:[%s1 + $0x1c68] sm:$0xff]
  %v932 = vld [vmem:[%s1 + $0x1c70] sm:$0xff]
  %v933 = vld [vmem:[%s1 + $0x1c78] sm:$0xff]
  %v934 = vld [vmem:[%s1 + $0x1c80] sm:$0xff]
  %v935 = vld [vmem:[%s1 + $0x1c88] sm:$0xff]
  %v936 = vld [vmem:[%s1 + $0x1c90] sm:$0xff]
  %v937 = vld [vmem:[%s1 + $0x1c98] sm:$0xff]
  %v938 = vld [vmem:[%s1 + $0x1ca0] sm:$0xff]
  %v939 = vld [vmem:[%s1 + $0x1ca8] sm:$0xff]
  %v940 = vld [vmem:[%s1 + $0x1cb0] sm:$0xff]
  %v941 = vld [vmem:[%s1 + $0x1cb8] sm:$0xff]
  %v942 = vld [vmem:[%s1 + $0x1cc0] sm:$0xff]
  %v943 = vld [vmem:[%s1 + $0x1cc8] sm:$0xff]
  %v944 = vld [vmem:[%s1 + $0x1cd0] sm:$0xff]
  %v945 = vld [vmem:[%s1 + $0x1cd8] sm:$0xff]
  %v946 = vld [vmem:[%s1 + $0x1ce0] sm:$0xff]
  %v947 = vld [vmem:[%s1 + $0x1ce8] sm:$0xff]
  %v948 = vld [vmem:[%s1 + $0x1cf0] sm:$0xff]
  %v949 = vld [vmem:[%s1 + $0x1cf8] sm:$0xff]
  %v950 = vld [vmem:[%s1 + $0x1d00] sm:$0xff]
  %v951 = vld [vmem:[%s1 + $0x1d08] sm:$0xff]
  %v952 = vld [vmem:[%s1 + $0x1d10] sm:$0xff]
  %v953 = vld [vmem:[%s1 + $0x1d18] sm:$0xff]
  %v954 = vld [vmem:[%s1 + $0x1d20] sm:$0xff]
  %v955 = vld [vmem:[%s1 + $0x1d28] sm:$0xff]
  %v956 = vld [vmem:[%s1 + $0x1d30] sm:$0xff]
  %v957 = vld [vmem:[%s1 + $0x1d38] sm:$0xff]
  %v958 = vld [vmem:[%s1 + $0x1d40] sm:$0xff]
  %v959 = vld [vmem:[%s1 + $0x1d48] sm:$0xff]
  %v960 = vld [vmem:[%s1 + $0x1d50] sm:$0xff]
  %v961 = vld [vmem:[%s1 + $0x1d58] sm:$0xff]
  %v962 = vld [vmem:[%s1 + $0x1d60] sm:$0xff]
  %v963 = vld [vmem:[%s1 + $0x1d68] sm:$0xff]
  %v964 = vld [vmem:[%s1 + $0x1d70] sm:$0xff]
  %v965 = vld [vmem:[%s1 + $0x1d78] sm:$0xff]
  %v966 = vld [vmem:[%s1 + $0x1d80] sm:$0xff]
  %v967 = vld [vmem:[%s1 + $0x1d88] sm:$0xff]
  %v968 = vld [vmem:[%s1 + $0x1d90] sm:$0xff]
  %v969 = vld [vmem:[%s1 + $0x1d98] sm:$0xff]
  %v970 = vld [vmem:[%s1 + $0x1da0] sm:$0xff]
  %v971 = vld [vmem:[%s1 + $0x1da8] sm:$0xff]
  %v972 = vld [vmem:[%s1 + $0x1db0] sm:$0xff]
  %v973 = vld [vmem:[%s1 + $0x1db8] sm:$0xff]
  %v974 = vld [vmem:[%s1 + $0x1dc0] sm:$0xff]
  %v975 = vld [vmem:[%s1 + $0x1dc8] sm:$0xff]
  %v976 = vld [vmem:[%s1 + $0x1dd0] sm:$0xff]
  %v977 = vld [vmem:[%s1 + $0x1dd8] sm:$0xff]
  %v978 = vld [vmem:[%s1 + $0x1de0] sm:$0xff]
  %v979 = vld [vmem:[%s1 + $0x1de8] sm:$0xff]
  %v980 = vld [vmem:[%s1 + $0x1df0] sm:$0xff]
  %v981 = vld [vmem:[%s1 + $0x1df8] sm:$0xff]
  %v982 = vld [vmem:[%s1 + $0x1e00] sm:$0xff]
  %v983 = vld [vmem:[%s1 + $0x1e08] sm:$0xff]
  %v984 = vld [vmem:[%s1 + $0x1e10] sm:$0xff]
  %v985 = vld [vmem:[%s1 + $0x1e18] sm:$0xff]
  %v986 = vld [vmem:[%s1 + $0x1e20] sm:$0xff]
  %v987 = vld [vmem:[%s1 + $0x1e28] sm:$0xff]
  %v988 = vld [vmem:[%s1 + $0x1e30] sm:$0xff]
  %v989 = vld [vmem:[%s1 + $0x1e38] sm:$0xff]
  %v990 = vld [vmem:[%s1 + $0x1e40] sm:$0xff]
  %v991 = vld [vmem:[%s1 + $0x1e48] sm:$0xff]
  %v992 = vld [vmem:[%s1 + $0x1e50] sm:$0xff]
  %v993 = vld [vmem:[%s1 + $0x1e58] sm:$0xff]
  %v994 = vld [vmem:[%s1 + $0x1e60] sm:$0xff]
  %v995 = vld [vmem:[%s1 + $0x1e68] sm:$0xff]
  %v996 = vld [vmem:[%s1 + $0x1e70] sm:$0xff]
  %v997 = vld [vmem:[%s1 + $0x1e78] sm:$0xff]
  %v998 = vld [vmem:[%s1 + $0x1e80] sm:$0xff]
  %v999 = vld [vmem:[%s1 + $0x1e88] sm:$0xff]
  %v1000 = vld [vmem:[%s1 + $0x1e90] sm:$0xff]
  %v1001 = vld [vmem:[%s1 + $0x1e98] sm:$0xff]
  %v1002 = vld [vmem:[%s1 + $0x1ea0] sm:$0xff]
  %v1003 = vld [vmem:[%s1 + $0x1ea8] sm:$0xff]
  %v1004 = vld [vmem:[%s1 + $0x1eb0] sm:$0xff]
  %v1005 = vld [vmem:[%s1 + $0x1eb8] sm:$0xff]
  %v1006 = vld [vmem:[%s1 + $0x1ec0] sm:$0xff]
  %v1007 = vld [vmem:[%s1 + $0x1ec8] sm:$0xff]
  %v1008 = vld [vmem:[%s1 + $0x1ed0] sm:$0xff]
  %v1009 = vld [vmem:[%s1 + $0x1ed8] sm:$0xff]
  %v1010 = vld [vmem:[%s1 + $0x1ee0] sm:$0xff]
  %v1011 = vld [vmem:[%s1 + $0x1ee8] sm:$0xff]
  %v1012 = vld [vmem:[%s1 + $0x1ef0] sm:$0xff]
  %v1013 = vld [vmem:[%s1 + $0x1ef8] sm:$0xff]
  %v1014 = vld [vmem:[%s1 + $0x1f00] sm:$0xff]
  %v1015 = vld [vmem:[%s1 + $0x1f08] sm:$0xff]
  %v1016 = vld [vmem:[%s1 + $0x1f10] sm:$0xff]
  %v1017 = vld [vmem:[%s1 + $0x1f18] sm:$0xff]
  %v1018 = vld [vmem:[%s1 + $0x1f20] sm:$0xff]
  %v1019 = vld [vmem:[%s1 + $0x1f28] sm:$0xff]
  %v1020 = vld [vmem:[%s1 + $0x1f30] sm:$0xff]
  %v1021 = vld [vmem:[%s1 + $0x1f38] sm:$0xff]
  %v1022 = vld [vmem:[%s1 + $0x1f40] sm:$0xff]
  %v1023 = vld [vmem:[%s1 + $0x1f48] sm:$0xff]
  %v1024 = vld [vmem:[%s1 + $0x1f50] sm:$0xff]
  %v1025 = vld [vmem:[%s1 + $0x1f58] sm:$0xff]
  %v1026 = vld [vmem:[%s1 + $0x1f60] sm:$0xff]
  %v1027 = vld [vmem:[%s1 + $0x1f68] sm:$0xff]
  %v1028 = vld [vmem:[%s1 + $0x1f70] sm:$0xff]
  %v1029 = vld [vmem:[%s1 + $0x1f78] sm:$0xff]
  %v1030 = vld [vmem:[%s1 + $0x1f80] sm:$0xff]
  %v1031 = vld [vmem:[%s1 + $0x1f88] sm:$0xff]
  %v1032 = vld [vmem:[%s1 + $0x1f90] sm:$0xff]
  %v1033 = vld [vmem:[%s1 + $0x1f98] sm:$0xff]
  %v1034 = vld [vmem:[%s1 + $0x1fa0] sm:$0xff]
  %v1035 = vld [vmem:[%s1 + $0x1fa8] sm:$0xff]
  %v1036 = vld [vmem:[%s1 + $0x1fb0] sm:$0xff]
  %v1037 = vld [vmem:[%s1 + $0x1fb8] sm:$0xff]
  %v1038 = vld [vmem:[%s1 + $0x1fc0] sm:$0xff]
  %v1039 = vld [vmem:[%s1 + $0x1fc8] sm:$0xff]
  %v1040 = vld [vmem:[%s1 + $0x1fd0] sm:$0xff]
  %v1041 = vld [vmem:[%s1 + $0x1fd8] sm:$0xff]
  %v1042 = vld [vmem:[%s1 + $0x1fe0] sm:$0xff]
  %v1043 = vld [vmem:[%s1 + $0x1fe8] sm:$0xff]
  %v1044 = vld [vmem:[%s1 + $0x1ff0] sm:$0xff]
  %v1045 = vld [vmem:[%s1 + $0x1ff8] sm:$0xff]
  %v1046 = vld [vmem:[%s2] sm:$0xff]
  %v1047 = vld [vmem:[%s2 + $0x8] sm:$0xff]
  %v1050 = vlaneseq
  %v1051 = vshrl.u32 %v1050, 7
  %v1052 = vsub.s32 0, %v1051
  %v1053 = vrot.slane %v1046, %v1052
  %v1054 = vlaneseq
  %v1055 = vshrl.u32 %v1054, 7
  %v1056 = vsub.s32 1, %v1055
  %v1057 = vrot.slane %v1046, %v1056
  %v1058 = vlaneseq
  %v1059 = vshrl.u32 %v1058, 7
  %v1060 = vsub.s32 2, %v1059
  %v1061 = vrot.slane %v1046, %v1060
  %v1062 = vlaneseq
  %v1063 = vshrl.u32 %v1062, 7
  %v1064 = vsub.s32 3, %v1063
  %v1065 = vrot.slane %v1046, %v1064
  %v1066 = vlaneseq
  %v1067 = vshrl.u32 %v1066, 7
  %v1068 = vsub.s32 4, %v1067
  %v1069 = vrot.slane %v1046, %v1068
  %v1070 = vlaneseq
  %v1071 = vshrl.u32 %v1070, 7
  %v1072 = vsub.s32 5, %v1071
  %v1073 = vrot.slane %v1046, %v1072
  %v1074 = vlaneseq
  %v1075 = vshrl.u32 %v1074, 7
  %v1076 = vsub.s32 6, %v1075
  %v1077 = vrot.slane %v1046, %v1076
  %v1078 = vlaneseq
  %v1079 = vshrl.u32 %v1078, 7
  %v1080 = vsub.s32 7, %v1079
  %v1081 = vrot.slane %v1046, %v1080
  %v1082 = vlaneseq
  %v1083 = vshrl.u32 %v1082, 7
  %v1084 = vsub.s32 0, %v1083
  %v1085 = vrot.slane %v1047, %v1084
  %v1086 = vlaneseq
  %v1087 = vshrl.u32 %v1086, 7
  %v1088 = vsub.s32 1, %v1087
  %v1089 = vrot.slane %v1047, %v1088
  %v1090 = vlaneseq
  %v1091 = vshrl.u32 %v1090, 7
  %v1092 = vsub.s32 2, %v1091
  %v1093 = vrot.slane %v1047, %v1092
  %v1094 = vlaneseq
  %v1095 = vshrl.u32 %v1094, 7
  %v1096 = vsub.s32 3, %v1095
  %v1097 = vrot.slane %v1047, %v1096
  %v1098 = vlaneseq
  %v1099 = vshrl.u32 %v1098, 7
  %v1100 = vsub.s32 4, %v1099
  %v1101 = vrot.slane %v1047, %v1100
  %v1102 = vlaneseq
  %v1103 = vshrl.u32 %v1102, 7
  %v1104 = vsub.s32 5, %v1103
  %v1105 = vrot.slane %v1047, %v1104
  %v1106 = vlaneseq
  %v1107 = vshrl.u32 %v1106, 7
  %v1108 = vsub.s32 6, %v1107
  %v1109 = vrot.slane %v1047, %v1108
  %v1110 = vlaneseq
  %v1111 = vshrl.u32 %v1110, 7
  %v1112 = vsub.s32 7, %v1111
  %v1113 = vrot.slane %v1047, %v1112
  %1130 = vmatprep.subr.mxu0 %v23
  %1131 = vmatpush1.msra.mxu0 %v22
  %1132 = vmatprep.subr.mxu0 %v39
  %1133 = vmatpush1.msra.mxu0 %v38
  %1134 = vmatprep.subr.mxu0 %v55
  %1135 = vmatpush1.msra.mxu0 %v54
  %1136 = vmatprep.subr.mxu0 %v71
  %1137 = vmatpush1.msra.mxu0 %v70
  %1138 = vmatprep.subr.mxu0 %v87
  %1139 = vmatpush1.msra.mxu0 %v86
  %1140 = vmatprep.subr.mxu0 %v103
  %1141 = vmatpush1.msra.mxu0 %v102
  %1142 = vmatprep.subr.mxu0 %v119
  %1143 = vmatpush1.msra.mxu0 %v118
  %1144 = vmatprep.subr.mxu0 %v135
  %1145 = vmatpush1.msra.mxu0 %v134
  %1146 = vmatprep.subr.mxu0 %v151
  %1147 = vmatpush1.msra.mxu0 %v150
  %1148 = vmatprep.subr.mxu0 %v167
  %1149 = vmatpush1.msra.mxu0 %v166
  %1150 = vmatprep.subr.mxu0 %v183
  %1151 = vmatpush1.msra.mxu0 %v182
  %1152 = vmatprep.subr.mxu0 %v199
  %1153 = vmatpush1.msra.mxu0 %v198
  %1154 = vmatprep.subr.mxu0 %v215
  %1155 = vmatpush1.msra.mxu0 %v214
  %1156 = vmatprep.subr.mxu0 %v231
  %1157 = vmatpush1.msra.mxu0 %v230
  %1158 = vmatprep.subr.mxu0 %v247
  %1159 = vmatpush1.msra.mxu0 %v246
  %1160 = vmatprep.subr.mxu0 %v263
  %1161 = vmatpush1.msra.mxu0 %v262
  %1162 = vmatprep.subr.mxu0 %v279
  %1163 = vmatpush1.msra.mxu0 %v278
  %1164 = vmatprep.subr.mxu0 %v295
  %1165 = vmatpush1.msra.mxu0 %v294
  %1166 = vmatprep.subr.mxu0 %v311
  %1167 = vmatpush1.msra.mxu0 %v310
  %1168 = vmatprep.subr.mxu0 %v327
  %1169 = vmatpush1.msra.mxu0 %v326
  %1170 = vmatprep.subr.mxu0 %v343
  %1171 = vmatpush1.msra.mxu0 %v342
  %1172 = vmatprep.subr.mxu0 %v359
  %1173 = vmatpush1.msra.mxu0 %v358
  %1174 = vmatprep.subr.mxu0 %v375
  %1175 = vmatpush1.msra.mxu0 %v374
  %1176 = vmatprep.subr.mxu0 %v391
  %1177 = vmatpush1.msra.mxu0 %v390
  %1178 = vmatprep.subr.mxu0 %v407
  %1179 = vmatpush1.msra.mxu0 %v406
  %1180 = vmatprep.subr.mxu0 %v423
  %1181 = vmatpush1.msra.mxu0 %v422
  %1182 = vmatprep.subr.mxu0 %v439
  %1183 = vmatpush1.msra.mxu0 %v438
  %1184 = vmatprep.subr.mxu0 %v455
  %1185 = vmatpush1.msra.mxu0 %v454
  %1186 = vmatprep.subr.mxu0 %v471
  %1187 = vmatpush1.msra.mxu0 %v470
  %1188 = vmatprep.subr.mxu0 %v487
  %1189 = vmatpush1.msra.mxu0 %v486
  %1190 = vmatprep.subr.mxu0 %v503
  %1191 = vmatpush1.msra.mxu0 %v502
  %1192 = vmatprep.subr.mxu0 %v519
  %1193 = vmatpush1.msra.mxu0 %v518
  %1194 = vmatprep.mubr.f32.mxu0 %v15
  %1195 = vmatmul.mubr.f32.gmra.mrb[0].mxu0 %v14
  %v1196 = vpop.f32.mrb[0].mxu0
  %v1197 = vadd.f32 %v1053, %v1196
  %v1198 = vpop.f32.mrb[0].mxu0
  %v1199 = vadd.f32 %v1057, %v1198
  %1200 = vmatprep.mubr.f32.mxu0 %v19
  %1201 = vmatmul.mubr.f32.gmra.mrb[0].mxu0 %v18
  %v1202 = vpop.f32.mrb[0].mxu0
  %v1203 = vadd.f32 %v1053, %v1202
  %v1204 = vpop.f32.mrb[0].mxu0
  %v1205 = vadd.f32 %v1057, %v1204
  %1206 = vdwg.mxu0
  %1207 = vmatprep.subr.mxu0 %v535
  %1208 = vmatpush1.msra.mxu0 %v534
  %1209 = vmatprep.subr.mxu0 %v551
  %1210 = vmatpush1.msra.mxu0 %v550
  %1211 = vmatprep.subr.mxu0 %v567
  %1212 = vmatpush1.msra.mxu0 %v566
  %1213 = vmatprep.subr.mxu0 %v583
  %1214 = vmatpush1.msra.mxu0 %v582
  %1215 = vmatprep.subr.mxu0 %v599
  %1216 = vmatpush1.msra.mxu0 %v598
  %1217 = vmatprep.subr.mxu0 %v615
  %1218 = vmatpush1.msra.mxu0 %v614
  %1219 = vmatprep.subr.mxu0 %v631
  %1220 = vmatpush1.msra.mxu0 %v630
  %1221 = vmatprep.subr.mxu0 %v647
  %1222 = vmatpush1.msra.mxu0 %v646
  %1223 = vmatprep.subr.mxu0 %v663
  %1224 = vmatpush1.msra.mxu0 %v662
  %1225 = vmatprep.subr.mxu0 %v679
  %1226 = vmatpush1.msra.mxu0 %v678
  %1227 = vmatprep.subr.mxu0 %v695
  %1228 = vmatpush1.msra.mxu0 %v694
  %1229 = vmatprep.subr.mxu0 %v711
  %1230 = vmatpush1.msra.mxu0 %v710
  %1231 = vmatprep.subr.mxu0 %v727
  %1232 = vmatpush1.msra.mxu0 %v726
  %1233 = vmatprep.subr.mxu0 %v743
  %1234 = vmatpush1.msra.mxu0 %v742
  %1235 = vmatprep.subr.mxu0 %v759
  %1236 = vmatpush1.msra.mxu0 %v758
  %1237 = vmatprep.subr.mxu0 %v775
  %1238 = vmatpush1.msra.mxu0 %v774
  %1239 = vmatprep.subr.mxu0 %v791
  %1240 = vmatpush1.msra.mxu0 %v790
  %1241 = vmatprep.subr.mxu0 %v807
  %1242 = vmatpush1.msra.mxu0 %v806
  %1243 = vmatprep.subr.mxu0 %v823
  %1244 = vmatpush1.msra.mxu0 %v822
  %1245 = vmatprep.subr.mxu0 %v839
  %1246 = vmatpush1.msra.mxu0 %v838
  %1247 = vmatprep.subr.mxu0 %v855
  %1248 = vmatpush1.msra.mxu0 %v854
  %1249 = vmatprep.subr.mxu0 %v871
  %1250 = vmatpush1.msra.mxu0 %v870
  %1251 = vmatprep.subr.mxu0 %v887
  %1252 = vmatpush1.msra.mxu0 %v886
  %1253 = vmatprep.subr.mxu0 %v903
  %1254 = vmatpush1.msra.mxu0 %v902
  %1255 = vmatprep.subr.mxu0 %v919
  %1256 = vmatpush1.msra.mxu0 %v918
  %1257 = vmatprep.subr.mxu0 %v935
  %1258 = vmatpush1.msra.mxu0 %v934
  %1259 = vmatprep.subr.mxu0 %v951
  %1260 = vmatpush1.msra.mxu0 %v950
  %1261 = vmatprep.subr.mxu0 %v967
  %1262 = vmatpush1.msra.mxu0 %v966
  %1263 = vmatprep.subr.mxu0 %v983
  %1264 = vmatpush1.msra.mxu0 %v982
  %1265 = vmatprep.subr.mxu0 %v999
  %1266 = vmatpush1.msra.mxu0 %v998
  %1267 = vmatprep.subr.mxu0 %v1015
  %1268 = vmatpush1.msra.mxu0 %v1014
  %1269 = vmatprep.subr.mxu0 %v1031
  %1270 = vmatpush1.msra.mxu0 %v1030
  %1271 = vmatprep.mubr.f32.mxu0 %v17
  %1272 = vmatmul.mubr.f32.gmra.mrb[0].mxu0 %v16
  %v1273 = vpop.f32.mrb[0].mxu0
  %v1274 = vadd.f32 %v1197, %v1273
  %v1275 = vpop.f32.mrb[0].mxu0
  %v1276 = vadd.f32 %v1199, %v1275
  %1277 = vmatprep.mubr.f32.mxu0 %v21
  %1278 = vmatmul.mubr.f32.gmra.mrb[0].mxu0 %v20
  %v1279 = vpop.f32.mrb[0].mxu0
  %v1280 = vadd.f32 %v1203, %v1279
  %v1281 = vpop.f32.mrb[0].mxu0
  %v1282 = vadd.f32 %v1205, %v1281
  %1283 = vdwg.mxu0
  %1284 = vmatprep.subr.mxu0 %v25
  %1285 = vmatpush1.msra.mxu0 %v24
  %1286 = vmatprep.subr.mxu0 %v41
  %1287 = vmatpush1.msra.mxu0 %v40
  %1288 = vmatprep.subr.mxu0 %v57
  %1289 = vmatpush1.msra.mxu0 %v56
  %1290 = vmatprep.subr.mxu0 %v73
  %1291 = vmatpush1.msra.mxu0 %v72
  %1292 = vmatprep.subr.mxu0 %v89
  %1293 = vmatpush1.msra.mxu0 %v88
  %1294 = vmatprep.subr.mxu0 %v105
  %1295 = vmatpush1.msra.mxu0 %v104
  %1296 = vmatprep.subr.mxu0 %v121
  %1297 = vmatpush1.msra.mxu0 %v120
  %1298 = vmatprep.subr.mxu0 %v137
  %1299 = vmatpush1.msra.mxu0 %v136
  %1300 = vmatprep.subr.mxu0 %v153
  %1301 = vmatpush1.msra.mxu0 %v152
  %1302 = vmatprep.subr.mxu0 %v169
  %1303 = vmatpush1.msra.mxu0 %v168
  %1304 = vmatprep.subr.mxu0 %v185
  %1305 = vmatpush1.msra.mxu0 %v184
  %1306 = vmatprep.subr.mxu0 %v201
  %1307 = vmatpush1.msra.mxu0 %v200
  %1308 = vmatprep.subr.mxu0 %v217
  %1309 = vmatpush1.msra.mxu0 %v216
  %1310 = vmatprep.subr.mxu0 %v233
  %1311 = vmatpush1.msra.mxu0 %v232
  %1312 = vmatprep.subr.mxu0 %v249
  %1313 = vmatpush1.msra.mxu0 %v248
  %1314 = vmatprep.subr.mxu0 %v265
  %1315 = vmatpush1.msra.mxu0 %v264
  %1316 = vmatprep.subr.mxu0 %v281
  %1317 = vmatpush1.msra.mxu0 %v280
  %1318 = vmatprep.subr.mxu0 %v297
  %1319 = vmatpush1.msra.mxu0 %v296
  %1320 = vmatprep.subr.mxu0 %v313
  %1321 = vmatpush1.msra.mxu0 %v312
  %1322 = vmatprep.subr.mxu0 %v329
  %1323 = vmatpush1.msra.mxu0 %v328
  %1324 = vmatprep.subr.mxu0 %v345
  %1325 = vmatpush1.msra.mxu0 %v344
  %1326 = vmatprep.subr.mxu0 %v361
  %1327 = vmatpush1.msra.mxu0 %v360
  %1328 = vmatprep.subr.mxu0 %v377
  %1329 = vmatpush1.msra.mxu0 %v376
  %1330 = vmatprep.subr.mxu0 %v393
  %1331 = vmatpush1.msra.mxu0 %v392
  %1332 = vmatprep.subr.mxu0 %v409
  %1333 = vmatpush1.msra.mxu0 %v408
  %1334 = vmatprep.subr.mxu0 %v425
  %1335 = vmatpush1.msra.mxu0 %v424
  %1336 = vmatprep.subr.mxu0 %v441
  %1337 = vmatpush1.msra.mxu0 %v440
  %1338 = vmatprep.subr.mxu0 %v457
  %1339 = vmatpush1.msra.mxu0 %v456
  %1340 = vmatprep.subr.mxu0 %v473
  %1341 = vmatpush1.msra.mxu0 %v472
  %1342 = vmatprep.subr.mxu0 %v489
  %1343 = vmatpush1.msra.mxu0 %v488
  %1344 = vmatprep.subr.mxu0 %v505
  %1345 = vmatpush1.msra.mxu0 %v504
  %1346 = vmatprep.subr.mxu0 %v521
  %1347 = vmatpush1.msra.mxu0 %v520
  %1348 = vmatprep.mubr.f32.mxu0 %v15
  %1349 = vmatmul.mubr.f32.gmra.mrb[0].mxu0 %v14
  %v1350 = vpop.f32.mrb[0].mxu0
  %v1351 = vadd.f32 %v1061, %v1350
  %v1352 = vpop.f32.mrb[0].mxu0
  %v1353 = vadd.f32 %v1065, %v1352
  %1354 = vmatprep.mubr.f32.mxu0 %v19
  %1355 = vmatmul.mubr.f32.gmra.mrb[0].mxu0 %v18
  %v1356 = vpop.f32.mrb[0].mxu0
  %v1357 = vadd.f32 %v1061, %v1356
  %v1358 = vpop.f32.mrb[0].mxu0
  %v1359 = vadd.f32 %v1065, %v1358
  %1360 = vdwg.mxu0
  %1361 = vmatprep.subr.mxu0 %v537
  %1362 = vmatpush1.msra.mxu0 %v536
  %1363 = vmatprep.subr.mxu0 %v553
  %1364 = vmatpush1.msra.mxu0 %v552
  %1365 = vmatprep.subr.mxu0 %v569
  %1366 = vmatpush1.msra.mxu0 %v568
  %1367 = vmatprep.subr.mxu0 %v585
  %1368 = vmatpush1.msra.mxu0 %v584
  %1369 = vmatprep.subr.mxu0 %v601
  %1370 = vmatpush1.msra.mxu0 %v600
  %1371 = vmatprep.subr.mxu0 %v617
  %1372 = vmatpush1.msra.mxu0 %v616
  %1373 = vmatprep.subr.mxu0 %v633
  %1374 = vmatpush1.msra.mxu0 %v632
  %1375 = vmatprep.subr.mxu0 %v649
  %1376 = vmatpush1.msra.mxu0 %v648
  %1377 = vmatprep.subr.mxu0 %v665
  %1378 = vmatpush1.msra.mxu0 %v664
  %1379 = vmatprep.subr.mxu0 %v681
  %1380 = vmatpush1.msra.mxu0 %v680
  %1381 = vmatprep.subr.mxu0 %v697
  %1382 = vmatpush1.msra.mxu0 %v696
  %1383 = vmatprep.subr.mxu0 %v713
  %1384 = vmatpush1.msra.mxu0 %v712
  %1385 = vmatprep.subr.mxu0 %v729
  %1386 = vmatpush1.msra.mxu0 %v728
  %1387 = vmatprep.subr.mxu0 %v745
  %1388 = vmatpush1.msra.mxu0 %v744
  %1389 = vmatprep.subr.mxu0 %v761
  %1390 = vmatpush1.msra.mxu0 %v760
  %1391 = vmatprep.subr.mxu0 %v777
  %1392 = vmatpush1.msra.mxu0 %v776
  %1393 = vmatprep.subr.mxu0 %v793
  %1394 = vmatpush1.msra.mxu0 %v792
  %1395 = vmatprep.subr.mxu0 %v809
  %1396 = vmatpush1.msra.mxu0 %v808
  %1397 = vmatprep.subr.mxu0 %v825
  %1398 = vmatpush1.msra.mxu0 %v824
  %1399 = vmatprep.subr.mxu0 %v841
  %1400 = vmatpush1.msra.mxu0 %v840
  %1401 = vmatprep.subr.mxu0 %v857
  %1402 = vmatpush1.msra.mxu0 %v856
  %1403 = vmatprep.subr.mxu0 %v873
  %1404 = vmatpush1.msra.mxu0 %v872
  %1405 = vmatprep.subr.mxu0 %v889
  %1406 = vmatpush1.msra.mxu0 %v888
  %1407 = vmatprep.subr.mxu0 %v905
  %1408 = vmatpush1.msra.mxu0 %v904
  %1409 = vmatprep.subr.mxu0 %v921
  %1410 = vmatpush1.msra.mxu0 %v920
  %1411 = vmatprep.subr.mxu0 %v937
  %1412 = vmatpush1.msra.mxu0 %v936
  %1413 = vmatprep.subr.mxu0 %v953
  %1414 = vmatpush1.msra.mxu0 %v952
  %1415 = vmatprep.subr.mxu0 %v969
  %1416 = vmatpush1.msra.mxu0 %v968
  %1417 = vmatprep.subr.mxu0 %v985
  %1418 = vmatpush1.msra.mxu0 %v984
  %1419 = vmatprep.subr.mxu0 %v1001
  %1420 = vmatpush1.msra.mxu0 %v1000
  %1421 = vmatprep.subr.mxu0 %v1017
  %1422 = vmatpush1.msra.mxu0 %v1016
  %1423 = vmatprep.subr.mxu0 %v1033
  %1424 = vmatpush1.msra.mxu0 %v1032
  %1425 = vmatprep.mubr.f32.mxu0 %v17
  %1426 = vmatmul.mubr.f32.gmra.mrb[0].mxu0 %v16
  %v1427 = vpop.f32.mrb[0].mxu0
  %v1428 = vadd.f32 %v1351, %v1427
  %v1429 = vpop.f32.mrb[0].mxu0
  %v1430 = vadd.f32 %v1353, %v1429
  %1431 = vmatprep.mubr.f32.mxu0 %v21
  %1432 = vmatmul.mubr.f32.gmra.mrb[0].mxu0 %v20
  %v1433 = vpop.f32.mrb[0].mxu0
  %v1434 = vadd.f32 %v1357, %v1433
  %v1435 = vpop.f32.mrb[0].mxu0
  %v1436 = vadd.f32 %v1359, %v1435
  %1437 = vdwg.mxu0
  %1438 = vmatprep.subr.mxu0 %v27
  %1439 = vmatpush1.msra.mxu0 %v26
  %1440 = vmatprep.subr.mxu0 %v43
  %1441 = vmatpush1.msra.mxu0 %v42
  %1442 = vmatprep.subr.mxu0 %v59
  %1443 = vmatpush1.msra.mxu0 %v58
  %1444 = vmatprep.subr.mxu0 %v75
  %1445 = vmatpush1.msra.mxu0 %v74
  %1446 = vmatprep.subr.mxu0 %v91
  %1447 = vmatpush1.msra.mxu0 %v90
  %1448 = vmatprep.subr.mxu0 %v107
  %1449 = vmatpush1.msra.mxu0 %v106
  %1450 = vmatprep.subr.mxu0 %v123
  %1451 = vmatpush1.msra.mxu0 %v122
  %1452 = vmatprep.subr.mxu0 %v139
  %1453 = vmatpush1.msra.mxu0 %v138
  %1454 = vmatprep.subr.mxu0 %v155
  %1455 = vmatpush1.msra.mxu0 %v154
  %1456 = vmatprep.subr.mxu0 %v171
  %1457 = vmatpush1.msra.mxu0 %v170
  %1458 = vmatprep.subr.mxu0 %v187
  %1459 = vmatpush1.msra.mxu0 %v186
  %1460 = vmatprep.subr.mxu0 %v203
  %1461 = vmatpush1.msra.mxu0 %v202
  %1462 = vmatprep.subr.mxu0 %v219
  %1463 = vmatpush1.msra.mxu0 %v218
  %1464 = vmatprep.subr.mxu0 %v235
  %1465 = vmatpush1.msra.mxu0 %v234
  %1466 = vmatprep.subr.mxu0 %v251
  %1467 = vmatpush1.msra.mxu0 %v250
  %1468 = vmatprep.subr.mxu0 %v267
  %1469 = vmatpush1.msra.mxu0 %v266
  %1470 = vmatprep.subr.mxu0 %v283
  %1471 = vmatpush1.msra.mxu0 %v282
  %1472 = vmatprep.subr.mxu0 %v299
  %1473 = vmatpush1.msra.mxu0 %v298
  %1474 = vmatprep.subr.mxu0 %v315
  %1475 = vmatpush1.msra.mxu0 %v314
  %1476 = vmatprep.subr.mxu0 %v331
  %1477 = vmatpush1.msra.mxu0 %v330
  %1478 = vmatprep.subr.mxu0 %v347
  %1479 = vmatpush1.msra.mxu0 %v346
  %1480 = vmatprep.subr.mxu0 %v363
  %1481 = vmatpush1.msra.mxu0 %v362
  %1482 = vmatprep.subr.mxu0 %v379
  %1483 = vmatpush1.msra.mxu0 %v378
  %1484 = vmatprep.subr.mxu0 %v395
  %1485 = vmatpush1.msra.mxu0 %v394
  %1486 = vmatprep.subr.mxu0 %v411
  %1487 = vmatpush1.msra.mxu0 %v410
  %1488 = vmatprep.subr.mxu0 %v427
  %1489 = vmatpush1.msra.mxu0 %v426
  %1490 = vmatprep.subr.mxu0 %v443
  %1491 = vmatpush1.msra.mxu0 %v442
  %1492 = vmatprep.subr.mxu0 %v459
  %1493 = vmatpush1.msra.mxu0 %v458
  %1494 = vmatprep.subr.mxu0 %v475
  %1495 = vmatpush1.msra.mxu0 %v474
  %1496 = vmatprep.subr.mxu0 %v491
  %1497 = vmatpush1.msra.mxu0 %v490
  %1498 = vmatprep.subr.mxu0 %v507
  %1499 = vmatpush1.msra.mxu0 %v506
  %1500 = vmatprep.subr.mxu0 %v523
  %1501 = vmatpush1.msra.mxu0 %v522
  %1502 = vmatprep.mubr.f32.mxu0 %v15
  %1503 = vmatmul.mubr.f32.gmra.mrb[0].mxu0 %v14
  %v1504 = vpop.f32.mrb[0].mxu0
  %v1505 = vadd.f32 %v1069, %v1504
  %v1506 = vpop.f32.mrb[0].mxu0
  %v1507 = vadd.f32 %v1073, %v1506
  %1508 = vmatprep.mubr.f32.mxu0 %v19
  %1509 = vmatmul.mubr.f32.gmra.mrb[0].mxu0 %v18
  %v1510 = vpop.f32.mrb[0].mxu0
  %v1511 = vadd.f32 %v1069, %v1510
  %v1512 = vpop.f32.mrb[0].mxu0
  %v1513 = vadd.f32 %v1073, %v1512
  %1514 = vdwg.mxu0
  %1515 = vmatprep.subr.mxu0 %v539
  %1516 = vmatpush1.msra.mxu0 %v538
  %1517 = vmatprep.subr.mxu0 %v555
  %1518 = vmatpush1.msra.mxu0 %v554
  %1519 = vmatprep.subr.mxu0 %v571
  %1520 = vmatpush1.msra.mxu0 %v570
  %1521 = vmatprep.subr.mxu0 %v587
  %1522 = vmatpush1.msra.mxu0 %v586
  %1523 = vmatprep.subr.mxu0 %v603
  %1524 = vmatpush1.msra.mxu0 %v602
  %1525 = vmatprep.subr.mxu0 %v619
  %1526 = vmatpush1.msra.mxu0 %v618
  %1527 = vmatprep.subr.mxu0 %v635
  %1528 = vmatpush1.msra.mxu0 %v634
  %1529 = vmatprep.subr.mxu0 %v651
  %1530 = vmatpush1.msra.mxu0 %v650
  %1531 = vmatprep.subr.mxu0 %v667
  %1532 = vmatpush1.msra.mxu0 %v666
  %1533 = vmatprep.subr.mxu0 %v683
  %1534 = vmatpush1.msra.mxu0 %v682
  %1535 = vmatprep.subr.mxu0 %v699
  %1536 = vmatpush1.msra.mxu0 %v698
  %1537 = vmatprep.subr.mxu0 %v715
  %1538 = vmatpush1.msra.mxu0 %v714
  %1539 = vmatprep.subr.mxu0 %v731
  %1540 = vmatpush1.msra.mxu0 %v730
  %1541 = vmatprep.subr.mxu0 %v747
  %1542 = vmatpush1.msra.mxu0 %v746
  %1543 = vmatprep.subr.mxu0 %v763
  %1544 = vmatpush1.msra.mxu0 %v762
  %1545 = vmatprep.subr.mxu0 %v779
  %1546 = vmatpush1.msra.mxu0 %v778
  %1547 = vmatprep.subr.mxu0 %v795
  %1548 = vmatpush1.msra.mxu0 %v794
  %1549 = vmatprep.subr.mxu0 %v811
  %1550 = vmatpush1.msra.mxu0 %v810
  %1551 = vmatprep.subr.mxu0 %v827
  %1552 = vmatpush1.msra.mxu0 %v826
  %1553 = vmatprep.subr.mxu0 %v843
  %1554 = vmatpush1.msra.mxu0 %v842
  %1555 = vmatprep.subr.mxu0 %v859
  %1556 = vmatpush1.msra.mxu0 %v858
  %1557 = vmatprep.subr.mxu0 %v875
  %1558 = vmatpush1.msra.mxu0 %v874
  %1559 = vmatprep.subr.mxu0 %v891
  %1560 = vmatpush1.msra.mxu0 %v890
  %1561 = vmatprep.subr.mxu0 %v907
  %1562 = vmatpush1.msra.mxu0 %v906
  %1563 = vmatprep.subr.mxu0 %v923
  %1564 = vmatpush1.msra.mxu0 %v922
  %1565 = vmatprep.subr.mxu0 %v939
  %1566 = vmatpush1.msra.mxu0 %v938
  %1567 = vmatprep.subr.mxu0 %v955
  %1568 = vmatpush1.msra.mxu0 %v954
  %1569 = vmatprep.subr.mxu0 %v971
  %1570 = vmatpush1.msra.mxu0 %v970
  %1571 = vmatprep.subr.mxu0 %v987
  %1572 = vmatpush1.msra.mxu0 %v986
  %1573 = vmatprep.subr.mxu0 %v1003
  %1574 = vmatpush1.msra.mxu0 %v1002
  %1575 = vmatprep.subr.mxu0 %v1019
  %1576 = vmatpush1.msra.mxu0 %v1018
  %1577 = vmatprep.subr.mxu0 %v1035
  %1578 = vmatpush1.msra.mxu0 %v1034
  %1579 = vmatprep.mubr.f32.mxu0 %v17
  %1580 = vmatmul.mubr.f32.gmra.mrb[0].mxu0 %v16
  %v1581 = vpop.f32.mrb[0].mxu0
  %v1582 = vadd.f32 %v1505, %v1581
  %v1583 = vpop.f32.mrb[0].mxu0
  %v1584 = vadd.f32 %v1507, %v1583
  %1585 = vmatprep.mubr.f32.mxu0 %v21
  %1586 = vmatmul.mubr.f32.gmra.mrb[0].mxu0 %v20
  %v1587 = vpop.f32.mrb[0].mxu0
  %v1588 = vadd.f32 %v1511, %v1587
  %v1589 = vpop.f32.mrb[0].mxu0
  %v1590 = vadd.f32 %v1513, %v1589
  %1591 = vdwg.mxu0
  %1592 = vmatprep.subr.mxu0 %v29
  %1593 = vmatpush1.msra.mxu0 %v28
  %1594 = vmatprep.subr.mxu0 %v45
  %1595 = vmatpush1.msra.mxu0 %v44
  %1596 = vmatprep.subr.mxu0 %v61
  %1597 = vmatpush1.msra.mxu0 %v60
  %1598 = vmatprep.subr.mxu0 %v77
  %1599 = vmatpush1.msra.mxu0 %v76
  %1600 = vmatprep.subr.mxu0 %v93
  %1601 = vmatpush1.msra.mxu0 %v92
  %1602 = vmatprep.subr.mxu0 %v109
  %1603 = vmatpush1.msra.mxu0 %v108
  %1604 = vmatprep.subr.mxu0 %v125
  %1605 = vmatpush1.msra.mxu0 %v124
  %1606 = vmatprep.subr.mxu0 %v141
  %1607 = vmatpush1.msra.mxu0 %v140
  %1608 = vmatprep.subr.mxu0 %v157
  %1609 = vmatpush1.msra.mxu0 %v156
  %1610 = vmatprep.subr.mxu0 %v173
  %1611 = vmatpush1.msra.mxu0 %v172
  %1612 = vmatprep.subr.mxu0 %v189
  %1613 = vmatpush1.msra.mxu0 %v188
  %1614 = vmatprep.subr.mxu0 %v205
  %1615 = vmatpush1.msra.mxu0 %v204
  %1616 = vmatprep.subr.mxu0 %v221
  %1617 = vmatpush1.msra.mxu0 %v220
  %1618 = vmatprep.subr.mxu0 %v237
  %1619 = vmatpush1.msra.mxu0 %v236
  %1620 = vmatprep.subr.mxu0 %v253
  %1621 = vmatpush1.msra.mxu0 %v252
  %1622 = vmatprep.subr.mxu0 %v269
  %1623 = vmatpush1.msra.mxu0 %v268
  %1624 = vmatprep.subr.mxu0 %v285
  %1625 = vmatpush1.msra.mxu0 %v284
  %1626 = vmatprep.subr.mxu0 %v301
  %1627 = vmatpush1.msra.mxu0 %v300
  %1628 = vmatprep.subr.mxu0 %v317
  %1629 = vmatpush1.msra.mxu0 %v316
  %1630 = vmatprep.subr.mxu0 %v333
  %1631 = vmatpush1.msra.mxu0 %v332
  %1632 = vmatprep.subr.mxu0 %v349
  %1633 = vmatpush1.msra.mxu0 %v348
  %1634 = vmatprep.subr.mxu0 %v365
  %1635 = vmatpush1.msra.mxu0 %v364
  %1636 = vmatprep.subr.mxu0 %v381
  %1637 = vmatpush1.msra.mxu0 %v380
  %1638 = vmatprep.subr.mxu0 %v397
  %1639 = vmatpush1.msra.mxu0 %v396
  %1640 = vmatprep.subr.mxu0 %v413
  %1641 = vmatpush1.msra.mxu0 %v412
  %1642 = vmatprep.subr.mxu0 %v429
  %1643 = vmatpush1.msra.mxu0 %v428
  %1644 = vmatprep.subr.mxu0 %v445
  %1645 = vmatpush1.msra.mxu0 %v444
  %1646 = vmatprep.subr.mxu0 %v461
  %1647 = vmatpush1.msra.mxu0 %v460
  %1648 = vmatprep.subr.mxu0 %v477
  %1649 = vmatpush1.msra.mxu0 %v476
  %1650 = vmatprep.subr.mxu0 %v493
  %1651 = vmatpush1.msra.mxu0 %v492
  %1652 = vmatprep.subr.mxu0 %v509
  %1653 = vmatpush1.msra.mxu0 %v508
  %1654 = vmatprep.subr.mxu0 %v525
  %1655 = vmatpush1.msra.mxu0 %v524
  %1656 = vmatprep.mubr.f32.mxu0 %v15
  %1657 = vmatmul.mubr.f32.gmra.mrb[0].mxu0 %v14
  %v1658 = vpop.f32.mrb[0].mxu0
  %v1659 = vadd.f32 %v1077, %v1658
  %v1660 = vpop.f32.mrb[0].mxu0
  %v1661 = vadd.f32 %v1081, %v1660
  %1662 = vmatprep.mubr.f32.mxu0 %v19
  %1663 = vmatmul.mubr.f32.gmra.mrb[0].mxu0 %v18
  %v1664 = vpop.f32.mrb[0].mxu0
  %v1665 = vadd.f32 %v1077, %v1664
  %v1666 = vpop.f32.mrb[0].mxu0
  %v1667 = vadd.f32 %v1081, %v1666
  %1668 = vdwg.mxu0
  %1669 = vmatprep.subr.mxu0 %v541
  %1670 = vmatpush1.msra.mxu0 %v540
  %1671 = vmatprep.subr.mxu0 %v557
  %1672 = vmatpush1.msra.mxu0 %v556
  %1673 = vmatprep.subr.mxu0 %v573
  %1674 = vmatpush1.msra.mxu0 %v572
  %1675 = vmatprep.subr.mxu0 %v589
  %1676 = vmatpush1.msra.mxu0 %v588
  %1677 = vmatprep.subr.mxu0 %v605
  %1678 = vmatpush1.msra.mxu0 %v604
  %1679 = vmatprep.subr.mxu0 %v621
  %1680 = vmatpush1.msra.mxu0 %v620
  %1681 = vmatprep.subr.mxu0 %v637
  %1682 = vmatpush1.msra.mxu0 %v636
  %1683 = vmatprep.subr.mxu0 %v653
  %1684 = vmatpush1.msra.mxu0 %v652
  %1685 = vmatprep.subr.mxu0 %v669
  %1686 = vmatpush1.msra.mxu0 %v668
  %1687 = vmatprep.subr.mxu0 %v685
  %1688 = vmatpush1.msra.mxu0 %v684
  %1689 = vmatprep.subr.mxu0 %v701
  %1690 = vmatpush1.msra.mxu0 %v700
  %1691 = vmatprep.subr.mxu0 %v717
  %1692 = vmatpush1.msra.mxu0 %v716
  %1693 = vmatprep.subr.mxu0 %v733
  %1694 = vmatpush1.msra.mxu0 %v732
  %1695 = vmatprep.subr.mxu0 %v749
  %1696 = vmatpush1.msra.mxu0 %v748
  %1697 = vmatprep.subr.mxu0 %v765
  %1698 = vmatpush1.msra.mxu0 %v764
  %1699 = vmatprep.subr.mxu0 %v781
  %1700 = vmatpush1.msra.mxu0 %v780
  %1701 = vmatprep.subr.mxu0 %v797
  %1702 = vmatpush1.msra.mxu0 %v796
  %1703 = vmatprep.subr.mxu0 %v813
  %1704 = vmatpush1.msra.mxu0 %v812
  %1705 = vmatprep.subr.mxu0 %v829
  %1706 = vmatpush1.msra.mxu0 %v828
  %1707 = vmatprep.subr.mxu0 %v845
  %1708 = vmatpush1.msra.mxu0 %v844
  %1709 = vmatprep.subr.mxu0 %v861
  %1710 = vmatpush1.msra.mxu0 %v860
  %1711 = vmatprep.subr.mxu0 %v877
  %1712 = vmatpush1.msra.mxu0 %v876
  %1713 = vmatprep.subr.mxu0 %v893
  %1714 = vmatpush1.msra.mxu0 %v892
  %1715 = vmatprep.subr.mxu0 %v909
  %1716 = vmatpush1.msra.mxu0 %v908
  %1717 = vmatprep.subr.mxu0 %v925
  %1718 = vmatpush1.msra.mxu0 %v924
  %1719 = vmatprep.subr.mxu0 %v941
  %1720 = vmatpush1.msra.mxu0 %v940
  %1721 = vmatprep.subr.mxu0 %v957
  %1722 = vmatpush1.msra.mxu0 %v956
  %1723 = vmatprep.subr.mxu0 %v973
  %1724 = vmatpush1.msra.mxu0 %v972
  %1725 = vmatprep.subr.mxu0 %v989
  %1726 = vmatpush1.msra.mxu0 %v988
  %1727 = vmatprep.subr.mxu0 %v1005
  %1728 = vmatpush1.msra.mxu0 %v1004
  %1729 = vmatprep.subr.mxu0 %v1021
  %1730 = vmatpush1.msra.mxu0 %v1020
  %1731 = vmatprep.subr.mxu0 %v1037
  %1732 = vmatpush1.msra.mxu0 %v1036
  %1733 = vmatprep.mubr.f32.mxu0 %v17
  %1734 = vmatmul.mubr.f32.gmra.mrb[0].mxu0 %v16
  %v1735 = vpop.f32.mrb[0].mxu0
  %v1736 = vadd.f32 %v1659, %v1735
  %v1737 = vpop.f32.mrb[0].mxu0
  %v1738 = vadd.f32 %v1661, %v1737
  %1739 = vmatprep.mubr.f32.mxu0 %v21
  %1740 = vmatmul.mubr.f32.gmra.mrb[0].mxu0 %v20
  %v1741 = vpop.f32.mrb[0].mxu0
  %v1742 = vadd.f32 %v1665, %v1741
  %v1743 = vpop.f32.mrb[0].mxu0
  %v1744 = vadd.f32 %v1667, %v1743
  %1745 = vdwg.mxu0
  %1746 = vmatprep.subr.mxu0 %v31
  %1747 = vmatpush1.msra.mxu0 %v30
  %1748 = vmatprep.subr.mxu0 %v47
  %1749 = vmatpush1.msra.mxu0 %v46
  %1750 = vmatprep.subr.mxu0 %v63
  %1751 = vmatpush1.msra.mxu0 %v62
  %1752 = vmatprep.subr.mxu0 %v79
  %1753 = vmatpush1.msra.mxu0 %v78
  %1754 = vmatprep.subr.mxu0 %v95
  %1755 = vmatpush1.msra.mxu0 %v94
  %1756 = vmatprep.subr.mxu0 %v111
  %1757 = vmatpush1.msra.mxu0 %v110
  %1758 = vmatprep.subr.mxu0 %v127
  %1759 = vmatpush1.msra.mxu0 %v126
  %1760 = vmatprep.subr.mxu0 %v143
  %1761 = vmatpush1.msra.mxu0 %v142
  %1762 = vmatprep.subr.mxu0 %v159
  %1763 = vmatpush1.msra.mxu0 %v158
  %1764 = vmatprep.subr.mxu0 %v175
  %1765 = vmatpush1.msra.mxu0 %v174
  %1766 = vmatprep.subr.mxu0 %v191
  %1767 = vmatpush1.msra.mxu0 %v190
  %1768 = vmatprep.subr.mxu0 %v207
  %1769 = vmatpush1.msra.mxu0 %v206
  %1770 = vmatprep.subr.mxu0 %v223
  %1771 = vmatpush1.msra.mxu0 %v222
  %1772 = vmatprep.subr.mxu0 %v239
  %1773 = vmatpush1.msra.mxu0 %v238
  %1774 = vmatprep.subr.mxu0 %v255
  %1775 = vmatpush1.msra.mxu0 %v254
  %1776 = vmatprep.subr.mxu0 %v271
  %1777 = vmatpush1.msra.mxu0 %v270
  %1778 = vmatprep.subr.mxu0 %v287
  %1779 = vmatpush1.msra.mxu0 %v286
  %1780 = vmatprep.subr.mxu0 %v303
  %1781 = vmatpush1.msra.mxu0 %v302
  %1782 = vmatprep.subr.mxu0 %v319
  %1783 = vmatpush1.msra.mxu0 %v318
  %1784 = vmatprep.subr.mxu0 %v335
  %1785 = vmatpush1.msra.mxu0 %v334
  %1786 = vmatprep.subr.mxu0 %v351
  %1787 = vmatpush1.msra.mxu0 %v350
  %1788 = vmatprep.subr.mxu0 %v367
  %1789 = vmatpush1.msra.mxu0 %v366
  %1790 = vmatprep.subr.mxu0 %v383
  %1791 = vmatpush1.msra.mxu0 %v382
  %1792 = vmatprep.subr.mxu0 %v399
  %1793 = vmatpush1.msra.mxu0 %v398
  %1794 = vmatprep.subr.mxu0 %v415
  %1795 = vmatpush1.msra.mxu0 %v414
  %1796 = vmatprep.subr.mxu0 %v431
  %1797 = vmatpush1.msra.mxu0 %v430
  %1798 = vmatprep.subr.mxu0 %v447
  %1799 = vmatpush1.msra.mxu0 %v446
  %1800 = vmatprep.subr.mxu0 %v463
  %1801 = vmatpush1.msra.mxu0 %v462
  %1802 = vmatprep.subr.mxu0 %v479
  %1803 = vmatpush1.msra.mxu0 %v478
  %1804 = vmatprep.subr.mxu0 %v495
  %1805 = vmatpush1.msra.mxu0 %v494
  %1806 = vmatprep.subr.mxu0 %v511
  %1807 = vmatpush1.msra.mxu0 %v510
  %1808 = vmatprep.subr.mxu0 %v527
  %1809 = vmatpush1.msra.mxu0 %v526
  %1810 = vmatprep.mubr.f32.mxu0 %v15
  %1811 = vmatmul.mubr.f32.gmra.mrb[0].mxu0 %v14
  %v1812 = vpop.f32.mrb[0].mxu0
  %v1813 = vadd.f32 %v1085, %v1812
  %v1814 = vpop.f32.mrb[0].mxu0
  %v1815 = vadd.f32 %v1089, %v1814
  %1816 = vmatprep.mubr.f32.mxu0 %v19
  %1817 = vmatmul.mubr.f32.gmra.mrb[0].mxu0 %v18
  %v1818 = vpop.f32.mrb[0].mxu0
  %v1819 = vadd.f32 %v1085, %v1818
  %v1820 = vpop.f32.mrb[0].mxu0
  %v1821 = vadd.f32 %v1089, %v1820
  %1822 = vdwg.mxu0
  %1823 = vmatprep.subr.mxu0 %v543
  %1824 = vmatpush1.msra.mxu0 %v542
  %1825 = vmatprep.subr.mxu0 %v559
  %1826 = vmatpush1.msra.mxu0 %v558
  %1827 = vmatprep.subr.mxu0 %v575
  %1828 = vmatpush1.msra.mxu0 %v574
  %1829 = vmatprep.subr.mxu0 %v591
  %1830 = vmatpush1.msra.mxu0 %v590
  %1831 = vmatprep.subr.mxu0 %v607
  %1832 = vmatpush1.msra.mxu0 %v606
  %1833 = vmatprep.subr.mxu0 %v623
  %1834 = vmatpush1.msra.mxu0 %v622
  %1835 = vmatprep.subr.mxu0 %v639
  %1836 = vmatpush1.msra.mxu0 %v638
  %1837 = vmatprep.subr.mxu0 %v655
  %1838 = vmatpush1.msra.mxu0 %v654
  %1839 = vmatprep.subr.mxu0 %v671
  %1840 = vmatpush1.msra.mxu0 %v670
  %1841 = vmatprep.subr.mxu0 %v687
  %1842 = vmatpush1.msra.mxu0 %v686
  %1843 = vmatprep.subr.mxu0 %v703
  %1844 = vmatpush1.msra.mxu0 %v702
  %1845 = vmatprep.subr.mxu0 %v719
  %1846 = vmatpush1.msra.mxu0 %v718
  %1847 = vmatprep.subr.mxu0 %v735
  %1848 = vmatpush1.msra.mxu0 %v734
  %1849 = vmatprep.subr.mxu0 %v751
  %1850 = vmatpush1.msra.mxu0 %v750
  %1851 = vmatprep.subr.mxu0 %v767
  %1852 = vmatpush1.msra.mxu0 %v766
  %1853 = vmatprep.subr.mxu0 %v783
  %1854 = vmatpush1.msra.mxu0 %v782
  %1855 = vmatprep.subr.mxu0 %v799
  %1856 = vmatpush1.msra.mxu0 %v798
  %1857 = vmatprep.subr.mxu0 %v815
  %1858 = vmatpush1.msra.mxu0 %v814
  %1859 = vmatprep.subr.mxu0 %v831
  %1860 = vmatpush1.msra.mxu0 %v830
  %1861 = vmatprep.subr.mxu0 %v847
  %1862 = vmatpush1.msra.mxu0 %v846
  %1863 = vmatprep.subr.mxu0 %v863
  %1864 = vmatpush1.msra.mxu0 %v862
  %1865 = vmatprep.subr.mxu0 %v879
  %1866 = vmatpush1.msra.mxu0 %v878
  %1867 = vmatprep.subr.mxu0 %v895
  %1868 = vmatpush1.msra.mxu0 %v894
  %1869 = vmatprep.subr.mxu0 %v911
  %1870 = vmatpush1.msra.mxu0 %v910
  %1871 = vmatprep.subr.mxu0 %v927
  %1872 = vmatpush1.msra.mxu0 %v926
  %1873 = vmatprep.subr.mxu0 %v943
  %1874 = vmatpush1.msra.mxu0 %v942
  %1875 = vmatprep.subr.mxu0 %v959
  %1876 = vmatpush1.msra.mxu0 %v958
  %1877 = vmatprep.subr.mxu0 %v975
  %1878 = vmatpush1.msra.mxu0 %v974
  %1879 = vmatprep.subr.mxu0 %v991
  %1880 = vmatpush1.msra.mxu0 %v990
  %1881 = vmatprep.subr.mxu0 %v1007
  %1882 = vmatpush1.msra.mxu0 %v1006
  %1883 = vmatprep.subr.mxu0 %v1023
  %1884 = vmatpush1.msra.mxu0 %v1022
  %1885 = vmatprep.subr.mxu0 %v1039
  %1886 = vmatpush1.msra.mxu0 %v1038
  %1887 = vmatprep.mubr.f32.mxu0 %v17
  %1888 = vmatmul.mubr.f32.gmra.mrb[0].mxu0 %v16
  %v1889 = vpop.f32.mrb[0].mxu0
  %v1890 = vadd.f32 %v1813, %v1889
  %v1891 = vpop.f32.mrb[0].mxu0
  %v1892 = vadd.f32 %v1815, %v1891
  %1893 = vmatprep.mubr.f32.mxu0 %v21
  %1894 = vmatmul.mubr.f32.gmra.mrb[0].mxu0 %v20
  %v1895 = vpop.f32.mrb[0].mxu0
  %v1896 = vadd.f32 %v1819, %v1895
  %v1897 = vpop.f32.mrb[0].mxu0
  %v1898 = vadd.f32 %v1821, %v1897
  %1899 = vdwg.mxu0
  %1900 = vmatprep.subr.mxu0 %v33
  %1901 = vmatpush1.msra.mxu0 %v32
  %1902 = vmatprep.subr.mxu0 %v49
  %1903 = vmatpush1.msra.mxu0 %v48
  %1904 = vmatprep.subr.mxu0 %v65
  %1905 = vmatpush1.msra.mxu0 %v64
  %1906 = vmatprep.subr.mxu0 %v81
  %1907 = vmatpush1.msra.mxu0 %v80
  %1908 = vmatprep.subr.mxu0 %v97
  %1909 = vmatpush1.msra.mxu0 %v96
  %1910 = vmatprep.subr.mxu0 %v113
  %1911 = vmatpush1.msra.mxu0 %v112
  %1912 = vmatprep.subr.mxu0 %v129
  %1913 = vmatpush1.msra.mxu0 %v128
  %1914 = vmatprep.subr.mxu0 %v145
  %1915 = vmatpush1.msra.mxu0 %v144
  %1916 = vmatprep.subr.mxu0 %v161
  %1917 = vmatpush1.msra.mxu0 %v160
  %1918 = vmatprep.subr.mxu0 %v177
  %1919 = vmatpush1.msra.mxu0 %v176
  %1920 = vmatprep.subr.mxu0 %v193
  %1921 = vmatpush1.msra.mxu0 %v192
  %1922 = vmatprep.subr.mxu0 %v209
  %1923 = vmatpush1.msra.mxu0 %v208
  %1924 = vmatprep.subr.mxu0 %v225
  %1925 = vmatpush1.msra.mxu0 %v224
  %1926 = vmatprep.subr.mxu0 %v241
  %1927 = vmatpush1.msra.mxu0 %v240
  %1928 = vmatprep.subr.mxu0 %v257
  %1929 = vmatpush1.msra.mxu0 %v256
  %1930 = vmatprep.subr.mxu0 %v273
  %1931 = vmatpush1.msra.mxu0 %v272
  %1932 = vmatprep.subr.mxu0 %v289
  %1933 = vmatpush1.msra.mxu0 %v288
  %1934 = vmatprep.subr.mxu0 %v305
  %1935 = vmatpush1.msra.mxu0 %v304
  %1936 = vmatprep.subr.mxu0 %v321
  %1937 = vmatpush1.msra.mxu0 %v320
  %1938 = vmatprep.subr.mxu0 %v337
  %1939 = vmatpush1.msra.mxu0 %v336
  %1940 = vmatprep.subr.mxu0 %v353
  %1941 = vmatpush1.msra.mxu0 %v352
  %1942 = vmatprep.subr.mxu0 %v369
  %1943 = vmatpush1.msra.mxu0 %v368
  %1944 = vmatprep.subr.mxu0 %v385
  %1945 = vmatpush1.msra.mxu0 %v384
  %1946 = vmatprep.subr.mxu0 %v401
  %1947 = vmatpush1.msra.mxu0 %v400
  %1948 = vmatprep.subr.mxu0 %v417
  %1949 = vmatpush1.msra.mxu0 %v416
  %1950 = vmatprep.subr.mxu0 %v433
  %1951 = vmatpush1.msra.mxu0 %v432
  %1952 = vmatprep.subr.mxu0 %v449
  %1953 = vmatpush1.msra.mxu0 %v448
  %1954 = vmatprep.subr.mxu0 %v465
  %1955 = vmatpush1.msra.mxu0 %v464
  %1956 = vmatprep.subr.mxu0 %v481
  %1957 = vmatpush1.msra.mxu0 %v480
  %1958 = vmatprep.subr.mxu0 %v497
  %1959 = vmatpush1.msra.mxu0 %v496
  %1960 = vmatprep.subr.mxu0 %v513
  %1961 = vmatpush1.msra.mxu0 %v512
  %1962 = vmatprep.subr.mxu0 %v529
  %1963 = vmatpush1.msra.mxu0 %v528
  %1964 = vmatprep.mubr.f32.mxu0 %v15
  %1965 = vmatmul.mubr.f32.gmra.mrb[0].mxu0 %v14
  %v1966 = vpop.f32.mrb[0].mxu0
  %v1967 = vadd.f32 %v1093, %v1966
  %v1968 = vpop.f32.mrb[0].mxu0
  %v1969 = vadd.f32 %v1097, %v1968
  %1970 = vmatprep.mubr.f32.mxu0 %v19
  %1971 = vmatmul.mubr.f32.gmra.mrb[0].mxu0 %v18
  %v1972 = vpop.f32.mrb[0].mxu0
  %v1973 = vadd.f32 %v1093, %v1972
  %v1974 = vpop.f32.mrb[0].mxu0
  %v1975 = vadd.f32 %v1097, %v1974
  %1976 = vdwg.mxu0
  %1977 = vmatprep.subr.mxu0 %v545
  %1978 = vmatpush1.msra.mxu0 %v544
  %1979 = vmatprep.subr.mxu0 %v561
  %1980 = vmatpush1.msra.mxu0 %v560
  %1981 = vmatprep.subr.mxu0 %v577
  %1982 = vmatpush1.msra.mxu0 %v576
  %1983 = vmatprep.subr.mxu0 %v593
  %1984 = vmatpush1.msra.mxu0 %v592
  %1985 = vmatprep.subr.mxu0 %v609
  %1986 = vmatpush1.msra.mxu0 %v608
  %1987 = vmatprep.subr.mxu0 %v625
  %1988 = vmatpush1.msra.mxu0 %v624
  %1989 = vmatprep.subr.mxu0 %v641
  %1990 = vmatpush1.msra.mxu0 %v640
  %1991 = vmatprep.subr.mxu0 %v657
  %1992 = vmatpush1.msra.mxu0 %v656
  %1993 = vmatprep.subr.mxu0 %v673
  %1994 = vmatpush1.msra.mxu0 %v672
  %1995 = vmatprep.subr.mxu0 %v689
  %1996 = vmatpush1.msra.mxu0 %v688
  %1997 = vmatprep.subr.mxu0 %v705
  %1998 = vmatpush1.msra.mxu0 %v704
  %1999 = vmatprep.subr.mxu0 %v721
  %2000 = vmatpush1.msra.mxu0 %v720
  %2001 = vmatprep.subr.mxu0 %v737
  %2002 = vmatpush1.msra.mxu0 %v736
  %2003 = vmatprep.subr.mxu0 %v753
  %2004 = vmatpush1.msra.mxu0 %v752
  %2005 = vmatprep.subr.mxu0 %v769
  %2006 = vmatpush1.msra.mxu0 %v768
  %2007 = vmatprep.subr.mxu0 %v785
  %2008 = vmatpush1.msra.mxu0 %v784
  %2009 = vmatprep.subr.mxu0 %v801
  %2010 = vmatpush1.msra.mxu0 %v800
  %2011 = vmatprep.subr.mxu0 %v817
  %2012 = vmatpush1.msra.mxu0 %v816
  %2013 = vmatprep.subr.mxu0 %v833
  %2014 = vmatpush1.msra.mxu0 %v832
  %2015 = vmatprep.subr.mxu0 %v849
  %2016 = vmatpush1.msra.mxu0 %v848
  %2017 = vmatprep.subr.mxu0 %v865
  %2018 = vmatpush1.msra.mxu0 %v864
  %2019 = vmatprep.subr.mxu0 %v881
  %2020 = vmatpush1.msra.mxu0 %v880
  %2021 = vmatprep.subr.mxu0 %v897
  %2022 = vmatpush1.msra.mxu0 %v896
  %2023 = vmatprep.subr.mxu0 %v913
  %2024 = vmatpush1.msra.mxu0 %v912
  %2025 = vmatprep.subr.mxu0 %v929
  %2026 = vmatpush1.msra.mxu0 %v928
  %2027 = vmatprep.subr.mxu0 %v945
  %2028 = vmatpush1.msra.mxu0 %v944
  %2029 = vmatprep.subr.mxu0 %v961
  %2030 = vmatpush1.msra.mxu0 %v960
  %2031 = vmatprep.subr.mxu0 %v977
  %2032 = vmatpush1.msra.mxu0 %v976
  %2033 = vmatprep.subr.mxu0 %v993
  %2034 = vmatpush1.msra.mxu0 %v992
  %2035 = vmatprep.subr.mxu0 %v1009
  %2036 = vmatpush1.msra.mxu0 %v1008
  %2037 = vmatprep.subr.mxu0 %v1025
  %2038 = vmatpush1.msra.mxu0 %v1024
  %2039 = vmatprep.subr.mxu0 %v1041
  %2040 = vmatpush1.msra.mxu0 %v1040
  %2041 = vmatprep.mubr.f32.mxu0 %v17
  %2042 = vmatmul.mubr.f32.gmra.mrb[0].mxu0 %v16
  %v2043 = vpop.f32.mrb[0].mxu0
  %v2044 = vadd.f32 %v1967, %v2043
  %v2045 = vpop.f32.mrb[0].mxu0
  %v2046 = vadd.f32 %v1969, %v2045
  %2047 = vmatprep.mubr.f32.mxu0 %v21
  %2048 = vmatmul.mubr.f32.gmra.mrb[0].mxu0 %v20
  %v2049 = vpop.f32.mrb[0].mxu0
  %v2050 = vadd.f32 %v1973, %v2049
  %v2051 = vpop.f32.mrb[0].mxu0
  %v2052 = vadd.f32 %v1975, %v2051
  %2053 = vdwg.mxu0
  %2054 = vmatprep.subr.mxu0 %v35
  %2055 = vmatpush1.msra.mxu0 %v34
  %2056 = vmatprep.subr.mxu0 %v51
  %2057 = vmatpush1.msra.mxu0 %v50
  %2058 = vmatprep.subr.mxu0 %v67
  %2059 = vmatpush1.msra.mxu0 %v66
  %2060 = vmatprep.subr.mxu0 %v83
  %2061 = vmatpush1.msra.mxu0 %v82
  %2062 = vmatprep.subr.mxu0 %v99
  %2063 = vmatpush1.msra.mxu0 %v98
  %2064 = vmatprep.subr.mxu0 %v115
  %2065 = vmatpush1.msra.mxu0 %v114
  %2066 = vmatprep.subr.mxu0 %v131
  %2067 = vmatpush1.msra.mxu0 %v130
  %2068 = vmatprep.subr.mxu0 %v147
  %2069 = vmatpush1.msra.mxu0 %v146
  %2070 = vmatprep.subr.mxu0 %v163
  %2071 = vmatpush1.msra.mxu0 %v162
  %2072 = vmatprep.subr.mxu0 %v179
  %2073 = vmatpush1.msra.mxu0 %v178
  %2074 = vmatprep.subr.mxu0 %v195
  %2075 = vmatpush1.msra.mxu0 %v194
  %2076 = vmatprep.subr.mxu0 %v211
  %2077 = vmatpush1.msra.mxu0 %v210
  %2078 = vmatprep.subr.mxu0 %v227
  %2079 = vmatpush1.msra.mxu0 %v226
  %2080 = vmatprep.subr.mxu0 %v243
  %2081 = vmatpush1.msra.mxu0 %v242
  %2082 = vmatprep.subr.mxu0 %v259
  %2083 = vmatpush1.msra.mxu0 %v258
  %2084 = vmatprep.subr.mxu0 %v275
  %2085 = vmatpush1.msra.mxu0 %v274
  %2086 = vmatprep.subr.mxu0 %v291
  %2087 = vmatpush1.msra.mxu0 %v290
  %2088 = vmatprep.subr.mxu0 %v307
  %2089 = vmatpush1.msra.mxu0 %v306
  %2090 = vmatprep.subr.mxu0 %v323
  %2091 = vmatpush1.msra.mxu0 %v322
  %2092 = vmatprep.subr.mxu0 %v339
  %2093 = vmatpush1.msra.mxu0 %v338
  %2094 = vmatprep.subr.mxu0 %v355
  %2095 = vmatpush1.msra.mxu0 %v354
  %2096 = vmatprep.subr.mxu0 %v371
  %2097 = vmatpush1.msra.mxu0 %v370
  %2098 = vmatprep.subr.mxu0 %v387
  %2099 = vmatpush1.msra.mxu0 %v386
  %2100 = vmatprep.subr.mxu0 %v403
  %2101 = vmatpush1.msra.mxu0 %v402
  %2102 = vmatprep.subr.mxu0 %v419
  %2103 = vmatpush1.msra.mxu0 %v418
  %2104 = vmatprep.subr.mxu0 %v435
  %2105 = vmatpush1.msra.mxu0 %v434
  %2106 = vmatprep.subr.mxu0 %v451
  %2107 = vmatpush1.msra.mxu0 %v450
  %2108 = vmatprep.subr.mxu0 %v467
  %2109 = vmatpush1.msra.mxu0 %v466
  %2110 = vmatprep.subr.mxu0 %v483
  %2111 = vmatpush1.msra.mxu0 %v482
  %2112 = vmatprep.subr.mxu0 %v499
  %2113 = vmatpush1.msra.mxu0 %v498
  %2114 = vmatprep.subr.mxu0 %v515
  %2115 = vmatpush1.msra.mxu0 %v514
  %2116 = vmatprep.subr.mxu0 %v531
  %2117 = vmatpush1.msra.mxu0 %v530
  %2118 = vmatprep.mubr.f32.mxu0 %v15
  %2119 = vmatmul.mubr.f32.gmra.mrb[0].mxu0 %v14
  %v2120 = vpop.f32.mrb[0].mxu0
  %v2121 = vadd.f32 %v1101, %v2120
  %v2122 = vpop.f32.mrb[0].mxu0
  %v2123 = vadd.f32 %v1105, %v2122
  %2124 = vmatprep.mubr.f32.mxu0 %v19
  %2125 = vmatmul.mubr.f32.gmra.mrb[0].mxu0 %v18
  %v2126 = vpop.f32.mrb[0].mxu0
  %v2127 = vadd.f32 %v1101, %v2126
  %v2128 = vpop.f32.mrb[0].mxu0
  %v2129 = vadd.f32 %v1105, %v2128
  %2130 = vdwg.mxu0
  %2131 = vmatprep.subr.mxu0 %v547
  %2132 = vmatpush1.msra.mxu0 %v546
  %2133 = vmatprep.subr.mxu0 %v563
  %2134 = vmatpush1.msra.mxu0 %v562
  %2135 = vmatprep.subr.mxu0 %v579
  %2136 = vmatpush1.msra.mxu0 %v578
  %2137 = vmatprep.subr.mxu0 %v595
  %2138 = vmatpush1.msra.mxu0 %v594
  %2139 = vmatprep.subr.mxu0 %v611
  %2140 = vmatpush1.msra.mxu0 %v610
  %2141 = vmatprep.subr.mxu0 %v627
  %2142 = vmatpush1.msra.mxu0 %v626
  %2143 = vmatprep.subr.mxu0 %v643
  %2144 = vmatpush1.msra.mxu0 %v642
  %2145 = vmatprep.subr.mxu0 %v659
  %2146 = vmatpush1.msra.mxu0 %v658
  %2147 = vmatprep.subr.mxu0 %v675
  %2148 = vmatpush1.msra.mxu0 %v674
  %2149 = vmatprep.subr.mxu0 %v691
  %2150 = vmatpush1.msra.mxu0 %v690
  %2151 = vmatprep.subr.mxu0 %v707
  %2152 = vmatpush1.msra.mxu0 %v706
  %2153 = vmatprep.subr.mxu0 %v723
  %2154 = vmatpush1.msra.mxu0 %v722
  %2155 = vmatprep.subr.mxu0 %v739
  %2156 = vmatpush1.msra.mxu0 %v738
  %2157 = vmatprep.subr.mxu0 %v755
  %2158 = vmatpush1.msra.mxu0 %v754
  %2159 = vmatprep.subr.mxu0 %v771
  %2160 = vmatpush1.msra.mxu0 %v770
  %2161 = vmatprep.subr.mxu0 %v787
  %2162 = vmatpush1.msra.mxu0 %v786
  %2163 = vmatprep.subr.mxu0 %v803
  %2164 = vmatpush1.msra.mxu0 %v802
  %2165 = vmatprep.subr.mxu0 %v819
  %2166 = vmatpush1.msra.mxu0 %v818
  %2167 = vmatprep.subr.mxu0 %v835
  %2168 = vmatpush1.msra.mxu0 %v834
  %2169 = vmatprep.subr.mxu0 %v851
  %2170 = vmatpush1.msra.mxu0 %v850
  %2171 = vmatprep.subr.mxu0 %v867
  %2172 = vmatpush1.msra.mxu0 %v866
  %2173 = vmatprep.subr.mxu0 %v883
  %2174 = vmatpush1.msra.mxu0 %v882
  %2175 = vmatprep.subr.mxu0 %v899
  %2176 = vmatpush1.msra.mxu0 %v898
  %2177 = vmatprep.subr.mxu0 %v915
  %2178 = vmatpush1.msra.mxu0 %v914
  %2179 = vmatprep.subr.mxu0 %v931
  %2180 = vmatpush1.msra.mxu0 %v930
  %2181 = vmatprep.subr.mxu0 %v947
  %2182 = vmatpush1.msra.mxu0 %v946
  %2183 = vmatprep.subr.mxu0 %v963
  %2184 = vmatpush1.msra.mxu0 %v962
  %2185 = vmatprep.subr.mxu0 %v979
  %2186 = vmatpush1.msra.mxu0 %v978
  %2187 = vmatprep.subr.mxu0 %v995
  %2188 = vmatpush1.msra.mxu0 %v994
  %2189 = vmatprep.subr.mxu0 %v1011
  %2190 = vmatpush1.msra.mxu0 %v1010
  %2191 = vmatprep.subr.mxu0 %v1027
  %2192 = vmatpush1.msra.mxu0 %v1026
  %2193 = vmatprep.subr.mxu0 %v1043
  %2194 = vmatpush1.msra.mxu0 %v1042
  %2195 = vmatprep.mubr.f32.mxu0 %v17
  %2196 = vmatmul.mubr.f32.gmra.mrb[0].mxu0 %v16
  %v2197 = vpop.f32.mrb[0].mxu0
  %v2198 = vadd.f32 %v2121, %v2197
  %v2199 = vpop.f32.mrb[0].mxu0
  %v2200 = vadd.f32 %v2123, %v2199
  %2201 = vmatprep.mubr.f32.mxu0 %v21
  %2202 = vmatmul.mubr.f32.gmra.mrb[0].mxu0 %v20
  %v2203 = vpop.f32.mrb[0].mxu0
  %v2204 = vadd.f32 %v2127, %v2203
  %v2205 = vpop.f32.mrb[0].mxu0
  %v2206 = vadd.f32 %v2129, %v2205
  %2207 = vdwg.mxu0
  %2208 = vmatprep.subr.mxu0 %v37
  %2209 = vmatpush1.msra.mxu0 %v36
  %2210 = vmatprep.subr.mxu0 %v53
  %2211 = vmatpush1.msra.mxu0 %v52
  %2212 = vmatprep.subr.mxu0 %v69
  %2213 = vmatpush1.msra.mxu0 %v68
  %2214 = vmatprep.subr.mxu0 %v85
  %2215 = vmatpush1.msra.mxu0 %v84
  %2216 = vmatprep.subr.mxu0 %v101
  %2217 = vmatpush1.msra.mxu0 %v100
  %2218 = vmatprep.subr.mxu0 %v117
  %2219 = vmatpush1.msra.mxu0 %v116
  %2220 = vmatprep.subr.mxu0 %v133
  %2221 = vmatpush1.msra.mxu0 %v132
  %2222 = vmatprep.subr.mxu0 %v149
  %2223 = vmatpush1.msra.mxu0 %v148
  %2224 = vmatprep.subr.mxu0 %v165
  %2225 = vmatpush1.msra.mxu0 %v164
  %2226 = vmatprep.subr.mxu0 %v181
  %2227 = vmatpush1.msra.mxu0 %v180
  %2228 = vmatprep.subr.mxu0 %v197
  %2229 = vmatpush1.msra.mxu0 %v196
  %2230 = vmatprep.subr.mxu0 %v213
  %2231 = vmatpush1.msra.mxu0 %v212
  %2232 = vmatprep.subr.mxu0 %v229
  %2233 = vmatpush1.msra.mxu0 %v228
  %2234 = vmatprep.subr.mxu0 %v245
  %2235 = vmatpush1.msra.mxu0 %v244
  %2236 = vmatprep.subr.mxu0 %v261
  %2237 = vmatpush1.msra.mxu0 %v260
  %2238 = vmatprep.subr.mxu0 %v277
  %2239 = vmatpush1.msra.mxu0 %v276
  %2240 = vmatprep.subr.mxu0 %v293
  %2241 = vmatpush1.msra.mxu0 %v292
  %2242 = vmatprep.subr.mxu0 %v309
  %2243 = vmatpush1.msra.mxu0 %v308
  %2244 = vmatprep.subr.mxu0 %v325
  %2245 = vmatpush1.msra.mxu0 %v324
  %2246 = vmatprep.subr.mxu0 %v341
  %2247 = vmatpush1.msra.mxu0 %v340
  %2248 = vmatprep.subr.mxu0 %v357
  %2249 = vmatpush1.msra.mxu0 %v356
  %2250 = vmatprep.subr.mxu0 %v373
  %2251 = vmatpush1.msra.mxu0 %v372
  %2252 = vmatprep.subr.mxu0 %v389
  %2253 = vmatpush1.msra.mxu0 %v388
  %2254 = vmatprep.subr.mxu0 %v405
  %2255 = vmatpush1.msra.mxu0 %v404
  %2256 = vmatprep.subr.mxu0 %v421
  %2257 = vmatpush1.msra.mxu0 %v420
  %2258 = vmatprep.subr.mxu0 %v437
  %2259 = vmatpush1.msra.mxu0 %v436
  %2260 = vmatprep.subr.mxu0 %v453
  %2261 = vmatpush1.msra.mxu0 %v452
  %2262 = vmatprep.subr.mxu0 %v469
  %2263 = vmatpush1.msra.mxu0 %v468
  %2264 = vmatprep.subr.mxu0 %v485
  %2265 = vmatpush1.msra.mxu0 %v484
  %2266 = vmatprep.subr.mxu0 %v501
  %2267 = vmatpush1.msra.mxu0 %v500
  %2268 = vmatprep.subr.mxu0 %v517
  %2269 = vmatpush1.msra.mxu0 %v516
  %2270 = vmatprep.subr.mxu0 %v533
  %2271 = vmatpush1.msra.mxu0 %v532
  %2272 = vmatprep.mubr.f32.mxu0 %v15
  %2273 = vmatmul.mubr.f32.gmra.mrb[0].mxu0 %v14
  %v2274 = vpop.f32.mrb[0].mxu0
  %v2275 = vadd.f32 %v1109, %v2274
  %v2276 = vpop.f32.mrb[0].mxu0
  %v2277 = vadd.f32 %v1113, %v2276
  %2278 = vmatprep.mubr.f32.mxu0 %v19
  %2279 = vmatmul.mubr.f32.gmra.mrb[0].mxu0 %v18
  %v2280 = vpop.f32.mrb[0].mxu0
  %v2281 = vadd.f32 %v1109, %v2280
  %v2282 = vpop.f32.mrb[0].mxu0
  %v2283 = vadd.f32 %v1113, %v2282
  %2284 = vdwg.mxu0
  %2285 = vmatprep.subr.mxu0 %v549
  %2286 = vmatpush1.msra.mxu0 %v548
  %2287 = vmatprep.subr.mxu0 %v565
  %2288 = vmatpush1.msra.mxu0 %v564
  %2289 = vmatprep.subr.mxu0 %v581
  %2290 = vmatpush1.msra.mxu0 %v580
  %2291 = vmatprep.subr.mxu0 %v597
  %2292 = vmatpush1.msra.mxu0 %v596
  %2293 = vmatprep.subr.mxu0 %v613
  %2294 = vmatpush1.msra.mxu0 %v612
  %2295 = vmatprep.subr.mxu0 %v629
  %2296 = vmatpush1.msra.mxu0 %v628
  %2297 = vmatprep.subr.mxu0 %v645
  %2298 = vmatpush1.msra.mxu0 %v644
  %2299 = vmatprep.subr.mxu0 %v661
  %2300 = vmatpush1.msra.mxu0 %v660
  %2301 = vmatprep.subr.mxu0 %v677
  %2302 = vmatpush1.msra.mxu0 %v676
  %2303 = vmatprep.subr.mxu0 %v693
  %2304 = vmatpush1.msra.mxu0 %v692
  %2305 = vmatprep.subr.mxu0 %v709
  %2306 = vmatpush1.msra.mxu0 %v708
  %2307 = vmatprep.subr.mxu0 %v725
  %2308 = vmatpush1.msra.mxu0 %v724
  %2309 = vmatprep.subr.mxu0 %v741
  %2310 = vmatpush1.msra.mxu0 %v740
  %2311 = vmatprep.subr.mxu0 %v757
  %2312 = vmatpush1.msra.mxu0 %v756
  %2313 = vmatprep.subr.mxu0 %v773
  %2314 = vmatpush1.msra.mxu0 %v772
  %2315 = vmatprep.subr.mxu0 %v789
  %2316 = vmatpush1.msra.mxu0 %v788
  %2317 = vmatprep.subr.mxu0 %v805
  %2318 = vmatpush1.msra.mxu0 %v804
  %2319 = vmatprep.subr.mxu0 %v821
  %2320 = vmatpush1.msra.mxu0 %v820
  %2321 = vmatprep.subr.mxu0 %v837
  %2322 = vmatpush1.msra.mxu0 %v836
  %2323 = vmatprep.subr.mxu0 %v853
  %2324 = vmatpush1.msra.mxu0 %v852
  %2325 = vmatprep.subr.mxu0 %v869
  %2326 = vmatpush1.msra.mxu0 %v868
  %2327 = vmatprep.subr.mxu0 %v885
  %2328 = vmatpush1.msra.mxu0 %v884
  %2329 = vmatprep.subr.mxu0 %v901
  %2330 = vmatpush1.msra.mxu0 %v900
  %2331 = vmatprep.subr.mxu0 %v917
  %2332 = vmatpush1.msra.mxu0 %v916
  %2333 = vmatprep.subr.mxu0 %v933
  %2334 = vmatpush1.msra.mxu0 %v932
  %2335 = vmatprep.subr.mxu0 %v949
  %2336 = vmatpush1.msra.mxu0 %v948
  %2337 = vmatprep.subr.mxu0 %v965
  %2338 = vmatpush1.msra.mxu0 %v964
  %2339 = vmatprep.subr.mxu0 %v981
  %2340 = vmatpush1.msra.mxu0 %v980
  %2341 = vmatprep.subr.mxu0 %v997
  %2342 = vmatpush1.msra.mxu0 %v996
  %2343 = vmatprep.subr.mxu0 %v1013
  %2344 = vmatpush1.msra.mxu0 %v1012
  %2345 = vmatprep.subr.mxu0 %v1029
  %2346 = vmatpush1.msra.mxu0 %v1028
  %2347 = vmatprep.subr.mxu0 %v1045
  %2348 = vmatpush1.msra.mxu0 %v1044
  %2349 = vmatprep.mubr.f32.mxu0 %v17
  %2350 = vmatmul.mubr.f32.gmra.mrb[0].mxu0 %v16
  %v2351 = vpop.f32.mrb[0].mxu0
  %v2352 = vadd.f32 %v2275, %v2351
  %v2353 = vpop.f32.mrb[0].mxu0
  %v2354 = vadd.f32 %v2277, %v2353
  %2355 = vmatprep.mubr.f32.mxu0 %v21
  %2356 = vmatmul.mubr.f32.gmra.mrb[0].mxu0 %v20
  %v2357 = vpop.f32.mrb[0].mxu0
  %v2358 = vadd.f32 %v2281, %v2357
  %v2359 = vpop.f32.mrb[0].mxu0
  %v2360 = vadd.f32 %v2283, %v2359
  %2361 = vdwg.mxu0
  %2362 = vst [vmem:[%s3] sm:$0xff] %v1274
  %2363 = vst [vmem:[%s3 + $0x8] sm:$0xff] %v1276
  %2364 = vst [vmem:[%s3 + $0x10] sm:$0xff] %v1428
  %2365 = vst [vmem:[%s3 + $0x18] sm:$0xff] %v1430
  %2366 = vst [vmem:[%s3 + $0x20] sm:$0xff] %v1582
  %2367 = vst [vmem:[%s3 + $0x28] sm:$0xff] %v1584
  %2368 = vst [vmem:[%s3 + $0x30] sm:$0xff] %v1736
  %2369 = vst [vmem:[%s3 + $0x38] sm:$0xff] %v1738
  %2370 = vst [vmem:[%s3 + $0x40] sm:$0xff] %v1890
  %2371 = vst [vmem:[%s3 + $0x48] sm:$0xff] %v1892
  %2372 = vst [vmem:[%s3 + $0x50] sm:$0xff] %v2044
  %2373 = vst [vmem:[%s3 + $0x58] sm:$0xff] %v2046
  %2374 = vst [vmem:[%s3 + $0x60] sm:$0xff] %v2198
  %2375 = vst [vmem:[%s3 + $0x68] sm:$0xff] %v2200
  %2376 = vst [vmem:[%s3 + $0x70] sm:$0xff] %v2352
  %2377 = vst [vmem:[%s3 + $0x78] sm:$0xff] %v2354
  %2378 = vst [vmem:[%s3 + $0x80] sm:$0xff] %v1280
  %2379 = vst [vmem:[%s3 + $0x88] sm:$0xff] %v1282
  %2380 = vst [vmem:[%s3 + $0x90] sm:$0xff] %v1434
  %2381 = vst [vmem:[%s3 + $0x98] sm:$0xff] %v1436
  %2382 = vst [vmem:[%s3 + $0xa0] sm:$0xff] %v1588
  %2383 = vst [vmem:[%s3 + $0xa8] sm:$0xff] %v1590
  %2384 = vst [vmem:[%s3 + $0xb0] sm:$0xff] %v1742
  %2385 = vst [vmem:[%s3 + $0xb8] sm:$0xff] %v1744
  %2386 = vst [vmem:[%s3 + $0xc0] sm:$0xff] %v1896
  %2387 = vst [vmem:[%s3 + $0xc8] sm:$0xff] %v1898
  %2388 = vst [vmem:[%s3 + $0xd0] sm:$0xff] %v2050
  %2389 = vst [vmem:[%s3 + $0xd8] sm:$0xff] %v2052
  %2390 = vst [vmem:[%s3 + $0xe0] sm:$0xff] %v2204
  %2391 = vst [vmem:[%s3 + $0xe8] sm:$0xff] %v2206
  %2392 = vst [vmem:[%s3 + $0xf0] sm:$0xff] %v2358
  %2393 = vst [vmem:[%s3 + $0xf8] sm:$0xff] %v2360
  // Predicated region
  $region14: #{forward.9} parent=0 // pred_check
    _
  $region15: #{forward.9} parent=0 // pred_check_branch
    %2395 = sbr.rel (0) target = $region17
  $region16: #{forward.9} parent=0 // pred_region
    _
  $region17: #{forward.9} parent=0 // pred_fallthru
    _
  // Predicated region
  $region18: #{forward.9} parent=0 // pred_check
    _
  $region19: #{forward.9} parent=0 // pred_check_branch
    %2397 = sbr.rel (0) target = $region21
  $region20: #{forward.9} parent=0 // pred_region
    _
  $region21: #{forward.9} parent=0 // pred_fallthru
    _

// kernel: forward.10
$region0: #{forward.10}
  #allocation0 [shape = 'u32[]', space=smem, size = 0x4, offset = 0x4, fixed_abs, tag = 'smem constant byte address 0x4 - core index']
  #allocation1 [shape = 'u32[144,128]{1,0:T(1,128)}', space=vmem, size = 0x12000, scoped, tag = 'internal scratch']
  %s0 = inlined_call_operand.vmem [shape: f32[8,2,2048], index: 0, kind: input, shape index: {}]
  %s1 = inlined_call_operand.vmem [shape: f32[512,2048], index: 1, kind: input, shape index: {}]
  %s2 = inlined_call_operand.vmem [shape: f32[8,2,512], index: 2, kind: output, shape index: {}]
  %s3 = sld [smem:[#allocation0]]
  $region25: #{forward.10} parent=0
    _
  %s5 = ssub.s32 1, %s3
  %s6 = scalar_select 0, %s5, %s3
  // Predicated region
  $region2: #{forward.10} parent=0 // pred_check
    _
  $region3: #{forward.10} parent=0 // pred_check_branch
    %8 = sbr.rel (0) target = $region5
  $region4: #{forward.10} parent=0 // pred_region
    _
  $region5: #{forward.10} parent=0 // pred_fallthru
    _
  // Predicated region
  $region6: #{forward.10} parent=0 // pred_check
    _
  $region7: #{forward.10} parent=0 // pred_check_branch
    %10 = sbr.rel (0) target = $region9
  $region8: #{forward.10} parent=0 // pred_region
    _
  $region9: #{forward.10} parent=0 // pred_fallthru
    _
  loop: start=0, step=1, limit=8
  $region10: #{forward.10} parent=0 // loop_pre_header
    _
  $region11: #{forward.10} parent=0 // loop_header
    %s12 = sphi 0, %s16
    %p13 = scmp.ge.s32.totalorder %s12, 8
    %v17 = vphi 0.0, %v2323
    %v18 = vphi 0.0, %v2321
  $region12: #{forward.10} parent=0 // loop_header_branch
    %15 = sbr.rel (%p13) target = $region16
  $region13: #{forward.10} parent=0 // loop_body
    %s19 = smul.u32 %s12, 16
    %s20 = smul.addr %s19, 2
    %s21 = scalar_lea.vmem %s0, %s20
    %v22 = vld [vmem:[%s21] sm:$0xff]
    %v23 = vld [vmem:[%s21 + $0x8] sm:$0xff]
    %v24 = vld [vmem:[%s21 + $0x10] sm:$0xff]
    %v25 = vld [vmem:[%s21 + $0x18] sm:$0xff]
    %v26 = vld [vmem:[%s1] sm:$0xff]
    %v27 = vld [vmem:[%s1 + $0x8] sm:$0xff]
    %v28 = vld [vmem:[%s1 + $0x10] sm:$0xff]
    %v29 = vld [vmem:[%s1 + $0x18] sm:$0xff]
    %v30 = vld [vmem:[%s1 + $0x20] sm:$0xff]
    %v31 = vld [vmem:[%s1 + $0x28] sm:$0xff]
    %v32 = vld [vmem:[%s1 + $0x30] sm:$0xff]
    %v33 = vld [vmem:[%s1 + $0x38] sm:$0xff]
    %v34 = vld [vmem:[%s1 + $0x40] sm:$0xff]
    %v35 = vld [vmem:[%s1 + $0x48] sm:$0xff]
    %v36 = vld [vmem:[%s1 + $0x50] sm:$0xff]
    %v37 = vld [vmem:[%s1 + $0x58] sm:$0xff]
    %v38 = vld [vmem:[%s1 + $0x60] sm:$0xff]
    %v39 = vld [vmem:[%s1 + $0x68] sm:$0xff]
    %v40 = vld [vmem:[%s1 + $0x70] sm:$0xff]
    %v41 = vld [vmem:[%s1 + $0x78] sm:$0xff]
    %v42 = vld [vmem:[%s1 + $0x80] sm:$0xff]
    %v43 = vld [vmem:[%s1 + $0x88] sm:$0xff]
    %v44 = vld [vmem:[%s1 + $0x90] sm:$0xff]
    %v45 = vld [vmem:[%s1 + $0x98] sm:$0xff]
    %v46 = vld [vmem:[%s1 + $0xa0] sm:$0xff]
    %v47 = vld [vmem:[%s1 + $0xa8] sm:$0xff]
    %v48 = vld [vmem:[%s1 + $0xb0] sm:$0xff]
    %v49 = vld [vmem:[%s1 + $0xb8] sm:$0xff]
    %v50 = vld [vmem:[%s1 + $0xc0] sm:$0xff]
    %v51 = vld [vmem:[%s1 + $0xc8] sm:$0xff]
    %v52 = vld [vmem:[%s1 + $0xd0] sm:$0xff]
    %v53 = vld [vmem:[%s1 + $0xd8] sm:$0xff]
    %v54 = vld [vmem:[%s1 + $0xe0] sm:$0xff]
    %v55 = vld [vmem:[%s1 + $0xe8] sm:$0xff]
    %v56 = vld [vmem:[%s1 + $0xf0] sm:$0xff]
    %v57 = vld [vmem:[%s1 + $0xf8] sm:$0xff]
    %v58 = vld [vmem:[%s1 + $0x100] sm:$0xff]
    %v59 = vld [vmem:[%s1 + $0x108] sm:$0xff]
    %v60 = vld [vmem:[%s1 + $0x110] sm:$0xff]
    %v61 = vld [vmem:[%s1 + $0x118] sm:$0xff]
    %v62 = vld [vmem:[%s1 + $0x120] sm:$0xff]
    %v63 = vld [vmem:[%s1 + $0x128] sm:$0xff]
    %v64 = vld [vmem:[%s1 + $0x130] sm:$0xff]
    %v65 = vld [vmem:[%s1 + $0x138] sm:$0xff]
    %v66 = vld [vmem:[%s1 + $0x140] sm:$0xff]
    %v67 = vld [vmem:[%s1 + $0x148] sm:$0xff]
    %v68 = vld [vmem:[%s1 + $0x150] sm:$0xff]
    %v69 = vld [vmem:[%s1 + $0x158] sm:$0xff]
    %v70 = vld [vmem:[%s1 + $0x160] sm:$0xff]
    %v71 = vld [vmem:[%s1 + $0x168] sm:$0xff]
    %v72 = vld [vmem:[%s1 + $0x170] sm:$0xff]
    %v73 = vld [vmem:[%s1 + $0x178] sm:$0xff]
    %v74 = vld [vmem:[%s1 + $0x180] sm:$0xff]
    %v75 = vld [vmem:[%s1 + $0x188] sm:$0xff]
    %v76 = vld [vmem:[%s1 + $0x190] sm:$0xff]
    %v77 = vld [vmem:[%s1 + $0x198] sm:$0xff]
    %v78 = vld [vmem:[%s1 + $0x1a0] sm:$0xff]
    %v79 = vld [vmem:[%s1 + $0x1a8] sm:$0xff]
    %v80 = vld [vmem:[%s1 + $0x1b0] sm:$0xff]
    %v81 = vld [vmem:[%s1 + $0x1b8] sm:$0xff]
    %v82 = vld [vmem:[%s1 + $0x1c0] sm:$0xff]
    %v83 = vld [vmem:[%s1 + $0x1c8] sm:$0xff]
    %v84 = vld [vmem:[%s1 + $0x1d0] sm:$0xff]
    %v85 = vld [vmem:[%s1 + $0x1d8] sm:$0xff]
    %v86 = vld [vmem:[%s1 + $0x1e0] sm:$0xff]
    %v87 = vld [vmem:[%s1 + $0x1e8] sm:$0xff]
    %v88 = vld [vmem:[%s1 + $0x1f0] sm:$0xff]
    %v89 = vld [vmem:[%s1 + $0x1f8] sm:$0xff]
    %v90 = vld [vmem:[%s1 + $0x200] sm:$0xff]
    %v91 = vld [vmem:[%s1 + $0x208] sm:$0xff]
    %v92 = vld [vmem:[%s1 + $0x210] sm:$0xff]
    %v93 = vld [vmem:[%s1 + $0x218] sm:$0xff]
    %v94 = vld [vmem:[%s1 + $0x220] sm:$0xff]
    %v95 = vld [vmem:[%s1 + $0x228] sm:$0xff]
    %v96 = vld [vmem:[%s1 + $0x230] sm:$0xff]
    %v97 = vld [vmem:[%s1 + $0x238] sm:$0xff]
    %v98 = vld [vmem:[%s1 + $0x240] sm:$0xff]
    %v99 = vld [vmem:[%s1 + $0x248] sm:$0xff]
    %v100 = vld [vmem:[%s1 + $0x250] sm:$0xff]
    %v101 = vld [vmem:[%s1 + $0x258] sm:$0xff]
    %v102 = vld [vmem:[%s1 + $0x260] sm:$0xff]
    %v103 = vld [vmem:[%s1 + $0x268] sm:$0xff]
    %v104 = vld [vmem:[%s1 + $0x270] sm:$0xff]
    %v105 = vld [vmem:[%s1 + $0x278] sm:$0xff]
    %v106 = vld [vmem:[%s1 + $0x280] sm:$0xff]
    %v107 = vld [vmem:[%s1 + $0x288] sm:$0xff]
    %v108 = vld [vmem:[%s1 + $0x290] sm:$0xff]
    %v109 = vld [vmem:[%s1 + $0x298] sm:$0xff]
    %v110 = vld [vmem:[%s1 + $0x2a0] sm:$0xff]
    %v111 = vld [vmem:[%s1 + $0x2a8] sm:$0xff]
    %v112 = vld [vmem:[%s1 + $0x2b0] sm:$0xff]
    %v113 = vld [vmem:[%s1 + $0x2b8] sm:$0xff]
    %v114 = vld [vmem:[%s1 + $0x2c0] sm:$0xff]
    %v115 = vld [vmem:[%s1 + $0x2c8] sm:$0xff]
    %v116 = vld [vmem:[%s1 + $0x2d0] sm:$0xff]
    %v117 = vld [vmem:[%s1 + $0x2d8] sm:$0xff]
    %v118 = vld [vmem:[%s1 + $0x2e0] sm:$0xff]
    %v119 = vld [vmem:[%s1 + $0x2e8] sm:$0xff]
    %v120 = vld [vmem:[%s1 + $0x2f0] sm:$0xff]
    %v121 = vld [vmem:[%s1 + $0x2f8] sm:$0xff]
    %v122 = vld [vmem:[%s1 + $0x300] sm:$0xff]
    %v123 = vld [vmem:[%s1 + $0x308] sm:$0xff]
    %v124 = vld [vmem:[%s1 + $0x310] sm:$0xff]
    %v125 = vld [vmem:[%s1 + $0x318] sm:$0xff]
    %v126 = vld [vmem:[%s1 + $0x320] sm:$0xff]
    %v127 = vld [vmem:[%s1 + $0x328] sm:$0xff]
    %v128 = vld [vmem:[%s1 + $0x330] sm:$0xff]
    %v129 = vld [vmem:[%s1 + $0x338] sm:$0xff]
    %v130 = vld [vmem:[%s1 + $0x340] sm:$0xff]
    %v131 = vld [vmem:[%s1 + $0x348] sm:$0xff]
    %v132 = vld [vmem:[%s1 + $0x350] sm:$0xff]
    %v133 = vld [vmem:[%s1 + $0x358] sm:$0xff]
    %v134 = vld [vmem:[%s1 + $0x360] sm:$0xff]
    %v135 = vld [vmem:[%s1 + $0x368] sm:$0xff]
    %v136 = vld [vmem:[%s1 + $0x370] sm:$0xff]
    %v137 = vld [vmem:[%s1 + $0x378] sm:$0xff]
    %v138 = vld [vmem:[%s1 + $0x380] sm:$0xff]
    %v139 = vld [vmem:[%s1 + $0x388] sm:$0xff]
    %v140 = vld [vmem:[%s1 + $0x390] sm:$0xff]
    %v141 = vld [vmem:[%s1 + $0x398] sm:$0xff]
    %v142 = vld [vmem:[%s1 + $0x3a0] sm:$0xff]
    %v143 = vld [vmem:[%s1 + $0x3a8] sm:$0xff]
    %v144 = vld [vmem:[%s1 + $0x3b0] sm:$0xff]
    %v145 = vld [vmem:[%s1 + $0x3b8] sm:$0xff]
    %v146 = vld [vmem:[%s1 + $0x3c0] sm:$0xff]
    %v147 = vld [vmem:[%s1 + $0x3c8] sm:$0xff]
    %v148 = vld [vmem:[%s1 + $0x3d0] sm:$0xff]
    %v149 = vld [vmem:[%s1 + $0x3d8] sm:$0xff]
    %v150 = vld [vmem:[%s1 + $0x3e0] sm:$0xff]
    %v151 = vld [vmem:[%s1 + $0x3e8] sm:$0xff]
    %v152 = vld [vmem:[%s1 + $0x3f0] sm:$0xff]
    %v153 = vld [vmem:[%s1 + $0x3f8] sm:$0xff]
    %v154 = vld [vmem:[%s1 + $0x400] sm:$0xff]
    %v155 = vld [vmem:[%s1 + $0x408] sm:$0xff]
    %v156 = vld [vmem:[%s1 + $0x410] sm:$0xff]
    %v157 = vld [vmem:[%s1 + $0x418] sm:$0xff]
    %v158 = vld [vmem:[%s1 + $0x420] sm:$0xff]
    %v159 = vld [vmem:[%s1 + $0x428] sm:$0xff]
    %v160 = vld [vmem:[%s1 + $0x430] sm:$0xff]
    %v161 = vld [vmem:[%s1 + $0x438] sm:$0xff]
    %v162 = vld [vmem:[%s1 + $0x440] sm:$0xff]
    %v163 = vld [vmem:[%s1 + $0x448] sm:$0xff]
    %v164 = vld [vmem:[%s1 + $0x450] sm:$0xff]
    %v165 = vld [vmem:[%s1 + $0x458] sm:$0xff]
    %v166 = vld [vmem:[%s1 + $0x460] sm:$0xff]
    %v167 = vld [vmem:[%s1 + $0x468] sm:$0xff]
    %v168 = vld [vmem:[%s1 + $0x470] sm:$0xff]
    %v169 = vld [vmem:[%s1 + $0x478] sm:$0xff]
    %v170 = vld [vmem:[%s1 + $0x480] sm:$0xff]
    %v171 = vld [vmem:[%s1 + $0x488] sm:$0xff]
    %v172 = vld [vmem:[%s1 + $0x490] sm:$0xff]
    %v173 = vld [vmem:[%s1 + $0x498] sm:$0xff]
    %v174 = vld [vmem:[%s1 + $0x4a0] sm:$0xff]
    %v175 = vld [vmem:[%s1 + $0x4a8] sm:$0xff]
    %v176 = vld [vmem:[%s1 + $0x4b0] sm:$0xff]
    %v177 = vld [vmem:[%s1 + $0x4b8] sm:$0xff]
    %v178 = vld [vmem:[%s1 + $0x4c0] sm:$0xff]
    %v179 = vld [vmem:[%s1 + $0x4c8] sm:$0xff]
    %v180 = vld [vmem:[%s1 + $0x4d0] sm:$0xff]
    %v181 = vld [vmem:[%s1 + $0x4d8] sm:$0xff]
    %v182 = vld [vmem:[%s1 + $0x4e0] sm:$0xff]
    %v183 = vld [vmem:[%s1 + $0x4e8] sm:$0xff]
    %v184 = vld [vmem:[%s1 + $0x4f0] sm:$0xff]
    %v185 = vld [vmem:[%s1 + $0x4f8] sm:$0xff]
    %v186 = vld [vmem:[%s1 + $0x500] sm:$0xff]
    %v187 = vld [vmem:[%s1 + $0x508] sm:$0xff]
    %v188 = vld [vmem:[%s1 + $0x510] sm:$0xff]
    %v189 = vld [vmem:[%s1 + $0x518] sm:$0xff]
    %v190 = vld [vmem:[%s1 + $0x520] sm:$0xff]
    %v191 = vld [vmem:[%s1 + $0x528] sm:$0xff]
    %v192 = vld [vmem:[%s1 + $0x530] sm:$0xff]
    %v193 = vld [vmem:[%s1 + $0x538] sm:$0xff]
    %v194 = vld [vmem:[%s1 + $0x540] sm:$0xff]
    %v195 = vld [vmem:[%s1 + $0x548] sm:$0xff]
    %v196 = vld [vmem:[%s1 + $0x550] sm:$0xff]
    %v197 = vld [vmem:[%s1 + $0x558] sm:$0xff]
    %v198 = vld [vmem:[%s1 + $0x560] sm:$0xff]
    %v199 = vld [vmem:[%s1 + $0x568] sm:$0xff]
    %v200 = vld [vmem:[%s1 + $0x570] sm:$0xff]
    %v201 = vld [vmem:[%s1 + $0x578] sm:$0xff]
    %v202 = vld [vmem:[%s1 + $0x580] sm:$0xff]
    %v203 = vld [vmem:[%s1 + $0x588] sm:$0xff]
    %v204 = vld [vmem:[%s1 + $0x590] sm:$0xff]
    %v205 = vld [vmem:[%s1 + $0x598] sm:$0xff]
    %v206 = vld [vmem:[%s1 + $0x5a0] sm:$0xff]
    %v207 = vld [vmem:[%s1 + $0x5a8] sm:$0xff]
    %v208 = vld [vmem:[%s1 + $0x5b0] sm:$0xff]
    %v209 = vld [vmem:[%s1 + $0x5b8] sm:$0xff]
    %v210 = vld [vmem:[%s1 + $0x5c0] sm:$0xff]
    %v211 = vld [vmem:[%s1 + $0x5c8] sm:$0xff]
    %v212 = vld [vmem:[%s1 + $0x5d0] sm:$0xff]
    %v213 = vld [vmem:[%s1 + $0x5d8] sm:$0xff]
    %v214 = vld [vmem:[%s1 + $0x5e0] sm:$0xff]
    %v215 = vld [vmem:[%s1 + $0x5e8] sm:$0xff]
    %v216 = vld [vmem:[%s1 + $0x5f0] sm:$0xff]
    %v217 = vld [vmem:[%s1 + $0x5f8] sm:$0xff]
    %v218 = vld [vmem:[%s1 + $0x600] sm:$0xff]
    %v219 = vld [vmem:[%s1 + $0x608] sm:$0xff]
    %v220 = vld [vmem:[%s1 + $0x610] sm:$0xff]
    %v221 = vld [vmem:[%s1 + $0x618] sm:$0xff]
    %v222 = vld [vmem:[%s1 + $0x620] sm:$0xff]
    %v223 = vld [vmem:[%s1 + $0x628] sm:$0xff]
    %v224 = vld [vmem:[%s1 + $0x630] sm:$0xff]
    %v225 = vld [vmem:[%s1 + $0x638] sm:$0xff]
    %v226 = vld [vmem:[%s1 + $0x640] sm:$0xff]
    %v227 = vld [vmem:[%s1 + $0x648] sm:$0xff]
    %v228 = vld [vmem:[%s1 + $0x650] sm:$0xff]
    %v229 = vld [vmem:[%s1 + $0x658] sm:$0xff]
    %v230 = vld [vmem:[%s1 + $0x660] sm:$0xff]
    %v231 = vld [vmem:[%s1 + $0x668] sm:$0xff]
    %v232 = vld [vmem:[%s1 + $0x670] sm:$0xff]
    %v233 = vld [vmem:[%s1 + $0x678] sm:$0xff]
    %v234 = vld [vmem:[%s1 + $0x680] sm:$0xff]
    %v235 = vld [vmem:[%s1 + $0x688] sm:$0xff]
    %v236 = vld [vmem:[%s1 + $0x690] sm:$0xff]
    %v237 = vld [vmem:[%s1 + $0x698] sm:$0xff]
    %v238 = vld [vmem:[%s1 + $0x6a0] sm:$0xff]
    %v239 = vld [vmem:[%s1 + $0x6a8] sm:$0xff]
    %v240 = vld [vmem:[%s1 + $0x6b0] sm:$0xff]
    %v241 = vld [vmem:[%s1 + $0x6b8] sm:$0xff]
    %v242 = vld [vmem:[%s1 + $0x6c0] sm:$0xff]
    %v243 = vld [vmem:[%s1 + $0x6c8] sm:$0xff]
    %v244 = vld [vmem:[%s1 + $0x6d0] sm:$0xff]
    %v245 = vld [vmem:[%s1 + $0x6d8] sm:$0xff]
    %v246 = vld [vmem:[%s1 + $0x6e0] sm:$0xff]
    %v247 = vld [vmem:[%s1 + $0x6e8] sm:$0xff]
    %v248 = vld [vmem:[%s1 + $0x6f0] sm:$0xff]
    %v249 = vld [vmem:[%s1 + $0x6f8] sm:$0xff]
    %v250 = vld [vmem:[%s1 + $0x700] sm:$0xff]
    %v251 = vld [vmem:[%s1 + $0x708] sm:$0xff]
    %v252 = vld [vmem:[%s1 + $0x710] sm:$0xff]
    %v253 = vld [vmem:[%s1 + $0x718] sm:$0xff]
    %v254 = vld [vmem:[%s1 + $0x720] sm:$0xff]
    %v255 = vld [vmem:[%s1 + $0x728] sm:$0xff]
    %v256 = vld [vmem:[%s1 + $0x730] sm:$0xff]
    %v257 = vld [vmem:[%s1 + $0x738] sm:$0xff]
    %v258 = vld [vmem:[%s1 + $0x740] sm:$0xff]
    %v259 = vld [vmem:[%s1 + $0x748] sm:$0xff]
    %v260 = vld [vmem:[%s1 + $0x750] sm:$0xff]
    %v261 = vld [vmem:[%s1 + $0x758] sm:$0xff]
    %v262 = vld [vmem:[%s1 + $0x760] sm:$0xff]
    %v263 = vld [vmem:[%s1 + $0x768] sm:$0xff]
    %v264 = vld [vmem:[%s1 + $0x770] sm:$0xff]
    %v265 = vld [vmem:[%s1 + $0x778] sm:$0xff]
    %v266 = vld [vmem:[%s1 + $0x780] sm:$0xff]
    %v267 = vld [vmem:[%s1 + $0x788] sm:$0xff]
    %v268 = vld [vmem:[%s1 + $0x790] sm:$0xff]
    %v269 = vld [vmem:[%s1 + $0x798] sm:$0xff]
    %v270 = vld [vmem:[%s1 + $0x7a0] sm:$0xff]
    %v271 = vld [vmem:[%s1 + $0x7a8] sm:$0xff]
    %v272 = vld [vmem:[%s1 + $0x7b0] sm:$0xff]
    %v273 = vld [vmem:[%s1 + $0x7b8] sm:$0xff]
    %v274 = vld [vmem:[%s1 + $0x7c0] sm:$0xff]
    %v275 = vld [vmem:[%s1 + $0x7c8] sm:$0xff]
    %v276 = vld [vmem:[%s1 + $0x7d0] sm:$0xff]
    %v277 = vld [vmem:[%s1 + $0x7d8] sm:$0xff]
    %v278 = vld [vmem:[%s1 + $0x7e0] sm:$0xff]
    %v279 = vld [vmem:[%s1 + $0x7e8] sm:$0xff]
    %v280 = vld [vmem:[%s1 + $0x7f0] sm:$0xff]
    %v281 = vld [vmem:[%s1 + $0x7f8] sm:$0xff]
    %v282 = vld [vmem:[%s1 + $0x800] sm:$0xff]
    %v283 = vld [vmem:[%s1 + $0x808] sm:$0xff]
    %v284 = vld [vmem:[%s1 + $0x810] sm:$0xff]
    %v285 = vld [vmem:[%s1 + $0x818] sm:$0xff]
    %v286 = vld [vmem:[%s1 + $0x820] sm:$0xff]
    %v287 = vld [vmem:[%s1 + $0x828] sm:$0xff]
    %v288 = vld [vmem:[%s1 + $0x830] sm:$0xff]
    %v289 = vld [vmem:[%s1 + $0x838] sm:$0xff]
    %v290 = vld [vmem:[%s1 + $0x840] sm:$0xff]
    %v291 = vld [vmem:[%s1 + $0x848] sm:$0xff]
    %v292 = vld [vmem:[%s1 + $0x850] sm:$0xff]
    %v293 = vld [vmem:[%s1 + $0x858] sm:$0xff]
    %v294 = vld [vmem:[%s1 + $0x860] sm:$0xff]
    %v295 = vld [vmem:[%s1 + $0x868] sm:$0xff]
    %v296 = vld [vmem:[%s1 + $0x870] sm:$0xff]
    %v297 = vld [vmem:[%s1 + $0x878] sm:$0xff]
    %v298 = vld [vmem:[%s1 + $0x880] sm:$0xff]
    %v299 = vld [vmem:[%s1 + $0x888] sm:$0xff]
    %v300 = vld [vmem:[%s1 + $0x890] sm:$0xff]
    %v301 = vld [vmem:[%s1 + $0x898] sm:$0xff]
    %v302 = vld [vmem:[%s1 + $0x8a0] sm:$0xff]
    %v303 = vld [vmem:[%s1 + $0x8a8] sm:$0xff]
    %v304 = vld [vmem:[%s1 + $0x8b0] sm:$0xff]
    %v305 = vld [vmem:[%s1 + $0x8b8] sm:$0xff]
    %v306 = vld [vmem:[%s1 + $0x8c0] sm:$0xff]
    %v307 = vld [vmem:[%s1 + $0x8c8] sm:$0xff]
    %v308 = vld [vmem:[%s1 + $0x8d0] sm:$0xff]
    %v309 = vld [vmem:[%s1 + $0x8d8] sm:$0xff]
    %v310 = vld [vmem:[%s1 + $0x8e0] sm:$0xff]
    %v311 = vld [vmem:[%s1 + $0x8e8] sm:$0xff]
    %v312 = vld [vmem:[%s1 + $0x8f0] sm:$0xff]
    %v313 = vld [vmem:[%s1 + $0x8f8] sm:$0xff]
    %v314 = vld [vmem:[%s1 + $0x900] sm:$0xff]
    %v315 = vld [vmem:[%s1 + $0x908] sm:$0xff]
    %v316 = vld [vmem:[%s1 + $0x910] sm:$0xff]
    %v317 = vld [vmem:[%s1 + $0x918] sm:$0xff]
    %v318 = vld [vmem:[%s1 + $0x920] sm:$0xff]
    %v319 = vld [vmem:[%s1 + $0x928] sm:$0xff]
    %v320 = vld [vmem:[%s1 + $0x930] sm:$0xff]
    %v321 = vld [vmem:[%s1 + $0x938] sm:$0xff]
    %v322 = vld [vmem:[%s1 + $0x940] sm:$0xff]
    %v323 = vld [vmem:[%s1 + $0x948] sm:$0xff]
    %v324 = vld [vmem:[%s1 + $0x950] sm:$0xff]
    %v325 = vld [vmem:[%s1 + $0x958] sm:$0xff]
    %v326 = vld [vmem:[%s1 + $0x960] sm:$0xff]
    %v327 = vld [vmem:[%s1 + $0x968] sm:$0xff]
    %v328 = vld [vmem:[%s1 + $0x970] sm:$0xff]
    %v329 = vld [vmem:[%s1 + $0x978] sm:$0xff]
    %v330 = vld [vmem:[%s1 + $0x980] sm:$0xff]
    %v331 = vld [vmem:[%s1 + $0x988] sm:$0xff]
    %v332 = vld [vmem:[%s1 + $0x990] sm:$0xff]
    %v333 = vld [vmem:[%s1 + $0x998] sm:$0xff]
    %v334 = vld [vmem:[%s1 + $0x9a0] sm:$0xff]
    %v335 = vld [vmem:[%s1 + $0x9a8] sm:$0xff]
    %v336 = vld [vmem:[%s1 + $0x9b0] sm:$0xff]
    %v337 = vld [vmem:[%s1 + $0x9b8] sm:$0xff]
    %v338 = vld [vmem:[%s1 + $0x9c0] sm:$0xff]
    %v339 = vld [vmem:[%s1 + $0x9c8] sm:$0xff]
    %v340 = vld [vmem:[%s1 + $0x9d0] sm:$0xff]
    %v341 = vld [vmem:[%s1 + $0x9d8] sm:$0xff]
    %v342 = vld [vmem:[%s1 + $0x9e0] sm:$0xff]
    %v343 = vld [vmem:[%s1 + $0x9e8] sm:$0xff]
    %v344 = vld [vmem:[%s1 + $0x9f0] sm:$0xff]
    %v345 = vld [vmem:[%s1 + $0x9f8] sm:$0xff]
    %v346 = vld [vmem:[%s1 + $0xa00] sm:$0xff]
    %v347 = vld [vmem:[%s1 + $0xa08] sm:$0xff]
    %v348 = vld [vmem:[%s1 + $0xa10] sm:$0xff]
    %v349 = vld [vmem:[%s1 + $0xa18] sm:$0xff]
    %v350 = vld [vmem:[%s1 + $0xa20] sm:$0xff]
    %v351 = vld [vmem:[%s1 + $0xa28] sm:$0xff]
    %v352 = vld [vmem:[%s1 + $0xa30] sm:$0xff]
    %v353 = vld [vmem:[%s1 + $0xa38] sm:$0xff]
    %v354 = vld [vmem:[%s1 + $0xa40] sm:$0xff]
    %v355 = vld [vmem:[%s1 + $0xa48] sm:$0xff]
    %v356 = vld [vmem:[%s1 + $0xa50] sm:$0xff]
    %v357 = vld [vmem:[%s1 + $0xa58] sm:$0xff]
    %v358 = vld [vmem:[%s1 + $0xa60] sm:$0xff]
    %v359 = vld [vmem:[%s1 + $0xa68] sm:$0xff]
    %v360 = vld [vmem:[%s1 + $0xa70] sm:$0xff]
    %v361 = vld [vmem:[%s1 + $0xa78] sm:$0xff]
    %v362 = vld [vmem:[%s1 + $0xa80] sm:$0xff]
    %v363 = vld [vmem:[%s1 + $0xa88] sm:$0xff]
    %v364 = vld [vmem:[%s1 + $0xa90] sm:$0xff]
    %v365 = vld [vmem:[%s1 + $0xa98] sm:$0xff]
    %v366 = vld [vmem:[%s1 + $0xaa0] sm:$0xff]
    %v367 = vld [vmem:[%s1 + $0xaa8] sm:$0xff]
    %v368 = vld [vmem:[%s1 + $0xab0] sm:$0xff]
    %v369 = vld [vmem:[%s1 + $0xab8] sm:$0xff]
    %v370 = vld [vmem:[%s1 + $0xac0] sm:$0xff]
    %v371 = vld [vmem:[%s1 + $0xac8] sm:$0xff]
    %v372 = vld [vmem:[%s1 + $0xad0] sm:$0xff]
    %v373 = vld [vmem:[%s1 + $0xad8] sm:$0xff]
    %v374 = vld [vmem:[%s1 + $0xae0] sm:$0xff]
    %v375 = vld [vmem:[%s1 + $0xae8] sm:$0xff]
    %v376 = vld [vmem:[%s1 + $0xaf0] sm:$0xff]
    %v377 = vld [vmem:[%s1 + $0xaf8] sm:$0xff]
    %v378 = vld [vmem:[%s1 + $0xb00] sm:$0xff]
    %v379 = vld [vmem:[%s1 + $0xb08] sm:$0xff]
    %v380 = vld [vmem:[%s1 + $0xb10] sm:$0xff]
    %v381 = vld [vmem:[%s1 + $0xb18] sm:$0xff]
    %v382 = vld [vmem:[%s1 + $0xb20] sm:$0xff]
    %v383 = vld [vmem:[%s1 + $0xb28] sm:$0xff]
    %v384 = vld [vmem:[%s1 + $0xb30] sm:$0xff]
    %v385 = vld [vmem:[%s1 + $0xb38] sm:$0xff]
    %v386 = vld [vmem:[%s1 + $0xb40] sm:$0xff]
    %v387 = vld [vmem:[%s1 + $0xb48] sm:$0xff]
    %v388 = vld [vmem:[%s1 + $0xb50] sm:$0xff]
    %v389 = vld [vmem:[%s1 + $0xb58] sm:$0xff]
    %v390 = vld [vmem:[%s1 + $0xb60] sm:$0xff]
    %v391 = vld [vmem:[%s1 + $0xb68] sm:$0xff]
    %v392 = vld [vmem:[%s1 + $0xb70] sm:$0xff]
    %v393 = vld [vmem:[%s1 + $0xb78] sm:$0xff]
    %v394 = vld [vmem:[%s1 + $0xb80] sm:$0xff]
    %v395 = vld [vmem:[%s1 + $0xb88] sm:$0xff]
    %v396 = vld [vmem:[%s1 + $0xb90] sm:$0xff]
    %v397 = vld [vmem:[%s1 + $0xb98] sm:$0xff]
    %v398 = vld [vmem:[%s1 + $0xba0] sm:$0xff]
    %v399 = vld [vmem:[%s1 + $0xba8] sm:$0xff]
    %v400 = vld [vmem:[%s1 + $0xbb0] sm:$0xff]
    %v401 = vld [vmem:[%s1 + $0xbb8] sm:$0xff]
    %v402 = vld [vmem:[%s1 + $0xbc0] sm:$0xff]
    %v403 = vld [vmem:[%s1 + $0xbc8] sm:$0xff]
    %v404 = vld [vmem:[%s1 + $0xbd0] sm:$0xff]
    %v405 = vld [vmem:[%s1 + $0xbd8] sm:$0xff]
    %v406 = vld [vmem:[%s1 + $0xbe0] sm:$0xff]
    %v407 = vld [vmem:[%s1 + $0xbe8] sm:$0xff]
    %v408 = vld [vmem:[%s1 + $0xbf0] sm:$0xff]
    %v409 = vld [vmem:[%s1 + $0xbf8] sm:$0xff]
    %v410 = vld [vmem:[%s1 + $0xc00] sm:$0xff]
    %v411 = vld [vmem:[%s1 + $0xc08] sm:$0xff]
    %v412 = vld [vmem:[%s1 + $0xc10] sm:$0xff]
    %v413 = vld [vmem:[%s1 + $0xc18] sm:$0xff]
    %v414 = vld [vmem:[%s1 + $0xc20] sm:$0xff]
    %v415 = vld [vmem:[%s1 + $0xc28] sm:$0xff]
    %v416 = vld [vmem:[%s1 + $0xc30] sm:$0xff]
    %v417 = vld [vmem:[%s1 + $0xc38] sm:$0xff]
    %v418 = vld [vmem:[%s1 + $0xc40] sm:$0xff]
    %v419 = vld [vmem:[%s1 + $0xc48] sm:$0xff]
    %v420 = vld [vmem:[%s1 + $0xc50] sm:$0xff]
    %v421 = vld [vmem:[%s1 + $0xc58] sm:$0xff]
    %v422 = vld [vmem:[%s1 + $0xc60] sm:$0xff]
    %v423 = vld [vmem:[%s1 + $0xc68] sm:$0xff]
    %v424 = vld [vmem:[%s1 + $0xc70] sm:$0xff]
    %v425 = vld [vmem:[%s1 + $0xc78] sm:$0xff]
    %v426 = vld [vmem:[%s1 + $0xc80] sm:$0xff]
    %v427 = vld [vmem:[%s1 + $0xc88] sm:$0xff]
    %v428 = vld [vmem:[%s1 + $0xc90] sm:$0xff]
    %v429 = vld [vmem:[%s1 + $0xc98] sm:$0xff]
    %v430 = vld [vmem:[%s1 + $0xca0] sm:$0xff]
    %v431 = vld [vmem:[%s1 + $0xca8] sm:$0xff]
    %v432 = vld [vmem:[%s1 + $0xcb0] sm:$0xff]
    %v433 = vld [vmem:[%s1 + $0xcb8] sm:$0xff]
    %v434 = vld [vmem:[%s1 + $0xcc0] sm:$0xff]
    %v435 = vld [vmem:[%s1 + $0xcc8] sm:$0xff]
    %v436 = vld [vmem:[%s1 + $0xcd0] sm:$0xff]
    %v437 = vld [vmem:[%s1 + $0xcd8] sm:$0xff]
    %v438 = vld [vmem:[%s1 + $0xce0] sm:$0xff]
    %v439 = vld [vmem:[%s1 + $0xce8] sm:$0xff]
    %v440 = vld [vmem:[%s1 + $0xcf0] sm:$0xff]
    %v441 = vld [vmem:[%s1 + $0xcf8] sm:$0xff]
    %v442 = vld [vmem:[%s1 + $0xd00] sm:$0xff]
    %v443 = vld [vmem:[%s1 + $0xd08] sm:$0xff]
    %v444 = vld [vmem:[%s1 + $0xd10] sm:$0xff]
    %v445 = vld [vmem:[%s1 + $0xd18] sm:$0xff]
    %v446 = vld [vmem:[%s1 + $0xd20] sm:$0xff]
    %v447 = vld [vmem:[%s1 + $0xd28] sm:$0xff]
    %v448 = vld [vmem:[%s1 + $0xd30] sm:$0xff]
    %v449 = vld [vmem:[%s1 + $0xd38] sm:$0xff]
    %v450 = vld [vmem:[%s1 + $0xd40] sm:$0xff]
    %v451 = vld [vmem:[%s1 + $0xd48] sm:$0xff]
    %v452 = vld [vmem:[%s1 + $0xd50] sm:$0xff]
    %v453 = vld [vmem:[%s1 + $0xd58] sm:$0xff]
    %v454 = vld [vmem:[%s1 + $0xd60] sm:$0xff]
    %v455 = vld [vmem:[%s1 + $0xd68] sm:$0xff]
    %v456 = vld [vmem:[%s1 + $0xd70] sm:$0xff]
    %v457 = vld [vmem:[%s1 + $0xd78] sm:$0xff]
    %v458 = vld [vmem:[%s1 + $0xd80] sm:$0xff]
    %v459 = vld [vmem:[%s1 + $0xd88] sm:$0xff]
    %v460 = vld [vmem:[%s1 + $0xd90] sm:$0xff]
    %v461 = vld [vmem:[%s1 + $0xd98] sm:$0xff]
    %v462 = vld [vmem:[%s1 + $0xda0] sm:$0xff]
    %v463 = vld [vmem:[%s1 + $0xda8] sm:$0xff]
    %v464 = vld [vmem:[%s1 + $0xdb0] sm:$0xff]
    %v465 = vld [vmem:[%s1 + $0xdb8] sm:$0xff]
    %v466 = vld [vmem:[%s1 + $0xdc0] sm:$0xff]
    %v467 = vld [vmem:[%s1 + $0xdc8] sm:$0xff]
    %v468 = vld [vmem:[%s1 + $0xdd0] sm:$0xff]
    %v469 = vld [vmem:[%s1 + $0xdd8] sm:$0xff]
    %v470 = vld [vmem:[%s1 + $0xde0] sm:$0xff]
    %v471 = vld [vmem:[%s1 + $0xde8] sm:$0xff]
    %v472 = vld [vmem:[%s1 + $0xdf0] sm:$0xff]
    %v473 = vld [vmem:[%s1 + $0xdf8] sm:$0xff]
    %v474 = vld [vmem:[%s1 + $0xe00] sm:$0xff]
    %v475 = vld [vmem:[%s1 + $0xe08] sm:$0xff]
    %v476 = vld [vmem:[%s1 + $0xe10] sm:$0xff]
    %v477 = vld [vmem:[%s1 + $0xe18] sm:$0xff]
    %v478 = vld [vmem:[%s1 + $0xe20] sm:$0xff]
    %v479 = vld [vmem:[%s1 + $0xe28] sm:$0xff]
    %v480 = vld [vmem:[%s1 + $0xe30] sm:$0xff]
    %v481 = vld [vmem:[%s1 + $0xe38] sm:$0xff]
    %v482 = vld [vmem:[%s1 + $0xe40] sm:$0xff]
    %v483 = vld [vmem:[%s1 + $0xe48] sm:$0xff]
    %v484 = vld [vmem:[%s1 + $0xe50] sm:$0xff]
    %v485 = vld [vmem:[%s1 + $0xe58] sm:$0xff]
    %v486 = vld [vmem:[%s1 + $0xe60] sm:$0xff]
    %v487 = vld [vmem:[%s1 + $0xe68] sm:$0xff]
    %v488 = vld [vmem:[%s1 + $0xe70] sm:$0xff]
    %v489 = vld [vmem:[%s1 + $0xe78] sm:$0xff]
    %v490 = vld [vmem:[%s1 + $0xe80] sm:$0xff]
    %v491 = vld [vmem:[%s1 + $0xe88] sm:$0xff]
    %v492 = vld [vmem:[%s1 + $0xe90] sm:$0xff]
    %v493 = vld [vmem:[%s1 + $0xe98] sm:$0xff]
    %v494 = vld [vmem:[%s1 + $0xea0] sm:$0xff]
    %v495 = vld [vmem:[%s1 + $0xea8] sm:$0xff]
    %v496 = vld [vmem:[%s1 + $0xeb0] sm:$0xff]
    %v497 = vld [vmem:[%s1 + $0xeb8] sm:$0xff]
    %v498 = vld [vmem:[%s1 + $0xec0] sm:$0xff]
    %v499 = vld [vmem:[%s1 + $0xec8] sm:$0xff]
    %v500 = vld [vmem:[%s1 + $0xed0] sm:$0xff]
    %v501 = vld [vmem:[%s1 + $0xed8] sm:$0xff]
    %v502 = vld [vmem:[%s1 + $0xee0] sm:$0xff]
    %v503 = vld [vmem:[%s1 + $0xee8] sm:$0xff]
    %v504 = vld [vmem:[%s1 + $0xef0] sm:$0xff]
    %v505 = vld [vmem:[%s1 + $0xef8] sm:$0xff]
    %v506 = vld [vmem:[%s1 + $0xf00] sm:$0xff]
    %v507 = vld [vmem:[%s1 + $0xf08] sm:$0xff]
    %v508 = vld [vmem:[%s1 + $0xf10] sm:$0xff]
    %v509 = vld [vmem:[%s1 + $0xf18] sm:$0xff]
    %v510 = vld [vmem:[%s1 + $0xf20] sm:$0xff]
    %v511 = vld [vmem:[%s1 + $0xf28] sm:$0xff]
    %v512 = vld [vmem:[%s1 + $0xf30] sm:$0xff]
    %v513 = vld [vmem:[%s1 + $0xf38] sm:$0xff]
    %v514 = vld [vmem:[%s1 + $0xf40] sm:$0xff]
    %v515 = vld [vmem:[%s1 + $0xf48] sm:$0xff]
    %v516 = vld [vmem:[%s1 + $0xf50] sm:$0xff]
    %v517 = vld [vmem:[%s1 + $0xf58] sm:$0xff]
    %v518 = vld [vmem:[%s1 + $0xf60] sm:$0xff]
    %v519 = vld [vmem:[%s1 + $0xf68] sm:$0xff]
    %v520 = vld [vmem:[%s1 + $0xf70] sm:$0xff]
    %v521 = vld [vmem:[%s1 + $0xf78] sm:$0xff]
    %v522 = vld [vmem:[%s1 + $0xf80] sm:$0xff]
    %v523 = vld [vmem:[%s1 + $0xf88] sm:$0xff]
    %v524 = vld [vmem:[%s1 + $0xf90] sm:$0xff]
    %v525 = vld [vmem:[%s1 + $0xf98] sm:$0xff]
    %v526 = vld [vmem:[%s1 + $0xfa0] sm:$0xff]
    %v527 = vld [vmem:[%s1 + $0xfa8] sm:$0xff]
    %v528 = vld [vmem:[%s1 + $0xfb0] sm:$0xff]
    %v529 = vld [vmem:[%s1 + $0xfb8] sm:$0xff]
    %v530 = vld [vmem:[%s1 + $0xfc0] sm:$0xff]
    %v531 = vld [vmem:[%s1 + $0xfc8] sm:$0xff]
    %v532 = vld [vmem:[%s1 + $0xfd0] sm:$0xff]
    %v533 = vld [vmem:[%s1 + $0xfd8] sm:$0xff]
    %v534 = vld [vmem:[%s1 + $0xfe0] sm:$0xff]
    %v535 = vld [vmem:[%s1 + $0xfe8] sm:$0xff]
    %v536 = vld [vmem:[%s1 + $0xff0] sm:$0xff]
    %v537 = vld [vmem:[%s1 + $0xff8] sm:$0xff]
    %v538 = vld [vmem:[%s1 + $0x1000] sm:$0xff]
    %v539 = vld [vmem:[%s1 + $0x1008] sm:$0xff]
    %v540 = vld [vmem:[%s1 + $0x1010] sm:$0xff]
    %v541 = vld [vmem:[%s1 + $0x1018] sm:$0xff]
    %v542 = vld [vmem:[%s1 + $0x1020] sm:$0xff]
    %v543 = vld [vmem:[%s1 + $0x1028] sm:$0xff]
    %v544 = vld [vmem:[%s1 + $0x1030] sm:$0xff]
    %v545 = vld [vmem:[%s1 + $0x1038] sm:$0xff]
    %v546 = vld [vmem:[%s1 + $0x1040] sm:$0xff]
    %v547 = vld [vmem:[%s1 + $0x1048] sm:$0xff]
    %v548 = vld [vmem:[%s1 + $0x1050] sm:$0xff]
    %v549 = vld [vmem:[%s1 + $0x1058] sm:$0xff]
    %v550 = vld [vmem:[%s1 + $0x1060] sm:$0xff]
    %v551 = vld [vmem:[%s1 + $0x1068] sm:$0xff]
    %v552 = vld [vmem:[%s1 + $0x1070] sm:$0xff]
    %v553 = vld [vmem:[%s1 + $0x1078] sm:$0xff]
    %v554 = vld [vmem:[%s1 + $0x1080] sm:$0xff]
    %v555 = vld [vmem:[%s1 + $0x1088] sm:$0xff]
    %v556 = vld [vmem:[%s1 + $0x1090] sm:$0xff]
    %v557 = vld [vmem:[%s1 + $0x1098] sm:$0xff]
    %v558 = vld [vmem:[%s1 + $0x10a0] sm:$0xff]
    %v559 = vld [vmem:[%s1 + $0x10a8] sm:$0xff]
    %v560 = vld [vmem:[%s1 + $0x10b0] sm:$0xff]
    %v561 = vld [vmem:[%s1 + $0x10b8] sm:$0xff]
    %v562 = vld [vmem:[%s1 + $0x10c0] sm:$0xff]
    %v563 = vld [vmem:[%s1 + $0x10c8] sm:$0xff]
    %v564 = vld [vmem:[%s1 + $0x10d0] sm:$0xff]
    %v565 = vld [vmem:[%s1 + $0x10d8] sm:$0xff]
    %v566 = vld [vmem:[%s1 + $0x10e0] sm:$0xff]
    %v567 = vld [vmem:[%s1 + $0x10e8] sm:$0xff]
    %v568 = vld [vmem:[%s1 + $0x10f0] sm:$0xff]
    %v569 = vld [vmem:[%s1 + $0x10f8] sm:$0xff]
    %v570 = vld [vmem:[%s1 + $0x1100] sm:$0xff]
    %v571 = vld [vmem:[%s1 + $0x1108] sm:$0xff]
    %v572 = vld [vmem:[%s1 + $0x1110] sm:$0xff]
    %v573 = vld [vmem:[%s1 + $0x1118] sm:$0xff]
    %v574 = vld [vmem:[%s1 + $0x1120] sm:$0xff]
    %v575 = vld [vmem:[%s1 + $0x1128] sm:$0xff]
    %v576 = vld [vmem:[%s1 + $0x1130] sm:$0xff]
    %v577 = vld [vmem:[%s1 + $0x1138] sm:$0xff]
    %v578 = vld [vmem:[%s1 + $0x1140] sm:$0xff]
    %v579 = vld [vmem:[%s1 + $0x1148] sm:$0xff]
    %v580 = vld [vmem:[%s1 + $0x1150] sm:$0xff]
    %v581 = vld [vmem:[%s1 + $0x1158] sm:$0xff]
    %v582 = vld [vmem:[%s1 + $0x1160] sm:$0xff]
    %v583 = vld [vmem:[%s1 + $0x1168] sm:$0xff]
    %v584 = vld [vmem:[%s1 + $0x1170] sm:$0xff]
    %v585 = vld [vmem:[%s1 + $0x1178] sm:$0xff]
    %v586 = vld [vmem:[%s1 + $0x1180] sm:$0xff]
    %v587 = vld [vmem:[%s1 + $0x1188] sm:$0xff]
    %v588 = vld [vmem:[%s1 + $0x1190] sm:$0xff]
    %v589 = vld [vmem:[%s1 + $0x1198] sm:$0xff]
    %v590 = vld [vmem:[%s1 + $0x11a0] sm:$0xff]
    %v591 = vld [vmem:[%s1 + $0x11a8] sm:$0xff]
    %v592 = vld [vmem:[%s1 + $0x11b0] sm:$0xff]
    %v593 = vld [vmem:[%s1 + $0x11b8] sm:$0xff]
    %v594 = vld [vmem:[%s1 + $0x11c0] sm:$0xff]
    %v595 = vld [vmem:[%s1 + $0x11c8] sm:$0xff]
    %v596 = vld [vmem:[%s1 + $0x11d0] sm:$0xff]
    %v597 = vld [vmem:[%s1 + $0x11d8] sm:$0xff]
    %v598 = vld [vmem:[%s1 + $0x11e0] sm:$0xff]
    %v599 = vld [vmem:[%s1 + $0x11e8] sm:$0xff]
    %v600 = vld [vmem:[%s1 + $0x11f0] sm:$0xff]
    %v601 = vld [vmem:[%s1 + $0x11f8] sm:$0xff]
    %v602 = vld [vmem:[%s1 + $0x1200] sm:$0xff]
    %v603 = vld [vmem:[%s1 + $0x1208] sm:$0xff]
    %v604 = vld [vmem:[%s1 + $0x1210] sm:$0xff]
    %v605 = vld [vmem:[%s1 + $0x1218] sm:$0xff]
    %v606 = vld [vmem:[%s1 + $0x1220] sm:$0xff]
    %v607 = vld [vmem:[%s1 + $0x1228] sm:$0xff]
    %v608 = vld [vmem:[%s1 + $0x1230] sm:$0xff]
    %v609 = vld [vmem:[%s1 + $0x1238] sm:$0xff]
    %v610 = vld [vmem:[%s1 + $0x1240] sm:$0xff]
    %v611 = vld [vmem:[%s1 + $0x1248] sm:$0xff]
    %v612 = vld [vmem:[%s1 + $0x1250] sm:$0xff]
    %v613 = vld [vmem:[%s1 + $0x1258] sm:$0xff]
    %v614 = vld [vmem:[%s1 + $0x1260] sm:$0xff]
    %v615 = vld [vmem:[%s1 + $0x1268] sm:$0xff]
    %v616 = vld [vmem:[%s1 + $0x1270] sm:$0xff]
    %v617 = vld [vmem:[%s1 + $0x1278] sm:$0xff]
    %v618 = vld [vmem:[%s1 + $0x1280] sm:$0xff]
    %v619 = vld [vmem:[%s1 + $0x1288] sm:$0xff]
    %v620 = vld [vmem:[%s1 + $0x1290] sm:$0xff]
    %v621 = vld [vmem:[%s1 + $0x1298] sm:$0xff]
    %v622 = vld [vmem:[%s1 + $0x12a0] sm:$0xff]
    %v623 = vld [vmem:[%s1 + $0x12a8] sm:$0xff]
    %v624 = vld [vmem:[%s1 + $0x12b0] sm:$0xff]
    %v625 = vld [vmem:[%s1 + $0x12b8] sm:$0xff]
    %v626 = vld [vmem:[%s1 + $0x12c0] sm:$0xff]
    %v627 = vld [vmem:[%s1 + $0x12c8] sm:$0xff]
    %v628 = vld [vmem:[%s1 + $0x12d0] sm:$0xff]
    %v629 = vld [vmem:[%s1 + $0x12d8] sm:$0xff]
    %v630 = vld [vmem:[%s1 + $0x12e0] sm:$0xff]
    %v631 = vld [vmem:[%s1 + $0x12e8] sm:$0xff]
    %v632 = vld [vmem:[%s1 + $0x12f0] sm:$0xff]
    %v633 = vld [vmem:[%s1 + $0x12f8] sm:$0xff]
    %v634 = vld [vmem:[%s1 + $0x1300] sm:$0xff]
    %v635 = vld [vmem:[%s1 + $0x1308] sm:$0xff]
    %v636 = vld [vmem:[%s1 + $0x1310] sm:$0xff]
    %v637 = vld [vmem:[%s1 + $0x1318] sm:$0xff]
    %v638 = vld [vmem:[%s1 + $0x1320] sm:$0xff]
    %v639 = vld [vmem:[%s1 + $0x1328] sm:$0xff]
    %v640 = vld [vmem:[%s1 + $0x1330] sm:$0xff]
    %v641 = vld [vmem:[%s1 + $0x1338] sm:$0xff]
    %v642 = vld [vmem:[%s1 + $0x1340] sm:$0xff]
    %v643 = vld [vmem:[%s1 + $0x1348] sm:$0xff]
    %v644 = vld [vmem:[%s1 + $0x1350] sm:$0xff]
    %v645 = vld [vmem:[%s1 + $0x1358] sm:$0xff]
    %v646 = vld [vmem:[%s1 + $0x1360] sm:$0xff]
    %v647 = vld [vmem:[%s1 + $0x1368] sm:$0xff]
    %v648 = vld [vmem:[%s1 + $0x1370] sm:$0xff]
    %v649 = vld [vmem:[%s1 + $0x1378] sm:$0xff]
    %v650 = vld [vmem:[%s1 + $0x1380] sm:$0xff]
    %v651 = vld [vmem:[%s1 + $0x1388] sm:$0xff]
    %v652 = vld [vmem:[%s1 + $0x1390] sm:$0xff]
    %v653 = vld [vmem:[%s1 + $0x1398] sm:$0xff]
    %v654 = vld [vmem:[%s1 + $0x13a0] sm:$0xff]
    %v655 = vld [vmem:[%s1 + $0x13a8] sm:$0xff]
    %v656 = vld [vmem:[%s1 + $0x13b0] sm:$0xff]
    %v657 = vld [vmem:[%s1 + $0x13b8] sm:$0xff]
    %v658 = vld [vmem:[%s1 + $0x13c0] sm:$0xff]
    %v659 = vld [vmem:[%s1 + $0x13c8] sm:$0xff]
    %v660 = vld [vmem:[%s1 + $0x13d0] sm:$0xff]
    %v661 = vld [vmem:[%s1 + $0x13d8] sm:$0xff]
    %v662 = vld [vmem:[%s1 + $0x13e0] sm:$0xff]
    %v663 = vld [vmem:[%s1 + $0x13e8] sm:$0xff]
    %v664 = vld [vmem:[%s1 + $0x13f0] sm:$0xff]
    %v665 = vld [vmem:[%s1 + $0x13f8] sm:$0xff]
    %v666 = vld [vmem:[%s1 + $0x1400] sm:$0xff]
    %v667 = vld [vmem:[%s1 + $0x1408] sm:$0xff]
    %v668 = vld [vmem:[%s1 + $0x1410] sm:$0xff]
    %v669 = vld [vmem:[%s1 + $0x1418] sm:$0xff]
    %v670 = vld [vmem:[%s1 + $0x1420] sm:$0xff]
    %v671 = vld [vmem:[%s1 + $0x1428] sm:$0xff]
    %v672 = vld [vmem:[%s1 + $0x1430] sm:$0xff]
    %v673 = vld [vmem:[%s1 + $0x1438] sm:$0xff]
    %v674 = vld [vmem:[%s1 + $0x1440] sm:$0xff]
    %v675 = vld [vmem:[%s1 + $0x1448] sm:$0xff]
    %v676 = vld [vmem:[%s1 + $0x1450] sm:$0xff]
    %v677 = vld [vmem:[%s1 + $0x1458] sm:$0xff]
    %v678 = vld [vmem:[%s1 + $0x1460] sm:$0xff]
    %v679 = vld [vmem:[%s1 + $0x1468] sm:$0xff]
    %v680 = vld [vmem:[%s1 + $0x1470] sm:$0xff]
    %v681 = vld [vmem:[%s1 + $0x1478] sm:$0xff]
    %v682 = vld [vmem:[%s1 + $0x1480] sm:$0xff]
    %v683 = vld [vmem:[%s1 + $0x1488] sm:$0xff]
    %v684 = vld [vmem:[%s1 + $0x1490] sm:$0xff]
    %v685 = vld [vmem:[%s1 + $0x1498] sm:$0xff]
    %v686 = vld [vmem:[%s1 + $0x14a0] sm:$0xff]
    %v687 = vld [vmem:[%s1 + $0x14a8] sm:$0xff]
    %v688 = vld [vmem:[%s1 + $0x14b0] sm:$0xff]
    %v689 = vld [vmem:[%s1 + $0x14b8] sm:$0xff]
    %v690 = vld [vmem:[%s1 + $0x14c0] sm:$0xff]
    %v691 = vld [vmem:[%s1 + $0x14c8] sm:$0xff]
    %v692 = vld [vmem:[%s1 + $0x14d0] sm:$0xff]
    %v693 = vld [vmem:[%s1 + $0x14d8] sm:$0xff]
    %v694 = vld [vmem:[%s1 + $0x14e0] sm:$0xff]
    %v695 = vld [vmem:[%s1 + $0x14e8] sm:$0xff]
    %v696 = vld [vmem:[%s1 + $0x14f0] sm:$0xff]
    %v697 = vld [vmem:[%s1 + $0x14f8] sm:$0xff]
    %v698 = vld [vmem:[%s1 + $0x1500] sm:$0xff]
    %v699 = vld [vmem:[%s1 + $0x1508] sm:$0xff]
    %v700 = vld [vmem:[%s1 + $0x1510] sm:$0xff]
    %v701 = vld [vmem:[%s1 + $0x1518] sm:$0xff]
    %v702 = vld [vmem:[%s1 + $0x1520] sm:$0xff]
    %v703 = vld [vmem:[%s1 + $0x1528] sm:$0xff]
    %v704 = vld [vmem:[%s1 + $0x1530] sm:$0xff]
    %v705 = vld [vmem:[%s1 + $0x1538] sm:$0xff]
    %v706 = vld [vmem:[%s1 + $0x1540] sm:$0xff]
    %v707 = vld [vmem:[%s1 + $0x1548] sm:$0xff]
    %v708 = vld [vmem:[%s1 + $0x1550] sm:$0xff]
    %v709 = vld [vmem:[%s1 + $0x1558] sm:$0xff]
    %v710 = vld [vmem:[%s1 + $0x1560] sm:$0xff]
    %v711 = vld [vmem:[%s1 + $0x1568] sm:$0xff]
    %v712 = vld [vmem:[%s1 + $0x1570] sm:$0xff]
    %v713 = vld [vmem:[%s1 + $0x1578] sm:$0xff]
    %v714 = vld [vmem:[%s1 + $0x1580] sm:$0xff]
    %v715 = vld [vmem:[%s1 + $0x1588] sm:$0xff]
    %v716 = vld [vmem:[%s1 + $0x1590] sm:$0xff]
    %v717 = vld [vmem:[%s1 + $0x1598] sm:$0xff]
    %v718 = vld [vmem:[%s1 + $0x15a0] sm:$0xff]
    %v719 = vld [vmem:[%s1 + $0x15a8] sm:$0xff]
    %v720 = vld [vmem:[%s1 + $0x15b0] sm:$0xff]
    %v721 = vld [vmem:[%s1 + $0x15b8] sm:$0xff]
    %v722 = vld [vmem:[%s1 + $0x15c0] sm:$0xff]
    %v723 = vld [vmem:[%s1 + $0x15c8] sm:$0xff]
    %v724 = vld [vmem:[%s1 + $0x15d0] sm:$0xff]
    %v725 = vld [vmem:[%s1 + $0x15d8] sm:$0xff]
    %v726 = vld [vmem:[%s1 + $0x15e0] sm:$0xff]
    %v727 = vld [vmem:[%s1 + $0x15e8] sm:$0xff]
    %v728 = vld [vmem:[%s1 + $0x15f0] sm:$0xff]
    %v729 = vld [vmem:[%s1 + $0x15f8] sm:$0xff]
    %v730 = vld [vmem:[%s1 + $0x1600] sm:$0xff]
    %v731 = vld [vmem:[%s1 + $0x1608] sm:$0xff]
    %v732 = vld [vmem:[%s1 + $0x1610] sm:$0xff]
    %v733 = vld [vmem:[%s1 + $0x1618] sm:$0xff]
    %v734 = vld [vmem:[%s1 + $0x1620] sm:$0xff]
    %v735 = vld [vmem:[%s1 + $0x1628] sm:$0xff]
    %v736 = vld [vmem:[%s1 + $0x1630] sm:$0xff]
    %v737 = vld [vmem:[%s1 + $0x1638] sm:$0xff]
    %v738 = vld [vmem:[%s1 + $0x1640] sm:$0xff]
    %v739 = vld [vmem:[%s1 + $0x1648] sm:$0xff]
    %v740 = vld [vmem:[%s1 + $0x1650] sm:$0xff]
    %v741 = vld [vmem:[%s1 + $0x1658] sm:$0xff]
    %v742 = vld [vmem:[%s1 + $0x1660] sm:$0xff]
    %v743 = vld [vmem:[%s1 + $0x1668] sm:$0xff]
    %v744 = vld [vmem:[%s1 + $0x1670] sm:$0xff]
    %v745 = vld [vmem:[%s1 + $0x1678] sm:$0xff]
    %v746 = vld [vmem:[%s1 + $0x1680] sm:$0xff]
    %v747 = vld [vmem:[%s1 + $0x1688] sm:$0xff]
    %v748 = vld [vmem:[%s1 + $0x1690] sm:$0xff]
    %v749 = vld [vmem:[%s1 + $0x1698] sm:$0xff]
    %v750 = vld [vmem:[%s1 + $0x16a0] sm:$0xff]
    %v751 = vld [vmem:[%s1 + $0x16a8] sm:$0xff]
    %v752 = vld [vmem:[%s1 + $0x16b0] sm:$0xff]
    %v753 = vld [vmem:[%s1 + $0x16b8] sm:$0xff]
    %v754 = vld [vmem:[%s1 + $0x16c0] sm:$0xff]
    %v755 = vld [vmem:[%s1 + $0x16c8] sm:$0xff]
    %v756 = vld [vmem:[%s1 + $0x16d0] sm:$0xff]
    %v757 = vld [vmem:[%s1 + $0x16d8] sm:$0xff]
    %v758 = vld [vmem:[%s1 + $0x16e0] sm:$0xff]
    %v759 = vld [vmem:[%s1 + $0x16e8] sm:$0xff]
    %v760 = vld [vmem:[%s1 + $0x16f0] sm:$0xff]
    %v761 = vld [vmem:[%s1 + $0x16f8] sm:$0xff]
    %v762 = vld [vmem:[%s1 + $0x1700] sm:$0xff]
    %v763 = vld [vmem:[%s1 + $0x1708] sm:$0xff]
    %v764 = vld [vmem:[%s1 + $0x1710] sm:$0xff]
    %v765 = vld [vmem:[%s1 + $0x1718] sm:$0xff]
    %v766 = vld [vmem:[%s1 + $0x1720] sm:$0xff]
    %v767 = vld [vmem:[%s1 + $0x1728] sm:$0xff]
    %v768 = vld [vmem:[%s1 + $0x1730] sm:$0xff]
    %v769 = vld [vmem:[%s1 + $0x1738] sm:$0xff]
    %v770 = vld [vmem:[%s1 + $0x1740] sm:$0xff]
    %v771 = vld [vmem:[%s1 + $0x1748] sm:$0xff]
    %v772 = vld [vmem:[%s1 + $0x1750] sm:$0xff]
    %v773 = vld [vmem:[%s1 + $0x1758] sm:$0xff]
    %v774 = vld [vmem:[%s1 + $0x1760] sm:$0xff]
    %v775 = vld [vmem:[%s1 + $0x1768] sm:$0xff]
    %v776 = vld [vmem:[%s1 + $0x1770] sm:$0xff]
    %v777 = vld [vmem:[%s1 + $0x1778] sm:$0xff]
    %v778 = vld [vmem:[%s1 + $0x1780] sm:$0xff]
    %v779 = vld [vmem:[%s1 + $0x1788] sm:$0xff]
    %v780 = vld [vmem:[%s1 + $0x1790] sm:$0xff]
    %v781 = vld [vmem:[%s1 + $0x1798] sm:$0xff]
    %v782 = vld [vmem:[%s1 + $0x17a0] sm:$0xff]
    %v783 = vld [vmem:[%s1 + $0x17a8] sm:$0xff]
    %v784 = vld [vmem:[%s1 + $0x17b0] sm:$0xff]
    %v785 = vld [vmem:[%s1 + $0x17b8] sm:$0xff]
    %v786 = vld [vmem:[%s1 + $0x17c0] sm:$0xff]
    %v787 = vld [vmem:[%s1 + $0x17c8] sm:$0xff]
    %v788 = vld [vmem:[%s1 + $0x17d0] sm:$0xff]
    %v789 = vld [vmem:[%s1 + $0x17d8] sm:$0xff]
    %v790 = vld [vmem:[%s1 + $0x17e0] sm:$0xff]
    %v791 = vld [vmem:[%s1 + $0x17e8] sm:$0xff]
    %v792 = vld [vmem:[%s1 + $0x17f0] sm:$0xff]
    %v793 = vld [vmem:[%s1 + $0x17f8] sm:$0xff]
    %v794 = vld [vmem:[%s1 + $0x1800] sm:$0xff]
    %v795 = vld [vmem:[%s1 + $0x1808] sm:$0xff]
    %v796 = vld [vmem:[%s1 + $0x1810] sm:$0xff]
    %v797 = vld [vmem:[%s1 + $0x1818] sm:$0xff]
    %v798 = vld [vmem:[%s1 + $0x1820] sm:$0xff]
    %v799 = vld [vmem:[%s1 + $0x1828] sm:$0xff]
    %v800 = vld [vmem:[%s1 + $0x1830] sm:$0xff]
    %v801 = vld [vmem:[%s1 + $0x1838] sm:$0xff]
    %v802 = vld [vmem:[%s1 + $0x1840] sm:$0xff]
    %v803 = vld [vmem:[%s1 + $0x1848] sm:$0xff]
    %v804 = vld [vmem:[%s1 + $0x1850] sm:$0xff]
    %v805 = vld [vmem:[%s1 + $0x1858] sm:$0xff]
    %v806 = vld [vmem:[%s1 + $0x1860] sm:$0xff]
    %v807 = vld [vmem:[%s1 + $0x1868] sm:$0xff]
    %v808 = vld [vmem:[%s1 + $0x1870] sm:$0xff]
    %v809 = vld [vmem:[%s1 + $0x1878] sm:$0xff]
    %v810 = vld [vmem:[%s1 + $0x1880] sm:$0xff]
    %v811 = vld [vmem:[%s1 + $0x1888] sm:$0xff]
    %v812 = vld [vmem:[%s1 + $0x1890] sm:$0xff]
    %v813 = vld [vmem:[%s1 + $0x1898] sm:$0xff]
    %v814 = vld [vmem:[%s1 + $0x18a0] sm:$0xff]
    %v815 = vld [vmem:[%s1 + $0x18a8] sm:$0xff]
    %v816 = vld [vmem:[%s1 + $0x18b0] sm:$0xff]
    %v817 = vld [vmem:[%s1 + $0x18b8] sm:$0xff]
    %v818 = vld [vmem:[%s1 + $0x18c0] sm:$0xff]
    %v819 = vld [vmem:[%s1 + $0x18c8] sm:$0xff]
    %v820 = vld [vmem:[%s1 + $0x18d0] sm:$0xff]
    %v821 = vld [vmem:[%s1 + $0x18d8] sm:$0xff]
    %v822 = vld [vmem:[%s1 + $0x18e0] sm:$0xff]
    %v823 = vld [vmem:[%s1 + $0x18e8] sm:$0xff]
    %v824 = vld [vmem:[%s1 + $0x18f0] sm:$0xff]
    %v825 = vld [vmem:[%s1 + $0x18f8] sm:$0xff]
    %v826 = vld [vmem:[%s1 + $0x1900] sm:$0xff]
    %v827 = vld [vmem:[%s1 + $0x1908] sm:$0xff]
    %v828 = vld [vmem:[%s1 + $0x1910] sm:$0xff]
    %v829 = vld [vmem:[%s1 + $0x1918] sm:$0xff]
    %v830 = vld [vmem:[%s1 + $0x1920] sm:$0xff]
    %v831 = vld [vmem:[%s1 + $0x1928] sm:$0xff]
    %v832 = vld [vmem:[%s1 + $0x1930] sm:$0xff]
    %v833 = vld [vmem:[%s1 + $0x1938] sm:$0xff]
    %v834 = vld [vmem:[%s1 + $0x1940] sm:$0xff]
    %v835 = vld [vmem:[%s1 + $0x1948] sm:$0xff]
    %v836 = vld [vmem:[%s1 + $0x1950] sm:$0xff]
    %v837 = vld [vmem:[%s1 + $0x1958] sm:$0xff]
    %v838 = vld [vmem:[%s1 + $0x1960] sm:$0xff]
    %v839 = vld [vmem:[%s1 + $0x1968] sm:$0xff]
    %v840 = vld [vmem:[%s1 + $0x1970] sm:$0xff]
    %v841 = vld [vmem:[%s1 + $0x1978] sm:$0xff]
    %v842 = vld [vmem:[%s1 + $0x1980] sm:$0xff]
    %v843 = vld [vmem:[%s1 + $0x1988] sm:$0xff]
    %v844 = vld [vmem:[%s1 + $0x1990] sm:$0xff]
    %v845 = vld [vmem:[%s1 + $0x1998] sm:$0xff]
    %v846 = vld [vmem:[%s1 + $0x19a0] sm:$0xff]
    %v847 = vld [vmem:[%s1 + $0x19a8] sm:$0xff]
    %v848 = vld [vmem:[%s1 + $0x19b0] sm:$0xff]
    %v849 = vld [vmem:[%s1 + $0x19b8] sm:$0xff]
    %v850 = vld [vmem:[%s1 + $0x19c0] sm:$0xff]
    %v851 = vld [vmem:[%s1 + $0x19c8] sm:$0xff]
    %v852 = vld [vmem:[%s1 + $0x19d0] sm:$0xff]
    %v853 = vld [vmem:[%s1 + $0x19d8] sm:$0xff]
    %v854 = vld [vmem:[%s1 + $0x19e0] sm:$0xff]
    %v855 = vld [vmem:[%s1 + $0x19e8] sm:$0xff]
    %v856 = vld [vmem:[%s1 + $0x19f0] sm:$0xff]
    %v857 = vld [vmem:[%s1 + $0x19f8] sm:$0xff]
    %v858 = vld [vmem:[%s1 + $0x1a00] sm:$0xff]
    %v859 = vld [vmem:[%s1 + $0x1a08] sm:$0xff]
    %v860 = vld [vmem:[%s1 + $0x1a10] sm:$0xff]
    %v861 = vld [vmem:[%s1 + $0x1a18] sm:$0xff]
    %v862 = vld [vmem:[%s1 + $0x1a20] sm:$0xff]
    %v863 = vld [vmem:[%s1 + $0x1a28] sm:$0xff]
    %v864 = vld [vmem:[%s1 + $0x1a30] sm:$0xff]
    %v865 = vld [vmem:[%s1 + $0x1a38] sm:$0xff]
    %v866 = vld [vmem:[%s1 + $0x1a40] sm:$0xff]
    %v867 = vld [vmem:[%s1 + $0x1a48] sm:$0xff]
    %v868 = vld [vmem:[%s1 + $0x1a50] sm:$0xff]
    %v869 = vld [vmem:[%s1 + $0x1a58] sm:$0xff]
    %v870 = vld [vmem:[%s1 + $0x1a60] sm:$0xff]
    %v871 = vld [vmem:[%s1 + $0x1a68] sm:$0xff]
    %v872 = vld [vmem:[%s1 + $0x1a70] sm:$0xff]
    %v873 = vld [vmem:[%s1 + $0x1a78] sm:$0xff]
    %v874 = vld [vmem:[%s1 + $0x1a80] sm:$0xff]
    %v875 = vld [vmem:[%s1 + $0x1a88] sm:$0xff]
    %v876 = vld [vmem:[%s1 + $0x1a90] sm:$0xff]
    %v877 = vld [vmem:[%s1 + $0x1a98] sm:$0xff]
    %v878 = vld [vmem:[%s1 + $0x1aa0] sm:$0xff]
    %v879 = vld [vmem:[%s1 + $0x1aa8] sm:$0xff]
    %v880 = vld [vmem:[%s1 + $0x1ab0] sm:$0xff]
    %v881 = vld [vmem:[%s1 + $0x1ab8] sm:$0xff]
    %v882 = vld [vmem:[%s1 + $0x1ac0] sm:$0xff]
    %v883 = vld [vmem:[%s1 + $0x1ac8] sm:$0xff]
    %v884 = vld [vmem:[%s1 + $0x1ad0] sm:$0xff]
    %v885 = vld [vmem:[%s1 + $0x1ad8] sm:$0xff]
    %v886 = vld [vmem:[%s1 + $0x1ae0] sm:$0xff]
    %v887 = vld [vmem:[%s1 + $0x1ae8] sm:$0xff]
    %v888 = vld [vmem:[%s1 + $0x1af0] sm:$0xff]
    %v889 = vld [vmem:[%s1 + $0x1af8] sm:$0xff]
    %v890 = vld [vmem:[%s1 + $0x1b00] sm:$0xff]
    %v891 = vld [vmem:[%s1 + $0x1b08] sm:$0xff]
    %v892 = vld [vmem:[%s1 + $0x1b10] sm:$0xff]
    %v893 = vld [vmem:[%s1 + $0x1b18] sm:$0xff]
    %v894 = vld [vmem:[%s1 + $0x1b20] sm:$0xff]
    %v895 = vld [vmem:[%s1 + $0x1b28] sm:$0xff]
    %v896 = vld [vmem:[%s1 + $0x1b30] sm:$0xff]
    %v897 = vld [vmem:[%s1 + $0x1b38] sm:$0xff]
    %v898 = vld [vmem:[%s1 + $0x1b40] sm:$0xff]
    %v899 = vld [vmem:[%s1 + $0x1b48] sm:$0xff]
    %v900 = vld [vmem:[%s1 + $0x1b50] sm:$0xff]
    %v901 = vld [vmem:[%s1 + $0x1b58] sm:$0xff]
    %v902 = vld [vmem:[%s1 + $0x1b60] sm:$0xff]
    %v903 = vld [vmem:[%s1 + $0x1b68] sm:$0xff]
    %v904 = vld [vmem:[%s1 + $0x1b70] sm:$0xff]
    %v905 = vld [vmem:[%s1 + $0x1b78] sm:$0xff]
    %v906 = vld [vmem:[%s1 + $0x1b80] sm:$0xff]
    %v907 = vld [vmem:[%s1 + $0x1b88] sm:$0xff]
    %v908 = vld [vmem:[%s1 + $0x1b90] sm:$0xff]
    %v909 = vld [vmem:[%s1 + $0x1b98] sm:$0xff]
    %v910 = vld [vmem:[%s1 + $0x1ba0] sm:$0xff]
    %v911 = vld [vmem:[%s1 + $0x1ba8] sm:$0xff]
    %v912 = vld [vmem:[%s1 + $0x1bb0] sm:$0xff]
    %v913 = vld [vmem:[%s1 + $0x1bb8] sm:$0xff]
    %v914 = vld [vmem:[%s1 + $0x1bc0] sm:$0xff]
    %v915 = vld [vmem:[%s1 + $0x1bc8] sm:$0xff]
    %v916 = vld [vmem:[%s1 + $0x1bd0] sm:$0xff]
    %v917 = vld [vmem:[%s1 + $0x1bd8] sm:$0xff]
    %v918 = vld [vmem:[%s1 + $0x1be0] sm:$0xff]
    %v919 = vld [vmem:[%s1 + $0x1be8] sm:$0xff]
    %v920 = vld [vmem:[%s1 + $0x1bf0] sm:$0xff]
    %v921 = vld [vmem:[%s1 + $0x1bf8] sm:$0xff]
    %v922 = vld [vmem:[%s1 + $0x1c00] sm:$0xff]
    %v923 = vld [vmem:[%s1 + $0x1c08] sm:$0xff]
    %v924 = vld [vmem:[%s1 + $0x1c10] sm:$0xff]
    %v925 = vld [vmem:[%s1 + $0x1c18] sm:$0xff]
    %v926 = vld [vmem:[%s1 + $0x1c20] sm:$0xff]
    %v927 = vld [vmem:[%s1 + $0x1c28] sm:$0xff]
    %v928 = vld [vmem:[%s1 + $0x1c30] sm:$0xff]
    %v929 = vld [vmem:[%s1 + $0x1c38] sm:$0xff]
    %v930 = vld [vmem:[%s1 + $0x1c40] sm:$0xff]
    %v931 = vld [vmem:[%s1 + $0x1c48] sm:$0xff]
    %v932 = vld [vmem:[%s1 + $0x1c50] sm:$0xff]
    %v933 = vld [vmem:[%s1 + $0x1c58] sm:$0xff]
    %v934 = vld [vmem:[%s1 + $0x1c60] sm:$0xff]
    %v935 = vld [vmem:[%s1 + $0x1c68] sm:$0xff]
    %v936 = vld [vmem:[%s1 + $0x1c70] sm:$0xff]
    %v937 = vld [vmem:[%s1 + $0x1c78] sm:$0xff]
    %v938 = vld [vmem:[%s1 + $0x1c80] sm:$0xff]
    %v939 = vld [vmem:[%s1 + $0x1c88] sm:$0xff]
    %v940 = vld [vmem:[%s1 + $0x1c90] sm:$0xff]
    %v941 = vld [vmem:[%s1 + $0x1c98] sm:$0xff]
    %v942 = vld [vmem:[%s1 + $0x1ca0] sm:$0xff]
    %v943 = vld [vmem:[%s1 + $0x1ca8] sm:$0xff]
    %v944 = vld [vmem:[%s1 + $0x1cb0] sm:$0xff]
    %v945 = vld [vmem:[%s1 + $0x1cb8] sm:$0xff]
    %v946 = vld [vmem:[%s1 + $0x1cc0] sm:$0xff]
    %v947 = vld [vmem:[%s1 + $0x1cc8] sm:$0xff]
    %v948 = vld [vmem:[%s1 + $0x1cd0] sm:$0xff]
    %v949 = vld [vmem:[%s1 + $0x1cd8] sm:$0xff]
    %v950 = vld [vmem:[%s1 + $0x1ce0] sm:$0xff]
    %v951 = vld [vmem:[%s1 + $0x1ce8] sm:$0xff]
    %v952 = vld [vmem:[%s1 + $0x1cf0] sm:$0xff]
    %v953 = vld [vmem:[%s1 + $0x1cf8] sm:$0xff]
    %v954 = vld [vmem:[%s1 + $0x1d00] sm:$0xff]
    %v955 = vld [vmem:[%s1 + $0x1d08] sm:$0xff]
    %v956 = vld [vmem:[%s1 + $0x1d10] sm:$0xff]
    %v957 = vld [vmem:[%s1 + $0x1d18] sm:$0xff]
    %v958 = vld [vmem:[%s1 + $0x1d20] sm:$0xff]
    %v959 = vld [vmem:[%s1 + $0x1d28] sm:$0xff]
    %v960 = vld [vmem:[%s1 + $0x1d30] sm:$0xff]
    %v961 = vld [vmem:[%s1 + $0x1d38] sm:$0xff]
    %v962 = vld [vmem:[%s1 + $0x1d40] sm:$0xff]
    %v963 = vld [vmem:[%s1 + $0x1d48] sm:$0xff]
    %v964 = vld [vmem:[%s1 + $0x1d50] sm:$0xff]
    %v965 = vld [vmem:[%s1 + $0x1d58] sm:$0xff]
    %v966 = vld [vmem:[%s1 + $0x1d60] sm:$0xff]
    %v967 = vld [vmem:[%s1 + $0x1d68] sm:$0xff]
    %v968 = vld [vmem:[%s1 + $0x1d70] sm:$0xff]
    %v969 = vld [vmem:[%s1 + $0x1d78] sm:$0xff]
    %v970 = vld [vmem:[%s1 + $0x1d80] sm:$0xff]
    %v971 = vld [vmem:[%s1 + $0x1d88] sm:$0xff]
    %v972 = vld [vmem:[%s1 + $0x1d90] sm:$0xff]
    %v973 = vld [vmem:[%s1 + $0x1d98] sm:$0xff]
    %v974 = vld [vmem:[%s1 + $0x1da0] sm:$0xff]
    %v975 = vld [vmem:[%s1 + $0x1da8] sm:$0xff]
    %v976 = vld [vmem:[%s1 + $0x1db0] sm:$0xff]
    %v977 = vld [vmem:[%s1 + $0x1db8] sm:$0xff]
    %v978 = vld [vmem:[%s1 + $0x1dc0] sm:$0xff]
    %v979 = vld [vmem:[%s1 + $0x1dc8] sm:$0xff]
    %v980 = vld [vmem:[%s1 + $0x1dd0] sm:$0xff]
    %v981 = vld [vmem:[%s1 + $0x1dd8] sm:$0xff]
    %v982 = vld [vmem:[%s1 + $0x1de0] sm:$0xff]
    %v983 = vld [vmem:[%s1 + $0x1de8] sm:$0xff]
    %v984 = vld [vmem:[%s1 + $0x1df0] sm:$0xff]
    %v985 = vld [vmem:[%s1 + $0x1df8] sm:$0xff]
    %v986 = vld [vmem:[%s1 + $0x1e00] sm:$0xff]
    %v987 = vld [vmem:[%s1 + $0x1e08] sm:$0xff]
    %v988 = vld [vmem:[%s1 + $0x1e10] sm:$0xff]
    %v989 = vld [vmem:[%s1 + $0x1e18] sm:$0xff]
    %v990 = vld [vmem:[%s1 + $0x1e20] sm:$0xff]
    %v991 = vld [vmem:[%s1 + $0x1e28] sm:$0xff]
    %v992 = vld [vmem:[%s1 + $0x1e30] sm:$0xff]
    %v993 = vld [vmem:[%s1 + $0x1e38] sm:$0xff]
    %v994 = vld [vmem:[%s1 + $0x1e40] sm:$0xff]
    %v995 = vld [vmem:[%s1 + $0x1e48] sm:$0xff]
    %v996 = vld [vmem:[%s1 + $0x1e50] sm:$0xff]
    %v997 = vld [vmem:[%s1 + $0x1e58] sm:$0xff]
    %v998 = vld [vmem:[%s1 + $0x1e60] sm:$0xff]
    %v999 = vld [vmem:[%s1 + $0x1e68] sm:$0xff]
    %v1000 = vld [vmem:[%s1 + $0x1e70] sm:$0xff]
    %v1001 = vld [vmem:[%s1 + $0x1e78] sm:$0xff]
    %v1002 = vld [vmem:[%s1 + $0x1e80] sm:$0xff]
    %v1003 = vld [vmem:[%s1 + $0x1e88] sm:$0xff]
    %v1004 = vld [vmem:[%s1 + $0x1e90] sm:$0xff]
    %v1005 = vld [vmem:[%s1 + $0x1e98] sm:$0xff]
    %v1006 = vld [vmem:[%s1 + $0x1ea0] sm:$0xff]
    %v1007 = vld [vmem:[%s1 + $0x1ea8] sm:$0xff]
    %v1008 = vld [vmem:[%s1 + $0x1eb0] sm:$0xff]
    %v1009 = vld [vmem:[%s1 + $0x1eb8] sm:$0xff]
    %v1010 = vld [vmem:[%s1 + $0x1ec0] sm:$0xff]
    %v1011 = vld [vmem:[%s1 + $0x1ec8] sm:$0xff]
    %v1012 = vld [vmem:[%s1 + $0x1ed0] sm:$0xff]
    %v1013 = vld [vmem:[%s1 + $0x1ed8] sm:$0xff]
    %v1014 = vld [vmem:[%s1 + $0x1ee0] sm:$0xff]
    %v1015 = vld [vmem:[%s1 + $0x1ee8] sm:$0xff]
    %v1016 = vld [vmem:[%s1 + $0x1ef0] sm:$0xff]
    %v1017 = vld [vmem:[%s1 + $0x1ef8] sm:$0xff]
    %v1018 = vld [vmem:[%s1 + $0x1f00] sm:$0xff]
    %v1019 = vld [vmem:[%s1 + $0x1f08] sm:$0xff]
    %v1020 = vld [vmem:[%s1 + $0x1f10] sm:$0xff]
    %v1021 = vld [vmem:[%s1 + $0x1f18] sm:$0xff]
    %v1022 = vld [vmem:[%s1 + $0x1f20] sm:$0xff]
    %v1023 = vld [vmem:[%s1 + $0x1f28] sm:$0xff]
    %v1024 = vld [vmem:[%s1 + $0x1f30] sm:$0xff]
    %v1025 = vld [vmem:[%s1 + $0x1f38] sm:$0xff]
    %v1026 = vld [vmem:[%s1 + $0x1f40] sm:$0xff]
    %v1027 = vld [vmem:[%s1 + $0x1f48] sm:$0xff]
    %v1028 = vld [vmem:[%s1 + $0x1f50] sm:$0xff]
    %v1029 = vld [vmem:[%s1 + $0x1f58] sm:$0xff]
    %v1030 = vld [vmem:[%s1 + $0x1f60] sm:$0xff]
    %v1031 = vld [vmem:[%s1 + $0x1f68] sm:$0xff]
    %v1032 = vld [vmem:[%s1 + $0x1f70] sm:$0xff]
    %v1033 = vld [vmem:[%s1 + $0x1f78] sm:$0xff]
    %v1034 = vld [vmem:[%s1 + $0x1f80] sm:$0xff]
    %v1035 = vld [vmem:[%s1 + $0x1f88] sm:$0xff]
    %v1036 = vld [vmem:[%s1 + $0x1f90] sm:$0xff]
    %v1037 = vld [vmem:[%s1 + $0x1f98] sm:$0xff]
    %v1038 = vld [vmem:[%s1 + $0x1fa0] sm:$0xff]
    %v1039 = vld [vmem:[%s1 + $0x1fa8] sm:$0xff]
    %v1040 = vld [vmem:[%s1 + $0x1fb0] sm:$0xff]
    %v1041 = vld [vmem:[%s1 + $0x1fb8] sm:$0xff]
    %v1042 = vld [vmem:[%s1 + $0x1fc0] sm:$0xff]
    %v1043 = vld [vmem:[%s1 + $0x1fc8] sm:$0xff]
    %v1044 = vld [vmem:[%s1 + $0x1fd0] sm:$0xff]
    %v1045 = vld [vmem:[%s1 + $0x1fd8] sm:$0xff]
    %v1046 = vld [vmem:[%s1 + $0x1fe0] sm:$0xff]
    %v1047 = vld [vmem:[%s1 + $0x1fe8] sm:$0xff]
    %v1048 = vld [vmem:[%s1 + $0x1ff0] sm:$0xff]
    %v1049 = vld [vmem:[%s1 + $0x1ff8] sm:$0xff]
    %v1051 = vcombine.high %v17, %v17
    %v1053 = vunpack.c.l.s4 1983009808
    %v1054 = vunpack.c.0.s8 %v1053
    %v1055 = vlaneseq
    %v1056 = vshrl.u32 %v1055, 7
    %v1057 = vsub.s32 %v1054, %v1056
    %v1058 = vrot.slane %v17, %v1057
    %v1060 = vunpack.c.l.s4 1983009808
    %v1061 = vunpack.c.0.s8 %v1060
    %v1062 = vlaneseq
    %v1063 = vshrl.u32 %v1062, 7
    %v1064 = vsub.s32 %v1061, %v1063
    %v1065 = vrot.slane %v1051, %v1064
    %v1066 = vcombine.high %v1058, %v1058
    %v1067 = vcombine.high %v1065, %v1065
    %1072 = vmatprep.subr.mxu0 %v27
    %1073 = vmatpush1.msra.mxu0 %v26
    %1074 = vmatprep.subr.mxu0 %v43
    %1075 = vmatpush1.msra.mxu0 %v42
    %1076 = vmatprep.subr.mxu0 %v59
    %1077 = vmatpush1.msra.mxu0 %v58
    %1078 = vmatprep.subr.mxu0 %v75
    %1079 = vmatpush1.msra.mxu0 %v74
    %1080 = vmatprep.subr.mxu0 %v91
    %1081 = vmatpush1.msra.mxu0 %v90
    %1082 = vmatprep.subr.mxu0 %v107
    %1083 = vmatpush1.msra.mxu0 %v106
    %1084 = vmatprep.subr.mxu0 %v123
    %1085 = vmatpush1.msra.mxu0 %v122
    %1086 = vmatprep.subr.mxu0 %v139
    %1087 = vmatpush1.msra.mxu0 %v138
    %1088 = vmatprep.subr.mxu0 %v155
    %1089 = vmatpush1.msra.mxu0 %v154
    %1090 = vmatprep.subr.mxu0 %v171
    %1091 = vmatpush1.msra.mxu0 %v170
    %1092 = vmatprep.subr.mxu0 %v187
    %1093 = vmatpush1.msra.mxu0 %v186
    %1094 = vmatprep.subr.mxu0 %v203
    %1095 = vmatpush1.msra.mxu0 %v202
    %1096 = vmatprep.subr.mxu0 %v219
    %1097 = vmatpush1.msra.mxu0 %v218
    %1098 = vmatprep.subr.mxu0 %v235
    %1099 = vmatpush1.msra.mxu0 %v234
    %1100 = vmatprep.subr.mxu0 %v251
    %1101 = vmatpush1.msra.mxu0 %v250
    %1102 = vmatprep.subr.mxu0 %v267
    %1103 = vmatpush1.msra.mxu0 %v266
    %1104 = vmatprep.subr.mxu0 %v283
    %1105 = vmatpush1.msra.mxu0 %v282
    %1106 = vmatprep.subr.mxu0 %v299
    %1107 = vmatpush1.msra.mxu0 %v298
    %1108 = vmatprep.subr.mxu0 %v315
    %1109 = vmatpush1.msra.mxu0 %v314
    %1110 = vmatprep.subr.mxu0 %v331
    %1111 = vmatpush1.msra.mxu0 %v330
    %1112 = vmatprep.subr.mxu0 %v347
    %1113 = vmatpush1.msra.mxu0 %v346
    %1114 = vmatprep.subr.mxu0 %v363
    %1115 = vmatpush1.msra.mxu0 %v362
    %1116 = vmatprep.subr.mxu0 %v379
    %1117 = vmatpush1.msra.mxu0 %v378
    %1118 = vmatprep.subr.mxu0 %v395
    %1119 = vmatpush1.msra.mxu0 %v394
    %1120 = vmatprep.subr.mxu0 %v411
    %1121 = vmatpush1.msra.mxu0 %v410
    %1122 = vmatprep.subr.mxu0 %v427
    %1123 = vmatpush1.msra.mxu0 %v426
    %1124 = vmatprep.subr.mxu0 %v443
    %1125 = vmatpush1.msra.mxu0 %v442
    %1126 = vmatprep.subr.mxu0 %v459
    %1127 = vmatpush1.msra.mxu0 %v458
    %1128 = vmatprep.subr.mxu0 %v475
    %1129 = vmatpush1.msra.mxu0 %v474
    %1130 = vmatprep.subr.mxu0 %v491
    %1131 = vmatpush1.msra.mxu0 %v490
    %1132 = vmatprep.subr.mxu0 %v507
    %1133 = vmatpush1.msra.mxu0 %v506
    %1134 = vmatprep.subr.mxu0 %v523
    %1135 = vmatpush1.msra.mxu0 %v522
    %1136 = vmatprep.mubr.f32.mxu0 %v1066
    %1137 = vmatmul.mubr.f32.gmra.mrb[0].mxu0 %v1058
    %v1138 = vpop.f32.mrb[0].mxu0
    %v1139 = vadd.f32 0.0, %v1138
    %v1140 = vpop.f32.mrb[0].mxu0
    %v1141 = vadd.f32 0.0, %v1140
    %1142 = vdwg.mxu0
    %1143 = vmatprep.subr.mxu0 %v539
    %1144 = vmatpush1.msra.mxu0 %v538
    %1145 = vmatprep.subr.mxu0 %v555
    %1146 = vmatpush1.msra.mxu0 %v554
    %1147 = vmatprep.subr.mxu0 %v571
    %1148 = vmatpush1.msra.mxu0 %v570
    %1149 = vmatprep.subr.mxu0 %v587
    %1150 = vmatpush1.msra.mxu0 %v586
    %1151 = vmatprep.subr.mxu0 %v603
    %1152 = vmatpush1.msra.mxu0 %v602
    %1153 = vmatprep.subr.mxu0 %v619
    %1154 = vmatpush1.msra.mxu0 %v618
    %1155 = vmatprep.subr.mxu0 %v635
    %1156 = vmatpush1.msra.mxu0 %v634
    %1157 = vmatprep.subr.mxu0 %v651
    %1158 = vmatpush1.msra.mxu0 %v650
    %1159 = vmatprep.subr.mxu0 %v667
    %1160 = vmatpush1.msra.mxu0 %v666
    %1161 = vmatprep.subr.mxu0 %v683
    %1162 = vmatpush1.msra.mxu0 %v682
    %1163 = vmatprep.subr.mxu0 %v699
    %1164 = vmatpush1.msra.mxu0 %v698
    %1165 = vmatprep.subr.mxu0 %v715
    %1166 = vmatpush1.msra.mxu0 %v714
    %1167 = vmatprep.subr.mxu0 %v731
    %1168 = vmatpush1.msra.mxu0 %v730
    %1169 = vmatprep.subr.mxu0 %v747
    %1170 = vmatpush1.msra.mxu0 %v746
    %1171 = vmatprep.subr.mxu0 %v763
    %1172 = vmatpush1.msra.mxu0 %v762
    %1173 = vmatprep.subr.mxu0 %v779
    %1174 = vmatpush1.msra.mxu0 %v778
    %1175 = vmatprep.subr.mxu0 %v795
    %1176 = vmatpush1.msra.mxu0 %v794
    %1177 = vmatprep.subr.mxu0 %v811
    %1178 = vmatpush1.msra.mxu0 %v810
    %1179 = vmatprep.subr.mxu0 %v827
    %1180 = vmatpush1.msra.mxu0 %v826
    %1181 = vmatprep.subr.mxu0 %v843
    %1182 = vmatpush1.msra.mxu0 %v842
    %1183 = vmatprep.subr.mxu0 %v859
    %1184 = vmatpush1.msra.mxu0 %v858
    %1185 = vmatprep.subr.mxu0 %v875
    %1186 = vmatpush1.msra.mxu0 %v874
    %1187 = vmatprep.subr.mxu0 %v891
    %1188 = vmatpush1.msra.mxu0 %v890
    %1189 = vmatprep.subr.mxu0 %v907
    %1190 = vmatpush1.msra.mxu0 %v906
    %1191 = vmatprep.subr.mxu0 %v923
    %1192 = vmatpush1.msra.mxu0 %v922
    %1193 = vmatprep.subr.mxu0 %v939
    %1194 = vmatpush1.msra.mxu0 %v938
    %1195 = vmatprep.subr.mxu0 %v955
    %1196 = vmatpush1.msra.mxu0 %v954
    %1197 = vmatprep.subr.mxu0 %v971
    %1198 = vmatpush1.msra.mxu0 %v970
    %1199 = vmatprep.subr.mxu0 %v987
    %1200 = vmatpush1.msra.mxu0 %v986
    %1201 = vmatprep.subr.mxu0 %v1003
    %1202 = vmatpush1.msra.mxu0 %v1002
    %1203 = vmatprep.subr.mxu0 %v1019
    %1204 = vmatpush1.msra.mxu0 %v1018
    %1205 = vmatprep.subr.mxu0 %v1035
    %1206 = vmatpush1.msra.mxu0 %v1034
    %1207 = vmatprep.mubr.f32.mxu0 %v1067
    %1208 = vmatmul.mubr.f32.gmra.mrb[0].mxu0 %v1065
    %v1209 = vpop.f32.mrb[0].mxu0
    %v1210 = vadd.f32 %v1139, %v1209
    %v1211 = vpop.f32.mrb[0].mxu0
    %v1212 = vadd.f32 %v1141, %v1211
    %1213 = vdwg.mxu0
    %1214 = vmatprep.subr.mxu0 %v29
    %1215 = vmatpush1.msra.mxu0 %v28
    %1216 = vmatprep.subr.mxu0 %v45
    %1217 = vmatpush1.msra.mxu0 %v44
    %1218 = vmatprep.subr.mxu0 %v61
    %1219 = vmatpush1.msra.mxu0 %v60
    %1220 = vmatprep.subr.mxu0 %v77
    %1221 = vmatpush1.msra.mxu0 %v76
    %1222 = vmatprep.subr.mxu0 %v93
    %1223 = vmatpush1.msra.mxu0 %v92
    %1224 = vmatprep.subr.mxu0 %v109
    %1225 = vmatpush1.msra.mxu0 %v108
    %1226 = vmatprep.subr.mxu0 %v125
    %1227 = vmatpush1.msra.mxu0 %v124
    %1228 = vmatprep.subr.mxu0 %v141
    %1229 = vmatpush1.msra.mxu0 %v140
    %1230 = vmatprep.subr.mxu0 %v157
    %1231 = vmatpush1.msra.mxu0 %v156
    %1232 = vmatprep.subr.mxu0 %v173
    %1233 = vmatpush1.msra.mxu0 %v172
    %1234 = vmatprep.subr.mxu0 %v189
    %1235 = vmatpush1.msra.mxu0 %v188
    %1236 = vmatprep.subr.mxu0 %v205
    %1237 = vmatpush1.msra.mxu0 %v204
    %1238 = vmatprep.subr.mxu0 %v221
    %1239 = vmatpush1.msra.mxu0 %v220
    %1240 = vmatprep.subr.mxu0 %v237
    %1241 = vmatpush1.msra.mxu0 %v236
    %1242 = vmatprep.subr.mxu0 %v253
    %1243 = vmatpush1.msra.mxu0 %v252
    %1244 = vmatprep.subr.mxu0 %v269
    %1245 = vmatpush1.msra.mxu0 %v268
    %1246 = vmatprep.subr.mxu0 %v285
    %1247 = vmatpush1.msra.mxu0 %v284
    %1248 = vmatprep.subr.mxu0 %v301
    %1249 = vmatpush1.msra.mxu0 %v300
    %1250 = vmatprep.subr.mxu0 %v317
    %1251 = vmatpush1.msra.mxu0 %v316
    %1252 = vmatprep.subr.mxu0 %v333
    %1253 = vmatpush1.msra.mxu0 %v332
    %1254 = vmatprep.subr.mxu0 %v349
    %1255 = vmatpush1.msra.mxu0 %v348
    %1256 = vmatprep.subr.mxu0 %v365
    %1257 = vmatpush1.msra.mxu0 %v364
    %1258 = vmatprep.subr.mxu0 %v381
    %1259 = vmatpush1.msra.mxu0 %v380
    %1260 = vmatprep.subr.mxu0 %v397
    %1261 = vmatpush1.msra.mxu0 %v396
    %1262 = vmatprep.subr.mxu0 %v413
    %1263 = vmatpush1.msra.mxu0 %v412
    %1264 = vmatprep.subr.mxu0 %v429
    %1265 = vmatpush1.msra.mxu0 %v428
    %1266 = vmatprep.subr.mxu0 %v445
    %1267 = vmatpush1.msra.mxu0 %v444
    %1268 = vmatprep.subr.mxu0 %v461
    %1269 = vmatpush1.msra.mxu0 %v460
    %1270 = vmatprep.subr.mxu0 %v477
    %1271 = vmatpush1.msra.mxu0 %v476
    %1272 = vmatprep.subr.mxu0 %v493
    %1273 = vmatpush1.msra.mxu0 %v492
    %1274 = vmatprep.subr.mxu0 %v509
    %1275 = vmatpush1.msra.mxu0 %v508
    %1276 = vmatprep.subr.mxu0 %v525
    %1277 = vmatpush1.msra.mxu0 %v524
    %1278 = vmatprep.mubr.f32.mxu0 %v1066
    %1279 = vmatmul.mubr.f32.gmra.mrb[0].mxu0 %v1058
    %v1280 = vpop.f32.mrb[0].mxu0
    %v1281 = vadd.f32 0.0, %v1280
    %v1282 = vpop.f32.mrb[0].mxu0
    %v1283 = vadd.f32 0.0, %v1282
    %1284 = vdwg.mxu0
    %1285 = vmatprep.subr.mxu0 %v541
    %1286 = vmatpush1.msra.mxu0 %v540
    %1287 = vmatprep.subr.mxu0 %v557
    %1288 = vmatpush1.msra.mxu0 %v556
    %1289 = vmatprep.subr.mxu0 %v573
    %1290 = vmatpush1.msra.mxu0 %v572
    %1291 = vmatprep.subr.mxu0 %v589
    %1292 = vmatpush1.msra.mxu0 %v588
    %1293 = vmatprep.subr.mxu0 %v605
    %1294 = vmatpush1.msra.mxu0 %v604
    %1295 = vmatprep.subr.mxu0 %v621
    %1296 = vmatpush1.msra.mxu0 %v620
    %1297 = vmatprep.subr.mxu0 %v637
    %1298 = vmatpush1.msra.mxu0 %v636
    %1299 = vmatprep.subr.mxu0 %v653
    %1300 = vmatpush1.msra.mxu0 %v652
    %1301 = vmatprep.subr.mxu0 %v669
    %1302 = vmatpush1.msra.mxu0 %v668
    %1303 = vmatprep.subr.mxu0 %v685
    %1304 = vmatpush1.msra.mxu0 %v684
    %1305 = vmatprep.subr.mxu0 %v701
    %1306 = vmatpush1.msra.mxu0 %v700
    %1307 = vmatprep.subr.mxu0 %v717
    %1308 = vmatpush1.msra.mxu0 %v716
    %1309 = vmatprep.subr.mxu0 %v733
    %1310 = vmatpush1.msra.mxu0 %v732
    %1311 = vmatprep.subr.mxu0 %v749
    %1312 = vmatpush1.msra.mxu0 %v748
    %1313 = vmatprep.subr.mxu0 %v765
    %1314 = vmatpush1.msra.mxu0 %v764
    %1315 = vmatprep.subr.mxu0 %v781
    %1316 = vmatpush1.msra.mxu0 %v780
    %1317 = vmatprep.subr.mxu0 %v797
    %1318 = vmatpush1.msra.mxu0 %v796
    %1319 = vmatprep.subr.mxu0 %v813
    %1320 = vmatpush1.msra.mxu0 %v812
    %1321 = vmatprep.subr.mxu0 %v829
    %1322 = vmatpush1.msra.mxu0 %v828
    %1323 = vmatprep.subr.mxu0 %v845
    %1324 = vmatpush1.msra.mxu0 %v844
    %1325 = vmatprep.subr.mxu0 %v861
    %1326 = vmatpush1.msra.mxu0 %v860
    %1327 = vmatprep.subr.mxu0 %v877
    %1328 = vmatpush1.msra.mxu0 %v876
    %1329 = vmatprep.subr.mxu0 %v893
    %1330 = vmatpush1.msra.mxu0 %v892
    %1331 = vmatprep.subr.mxu0 %v909
    %1332 = vmatpush1.msra.mxu0 %v908
    %1333 = vmatprep.subr.mxu0 %v925
    %1334 = vmatpush1.msra.mxu0 %v924
    %1335 = vmatprep.subr.mxu0 %v941
    %1336 = vmatpush1.msra.mxu0 %v940
    %1337 = vmatprep.subr.mxu0 %v957
    %1338 = vmatpush1.msra.mxu0 %v956
    %1339 = vmatprep.subr.mxu0 %v973
    %1340 = vmatpush1.msra.mxu0 %v972
    %1341 = vmatprep.subr.mxu0 %v989
    %1342 = vmatpush1.msra.mxu0 %v988
    %1343 = vmatprep.subr.mxu0 %v1005
    %1344 = vmatpush1.msra.mxu0 %v1004
    %1345 = vmatprep.subr.mxu0 %v1021
    %1346 = vmatpush1.msra.mxu0 %v1020
    %1347 = vmatprep.subr.mxu0 %v1037
    %1348 = vmatpush1.msra.mxu0 %v1036
    %1349 = vmatprep.mubr.f32.mxu0 %v1067
    %1350 = vmatmul.mubr.f32.gmra.mrb[0].mxu0 %v1065
    %v1351 = vpop.f32.mrb[0].mxu0
    %v1352 = vadd.f32 %v1281, %v1351
    %v1353 = vpop.f32.mrb[0].mxu0
    %v1354 = vadd.f32 %v1283, %v1353
    %1355 = vdwg.mxu0
    %1356 = vmatprep.subr.mxu0 %v31
    %1357 = vmatpush1.msra.mxu0 %v30
    %1358 = vmatprep.subr.mxu0 %v47
    %1359 = vmatpush1.msra.mxu0 %v46
    %1360 = vmatprep.subr.mxu0 %v63
    %1361 = vmatpush1.msra.mxu0 %v62
    %1362 = vmatprep.subr.mxu0 %v79
    %1363 = vmatpush1.msra.mxu0 %v78
    %1364 = vmatprep.subr.mxu0 %v95
    %1365 = vmatpush1.msra.mxu0 %v94
    %1366 = vmatprep.subr.mxu0 %v111
    %1367 = vmatpush1.msra.mxu0 %v110
    %1368 = vmatprep.subr.mxu0 %v127
    %1369 = vmatpush1.msra.mxu0 %v126
    %1370 = vmatprep.subr.mxu0 %v143
    %1371 = vmatpush1.msra.mxu0 %v142
    %1372 = vmatprep.subr.mxu0 %v159
    %1373 = vmatpush1.msra.mxu0 %v158
    %1374 = vmatprep.subr.mxu0 %v175
    %1375 = vmatpush1.msra.mxu0 %v174
    %1376 = vmatprep.subr.mxu0 %v191
    %1377 = vmatpush1.msra.mxu0 %v190
    %1378 = vmatprep.subr.mxu0 %v207
    %1379 = vmatpush1.msra.mxu0 %v206
    %1380 = vmatprep.subr.mxu0 %v223
    %1381 = vmatpush1.msra.mxu0 %v222
    %1382 = vmatprep.subr.mxu0 %v239
    %1383 = vmatpush1.msra.mxu0 %v238
    %1384 = vmatprep.subr.mxu0 %v255
    %1385 = vmatpush1.msra.mxu0 %v254
    %1386 = vmatprep.subr.mxu0 %v271
    %1387 = vmatpush1.msra.mxu0 %v270
    %1388 = vmatprep.subr.mxu0 %v287
    %1389 = vmatpush1.msra.mxu0 %v286
    %1390 = vmatprep.subr.mxu0 %v303
    %1391 = vmatpush1.msra.mxu0 %v302
    %1392 = vmatprep.subr.mxu0 %v319
    %1393 = vmatpush1.msra.mxu0 %v318
    %1394 = vmatprep.subr.mxu0 %v335
    %1395 = vmatpush1.msra.mxu0 %v334
    %1396 = vmatprep.subr.mxu0 %v351
    %1397 = vmatpush1.msra.mxu0 %v350
    %1398 = vmatprep.subr.mxu0 %v367
    %1399 = vmatpush1.msra.mxu0 %v366
    %1400 = vmatprep.subr.mxu0 %v383
    %1401 = vmatpush1.msra.mxu0 %v382
    %1402 = vmatprep.subr.mxu0 %v399
    %1403 = vmatpush1.msra.mxu0 %v398
    %1404 = vmatprep.subr.mxu0 %v415
    %1405 = vmatpush1.msra.mxu0 %v414
    %1406 = vmatprep.subr.mxu0 %v431
    %1407 = vmatpush1.msra.mxu0 %v430
    %1408 = vmatprep.subr.mxu0 %v447
    %1409 = vmatpush1.msra.mxu0 %v446
    %1410 = vmatprep.subr.mxu0 %v463
    %1411 = vmatpush1.msra.mxu0 %v462
    %1412 = vmatprep.subr.mxu0 %v479
    %1413 = vmatpush1.msra.mxu0 %v478
    %1414 = vmatprep.subr.mxu0 %v495
    %1415 = vmatpush1.msra.mxu0 %v494
    %1416 = vmatprep.subr.mxu0 %v511
    %1417 = vmatpush1.msra.mxu0 %v510
    %1418 = vmatprep.subr.mxu0 %v527
    %1419 = vmatpush1.msra.mxu0 %v526
    %1420 = vmatprep.mubr.f32.mxu0 %v1066
    %1421 = vmatmul.mubr.f32.gmra.mrb[0].mxu0 %v1058
    %v1422 = vpop.f32.mrb[0].mxu0
    %v1423 = vadd.f32 0.0, %v1422
    %v1424 = vpop.f32.mrb[0].mxu0
    %v1425 = vadd.f32 0.0, %v1424
    %1426 = vdwg.mxu0
    %1427 = vmatprep.subr.mxu0 %v543
    %1428 = vmatpush1.msra.mxu0 %v542
    %1429 = vmatprep.subr.mxu0 %v559
    %1430 = vmatpush1.msra.mxu0 %v558
    %1431 = vmatprep.subr.mxu0 %v575
    %1432 = vmatpush1.msra.mxu0 %v574
    %1433 = vmatprep.subr.mxu0 %v591
    %1434 = vmatpush1.msra.mxu0 %v590
    %1435 = vmatprep.subr.mxu0 %v607
    %1436 = vmatpush1.msra.mxu0 %v606
    %1437 = vmatprep.subr.mxu0 %v623
    %1438 = vmatpush1.msra.mxu0 %v622
    %1439 = vmatprep.subr.mxu0 %v639
    %1440 = vmatpush1.msra.mxu0 %v638
    %1441 = vmatprep.subr.mxu0 %v655
    %1442 = vmatpush1.msra.mxu0 %v654
    %1443 = vmatprep.subr.mxu0 %v671
    %1444 = vmatpush1.msra.mxu0 %v670
    %1445 = vmatprep.subr.mxu0 %v687
    %1446 = vmatpush1.msra.mxu0 %v686
    %1447 = vmatprep.subr.mxu0 %v703
    %1448 = vmatpush1.msra.mxu0 %v702
    %1449 = vmatprep.subr.mxu0 %v719
    %1450 = vmatpush1.msra.mxu0 %v718
    %1451 = vmatprep.subr.mxu0 %v735
    %1452 = vmatpush1.msra.mxu0 %v734
    %1453 = vmatprep.subr.mxu0 %v751
    %1454 = vmatpush1.msra.mxu0 %v750
    %1455 = vmatprep.subr.mxu0 %v767
    %1456 = vmatpush1.msra.mxu0 %v766
    %1457 = vmatprep.subr.mxu0 %v783
    %1458 = vmatpush1.msra.mxu0 %v782
    %1459 = vmatprep.subr.mxu0 %v799
    %1460 = vmatpush1.msra.mxu0 %v798
    %1461 = vmatprep.subr.mxu0 %v815
    %1462 = vmatpush1.msra.mxu0 %v814
    %1463 = vmatprep.subr.mxu0 %v831
    %1464 = vmatpush1.msra.mxu0 %v830
    %1465 = vmatprep.subr.mxu0 %v847
    %1466 = vmatpush1.msra.mxu0 %v846
    %1467 = vmatprep.subr.mxu0 %v863
    %1468 = vmatpush1.msra.mxu0 %v862
    %1469 = vmatprep.subr.mxu0 %v879
    %1470 = vmatpush1.msra.mxu0 %v878
    %1471 = vmatprep.subr.mxu0 %v895
    %1472 = vmatpush1.msra.mxu0 %v894
    %1473 = vmatprep.subr.mxu0 %v911
    %1474 = vmatpush1.msra.mxu0 %v910
    %1475 = vmatprep.subr.mxu0 %v927
    %1476 = vmatpush1.msra.mxu0 %v926
    %1477 = vmatprep.subr.mxu0 %v943
    %1478 = vmatpush1.msra.mxu0 %v942
    %1479 = vmatprep.subr.mxu0 %v959
    %1480 = vmatpush1.msra.mxu0 %v958
    %1481 = vmatprep.subr.mxu0 %v975
    %1482 = vmatpush1.msra.mxu0 %v974
    %1483 = vmatprep.subr.mxu0 %v991
    %1484 = vmatpush1.msra.mxu0 %v990
    %1485 = vmatprep.subr.mxu0 %v1007
    %1486 = vmatpush1.msra.mxu0 %v1006
    %1487 = vmatprep.subr.mxu0 %v1023
    %1488 = vmatpush1.msra.mxu0 %v1022
    %1489 = vmatprep.subr.mxu0 %v1039
    %1490 = vmatpush1.msra.mxu0 %v1038
    %1491 = vmatprep.mubr.f32.mxu0 %v1067
    %1492 = vmatmul.mubr.f32.gmra.mrb[0].mxu0 %v1065
    %v1493 = vpop.f32.mrb[0].mxu0
    %v1494 = vadd.f32 %v1423, %v1493
    %v1495 = vpop.f32.mrb[0].mxu0
    %v1496 = vadd.f32 %v1425, %v1495
    %1497 = vdwg.mxu0
    %1498 = vmatprep.subr.mxu0 %v33
    %1499 = vmatpush1.msra.mxu0 %v32
    %1500 = vmatprep.subr.mxu0 %v49
    %1501 = vmatpush1.msra.mxu0 %v48
    %1502 = vmatprep.subr.mxu0 %v65
    %1503 = vmatpush1.msra.mxu0 %v64
    %1504 = vmatprep.subr.mxu0 %v81
    %1505 = vmatpush1.msra.mxu0 %v80
    %1506 = vmatprep.subr.mxu0 %v97
    %1507 = vmatpush1.msra.mxu0 %v96
    %1508 = vmatprep.subr.mxu0 %v113
    %1509 = vmatpush1.msra.mxu0 %v112
    %1510 = vmatprep.subr.mxu0 %v129
    %1511 = vmatpush1.msra.mxu0 %v128
    %1512 = vmatprep.subr.mxu0 %v145
    %1513 = vmatpush1.msra.mxu0 %v144
    %1514 = vmatprep.subr.mxu0 %v161
    %1515 = vmatpush1.msra.mxu0 %v160
    %1516 = vmatprep.subr.mxu0 %v177
    %1517 = vmatpush1.msra.mxu0 %v176
    %1518 = vmatprep.subr.mxu0 %v193
    %1519 = vmatpush1.msra.mxu0 %v192
    %1520 = vmatprep.subr.mxu0 %v209
    %1521 = vmatpush1.msra.mxu0 %v208
    %1522 = vmatprep.subr.mxu0 %v225
    %1523 = vmatpush1.msra.mxu0 %v224
    %1524 = vmatprep.subr.mxu0 %v241
    %1525 = vmatpush1.msra.mxu0 %v240
    %1526 = vmatprep.subr.mxu0 %v257
    %1527 = vmatpush1.msra.mxu0 %v256
    %1528 = vmatprep.subr.mxu0 %v273
    %1529 = vmatpush1.msra.mxu0 %v272
    %1530 = vmatprep.subr.mxu0 %v289
    %1531 = vmatpush1.msra.mxu0 %v288
    %1532 = vmatprep.subr.mxu0 %v305
    %1533 = vmatpush1.msra.mxu0 %v304
    %1534 = vmatprep.subr.mxu0 %v321
    %1535 = vmatpush1.msra.mxu0 %v320
    %1536 = vmatprep.subr.mxu0 %v337
    %1537 = vmatpush1.msra.mxu0 %v336
    %1538 = vmatprep.subr.mxu0 %v353
    %1539 = vmatpush1.msra.mxu0 %v352
    %1540 = vmatprep.subr.mxu0 %v369
    %1541 = vmatpush1.msra.mxu0 %v368
    %1542 = vmatprep.subr.mxu0 %v385
    %1543 = vmatpush1.msra.mxu0 %v384
    %1544 = vmatprep.subr.mxu0 %v401
    %1545 = vmatpush1.msra.mxu0 %v400
    %1546 = vmatprep.subr.mxu0 %v417
    %1547 = vmatpush1.msra.mxu0 %v416
    %1548 = vmatprep.subr.mxu0 %v433
    %1549 = vmatpush1.msra.mxu0 %v432
    %1550 = vmatprep.subr.mxu0 %v449
    %1551 = vmatpush1.msra.mxu0 %v448
    %1552 = vmatprep.subr.mxu0 %v465
    %1553 = vmatpush1.msra.mxu0 %v464
    %1554 = vmatprep.subr.mxu0 %v481
    %1555 = vmatpush1.msra.mxu0 %v480
    %1556 = vmatprep.subr.mxu0 %v497
    %1557 = vmatpush1.msra.mxu0 %v496
    %1558 = vmatprep.subr.mxu0 %v513
    %1559 = vmatpush1.msra.mxu0 %v512
    %1560 = vmatprep.subr.mxu0 %v529
    %1561 = vmatpush1.msra.mxu0 %v528
    %1562 = vmatprep.mubr.f32.mxu0 %v1066
    %1563 = vmatmul.mubr.f32.gmra.mrb[0].mxu0 %v1058
    %v1564 = vpop.f32.mrb[0].mxu0
    %v1565 = vadd.f32 0.0, %v1564
    %v1566 = vpop.f32.mrb[0].mxu0
    %v1567 = vadd.f32 0.0, %v1566
    %1568 = vdwg.mxu0
    %1569 = vmatprep.subr.mxu0 %v545
    %1570 = vmatpush1.msra.mxu0 %v544
    %1571 = vmatprep.subr.mxu0 %v561
    %1572 = vmatpush1.msra.mxu0 %v560
    %1573 = vmatprep.subr.mxu0 %v577
    %1574 = vmatpush1.msra.mxu0 %v576
    %1575 = vmatprep.subr.mxu0 %v593
    %1576 = vmatpush1.msra.mxu0 %v592
    %1577 = vmatprep.subr.mxu0 %v609
    %1578 = vmatpush1.msra.mxu0 %v608
    %1579 = vmatprep.subr.mxu0 %v625
    %1580 = vmatpush1.msra.mxu0 %v624
    %1581 = vmatprep.subr.mxu0 %v641
    %1582 = vmatpush1.msra.mxu0 %v640
    %1583 = vmatprep.subr.mxu0 %v657
    %1584 = vmatpush1.msra.mxu0 %v656
    %1585 = vmatprep.subr.mxu0 %v673
    %1586 = vmatpush1.msra.mxu0 %v672
    %1587 = vmatprep.subr.mxu0 %v689
    %1588 = vmatpush1.msra.mxu0 %v688
    %1589 = vmatprep.subr.mxu0 %v705
    %1590 = vmatpush1.msra.mxu0 %v704
    %1591 = vmatprep.subr.mxu0 %v721
    %1592 = vmatpush1.msra.mxu0 %v720
    %1593 = vmatprep.subr.mxu0 %v737
    %1594 = vmatpush1.msra.mxu0 %v736
    %1595 = vmatprep.subr.mxu0 %v753
    %1596 = vmatpush1.msra.mxu0 %v752
    %1597 = vmatprep.subr.mxu0 %v769
    %1598 = vmatpush1.msra.mxu0 %v768
    %1599 = vmatprep.subr.mxu0 %v785
    %1600 = vmatpush1.msra.mxu0 %v784
    %1601 = vmatprep.subr.mxu0 %v801
    %1602 = vmatpush1.msra.mxu0 %v800
    %1603 = vmatprep.subr.mxu0 %v817
    %1604 = vmatpush1.msra.mxu0 %v816
    %1605 = vmatprep.subr.mxu0 %v833
    %1606 = vmatpush1.msra.mxu0 %v832
    %1607 = vmatprep.subr.mxu0 %v849
    %1608 = vmatpush1.msra.mxu0 %v848
    %1609 = vmatprep.subr.mxu0 %v865
    %1610 = vmatpush1.msra.mxu0 %v864
    %1611 = vmatprep.subr.mxu0 %v881
    %1612 = vmatpush1.msra.mxu0 %v880
    %1613 = vmatprep.subr.mxu0 %v897
    %1614 = vmatpush1.msra.mxu0 %v896
    %1615 = vmatprep.subr.mxu0 %v913
    %1616 = vmatpush1.msra.mxu0 %v912
    %1617 = vmatprep.subr.mxu0 %v929
    %1618 = vmatpush1.msra.mxu0 %v928
    %1619 = vmatprep.subr.mxu0 %v945
    %1620 = vmatpush1.msra.mxu0 %v944
    %1621 = vmatprep.subr.mxu0 %v961
    %1622 = vmatpush1.msra.mxu0 %v960
    %1623 = vmatprep.subr.mxu0 %v977
    %1624 = vmatpush1.msra.mxu0 %v976
    %1625 = vmatprep.subr.mxu0 %v993
    %1626 = vmatpush1.msra.mxu0 %v992
    %1627 = vmatprep.subr.mxu0 %v1009
    %1628 = vmatpush1.msra.mxu0 %v1008
    %1629 = vmatprep.subr.mxu0 %v1025
    %1630 = vmatpush1.msra.mxu0 %v1024
    %1631 = vmatprep.subr.mxu0 %v1041
    %1632 = vmatpush1.msra.mxu0 %v1040
    %1633 = vmatprep.mubr.f32.mxu0 %v1067
    %1634 = vmatmul.mubr.f32.gmra.mrb[0].mxu0 %v1065
    %v1635 = vpop.f32.mrb[0].mxu0
    %v1636 = vadd.f32 %v1565, %v1635
    %v1637 = vpop.f32.mrb[0].mxu0
    %v1638 = vadd.f32 %v1567, %v1637
    %1639 = vdwg.mxu0
    %1640 = vmatprep.subr.mxu0 %v35
    %1641 = vmatpush1.msra.mxu0 %v34
    %1642 = vmatprep.subr.mxu0 %v51
    %1643 = vmatpush1.msra.mxu0 %v50
    %1644 = vmatprep.subr.mxu0 %v67
    %1645 = vmatpush1.msra.mxu0 %v66
    %1646 = vmatprep.subr.mxu0 %v83
    %1647 = vmatpush1.msra.mxu0 %v82
    %1648 = vmatprep.subr.mxu0 %v99
    %1649 = vmatpush1.msra.mxu0 %v98
    %1650 = vmatprep.subr.mxu0 %v115
    %1651 = vmatpush1.msra.mxu0 %v114
    %1652 = vmatprep.subr.mxu0 %v131
    %1653 = vmatpush1.msra.mxu0 %v130
    %1654 = vmatprep.subr.mxu0 %v147
    %1655 = vmatpush1.msra.mxu0 %v146
    %1656 = vmatprep.subr.mxu0 %v163
    %1657 = vmatpush1.msra.mxu0 %v162
    %1658 = vmatprep.subr.mxu0 %v179
    %1659 = vmatpush1.msra.mxu0 %v178
    %1660 = vmatprep.subr.mxu0 %v195
    %1661 = vmatpush1.msra.mxu0 %v194
    %1662 = vmatprep.subr.mxu0 %v211
    %1663 = vmatpush1.msra.mxu0 %v210
    %1664 = vmatprep.subr.mxu0 %v227
    %1665 = vmatpush1.msra.mxu0 %v226
    %1666 = vmatprep.subr.mxu0 %v243
    %1667 = vmatpush1.msra.mxu0 %v242
    %1668 = vmatprep.subr.mxu0 %v259
    %1669 = vmatpush1.msra.mxu0 %v258
    %1670 = vmatprep.subr.mxu0 %v275
    %1671 = vmatpush1.msra.mxu0 %v274
    %1672 = vmatprep.subr.mxu0 %v291
    %1673 = vmatpush1.msra.mxu0 %v290
    %1674 = vmatprep.subr.mxu0 %v307
    %1675 = vmatpush1.msra.mxu0 %v306
    %1676 = vmatprep.subr.mxu0 %v323
    %1677 = vmatpush1.msra.mxu0 %v322
    %1678 = vmatprep.subr.mxu0 %v339
    %1679 = vmatpush1.msra.mxu0 %v338
    %1680 = vmatprep.subr.mxu0 %v355
    %1681 = vmatpush1.msra.mxu0 %v354
    %1682 = vmatprep.subr.mxu0 %v371
    %1683 = vmatpush1.msra.mxu0 %v370
    %1684 = vmatprep.subr.mxu0 %v387
    %1685 = vmatpush1.msra.mxu0 %v386
    %1686 = vmatprep.subr.mxu0 %v403
    %1687 = vmatpush1.msra.mxu0 %v402
    %1688 = vmatprep.subr.mxu0 %v419
    %1689 = vmatpush1.msra.mxu0 %v418
    %1690 = vmatprep.subr.mxu0 %v435
    %1691 = vmatpush1.msra.mxu0 %v434
    %1692 = vmatprep.subr.mxu0 %v451
    %1693 = vmatpush1.msra.mxu0 %v450
    %1694 = vmatprep.subr.mxu0 %v467
    %1695 = vmatpush1.msra.mxu0 %v466
    %1696 = vmatprep.subr.mxu0 %v483
    %1697 = vmatpush1.msra.mxu0 %v482
    %1698 = vmatprep.subr.mxu0 %v499
    %1699 = vmatpush1.msra.mxu0 %v498
    %1700 = vmatprep.subr.mxu0 %v515
    %1701 = vmatpush1.msra.mxu0 %v514
    %1702 = vmatprep.subr.mxu0 %v531
    %1703 = vmatpush1.msra.mxu0 %v530
    %1704 = vmatprep.mubr.f32.mxu0 %v1066
    %1705 = vmatmul.mubr.f32.gmra.mrb[0].mxu0 %v1058
    %v1706 = vpop.f32.mrb[0].mxu0
    %v1707 = vadd.f32 0.0, %v1706
    %v1708 = vpop.f32.mrb[0].mxu0
    %v1709 = vadd.f32 0.0, %v1708
    %1710 = vdwg.mxu0
    %1711 = vmatprep.subr.mxu0 %v547
    %1712 = vmatpush1.msra.mxu0 %v546
    %1713 = vmatprep.subr.mxu0 %v563
    %1714 = vmatpush1.msra.mxu0 %v562
    %1715 = vmatprep.subr.mxu0 %v579
    %1716 = vmatpush1.msra.mxu0 %v578
    %1717 = vmatprep.subr.mxu0 %v595
    %1718 = vmatpush1.msra.mxu0 %v594
    %1719 = vmatprep.subr.mxu0 %v611
    %1720 = vmatpush1.msra.mxu0 %v610
    %1721 = vmatprep.subr.mxu0 %v627
    %1722 = vmatpush1.msra.mxu0 %v626
    %1723 = vmatprep.subr.mxu0 %v643
    %1724 = vmatpush1.msra.mxu0 %v642
    %1725 = vmatprep.subr.mxu0 %v659
    %1726 = vmatpush1.msra.mxu0 %v658
    %1727 = vmatprep.subr.mxu0 %v675
    %1728 = vmatpush1.msra.mxu0 %v674
    %1729 = vmatprep.subr.mxu0 %v691
    %1730 = vmatpush1.msra.mxu0 %v690
    %1731 = vmatprep.subr.mxu0 %v707
    %1732 = vmatpush1.msra.mxu0 %v706
    %1733 = vmatprep.subr.mxu0 %v723
    %1734 = vmatpush1.msra.mxu0 %v722
    %1735 = vmatprep.subr.mxu0 %v739
    %1736 = vmatpush1.msra.mxu0 %v738
    %1737 = vmatprep.subr.mxu0 %v755
    %1738 = vmatpush1.msra.mxu0 %v754
    %1739 = vmatprep.subr.mxu0 %v771
    %1740 = vmatpush1.msra.mxu0 %v770
    %1741 = vmatprep.subr.mxu0 %v787
    %1742 = vmatpush1.msra.mxu0 %v786
    %1743 = vmatprep.subr.mxu0 %v803
    %1744 = vmatpush1.msra.mxu0 %v802
    %1745 = vmatprep.subr.mxu0 %v819
    %1746 = vmatpush1.msra.mxu0 %v818
    %1747 = vmatprep.subr.mxu0 %v835
    %1748 = vmatpush1.msra.mxu0 %v834
    %1749 = vmatprep.subr.mxu0 %v851
    %1750 = vmatpush1.msra.mxu0 %v850
    %1751 = vmatprep.subr.mxu0 %v867
    %1752 = vmatpush1.msra.mxu0 %v866
    %1753 = vmatprep.subr.mxu0 %v883
    %1754 = vmatpush1.msra.mxu0 %v882
    %1755 = vmatprep.subr.mxu0 %v899
    %1756 = vmatpush1.msra.mxu0 %v898
    %1757 = vmatprep.subr.mxu0 %v915
    %1758 = vmatpush1.msra.mxu0 %v914
    %1759 = vmatprep.subr.mxu0 %v931
    %1760 = vmatpush1.msra.mxu0 %v930
    %1761 = vmatprep.subr.mxu0 %v947
    %1762 = vmatpush1.msra.mxu0 %v946
    %1763 = vmatprep.subr.mxu0 %v963
    %1764 = vmatpush1.msra.mxu0 %v962
    %1765 = vmatprep.subr.mxu0 %v979
    %1766 = vmatpush1.msra.mxu0 %v978
    %1767 = vmatprep.subr.mxu0 %v995
    %1768 = vmatpush1.msra.mxu0 %v994
    %1769 = vmatprep.subr.mxu0 %v1011
    %1770 = vmatpush1.msra.mxu0 %v1010
    %1771 = vmatprep.subr.mxu0 %v1027
    %1772 = vmatpush1.msra.mxu0 %v1026
    %1773 = vmatprep.subr.mxu0 %v1043
    %1774 = vmatpush1.msra.mxu0 %v1042
    %1775 = vmatprep.mubr.f32.mxu0 %v1067
    %1776 = vmatmul.mubr.f32.gmra.mrb[0].mxu0 %v1065
    %v1777 = vpop.f32.mrb[0].mxu0
    %v1778 = vadd.f32 %v1707, %v1777
    %v1779 = vpop.f32.mrb[0].mxu0
    %v1780 = vadd.f32 %v1709, %v1779
    %1781 = vdwg.mxu0
    %1782 = vmatprep.subr.mxu0 %v37
    %1783 = vmatpush1.msra.mxu0 %v36
    %1784 = vmatprep.subr.mxu0 %v53
    %1785 = vmatpush1.msra.mxu0 %v52
    %1786 = vmatprep.subr.mxu0 %v69
    %1787 = vmatpush1.msra.mxu0 %v68
    %1788 = vmatprep.subr.mxu0 %v85
    %1789 = vmatpush1.msra.mxu0 %v84
    %1790 = vmatprep.subr.mxu0 %v101
    %1791 = vmatpush1.msra.mxu0 %v100
    %1792 = vmatprep.subr.mxu0 %v117
    %1793 = vmatpush1.msra.mxu0 %v116
    %1794 = vmatprep.subr.mxu0 %v133
    %1795 = vmatpush1.msra.mxu0 %v132
    %1796 = vmatprep.subr.mxu0 %v149
    %1797 = vmatpush1.msra.mxu0 %v148
    %1798 = vmatprep.subr.mxu0 %v165
    %1799 = vmatpush1.msra.mxu0 %v164
    %1800 = vmatprep.subr.mxu0 %v181
    %1801 = vmatpush1.msra.mxu0 %v180
    %1802 = vmatprep.subr.mxu0 %v197
    %1803 = vmatpush1.msra.mxu0 %v196
    %1804 = vmatprep.subr.mxu0 %v213
    %1805 = vmatpush1.msra.mxu0 %v212
    %1806 = vmatprep.subr.mxu0 %v229
    %1807 = vmatpush1.msra.mxu0 %v228
    %1808 = vmatprep.subr.mxu0 %v245
    %1809 = vmatpush1.msra.mxu0 %v244
    %1810 = vmatprep.subr.mxu0 %v261
    %1811 = vmatpush1.msra.mxu0 %v260
    %1812 = vmatprep.subr.mxu0 %v277
    %1813 = vmatpush1.msra.mxu0 %v276
    %1814 = vmatprep.subr.mxu0 %v293
    %1815 = vmatpush1.msra.mxu0 %v292
    %1816 = vmatprep.subr.mxu0 %v309
    %1817 = vmatpush1.msra.mxu0 %v308
    %1818 = vmatprep.subr.mxu0 %v325
    %1819 = vmatpush1.msra.mxu0 %v324
    %1820 = vmatprep.subr.mxu0 %v341
    %1821 = vmatpush1.msra.mxu0 %v340
    %1822 = vmatprep.subr.mxu0 %v357
    %1823 = vmatpush1.msra.mxu0 %v356
    %1824 = vmatprep.subr.mxu0 %v373
    %1825 = vmatpush1.msra.mxu0 %v372
    %1826 = vmatprep.subr.mxu0 %v389
    %1827 = vmatpush1.msra.mxu0 %v388
    %1828 = vmatprep.subr.mxu0 %v405
    %1829 = vmatpush1.msra.mxu0 %v404
    %1830 = vmatprep.subr.mxu0 %v421
    %1831 = vmatpush1.msra.mxu0 %v420
    %1832 = vmatprep.subr.mxu0 %v437
    %1833 = vmatpush1.msra.mxu0 %v436
    %1834 = vmatprep.subr.mxu0 %v453
    %1835 = vmatpush1.msra.mxu0 %v452
    %1836 = vmatprep.subr.mxu0 %v469
    %1837 = vmatpush1.msra.mxu0 %v468
    %1838 = vmatprep.subr.mxu0 %v485
    %1839 = vmatpush1.msra.mxu0 %v484
    %1840 = vmatprep.subr.mxu0 %v501
    %1841 = vmatpush1.msra.mxu0 %v500
    %1842 = vmatprep.subr.mxu0 %v517
    %1843 = vmatpush1.msra.mxu0 %v516
    %1844 = vmatprep.subr.mxu0 %v533
    %1845 = vmatpush1.msra.mxu0 %v532
    %1846 = vmatprep.mubr.f32.mxu0 %v1066
    %1847 = vmatmul.mubr.f32.gmra.mrb[0].mxu0 %v1058
    %v1848 = vpop.f32.mrb[0].mxu0
    %v1849 = vadd.f32 0.0, %v1848
    %v1850 = vpop.f32.mrb[0].mxu0
    %v1851 = vadd.f32 0.0, %v1850
    %1852 = vdwg.mxu0
    %1853 = vmatprep.subr.mxu0 %v549
    %1854 = vmatpush1.msra.mxu0 %v548
    %1855 = vmatprep.subr.mxu0 %v565
    %1856 = vmatpush1.msra.mxu0 %v564
    %1857 = vmatprep.subr.mxu0 %v581
    %1858 = vmatpush1.msra.mxu0 %v580
    %1859 = vmatprep.subr.mxu0 %v597
    %1860 = vmatpush1.msra.mxu0 %v596
    %1861 = vmatprep.subr.mxu0 %v613
    %1862 = vmatpush1.msra.mxu0 %v612
    %1863 = vmatprep.subr.mxu0 %v629
    %1864 = vmatpush1.msra.mxu0 %v628
    %1865 = vmatprep.subr.mxu0 %v645
    %1866 = vmatpush1.msra.mxu0 %v644
    %1867 = vmatprep.subr.mxu0 %v661
    %1868 = vmatpush1.msra.mxu0 %v660
    %1869 = vmatprep.subr.mxu0 %v677
    %1870 = vmatpush1.msra.mxu0 %v676
    %1871 = vmatprep.subr.mxu0 %v693
    %1872 = vmatpush1.msra.mxu0 %v692
    %1873 = vmatprep.subr.mxu0 %v709
    %1874 = vmatpush1.msra.mxu0 %v708
    %1875 = vmatprep.subr.mxu0 %v725
    %1876 = vmatpush1.msra.mxu0 %v724
    %1877 = vmatprep.subr.mxu0 %v741
    %1878 = vmatpush1.msra.mxu0 %v740
    %1879 = vmatprep.subr.mxu0 %v757
    %1880 = vmatpush1.msra.mxu0 %v756
    %1881 = vmatprep.subr.mxu0 %v773
    %1882 = vmatpush1.msra.mxu0 %v772
    %1883 = vmatprep.subr.mxu0 %v789
    %1884 = vmatpush1.msra.mxu0 %v788
    %1885 = vmatprep.subr.mxu0 %v805
    %1886 = vmatpush1.msra.mxu0 %v804
    %1887 = vmatprep.subr.mxu0 %v821
    %1888 = vmatpush1.msra.mxu0 %v820
    %1889 = vmatprep.subr.mxu0 %v837
    %1890 = vmatpush1.msra.mxu0 %v836
    %1891 = vmatprep.subr.mxu0 %v853
    %1892 = vmatpush1.msra.mxu0 %v852
    %1893 = vmatprep.subr.mxu0 %v869
    %1894 = vmatpush1.msra.mxu0 %v868
    %1895 = vmatprep.subr.mxu0 %v885
    %1896 = vmatpush1.msra.mxu0 %v884
    %1897 = vmatprep.subr.mxu0 %v901
    %1898 = vmatpush1.msra.mxu0 %v900
    %1899 = vmatprep.subr.mxu0 %v917
    %1900 = vmatpush1.msra.mxu0 %v916
    %1901 = vmatprep.subr.mxu0 %v933
    %1902 = vmatpush1.msra.mxu0 %v932
    %1903 = vmatprep.subr.mxu0 %v949
    %1904 = vmatpush1.msra.mxu0 %v948
    %1905 = vmatprep.subr.mxu0 %v965
    %1906 = vmatpush1.msra.mxu0 %v964
    %1907 = vmatprep.subr.mxu0 %v981
    %1908 = vmatpush1.msra.mxu0 %v980
    %1909 = vmatprep.subr.mxu0 %v997
    %1910 = vmatpush1.msra.mxu0 %v996
    %1911 = vmatprep.subr.mxu0 %v1013
    %1912 = vmatpush1.msra.mxu0 %v1012
    %1913 = vmatprep.subr.mxu0 %v1029
    %1914 = vmatpush1.msra.mxu0 %v1028
    %1915 = vmatprep.subr.mxu0 %v1045
    %1916 = vmatpush1.msra.mxu0 %v1044
    %1917 = vmatprep.mubr.f32.mxu0 %v1067
    %1918 = vmatmul.mubr.f32.gmra.mrb[0].mxu0 %v1065
    %v1919 = vpop.f32.mrb[0].mxu0
    %v1920 = vadd.f32 %v1849, %v1919
    %v1921 = vpop.f32.mrb[0].mxu0
    %v1922 = vadd.f32 %v1851, %v1921
    %1923 = vdwg.mxu0
    %1924 = vmatprep.subr.mxu0 %v39
    %1925 = vmatpush1.msra.mxu0 %v38
    %1926 = vmatprep.subr.mxu0 %v55
    %1927 = vmatpush1.msra.mxu0 %v54
    %1928 = vmatprep.subr.mxu0 %v71
    %1929 = vmatpush1.msra.mxu0 %v70
    %1930 = vmatprep.subr.mxu0 %v87
    %1931 = vmatpush1.msra.mxu0 %v86
    %1932 = vmatprep.subr.mxu0 %v103
    %1933 = vmatpush1.msra.mxu0 %v102
    %1934 = vmatprep.subr.mxu0 %v119
    %1935 = vmatpush1.msra.mxu0 %v118
    %1936 = vmatprep.subr.mxu0 %v135
    %1937 = vmatpush1.msra.mxu0 %v134
    %1938 = vmatprep.subr.mxu0 %v151
    %1939 = vmatpush1.msra.mxu0 %v150
    %1940 = vmatprep.subr.mxu0 %v167
    %1941 = vmatpush1.msra.mxu0 %v166
    %1942 = vmatprep.subr.mxu0 %v183
    %1943 = vmatpush1.msra.mxu0 %v182
    %1944 = vmatprep.subr.mxu0 %v199
    %1945 = vmatpush1.msra.mxu0 %v198
    %1946 = vmatprep.subr.mxu0 %v215
    %1947 = vmatpush1.msra.mxu0 %v214
    %1948 = vmatprep.subr.mxu0 %v231
    %1949 = vmatpush1.msra.mxu0 %v230
    %1950 = vmatprep.subr.mxu0 %v247
    %1951 = vmatpush1.msra.mxu0 %v246
    %1952 = vmatprep.subr.mxu0 %v263
    %1953 = vmatpush1.msra.mxu0 %v262
    %1954 = vmatprep.subr.mxu0 %v279
    %1955 = vmatpush1.msra.mxu0 %v278
    %1956 = vmatprep.subr.mxu0 %v295
    %1957 = vmatpush1.msra.mxu0 %v294
    %1958 = vmatprep.subr.mxu0 %v311
    %1959 = vmatpush1.msra.mxu0 %v310
    %1960 = vmatprep.subr.mxu0 %v327
    %1961 = vmatpush1.msra.mxu0 %v326
    %1962 = vmatprep.subr.mxu0 %v343
    %1963 = vmatpush1.msra.mxu0 %v342
    %1964 = vmatprep.subr.mxu0 %v359
    %1965 = vmatpush1.msra.mxu0 %v358
    %1966 = vmatprep.subr.mxu0 %v375
    %1967 = vmatpush1.msra.mxu0 %v374
    %1968 = vmatprep.subr.mxu0 %v391
    %1969 = vmatpush1.msra.mxu0 %v390
    %1970 = vmatprep.subr.mxu0 %v407
    %1971 = vmatpush1.msra.mxu0 %v406
    %1972 = vmatprep.subr.mxu0 %v423
    %1973 = vmatpush1.msra.mxu0 %v422
    %1974 = vmatprep.subr.mxu0 %v439
    %1975 = vmatpush1.msra.mxu0 %v438
    %1976 = vmatprep.subr.mxu0 %v455
    %1977 = vmatpush1.msra.mxu0 %v454
    %1978 = vmatprep.subr.mxu0 %v471
    %1979 = vmatpush1.msra.mxu0 %v470
    %1980 = vmatprep.subr.mxu0 %v487
    %1981 = vmatpush1.msra.mxu0 %v486
    %1982 = vmatprep.subr.mxu0 %v503
    %1983 = vmatpush1.msra.mxu0 %v502
    %1984 = vmatprep.subr.mxu0 %v519
    %1985 = vmatpush1.msra.mxu0 %v518
    %1986 = vmatprep.subr.mxu0 %v535
    %1987 = vmatpush1.msra.mxu0 %v534
    %1988 = vmatprep.mubr.f32.mxu0 %v1066
    %1989 = vmatmul.mubr.f32.gmra.mrb[0].mxu0 %v1058
    %v1990 = vpop.f32.mrb[0].mxu0
    %v1991 = vadd.f32 0.0, %v1990
    %v1992 = vpop.f32.mrb[0].mxu0
    %v1993 = vadd.f32 0.0, %v1992
    %1994 = vdwg.mxu0
    %1995 = vmatprep.subr.mxu0 %v551
    %1996 = vmatpush1.msra.mxu0 %v550
    %1997 = vmatprep.subr.mxu0 %v567
    %1998 = vmatpush1.msra.mxu0 %v566
    %1999 = vmatprep.subr.mxu0 %v583
    %2000 = vmatpush1.msra.mxu0 %v582
    %2001 = vmatprep.subr.mxu0 %v599
    %2002 = vmatpush1.msra.mxu0 %v598
    %2003 = vmatprep.subr.mxu0 %v615
    %2004 = vmatpush1.msra.mxu0 %v614
    %2005 = vmatprep.subr.mxu0 %v631
    %2006 = vmatpush1.msra.mxu0 %v630
    %2007 = vmatprep.subr.mxu0 %v647
    %2008 = vmatpush1.msra.mxu0 %v646
    %2009 = vmatprep.subr.mxu0 %v663
    %2010 = vmatpush1.msra.mxu0 %v662
    %2011 = vmatprep.subr.mxu0 %v679
    %2012 = vmatpush1.msra.mxu0 %v678
    %2013 = vmatprep.subr.mxu0 %v695
    %2014 = vmatpush1.msra.mxu0 %v694
    %2015 = vmatprep.subr.mxu0 %v711
    %2016 = vmatpush1.msra.mxu0 %v710
    %2017 = vmatprep.subr.mxu0 %v727
    %2018 = vmatpush1.msra.mxu0 %v726
    %2019 = vmatprep.subr.mxu0 %v743
    %2020 = vmatpush1.msra.mxu0 %v742
    %2021 = vmatprep.subr.mxu0 %v759
    %2022 = vmatpush1.msra.mxu0 %v758
    %2023 = vmatprep.subr.mxu0 %v775
    %2024 = vmatpush1.msra.mxu0 %v774
    %2025 = vmatprep.subr.mxu0 %v791
    %2026 = vmatpush1.msra.mxu0 %v790
    %2027 = vmatprep.subr.mxu0 %v807
    %2028 = vmatpush1.msra.mxu0 %v806
    %2029 = vmatprep.subr.mxu0 %v823
    %2030 = vmatpush1.msra.mxu0 %v822
    %2031 = vmatprep.subr.mxu0 %v839
    %2032 = vmatpush1.msra.mxu0 %v838
    %2033 = vmatprep.subr.mxu0 %v855
    %2034 = vmatpush1.msra.mxu0 %v854
    %2035 = vmatprep.subr.mxu0 %v871
    %2036 = vmatpush1.msra.mxu0 %v870
    %2037 = vmatprep.subr.mxu0 %v887
    %2038 = vmatpush1.msra.mxu0 %v886
    %2039 = vmatprep.subr.mxu0 %v903
    %2040 = vmatpush1.msra.mxu0 %v902
    %2041 = vmatprep.subr.mxu0 %v919
    %2042 = vmatpush1.msra.mxu0 %v918
    %2043 = vmatprep.subr.mxu0 %v935
    %2044 = vmatpush1.msra.mxu0 %v934
    %2045 = vmatprep.subr.mxu0 %v951
    %2046 = vmatpush1.msra.mxu0 %v950
    %2047 = vmatprep.subr.mxu0 %v967
    %2048 = vmatpush1.msra.mxu0 %v966
    %2049 = vmatprep.subr.mxu0 %v983
    %2050 = vmatpush1.msra.mxu0 %v982
    %2051 = vmatprep.subr.mxu0 %v999
    %2052 = vmatpush1.msra.mxu0 %v998
    %2053 = vmatprep.subr.mxu0 %v1015
    %2054 = vmatpush1.msra.mxu0 %v1014
    %2055 = vmatprep.subr.mxu0 %v1031
    %2056 = vmatpush1.msra.mxu0 %v1030
    %2057 = vmatprep.subr.mxu0 %v1047
    %2058 = vmatpush1.msra.mxu0 %v1046
    %2059 = vmatprep.mubr.f32.mxu0 %v1067
    %2060 = vmatmul.mubr.f32.gmra.mrb[0].mxu0 %v1065
    %v2061 = vpop.f32.mrb[0].mxu0
    %v2062 = vadd.f32 %v1991, %v2061
    %v2063 = vpop.f32.mrb[0].mxu0
    %v2064 = vadd.f32 %v1993, %v2063
    %2065 = vdwg.mxu0
    %2066 = vmatprep.subr.mxu0 %v41
    %2067 = vmatpush1.msra.mxu0 %v40
    %2068 = vmatprep.subr.mxu0 %v57
    %2069 = vmatpush1.msra.mxu0 %v56
    %2070 = vmatprep.subr.mxu0 %v73
    %2071 = vmatpush1.msra.mxu0 %v72
    %2072 = vmatprep.subr.mxu0 %v89
    %2073 = vmatpush1.msra.mxu0 %v88
    %2074 = vmatprep.subr.mxu0 %v105
    %2075 = vmatpush1.msra.mxu0 %v104
    %2076 = vmatprep.subr.mxu0 %v121
    %2077 = vmatpush1.msra.mxu0 %v120
    %2078 = vmatprep.subr.mxu0 %v137
    %2079 = vmatpush1.msra.mxu0 %v136
    %2080 = vmatprep.subr.mxu0 %v153
    %2081 = vmatpush1.msra.mxu0 %v152
    %2082 = vmatprep.subr.mxu0 %v169
    %2083 = vmatpush1.msra.mxu0 %v168
    %2084 = vmatprep.subr.mxu0 %v185
    %2085 = vmatpush1.msra.mxu0 %v184
    %2086 = vmatprep.subr.mxu0 %v201
    %2087 = vmatpush1.msra.mxu0 %v200
    %2088 = vmatprep.subr.mxu0 %v217
    %2089 = vmatpush1.msra.mxu0 %v216
    %2090 = vmatprep.subr.mxu0 %v233
    %2091 = vmatpush1.msra.mxu0 %v232
    %2092 = vmatprep.subr.mxu0 %v249
    %2093 = vmatpush1.msra.mxu0 %v248
    %2094 = vmatprep.subr.mxu0 %v265
    %2095 = vmatpush1.msra.mxu0 %v264
    %2096 = vmatprep.subr.mxu0 %v281
    %2097 = vmatpush1.msra.mxu0 %v280
    %2098 = vmatprep.subr.mxu0 %v297
    %2099 = vmatpush1.msra.mxu0 %v296
    %2100 = vmatprep.subr.mxu0 %v313
    %2101 = vmatpush1.msra.mxu0 %v312
    %2102 = vmatprep.subr.mxu0 %v329
    %2103 = vmatpush1.msra.mxu0 %v328
    %2104 = vmatprep.subr.mxu0 %v345
    %2105 = vmatpush1.msra.mxu0 %v344
    %2106 = vmatprep.subr.mxu0 %v361
    %2107 = vmatpush1.msra.mxu0 %v360
    %2108 = vmatprep.subr.mxu0 %v377
    %2109 = vmatpush1.msra.mxu0 %v376
    %2110 = vmatprep.subr.mxu0 %v393
    %2111 = vmatpush1.msra.mxu0 %v392
    %2112 = vmatprep.subr.mxu0 %v409
    %2113 = vmatpush1.msra.mxu0 %v408
    %2114 = vmatprep.subr.mxu0 %v425
    %2115 = vmatpush1.msra.mxu0 %v424
    %2116 = vmatprep.subr.mxu0 %v441
    %2117 = vmatpush1.msra.mxu0 %v440
    %2118 = vmatprep.subr.mxu0 %v457
    %2119 = vmatpush1.msra.mxu0 %v456
    %2120 = vmatprep.subr.mxu0 %v473
    %2121 = vmatpush1.msra.mxu0 %v472
    %2122 = vmatprep.subr.mxu0 %v489
    %2123 = vmatpush1.msra.mxu0 %v488
    %2124 = vmatprep.subr.mxu0 %v505
    %2125 = vmatpush1.msra.mxu0 %v504
    %2126 = vmatprep.subr.mxu0 %v521
    %2127 = vmatpush1.msra.mxu0 %v520
    %2128 = vmatprep.subr.mxu0 %v537
    %2129 = vmatpush1.msra.mxu0 %v536
    %2130 = vmatprep.mubr.f32.mxu0 %v1066
    %2131 = vmatmul.mubr.f32.gmra.mrb[0].mxu0 %v1058
    %v2132 = vpop.f32.mrb[0].mxu0
    %v2133 = vadd.f32 0.0, %v2132
    %v2134 = vpop.f32.mrb[0].mxu0
    %v2135 = vadd.f32 0.0, %v2134
    %2136 = vdwg.mxu0
    %2137 = vmatprep.subr.mxu0 %v553
    %2138 = vmatpush1.msra.mxu0 %v552
    %2139 = vmatprep.subr.mxu0 %v569
    %2140 = vmatpush1.msra.mxu0 %v568
    %2141 = vmatprep.subr.mxu0 %v585
    %2142 = vmatpush1.msra.mxu0 %v584
    %2143 = vmatprep.subr.mxu0 %v601
    %2144 = vmatpush1.msra.mxu0 %v600
    %2145 = vmatprep.subr.mxu0 %v617
    %2146 = vmatpush1.msra.mxu0 %v616
    %2147 = vmatprep.subr.mxu0 %v633
    %2148 = vmatpush1.msra.mxu0 %v632
    %2149 = vmatprep.subr.mxu0 %v649
    %2150 = vmatpush1.msra.mxu0 %v648
    %2151 = vmatprep.subr.mxu0 %v665
    %2152 = vmatpush1.msra.mxu0 %v664
    %2153 = vmatprep.subr.mxu0 %v681
    %2154 = vmatpush1.msra.mxu0 %v680
    %2155 = vmatprep.subr.mxu0 %v697
    %2156 = vmatpush1.msra.mxu0 %v696
    %2157 = vmatprep.subr.mxu0 %v713
    %2158 = vmatpush1.msra.mxu0 %v712
    %2159 = vmatprep.subr.mxu0 %v729
    %2160 = vmatpush1.msra.mxu0 %v728
    %2161 = vmatprep.subr.mxu0 %v745
    %2162 = vmatpush1.msra.mxu0 %v744
    %2163 = vmatprep.subr.mxu0 %v761
    %2164 = vmatpush1.msra.mxu0 %v760
    %2165 = vmatprep.subr.mxu0 %v777
    %2166 = vmatpush1.msra.mxu0 %v776
    %2167 = vmatprep.subr.mxu0 %v793
    %2168 = vmatpush1.msra.mxu0 %v792
    %2169 = vmatprep.subr.mxu0 %v809
    %2170 = vmatpush1.msra.mxu0 %v808
    %2171 = vmatprep.subr.mxu0 %v825
    %2172 = vmatpush1.msra.mxu0 %v824
    %2173 = vmatprep.subr.mxu0 %v841
    %2174 = vmatpush1.msra.mxu0 %v840
    %2175 = vmatprep.subr.mxu0 %v857
    %2176 = vmatpush1.msra.mxu0 %v856
    %2177 = vmatprep.subr.mxu0 %v873
    %2178 = vmatpush1.msra.mxu0 %v872
    %2179 = vmatprep.subr.mxu0 %v889
    %2180 = vmatpush1.msra.mxu0 %v888
    %2181 = vmatprep.subr.mxu0 %v905
    %2182 = vmatpush1.msra.mxu0 %v904
    %2183 = vmatprep.subr.mxu0 %v921
    %2184 = vmatpush1.msra.mxu0 %v920
    %2185 = vmatprep.subr.mxu0 %v937
    %2186 = vmatpush1.msra.mxu0 %v936
    %2187 = vmatprep.subr.mxu0 %v953
    %2188 = vmatpush1.msra.mxu0 %v952
    %2189 = vmatprep.subr.mxu0 %v969
    %2190 = vmatpush1.msra.mxu0 %v968
    %2191 = vmatprep.subr.mxu0 %v985
    %2192 = vmatpush1.msra.mxu0 %v984
    %2193 = vmatprep.subr.mxu0 %v1001
    %2194 = vmatpush1.msra.mxu0 %v1000
    %2195 = vmatprep.subr.mxu0 %v1017
    %2196 = vmatpush1.msra.mxu0 %v1016
    %2197 = vmatprep.subr.mxu0 %v1033
    %2198 = vmatpush1.msra.mxu0 %v1032
    %2199 = vmatprep.subr.mxu0 %v1049
    %2200 = vmatpush1.msra.mxu0 %v1048
    %2201 = vmatprep.mubr.f32.mxu0 %v1067
    %2202 = vmatmul.mubr.f32.gmra.mrb[0].mxu0 %v1065
    %v2203 = vpop.f32.mrb[0].mxu0
    %v2204 = vadd.f32 %v2133, %v2203
    %v2205 = vpop.f32.mrb[0].mxu0
    %v2206 = vadd.f32 %v2135, %v2205
    %2207 = vdwg.mxu0
    %v2224 = vcombine.low %v1210, %v1212
    %v2225 = vcombine.low %v1352, %v1354
    %v2227 = vunpack.c.l.s4 1983009808
    %v2228 = vunpack.c.0.s8 %v2227
    %v2229 = vlaneseq
    %v2230 = vshrl.u32 %v2229, 7
    %v2231 = vsub.s32 %v2228, %v2230
    %v2232 = vrot.slane %v2224, %v2231
    %v2234 = vunpack.c.l.s4 1983009808
    %v2235 = vunpack.c.0.s8 %v2234
    %v2236 = vlaneseq
    %v2237 = vshrl.u32 %v2236, 7
    %v2238 = vsub.s32 %v2235, %v2237
    %v2239 = vrot.slane %v2225, %v2238
    %v2240 = vcombine.low %v2232, %v2239
    %v2241 = vcombine.low %v1494, %v1496
    %v2242 = vcombine.low %v1636, %v1638
    %v2244 = vunpack.c.l.s4 1983009808
    %v2245 = vunpack.c.0.s8 %v2244
    %v2246 = vlaneseq
    %v2247 = vshrl.u32 %v2246, 7
    %v2248 = vsub.s32 %v2245, %v2247
    %v2249 = vrot.slane %v2241, %v2248
    %v2251 = vunpack.c.l.s4 1983009808
    %v2252 = vunpack.c.0.s8 %v2251
    %v2253 = vlaneseq
    %v2254 = vshrl.u32 %v2253, 7
    %v2255 = vsub.s32 %v2252, %v2254
    %v2256 = vrot.slane %v2242, %v2255
    %v2257 = vcombine.low %v2249, %v2256
    %v2258 = vcombine.low %v1778, %v1780
    %v2259 = vcombine.low %v1920, %v1922
    %v2261 = vunpack.c.l.s4 1983009808
    %v2262 = vunpack.c.0.s8 %v2261
    %v2263 = vlaneseq
    %v2264 = vshrl.u32 %v2263, 7
    %v2265 = vsub.s32 %v2262, %v2264
    %v2266 = vrot.slane %v2258, %v2265
    %v2268 = vunpack.c.l.s4 1983009808
    %v2269 = vunpack.c.0.s8 %v2268
    %v2270 = vlaneseq
    %v2271 = vshrl.u32 %v2270, 7
    %v2272 = vsub.s32 %v2269, %v2271
    %v2273 = vrot.slane %v2259, %v2272
    %v2274 = vcombine.low %v2266, %v2273
    %v2275 = vcombine.low %v2062, %v2064
    %v2276 = vcombine.low %v2204, %v2206
    %v2278 = vunpack.c.l.s4 1983009808
    %v2279 = vunpack.c.0.s8 %v2278
    %v2280 = vlaneseq
    %v2281 = vshrl.u32 %v2280, 7
    %v2282 = vsub.s32 %v2279, %v2281
    %v2283 = vrot.slane %v2275, %v2282
    %v2285 = vunpack.c.l.s4 1983009808
    %v2286 = vunpack.c.0.s8 %v2285
    %v2287 = vlaneseq
    %v2288 = vshrl.u32 %v2287, 7
    %v2289 = vsub.s32 %v2286, %v2288
    %v2290 = vrot.slane %v2276, %v2289
    %v2291 = vcombine.low %v2283, %v2290
    %v2296 = vadd.f32 %v22, %v2240
    %v2297 = vadd.f32 %v23, %v2257
    %v2298 = vadd.f32 %v24, %v2274
    %v2299 = vadd.f32 %v25, %v2291
    %v2300 = vxor.u32 %v2296, 2147483648
    %v2301 = vxor.u32 %v2297, 2147483648
    %v2302 = vxor.u32 %v2299, 2147483648
    %v2303 = vmul.f32 %v2300, 1.442695
    %v2304 = vpow.pop %v2303
    %v2305 = vmul.f32 %v2301, 1.442695
    %v2306 = vpow.pop %v2305
    %v2307 = vmul.f32 %v2302, 1.442695
    %v2308 = vpow.pop %v2307
    %v2309 = vadd.f32 %v2304, 1.0
    %v2310 = vadd.f32 %v2306, 1.0
    %v2311 = vadd.f32 %v2308, 1.0
    %v2312 = vrcp.pop %v2309
    %v2313 = vmul.f32 1.0, %v2312
    %v2314 = vrcp.pop %v2310
    %v2315 = vmul.f32 1.0, %v2314
    %v2316 = vrcp.pop %v2311
    %v2317 = vmul.f32 1.0, %v2316
    %v2318 = vtanh.pop %v2298
    %v2319 = vmul.f32 %v2315, %v18
    %v2320 = vmul.f32 %v2313, %v2318
    %v2321 = vadd.f32 %v2319, %v2320
    %v2322 = vtanh.pop %v2321
    %v2323 = vmul.f32 %v2317, %v2322
    %s2324 = smul.u32 %s12, 4
    %s2325 = smul.addr %s2324, 2
    %s2326 = scalar_lea.vmem %s2, %s2325
    %2327 = vst [vmem:[%s2326] sm:$0xff] %v2323
  $region14: #{forward.10} parent=0 // loop_footer
    %s16 = sadd.s32 1, %s12
  $region15: #{forward.10} parent=0 // loop_footer_branch
    %11 = sbr.rel target = $region11
  $region16: #{forward.10} parent=0 // loop_exit
    _
  // Predicated region
  $region17: #{forward.10} parent=0 // pred_check
    _
  $region18: #{forward.10} parent=0 // pred_check_branch
    %2329 = sbr.rel (0) target = $region20
  $region19: #{forward.10} parent=0 // pred_region
    _
  $region20: #{forward.10} parent=0 // pred_fallthru
    _
  // Predicated region
  $region21: #{forward.10} parent=0 // pred_check
    _
  $region22: #{forward.10} parent=0 // pred_check_branch
    %2331 = sbr.rel (0) target = $region24
  $region23: #{forward.10} parent=0 // pred_region
    _
  $region24: #{forward.10} parent=0 // pred_fallthru
    _

// kernel: forward.13
$region0: #{forward.13}
  #allocation0 [shape = 'u32[]', space=smem, size = 0x4, offset = 0x4, fixed_abs, tag = 'smem constant byte address 0x4 - core index']
  #allocation1 [shape = 'u32[144,128]{1,0:T(1,128)}', space=vmem, size = 0x12000, scoped, tag = 'internal scratch']
  %s0 = inlined_call_operand.vmem [shape: f32[16,512], index: 0, kind: input, shape index: {}]
  %s1 = inlined_call_operand.vmem [shape: f32[16,512], index: 1, kind: input, shape index: {}]
  %s2 = inlined_call_operand.vmem [shape: f32[512,128], index: 2, kind: input, shape index: {}]
  %s3 = inlined_call_operand.vmem [shape: f32[1,128], index: 3, kind: input, shape index: {}]
  %s4 = inlined_call_operand.vmem [shape: f32[512,128], index: 4, kind: input, shape index: {}]
  %s5 = inlined_call_operand.vmem [shape: f32[1,128], index: 5, kind: input, shape index: {}]
  %s6 = inlined_call_operand.vmem [shape: f32[16,128], index: 6, kind: input, shape index: {}]
  %s7 = inlined_call_operand.hbm [shape: f32[16,128], index: 7, kind: output, shape index: {0}]
  %s8 = inlined_call_operand.vmem [shape: f32[16,128], index: 8, kind: output, shape index: {1}]
  %9 = xla_tuple %s7, %s8
  %s10 = sld [smem:[#allocation0]]
  $region46: #{forward.13} parent=0
    _
  %s12 = ssub.s32 1, %s10
  %s13 = scalar_select 0, %s12, %s10
  $region1: #{forward.13} parent=0
    #allocation2 [shape = 'u8[8192]{0}', space=vmem, size = 0x2000, scoped, tag = 'output window, operand 0, single buffered']
    #allocation3 [shape = 's32[1]{0}', space=sflag, size = 0x4, scoped, tag = 'scoped memory for forward.13']
    %14 = vsyncpa [#allocation3], 0
    // Predicated region
    $region2: #{forward.13} parent=1 // pred_check
      _
    $region3: #{forward.13} parent=1 // pred_check_branch
      %16 = sbr.rel (0) target = $region5
    $region4: #{forward.13} parent=1 // pred_region
      _
    $region5: #{forward.13} parent=1 // pred_fallthru
      _
    // Predicated region
    $region6: #{forward.13} parent=1 // pred_check
      _
    $region7: #{forward.13} parent=1 // pred_check_branch
      %18 = sbr.rel (0) target = $region9
    $region8: #{forward.13} parent=1 // pred_region
      _
    $region9: #{forward.13} parent=1 // pred_fallthru
      _
    // Predicated region
    $region10: #{forward.13} parent=1 // pred_check
      _
    $region11: #{forward.13} parent=1 // pred_check_branch
      %20 = sbr.rel (0) target = $region13
    $region12: #{forward.13} parent=1 // pred_region
      _
    $region13: #{forward.13} parent=1 // pred_fallthru
      _
    // Predicated region
    $region14: #{forward.13} parent=1 // pred_check
      _
    $region15: #{forward.13} parent=1 // pred_check_branch
      %22 = sbr.rel (0) target = $region17
    $region16: #{forward.13} parent=1 // pred_region
      _
    $region17: #{forward.13} parent=1 // pred_fallthru
      _
    // Predicated region
    $region18: #{forward.13} parent=1 // pred_check
      _
    $region19: #{forward.13} parent=1 // pred_check_branch
      %24 = sbr.rel (0) target = $region21
    $region20: #{forward.13} parent=1 // pred_region
      _
    $region21: #{forward.13} parent=1 // pred_fallthru
      _
    // Predicated region
    $region22: #{forward.13} parent=1 // pred_check
      _
    $region23: #{forward.13} parent=1 // pred_check_branch
      %26 = sbr.rel (0) target = $region25
    $region24: #{forward.13} parent=1 // pred_region
      _
    $region25: #{forward.13} parent=1 // pred_fallthru
      _
    // Predicated region
    $region26: #{forward.13} parent=1 // pred_check
      _
    $region27: #{forward.13} parent=1 // pred_check_branch
      %28 = sbr.rel (0) target = $region29
    $region28: #{forward.13} parent=1 // pred_region
      _
    $region29: #{forward.13} parent=1 // pred_fallthru
      _
    %v29 = vld [vmem:[%s0] sm:$0xff]
    %v30 = vld [vmem:[%s0 + $0x8] sm:$0xff]
    %v31 = vld [vmem:[%s0 + $0x10] sm:$0xff]
    %v32 = vld [vmem:[%s0 + $0x18] sm:$0xff]
    %v33 = vld [vmem:[%s0 + $0x20] sm:$0xff]
    %v34 = vld [vmem:[%s0 + $0x28] sm:$0xff]
    %v35 = vld [vmem:[%s0 + $0x30] sm:$0xff]
    %v36 = vld [vmem:[%s0 + $0x38] sm:$0xff]
    %v37 = vld [vmem:[%s2] sm:$0xff]
    %v38 = vld [vmem:[%s2 + $0x8] sm:$0xff]
    %v39 = vld [vmem:[%s2 + $0x10] sm:$0xff]
    %v40 = vld [vmem:[%s2 + $0x18] sm:$0xff]
    %v41 = vld [vmem:[%s2 + $0x20] sm:$0xff]
    %v42 = vld [vmem:[%s2 + $0x28] sm:$0xff]
    %v43 = vld [vmem:[%s2 + $0x30] sm:$0xff]
    %v44 = vld [vmem:[%s2 + $0x38] sm:$0xff]
    %v45 = vld [vmem:[%s2 + $0x40] sm:$0xff]
    %v46 = vld [vmem:[%s2 + $0x48] sm:$0xff]
    %v47 = vld [vmem:[%s2 + $0x50] sm:$0xff]
    %v48 = vld [vmem:[%s2 + $0x58] sm:$0xff]
    %v49 = vld [vmem:[%s2 + $0x60] sm:$0xff]
    %v50 = vld [vmem:[%s2 + $0x68] sm:$0xff]
    %v51 = vld [vmem:[%s2 + $0x70] sm:$0xff]
    %v52 = vld [vmem:[%s2 + $0x78] sm:$0xff]
    %v53 = vld [vmem:[%s2 + $0x80] sm:$0xff]
    %v54 = vld [vmem:[%s2 + $0x88] sm:$0xff]
    %v55 = vld [vmem:[%s2 + $0x90] sm:$0xff]
    %v56 = vld [vmem:[%s2 + $0x98] sm:$0xff]
    %v57 = vld [vmem:[%s2 + $0xa0] sm:$0xff]
    %v58 = vld [vmem:[%s2 + $0xa8] sm:$0xff]
    %v59 = vld [vmem:[%s2 + $0xb0] sm:$0xff]
    %v60 = vld [vmem:[%s2 + $0xb8] sm:$0xff]
    %v61 = vld [vmem:[%s2 + $0xc0] sm:$0xff]
    %v62 = vld [vmem:[%s2 + $0xc8] sm:$0xff]
    %v63 = vld [vmem:[%s2 + $0xd0] sm:$0xff]
    %v64 = vld [vmem:[%s2 + $0xd8] sm:$0xff]
    %v65 = vld [vmem:[%s2 + $0xe0] sm:$0xff]
    %v66 = vld [vmem:[%s2 + $0xe8] sm:$0xff]
    %v67 = vld [vmem:[%s2 + $0xf0] sm:$0xff]
    %v68 = vld [vmem:[%s2 + $0xf8] sm:$0xff]
    %v69 = vld [vmem:[%s2 + $0x100] sm:$0xff]
    %v70 = vld [vmem:[%s2 + $0x108] sm:$0xff]
    %v71 = vld [vmem:[%s2 + $0x110] sm:$0xff]
    %v72 = vld [vmem:[%s2 + $0x118] sm:$0xff]
    %v73 = vld [vmem:[%s2 + $0x120] sm:$0xff]
    %v74 = vld [vmem:[%s2 + $0x128] sm:$0xff]
    %v75 = vld [vmem:[%s2 + $0x130] sm:$0xff]
    %v76 = vld [vmem:[%s2 + $0x138] sm:$0xff]
    %v77 = vld [vmem:[%s2 + $0x140] sm:$0xff]
    %v78 = vld [vmem:[%s2 + $0x148] sm:$0xff]
    %v79 = vld [vmem:[%s2 + $0x150] sm:$0xff]
    %v80 = vld [vmem:[%s2 + $0x158] sm:$0xff]
    %v81 = vld [vmem:[%s2 + $0x160] sm:$0xff]
    %v82 = vld [vmem:[%s2 + $0x168] sm:$0xff]
    %v83 = vld [vmem:[%s2 + $0x170] sm:$0xff]
    %v84 = vld [vmem:[%s2 + $0x178] sm:$0xff]
    %v85 = vld [vmem:[%s2 + $0x180] sm:$0xff]
    %v86 = vld [vmem:[%s2 + $0x188] sm:$0xff]
    %v87 = vld [vmem:[%s2 + $0x190] sm:$0xff]
    %v88 = vld [vmem:[%s2 + $0x198] sm:$0xff]
    %v89 = vld [vmem:[%s2 + $0x1a0] sm:$0xff]
    %v90 = vld [vmem:[%s2 + $0x1a8] sm:$0xff]
    %v91 = vld [vmem:[%s2 + $0x1b0] sm:$0xff]
    %v92 = vld [vmem:[%s2 + $0x1b8] sm:$0xff]
    %v93 = vld [vmem:[%s2 + $0x1c0] sm:$0xff]
    %v94 = vld [vmem:[%s2 + $0x1c8] sm:$0xff]
    %v95 = vld [vmem:[%s2 + $0x1d0] sm:$0xff]
    %v96 = vld [vmem:[%s2 + $0x1d8] sm:$0xff]
    %v97 = vld [vmem:[%s2 + $0x1e0] sm:$0xff]
    %v98 = vld [vmem:[%s2 + $0x1e8] sm:$0xff]
    %v99 = vld [vmem:[%s2 + $0x1f0] sm:$0xff]
    %v100 = vld [vmem:[%s2 + $0x1f8] sm:$0xff]
    %v101 = vld [vmem:[%s3] sm:$0x1]
    %v103 = vlaneseq
    %v104 = vshrl.u32 %v103, 7
    %v105 = vsub.s32 0, %v104
    %v106 = vrot.slane %v101, %v105
    %108 = vmatprep.subr.mxu0 0.0
    %109 = vmatpush1.msra.mxu0 %v37
    %110 = vmatprep.subr.mxu0 0.0
    %111 = vmatpush1.msra.mxu0 %v38
    %112 = vmatprep.subr.mxu0 0.0
    %113 = vmatpush1.msra.mxu0 %v39
    %114 = vmatprep.subr.mxu0 0.0
    %115 = vmatpush1.msra.mxu0 %v40
    %116 = vmatprep.subr.mxu0 0.0
    %117 = vmatpush1.msra.mxu0 %v41
    %118 = vmatprep.subr.mxu0 0.0
    %119 = vmatpush1.msra.mxu0 %v42
    %120 = vmatprep.subr.mxu0 0.0
    %121 = vmatpush1.msra.mxu0 %v43
    %122 = vmatprep.subr.mxu0 0.0
    %123 = vmatpush1.msra.mxu0 %v44
    %124 = vmatprep.subr.mxu0 0.0
    %125 = vmatpush1.msra.mxu0 %v45
    %126 = vmatprep.subr.mxu0 0.0
    %127 = vmatpush1.msra.mxu0 %v46
    %128 = vmatprep.subr.mxu0 0.0
    %129 = vmatpush1.msra.mxu0 %v47
    %130 = vmatprep.subr.mxu0 0.0
    %131 = vmatpush1.msra.mxu0 %v48
    %132 = vmatprep.subr.mxu0 0.0
    %133 = vmatpush1.msra.mxu0 %v49
    %134 = vmatprep.subr.mxu0 0.0
    %135 = vmatpush1.msra.mxu0 %v50
    %136 = vmatprep.subr.mxu0 0.0
    %137 = vmatpush1.msra.mxu0 %v51
    %138 = vmatprep.subr.mxu0 0.0
    %139 = vmatpush1.msra.mxu0 %v52
    %140 = vmatprep.subr.mxu0 0.0
    %141 = vmatpush1.msra.mxu0 %v53
    %142 = vmatprep.subr.mxu0 0.0
    %143 = vmatpush1.msra.mxu0 %v54
    %144 = vmatprep.subr.mxu0 0.0
    %145 = vmatpush1.msra.mxu0 %v55
    %146 = vmatprep.subr.mxu0 0.0
    %147 = vmatpush1.msra.mxu0 %v56
    %148 = vmatprep.subr.mxu0 0.0
    %149 = vmatpush1.msra.mxu0 %v57
    %150 = vmatprep.subr.mxu0 0.0
    %151 = vmatpush1.msra.mxu0 %v58
    %152 = vmatprep.subr.mxu0 0.0
    %153 = vmatpush1.msra.mxu0 %v59
    %154 = vmatprep.subr.mxu0 0.0
    %155 = vmatpush1.msra.mxu0 %v60
    %156 = vmatprep.subr.mxu0 0.0
    %157 = vmatpush1.msra.mxu0 %v61
    %158 = vmatprep.subr.mxu0 0.0
    %159 = vmatpush1.msra.mxu0 %v62
    %160 = vmatprep.subr.mxu0 0.0
    %161 = vmatpush1.msra.mxu0 %v63
    %162 = vmatprep.subr.mxu0 0.0
    %163 = vmatpush1.msra.mxu0 %v64
    %164 = vmatprep.subr.mxu0 0.0
    %165 = vmatpush1.msra.mxu0 %v65
    %166 = vmatprep.subr.mxu0 0.0
    %167 = vmatpush1.msra.mxu0 %v66
    %168 = vmatprep.subr.mxu0 0.0
    %169 = vmatpush1.msra.mxu0 %v67
    %170 = vmatprep.subr.mxu0 0.0
    %171 = vmatpush1.msra.mxu0 %v68
    %172 = vmatprep.mubr.f32.mxu0 %v30
    %173 = vmatmul.mubr.f32.gmra.mrb[0].mxu0 %v29
    %v174 = vpop.f32.mrb[0].mxu0
    %v175 = vadd.f32 %v106, %v174
    %v176 = vpop.f32.mrb[0].mxu0
    %177 = vmatprep.mubr.f32.mxu0 %v34
    %178 = vmatmul.mubr.f32.gmra.mrb[0].mxu0 %v33
    %v179 = vpop.f32.mrb[0].mxu0
    %v180 = vadd.f32 %v106, %v179
    %v181 = vpop.f32.mrb[0].mxu0
    %182 = vdwg.mxu0
    %183 = vmatprep.subr.mxu0 0.0
    %184 = vmatpush1.msra.mxu0 %v69
    %185 = vmatprep.subr.mxu0 0.0
    %186 = vmatpush1.msra.mxu0 %v70
    %187 = vmatprep.subr.mxu0 0.0
    %188 = vmatpush1.msra.mxu0 %v71
    %189 = vmatprep.subr.mxu0 0.0
    %190 = vmatpush1.msra.mxu0 %v72
    %191 = vmatprep.subr.mxu0 0.0
    %192 = vmatpush1.msra.mxu0 %v73
    %193 = vmatprep.subr.mxu0 0.0
    %194 = vmatpush1.msra.mxu0 %v74
    %195 = vmatprep.subr.mxu0 0.0
    %196 = vmatpush1.msra.mxu0 %v75
    %197 = vmatprep.subr.mxu0 0.0
    %198 = vmatpush1.msra.mxu0 %v76
    %199 = vmatprep.subr.mxu0 0.0
    %200 = vmatpush1.msra.mxu0 %v77
    %201 = vmatprep.subr.mxu0 0.0
    %202 = vmatpush1.msra.mxu0 %v78
    %203 = vmatprep.subr.mxu0 0.0
    %204 = vmatpush1.msra.mxu0 %v79
    %205 = vmatprep.subr.mxu0 0.0
    %206 = vmatpush1.msra.mxu0 %v80
    %207 = vmatprep.subr.mxu0 0.0
    %208 = vmatpush1.msra.mxu0 %v81
    %209 = vmatprep.subr.mxu0 0.0
    %210 = vmatpush1.msra.mxu0 %v82
    %211 = vmatprep.subr.mxu0 0.0
    %212 = vmatpush1.msra.mxu0 %v83
    %213 = vmatprep.subr.mxu0 0.0
    %214 = vmatpush1.msra.mxu0 %v84
    %215 = vmatprep.subr.mxu0 0.0
    %216 = vmatpush1.msra.mxu0 %v85
    %217 = vmatprep.subr.mxu0 0.0
    %218 = vmatpush1.msra.mxu0 %v86
    %219 = vmatprep.subr.mxu0 0.0
    %220 = vmatpush1.msra.mxu0 %v87
    %221 = vmatprep.subr.mxu0 0.0
    %222 = vmatpush1.msra.mxu0 %v88
    %223 = vmatprep.subr.mxu0 0.0
    %224 = vmatpush1.msra.mxu0 %v89
    %225 = vmatprep.subr.mxu0 0.0
    %226 = vmatpush1.msra.mxu0 %v90
    %227 = vmatprep.subr.mxu0 0.0
    %228 = vmatpush1.msra.mxu0 %v91
    %229 = vmatprep.subr.mxu0 0.0
    %230 = vmatpush1.msra.mxu0 %v92
    %231 = vmatprep.subr.mxu0 0.0
    %232 = vmatpush1.msra.mxu0 %v93
    %233 = vmatprep.subr.mxu0 0.0
    %234 = vmatpush1.msra.mxu0 %v94
    %235 = vmatprep.subr.mxu0 0.0
    %236 = vmatpush1.msra.mxu0 %v95
    %237 = vmatprep.subr.mxu0 0.0
    %238 = vmatpush1.msra.mxu0 %v96
    %239 = vmatprep.subr.mxu0 0.0
    %240 = vmatpush1.msra.mxu0 %v97
    %241 = vmatprep.subr.mxu0 0.0
    %242 = vmatpush1.msra.mxu0 %v98
    %243 = vmatprep.subr.mxu0 0.0
    %244 = vmatpush1.msra.mxu0 %v99
    %245 = vmatprep.subr.mxu0 0.0
    %246 = vmatpush1.msra.mxu0 %v100
    %247 = vmatprep.mubr.f32.mxu0 %v32
    %248 = vmatmul.mubr.f32.gmra.mrb[0].mxu0 %v31
    %v249 = vpop.f32.mrb[0].mxu0
    %v250 = vadd.f32 %v175, %v249
    %v251 = vpop.f32.mrb[0].mxu0
    %252 = vmatprep.mubr.f32.mxu0 %v36
    %253 = vmatmul.mubr.f32.gmra.mrb[0].mxu0 %v35
    %v254 = vpop.f32.mrb[0].mxu0
    %v255 = vadd.f32 %v180, %v254
    %v256 = vpop.f32.mrb[0].mxu0
    %257 = vdwg.mxu0
    %v258 = vld [vmem:[%s6] sm:$0xff]
    %v259 = vld [vmem:[%s6 + $0x8] sm:$0xff]
    %v260 = vmul.f32 %v250, %v258
    %v261 = vmul.f32 %v255, %v259
    %262 = vst [vmem:[#allocation2] sm:$0xff] %v260
    %263 = vst [vmem:[#allocation2 + $0x8] sm:$0xff] %v261
    %v264 = vld [vmem:[%s1] sm:$0xff]
    %v265 = vld [vmem:[%s1 + $0x8] sm:$0xff]
    %v266 = vld [vmem:[%s1 + $0x10] sm:$0xff]
    %v267 = vld [vmem:[%s1 + $0x18] sm:$0xff]
    %v268 = vld [vmem:[%s1 + $0x20] sm:$0xff]
    %v269 = vld [vmem:[%s1 + $0x28] sm:$0xff]
    %v270 = vld [vmem:[%s1 + $0x30] sm:$0xff]
    %v271 = vld [vmem:[%s1 + $0x38] sm:$0xff]
    %v272 = vld [vmem:[%s4] sm:$0xff]
    %v273 = vld [vmem:[%s4 + $0x8] sm:$0xff]
    %v274 = vld [vmem:[%s4 + $0x10] sm:$0xff]
    %v275 = vld [vmem:[%s4 + $0x18] sm:$0xff]
    %v276 = vld [vmem:[%s4 + $0x20] sm:$0xff]
    %v277 = vld [vmem:[%s4 + $0x28] sm:$0xff]
    %v278 = vld [vmem:[%s4 + $0x30] sm:$0xff]
    %v279 = vld [vmem:[%s4 + $0x38] sm:$0xff]
    %v280 = vld [vmem:[%s4 + $0x40] sm:$0xff]
    %v281 = vld [vmem:[%s4 + $0x48] sm:$0xff]
    %v282 = vld [vmem:[%s4 + $0x50] sm:$0xff]
    %v283 = vld [vmem:[%s4 + $0x58] sm:$0xff]
    %v284 = vld [vmem:[%s4 + $0x60] sm:$0xff]
    %v285 = vld [vmem:[%s4 + $0x68] sm:$0xff]
    %v286 = vld [vmem:[%s4 + $0x70] sm:$0xff]
    %v287 = vld [vmem:[%s4 + $0x78] sm:$0xff]
    %v288 = vld [vmem:[%s4 + $0x80] sm:$0xff]
    %v289 = vld [vmem:[%s4 + $0x88] sm:$0xff]
    %v290 = vld [vmem:[%s4 + $0x90] sm:$0xff]
    %v291 = vld [vmem:[%s4 + $0x98] sm:$0xff]
    %v292 = vld [vmem:[%s4 + $0xa0] sm:$0xff]
    %v293 = vld [vmem:[%s4 + $0xa8] sm:$0xff]
    %v294 = vld [vmem:[%s4 + $0xb0] sm:$0xff]
    %v295 = vld [vmem:[%s4 + $0xb8] sm:$0xff]
    %v296 = vld [vmem:[%s4 + $0xc0] sm:$0xff]
    %v297 = vld [vmem:[%s4 + $0xc8] sm:$0xff]
    %v298 = vld [vmem:[%s4 + $0xd0] sm:$0xff]
    %v299 = vld [vmem:[%s4 + $0xd8] sm:$0xff]
    %v300 = vld [vmem:[%s4 + $0xe0] sm:$0xff]
    %v301 = vld [vmem:[%s4 + $0xe8] sm:$0xff]
    %v302 = vld [vmem:[%s4 + $0xf0] sm:$0xff]
    %v303 = vld [vmem:[%s4 + $0xf8] sm:$0xff]
    %v304 = vld [vmem:[%s4 + $0x100] sm:$0xff]
    %v305 = vld [vmem:[%s4 + $0x108] sm:$0xff]
    %v306 = vld [vmem:[%s4 + $0x110] sm:$0xff]
    %v307 = vld [vmem:[%s4 + $0x118] sm:$0xff]
    %v308 = vld [vmem:[%s4 + $0x120] sm:$0xff]
    %v309 = vld [vmem:[%s4 + $0x128] sm:$0xff]
    %v310 = vld [vmem:[%s4 + $0x130] sm:$0xff]
    %v311 = vld [vmem:[%s4 + $0x138] sm:$0xff]
    %v312 = vld [vmem:[%s4 + $0x140] sm:$0xff]
    %v313 = vld [vmem:[%s4 + $0x148] sm:$0xff]
    %v314 = vld [vmem:[%s4 + $0x150] sm:$0xff]
    %v315 = vld [vmem:[%s4 + $0x158] sm:$0xff]
    %v316 = vld [vmem:[%s4 + $0x160] sm:$0xff]
    %v317 = vld [vmem:[%s4 + $0x168] sm:$0xff]
    %v318 = vld [vmem:[%s4 + $0x170] sm:$0xff]
    %v319 = vld [vmem:[%s4 + $0x178] sm:$0xff]
    %v320 = vld [vmem:[%s4 + $0x180] sm:$0xff]
    %v321 = vld [vmem:[%s4 + $0x188] sm:$0xff]
    %v322 = vld [vmem:[%s4 + $0x190] sm:$0xff]
    %v323 = vld [vmem:[%s4 + $0x198] sm:$0xff]
    %v324 = vld [vmem:[%s4 + $0x1a0] sm:$0xff]
    %v325 = vld [vmem:[%s4 + $0x1a8] sm:$0xff]
    %v326 = vld [vmem:[%s4 + $0x1b0] sm:$0xff]
    %v327 = vld [vmem:[%s4 + $0x1b8] sm:$0xff]
    %v328 = vld [vmem:[%s4 + $0x1c0] sm:$0xff]
    %v329 = vld [vmem:[%s4 + $0x1c8] sm:$0xff]
    %v330 = vld [vmem:[%s4 + $0x1d0] sm:$0xff]
    %v331 = vld [vmem:[%s4 + $0x1d8] sm:$0xff]
    %v332 = vld [vmem:[%s4 + $0x1e0] sm:$0xff]
    %v333 = vld [vmem:[%s4 + $0x1e8] sm:$0xff]
    %v334 = vld [vmem:[%s4 + $0x1f0] sm:$0xff]
    %v335 = vld [vmem:[%s4 + $0x1f8] sm:$0xff]
    %v336 = vld [vmem:[%s5] sm:$0x1]
    %v338 = vlaneseq
    %v339 = vshrl.u32 %v338, 7
    %v340 = vsub.s32 0, %v339
    %v341 = vrot.slane %v336, %v340
    %343 = vmatprep.subr.mxu0 0.0
    %344 = vmatpush1.msra.mxu0 %v272
    %345 = vmatprep.subr.mxu0 0.0
    %346 = vmatpush1.msra.mxu0 %v273
    %347 = vmatprep.subr.mxu0 0.0
    %348 = vmatpush1.msra.mxu0 %v274
    %349 = vmatprep.subr.mxu0 0.0
    %350 = vmatpush1.msra.mxu0 %v275
    %351 = vmatprep.subr.mxu0 0.0
    %352 = vmatpush1.msra.mxu0 %v276
    %353 = vmatprep.subr.mxu0 0.0
    %354 = vmatpush1.msra.mxu0 %v277
    %355 = vmatprep.subr.mxu0 0.0
    %356 = vmatpush1.msra.mxu0 %v278
    %357 = vmatprep.subr.mxu0 0.0
    %358 = vmatpush1.msra.mxu0 %v279
    %359 = vmatprep.subr.mxu0 0.0
    %360 = vmatpush1.msra.mxu0 %v280
    %361 = vmatprep.subr.mxu0 0.0
    %362 = vmatpush1.msra.mxu0 %v281
    %363 = vmatprep.subr.mxu0 0.0
    %364 = vmatpush1.msra.mxu0 %v282
    %365 = vmatprep.subr.mxu0 0.0
    %366 = vmatpush1.msra.mxu0 %v283
    %367 = vmatprep.subr.mxu0 0.0
    %368 = vmatpush1.msra.mxu0 %v284
    %369 = vmatprep.subr.mxu0 0.0
    %370 = vmatpush1.msra.mxu0 %v285
    %371 = vmatprep.subr.mxu0 0.0
    %372 = vmatpush1.msra.mxu0 %v286
    %373 = vmatprep.subr.mxu0 0.0
    %374 = vmatpush1.msra.mxu0 %v287
    %375 = vmatprep.subr.mxu0 0.0
    %376 = vmatpush1.msra.mxu0 %v288
    %377 = vmatprep.subr.mxu0 0.0
    %378 = vmatpush1.msra.mxu0 %v289
    %379 = vmatprep.subr.mxu0 0.0
    %380 = vmatpush1.msra.mxu0 %v290
    %381 = vmatprep.subr.mxu0 0.0
    %382 = vmatpush1.msra.mxu0 %v291
    %383 = vmatprep.subr.mxu0 0.0
    %384 = vmatpush1.msra.mxu0 %v292
    %385 = vmatprep.subr.mxu0 0.0
    %386 = vmatpush1.msra.mxu0 %v293
    %387 = vmatprep.subr.mxu0 0.0
    %388 = vmatpush1.msra.mxu0 %v294
    %389 = vmatprep.subr.mxu0 0.0
    %390 = vmatpush1.msra.mxu0 %v295
    %391 = vmatprep.subr.mxu0 0.0
    %392 = vmatpush1.msra.mxu0 %v296
    %393 = vmatprep.subr.mxu0 0.0
    %394 = vmatpush1.msra.mxu0 %v297
    %395 = vmatprep.subr.mxu0 0.0
    %396 = vmatpush1.msra.mxu0 %v298
    %397 = vmatprep.subr.mxu0 0.0
    %398 = vmatpush1.msra.mxu0 %v299
    %399 = vmatprep.subr.mxu0 0.0
    %400 = vmatpush1.msra.mxu0 %v300
    %401 = vmatprep.subr.mxu0 0.0
    %402 = vmatpush1.msra.mxu0 %v301
    %403 = vmatprep.subr.mxu0 0.0
    %404 = vmatpush1.msra.mxu0 %v302
    %405 = vmatprep.subr.mxu0 0.0
    %406 = vmatpush1.msra.mxu0 %v303
    %407 = vmatprep.mubr.f32.mxu0 %v265
    %408 = vmatmul.mubr.f32.gmra.mrb[0].mxu0 %v264
    %v409 = vpop.f32.mrb[0].mxu0
    %v410 = vadd.f32 %v341, %v409
    %v411 = vpop.f32.mrb[0].mxu0
    %412 = vmatprep.mubr.f32.mxu0 %v269
    %413 = vmatmul.mubr.f32.gmra.mrb[0].mxu0 %v268
    %v414 = vpop.f32.mrb[0].mxu0
    %v415 = vadd.f32 %v341, %v414
    %v416 = vpop.f32.mrb[0].mxu0
    %417 = vdwg.mxu0
    %418 = vmatprep.subr.mxu0 0.0
    %419 = vmatpush1.msra.mxu0 %v304
    %420 = vmatprep.subr.mxu0 0.0
    %421 = vmatpush1.msra.mxu0 %v305
    %422 = vmatprep.subr.mxu0 0.0
    %423 = vmatpush1.msra.mxu0 %v306
    %424 = vmatprep.subr.mxu0 0.0
    %425 = vmatpush1.msra.mxu0 %v307
    %426 = vmatprep.subr.mxu0 0.0
    %427 = vmatpush1.msra.mxu0 %v308
    %428 = vmatprep.subr.mxu0 0.0
    %429 = vmatpush1.msra.mxu0 %v309
    %430 = vmatprep.subr.mxu0 0.0
    %431 = vmatpush1.msra.mxu0 %v310
    %432 = vmatprep.subr.mxu0 0.0
    %433 = vmatpush1.msra.mxu0 %v311
    %434 = vmatprep.subr.mxu0 0.0
    %435 = vmatpush1.msra.mxu0 %v312
    %436 = vmatprep.subr.mxu0 0.0
    %437 = vmatpush1.msra.mxu0 %v313
    %438 = vmatprep.subr.mxu0 0.0
    %439 = vmatpush1.msra.mxu0 %v314
    %440 = vmatprep.subr.mxu0 0.0
    %441 = vmatpush1.msra.mxu0 %v315
    %442 = vmatprep.subr.mxu0 0.0
    %443 = vmatpush1.msra.mxu0 %v316
    %444 = vmatprep.subr.mxu0 0.0
    %445 = vmatpush1.msra.mxu0 %v317
    %446 = vmatprep.subr.mxu0 0.0
    %447 = vmatpush1.msra.mxu0 %v318
    %448 = vmatprep.subr.mxu0 0.0
    %449 = vmatpush1.msra.mxu0 %v319
    %450 = vmatprep.subr.mxu0 0.0
    %451 = vmatpush1.msra.mxu0 %v320
    %452 = vmatprep.subr.mxu0 0.0
    %453 = vmatpush1.msra.mxu0 %v321
    %454 = vmatprep.subr.mxu0 0.0
    %455 = vmatpush1.msra.mxu0 %v322
    %456 = vmatprep.subr.mxu0 0.0
    %457 = vmatpush1.msra.mxu0 %v323
    %458 = vmatprep.subr.mxu0 0.0
    %459 = vmatpush1.msra.mxu0 %v324
    %460 = vmatprep.subr.mxu0 0.0
    %461 = vmatpush1.msra.mxu0 %v325
    %462 = vmatprep.subr.mxu0 0.0
    %463 = vmatpush1.msra.mxu0 %v326
    %464 = vmatprep.subr.mxu0 0.0
    %465 = vmatpush1.msra.mxu0 %v327
    %466 = vmatprep.subr.mxu0 0.0
    %467 = vmatpush1.msra.mxu0 %v328
    %468 = vmatprep.subr.mxu0 0.0
    %469 = vmatpush1.msra.mxu0 %v329
    %470 = vmatprep.subr.mxu0 0.0
    %471 = vmatpush1.msra.mxu0 %v330
    %472 = vmatprep.subr.mxu0 0.0
    %473 = vmatpush1.msra.mxu0 %v331
    %474 = vmatprep.subr.mxu0 0.0
    %475 = vmatpush1.msra.mxu0 %v332
    %476 = vmatprep.subr.mxu0 0.0
    %477 = vmatpush1.msra.mxu0 %v333
    %478 = vmatprep.subr.mxu0 0.0
    %479 = vmatpush1.msra.mxu0 %v334
    %480 = vmatprep.subr.mxu0 0.0
    %481 = vmatpush1.msra.mxu0 %v335
    %482 = vmatprep.mubr.f32.mxu0 %v267
    %483 = vmatmul.mubr.f32.gmra.mrb[0].mxu0 %v266
    %v484 = vpop.f32.mrb[0].mxu0
    %v485 = vadd.f32 %v410, %v484
    %v486 = vpop.f32.mrb[0].mxu0
    %487 = vmatprep.mubr.f32.mxu0 %v271
    %488 = vmatmul.mubr.f32.gmra.mrb[0].mxu0 %v270
    %v489 = vpop.f32.mrb[0].mxu0
    %v490 = vadd.f32 %v415, %v489
    %v491 = vpop.f32.mrb[0].mxu0
    %492 = vdwg.mxu0
    %493 = vst [vmem:[%s8] sm:$0xff] %v485
    %494 = vst [vmem:[%s8 + $0x8] sm:$0xff] %v490
    // Predicated region
    $region30: #{forward.13} parent=1 // pred_check
      _
    $region31: #{forward.13} parent=1 // pred_check_branch
      %496 = sbr.rel (0) target = $region33
    $region32: #{forward.13} parent=1 // pred_region
      %s498 = ssub.s32 256, 256
      %499 = vsyncadd [#allocation3], %s498
      %s500 = sshll.u32 [#allocation2], 4
      %s501 = int_to_ptr.vmem [resolvable:$true] %s500
      %506 = dma.vmem_to_hbm [thread:$0]  %s501, 256, %s7, [#allocation3], 128, 128, 8
    $region33: #{forward.13} parent=1 // pred_fallthru
      _
    // Predicated region
    $region34: #{forward.13} parent=1 // pred_check
      _
    $region35: #{forward.13} parent=1 // pred_check_branch
      %508 = sbr.rel (0) target = $region37
    $region36: #{forward.13} parent=1 // pred_region
      _
    $region37: #{forward.13} parent=1 // pred_fallthru
      _
    // Predicated region
    $region38: #{forward.13} parent=1 // pred_check
      _
    $region39: #{forward.13} parent=1 // pred_check_branch
      %510 = sbr.rel (0) target = $region41
    $region40: #{forward.13} parent=1 // pred_region
      %511 = dma.done [#allocation3], 256
    $region41: #{forward.13} parent=1 // pred_fallthru
      _
    // Predicated region
    $region42: #{forward.13} parent=1 // pred_check
      _
    $region43: #{forward.13} parent=1 // pred_check_branch
      %513 = sbr.rel (0) target = $region45
    $region44: #{forward.13} parent=1 // pred_region
      _
    $region45: #{forward.13} parent=1 // pred_fallthru
      _
    %514 = vsyncpa [#allocation3], 1

</llo_original>
